<compile_context>
chip_gen: v7x
topology: tpu7x:2x2x1
jax: 0.10.0
libtpu: 0.0.40
codegen_flags: <defaults>
</compile_context>

<pallas_src>
import functools

import jax
import jax.numpy as jnp
from jax import lax
from jax.experimental import pallas as pl
from jax.experimental.pallas import tpu as pltpu


def local_luong_attention_kernel(pos_ref, src_ref, tgt_ref, wt_ref, ws_ref,
                                 out_ref, *, stddev, seq_len):
    src = src_ref[...]            # (BT, S, D), native dtype
    tgt3 = tgt_ref[...]           # (BT, 1, D), native dtype

    # attention_score[b, 0, s] = <source[b, s, :], target[b, :]>  — batched MXU contraction
    scores = jnp.einsum('bqd,bkd->bqk', tgt3, src,
                        preferred_element_type=jnp.float32)            # (BT, 1, S) f32

    # softmax over the sequence axis (torch dim=1)
    m = jnp.max(scores, axis=-1, keepdims=True)
    e = jnp.exp(scores - m)                                            # (BT, 1, S)
    den = jnp.sum(e, axis=-1, keepdims=True)                           # (BT, 1, 1)

    # Gaussian position weighting.
    # TODO(synk): torch.range(seq_len) in the reference is inclusive (length S+1), an
    # off-by-one that would break broadcasting; we implement the intended arange(S).
    pos = pos_ref[...]                                                 # (BT, 1, 1) f32
    idx = lax.broadcasted_iota(jnp.int32, (1, 1, seq_len), 2).astype(jnp.float32)
    rel = idx - pos                                                    # (BT, 1, S)
    neg_half_inv_var = -1.0 / (2.0 * stddev * stddev)                  # folded constant
    pw = jnp.exp(rel * rel * neg_half_inv_var)                         # (BT, 1, S)

    # softmax * position weighting, normalized with an EUP reciprocal (no divide)
    weights = (e * pw) * pl.reciprocal(den, approx=True)               # (BT, 1, S)

    # weighted context: sum_s weights[b, s] * source[b, s, :]  — batched MXU contraction
    wtd = jnp.einsum('bqk,bkd->bqd', weights.astype(src.dtype), src,
                     preferred_element_type=jnp.float32)               # (BT, 1, D) f32

    # Output projection: tanh(cat([target, weighted], dim=1) @ W)
    #   == tanh(target @ W[:D] + weighted @ W[D:])   (W pre-split in the wrapper)
    tgt2 = tgt_ref[:, 0, :]                                            # (BT, D)
    wtd2 = wtd[:, 0, :]                                                # (BT, D) f32
    ws = ws_ref[...]
    out = jnp.tanh(
        jnp.dot(tgt2, wt_ref[...], preferred_element_type=jnp.float32)
        + jnp.dot(wtd2.astype(ws.dtype), ws, preferred_element_type=jnp.float32))
    out_ref[...] = out.astype(out_ref.dtype)                           # dense (BT, U) store


def local_luong_attention(source, target, positions, attention_weights,
                          stddev=1.0, *, block_b=None):
    B, S, D = source.shape
    two_d, U = attention_weights.shape
    assert target.shape == (B, D), "target_dim must equal source_dim (score matmul)"
    assert two_d == 2 * D

    # Batch tile: full MXU height where possible (256 on v6e/v7x; pass 128 for v5e).
    BT = min(B, 256) if block_b is None else int(block_b)
    num_blocks = (B + BT - 1) // BT
    Bp = num_blocks * BT
    if Bp != B:                      # pad batch to a multiple of BT (rows discarded below)
        pad = Bp - B
        source = jnp.pad(source, ((0, pad), (0, 0), (0, 0)))
        target = jnp.pad(target, ((0, pad), (0, 0)))
        positions = jnp.pad(positions, ((0, pad),))

    # Layout plumbing done in the wrapper (free XLA reshapes / slices):
    tgt3 = target.reshape(Bp, 1, D)
    pos3 = positions.reshape(Bp, 1, 1).astype(jnp.float32)
    w_t = attention_weights[:D]      # (D, U)  — target half of W
    w_s = attention_weights[D:]      # (D, U)  — weighted-context half of W

    kernel = functools.partial(local_luong_attention_kernel,
                               stddev=float(stddev), seq_len=S)

    out = pl.pallas_call(
        kernel,
        out_shape=jax.ShapeDtypeStruct((Bp, U), source.dtype),
        grid=(num_blocks,),
        in_specs=[
            pl.BlockSpec((BT, 1, 1), lambda b: (b, 0, 0)),   # positions  (VMEM)
            pl.BlockSpec((BT, S, D), lambda b: (b, 0, 0)),   # source tile
            pl.BlockSpec((BT, 1, D), lambda b: (b, 0, 0)),   # target tile
            pl.BlockSpec((D, U), lambda b: (0, 0)),          # W[:D]  (grid-constant)
            pl.BlockSpec((D, U), lambda b: (0, 0)),          # W[D:]  (grid-constant)
        ],
        out_specs=pl.BlockSpec((BT, U), lambda b: (b, 0)),   # dense (BT, U) output slab
        compiler_params=pltpu.CompilerParams(
            dimension_semantics=("parallel",)),               # splits across TCs on v7x
    )(pos3, source, tgt3, w_t, w_s)
    return out[:B]


def reference(source, target, positions, W, stddev=1.0):
    """Pure-JAX replica of the (intended) PyTorch forward pass."""
    scores = jnp.einsum('bsd,bd->bs', source, target)[..., None]      # (B, S, 1)
    attn = jax.nn.softmax(scores, axis=1)
    S = source.shape[1]
    rel = jnp.arange(S, dtype=jnp.float32)[None, :] - positions[:, None]
    pw = jnp.exp(-(rel ** 2) / (2.0 * stddev ** 2))
    weights = attn * pw[..., None]
    weighted = jnp.sum(source * weights, axis=1)                      # (B, D)
    return jnp.tanh(jnp.concatenate([target, weighted], axis=1) @ W)  # (B, U)


if __name__ == "__main__":
    B, S = 128, 16
    source_dim = target_dim = 32      # must match for the score matmul
    output_units = 64
    stddev = 1.0

    key = jax.random.PRNGKey(0)
    k1, k2, k3, k4 = jax.random.split(key, 4)

    source = jax.random.normal(k1, (B, S, source_dim), dtype=jnp.float32)
    target = jax.random.normal(k2, (B, target_dim), dtype=jnp.float32)
    positions = jax.random.uniform(k3, (B,), dtype=jnp.float32, minval=0.0, maxval=S - 1)
    # deterministic parameter init (get_parameter([source_dim + target_dim, output_units]))
    attention_weights = (jax.random.normal(
        k4, (source_dim + target_dim, output_units), dtype=jnp.float32)
        / jnp.sqrt(jnp.float32(source_dim + target_dim)))

    # block_b=64 -> 2 grid steps (exercises the batched tiling + parallel grid).
    out = local_luong_attention(source, target, positions, attention_weights,
                                stddev, block_b=64)
    out = jax.block_until_ready(out)

    ref = reference(source, target, positions, attention_weights, stddev)
    assert out.shape == (B, output_units)
    # approx=True EUP reciprocal in the softmax -> slightly looser tolerance than exact divide.
    assert jnp.allclose(out, ref, atol=5e-3, rtol=5e-3), (out, ref)
    print("KERNEL_OK")
</pallas_src>

<mosaic_0001>
module attributes {stable_mosaic.version = 11 : i64} {
  func.func @local_luong_attention_kernel(%arg0: i32, %arg1: memref<64x1x1xf32, #tpu.memory_space<vmem>>, %arg2: memref<64x16x32xf32, #tpu.memory_space<vmem>>, %arg3: memref<64x1x32xf32, #tpu.memory_space<vmem>>, %arg4: memref<32x64xf32, #tpu.memory_space<vmem>>, %arg5: memref<32x64xf32, #tpu.memory_space<vmem>>, %arg6: memref<64x64xf32, #tpu.memory_space<vmem>>) attributes {dimension_semantics = [#tpu.dimension_semantics<parallel>], iteration_bounds = array<i64: 2>, scalar_prefetch = 0 : i64, scratch_operands = 0 : i64, tpu.core_type = #tpu.core_type<tc>, window_params = [{transform_indices = @transform_0, window_bounds = array<i64: 64, 1, 1>}, {transform_indices = @transform_1, window_bounds = array<i64: 64, 16, 32>}, {transform_indices = @transform_2, window_bounds = array<i64: 64, 1, 32>}, {pipeline_mode = #tpu.pipeline_mode<synchronous>, transform_indices = @transform_3, window_bounds = array<i64: 32, 64>}, {pipeline_mode = #tpu.pipeline_mode<synchronous>, transform_indices = @transform_4, window_bounds = array<i64: 32, 64>}, {transform_indices = @transform_5, window_bounds = array<i64: 64, 64>}]} {
    %c0 = arith.constant 0 : index
    %c0_0 = arith.constant 0 : index
    %c0_1 = arith.constant 0 : index
    %0 = vector.load %arg2[%c0, %c0_0, %c0_1] : memref<64x16x32xf32, #tpu.memory_space<vmem>>, vector<64x16x32xf32>
    %c0_2 = arith.constant 0 : index
    %c0_3 = arith.constant 0 : index
    %c0_4 = arith.constant 0 : index
    %1 = vector.load %arg3[%c0_2, %c0_3, %c0_4] : memref<64x1x32xf32, #tpu.memory_space<vmem>>, vector<64x1x32xf32>
    "tpu.trace_start"() <{level = 10 : i32, message = "bqd,bkd->bqk"}> : () -> ()
    %cst = arith.constant dense<0.000000e+00> : vector<64x1x16xf32>
    %2 = tpu.matmul %1, %0, %cst {dimension_numbers = #tpu.dot_dimension_numbers<[2], [2], [1], [1], [0, 0, 0, 1, 1, 1], [0], [0]>} : vector<64x1x32xf32>, vector<64x16x32xf32>, vector<64x1x16xf32> -> vector<64x1x16xf32>
    "tpu.trace_stop"() : () -> ()
    %cst_5 = arith.constant dense<0xFF800000> : vector<64x1xf32>
    %3 = vector.multi_reduction <maximumf>, %2, %cst_5 [2] : vector<64x1x16xf32> to vector<64x1xf32>
    %4 = vector.shape_cast %3 : vector<64x1xf32> to vector<64x1x1xf32>
    %5 = vector.broadcast %4 : vector<64x1x1xf32> to vector<64x1x16xf32>
    %6 = arith.subf %2, %5 : vector<64x1x16xf32>
    %7 = math.exp %6 : vector<64x1x16xf32>
    %cst_6 = arith.constant dense<0.000000e+00> : vector<64x1xf32>
    %8 = vector.multi_reduction <add>, %7, %cst_6 [2] : vector<64x1x16xf32> to vector<64x1xf32>
    %9 = vector.shape_cast %8 : vector<64x1xf32> to vector<64x1x1xf32>
    %c0_7 = arith.constant 0 : index
    %c0_8 = arith.constant 0 : index
    %c0_9 = arith.constant 0 : index
    %10 = vector.load %arg1[%c0_7, %c0_8, %c0_9] : memref<64x1x1xf32, #tpu.memory_space<vmem>>, vector<64x1x1xf32>
    %11 = tpu.iota {dimensions = array<i32: 2>} : vector<1x1x16xi32>
    %12 = arith.sitofp %11 : vector<1x1x16xi32> to vector<1x1x16xf32>
    %13 = vector.broadcast %12 : vector<1x1x16xf32> to vector<64x1x16xf32>
    %14 = vector.broadcast %10 : vector<64x1x1xf32> to vector<64x1x16xf32>
    %15 = arith.subf %13, %14 : vector<64x1x16xf32>
    %16 = arith.mulf %15, %15 : vector<64x1x16xf32>
    %cst_10 = arith.constant -5.000000e-01 : f32
    %17 = vector.broadcast %cst_10 : f32 to vector<64x1x16xf32>
    %18 = arith.mulf %16, %17 : vector<64x1x16xf32>
    %19 = math.exp %18 : vector<64x1x16xf32>
    %20 = arith.mulf %7, %19 : vector<64x1x16xf32>
    %21 = tpu.reciprocal %9 {approx = true} : vector<64x1x1xf32> -> vector<64x1x1xf32>
    %22 = vector.broadcast %21 : vector<64x1x1xf32> to vector<64x1x16xf32>
    %23 = arith.mulf %20, %22 : vector<64x1x16xf32>
    "tpu.trace_start"() <{level = 10 : i32, message = "bqk,bkd->bqd"}> : () -> ()
    %cst_11 = arith.constant dense<0.000000e+00> : vector<64x1x32xf32>
    %24 = tpu.matmul %23, %0, %cst_11 {dimension_numbers = #tpu.dot_dimension_numbers<[2], [1], [1], [2], [0, 0, 0, 1, 1, 2], [0], [0]>} : vector<64x1x16xf32>, vector<64x16x32xf32>, vector<64x1x32xf32> -> vector<64x1x32xf32>
    "tpu.trace_stop"() : () -> ()
    %c0_12 = arith.constant 0 : index
    %c0_13 = arith.constant 0 : index
    %c0_14 = arith.constant 0 : index
    %25 = vector.load %arg3[%c0_12, %c0_13, %c0_14] : memref<64x1x32xf32, #tpu.memory_space<vmem>>, vector<64x1x32xf32>
    %26 = vector.shape_cast %25 : vector<64x1x32xf32> to vector<64x32xf32>
    %27 = vector.shape_cast %24 : vector<64x1x32xf32> to vector<64x32xf32>
    %c0_15 = arith.constant 0 : index
    %c0_16 = arith.constant 0 : index
    %28 = vector.load %arg5[%c0_15, %c0_16] : memref<32x64xf32, #tpu.memory_space<vmem>>, vector<32x64xf32>
    %c0_17 = arith.constant 0 : index
    %c0_18 = arith.constant 0 : index
    %29 = vector.load %arg4[%c0_17, %c0_18] : memref<32x64xf32, #tpu.memory_space<vmem>>, vector<32x64xf32>
    %cst_19 = arith.constant dense<0.000000e+00> : vector<64x64xf32>
    %30 = tpu.matmul %26, %29, %cst_19 {dimension_numbers = #tpu.dot_dimension_numbers<[1], [0], [0], [1], [0, 0, 1, 1], [], []>} : vector<64x32xf32>, vector<32x64xf32>, vector<64x64xf32> -> vector<64x64xf32>
    %cst_20 = arith.constant dense<0.000000e+00> : vector<64x64xf32>
    %31 = tpu.matmul %27, %28, %cst_20 {dimension_numbers = #tpu.dot_dimension_numbers<[1], [0], [0], [1], [0, 0, 1, 1], [], []>} : vector<64x32xf32>, vector<32x64xf32>, vector<64x64xf32> -> vector<64x64xf32>
    %32 = arith.addf %30, %31 : vector<64x64xf32>
    %33 = math.tanh %32 : vector<64x64xf32>
    %c0_21 = arith.constant 0 : index
    %c0_22 = arith.constant 0 : index
    %34 = vector.load %arg6[%c0_21, %c0_22] : memref<64x64xf32, #tpu.memory_space<vmem>>, vector<64x64xf32>
    tpu.vector_store %arg6[%c0_21, %c0_22], %33 {strides = array<i32>} : memref<64x64xf32, #tpu.memory_space<vmem>>, vector<64x64xf32>,
    return
  }
  func.func @transform_0(%arg0: i32) -> (i32, i32, i32) {
    %c0_i32 = arith.constant 0 : i32
    %c0_i32_0 = arith.constant 0 : i32
    %c0_i32_1 = arith.constant 0 : i32
    return %arg0, %c0_i32, %c0_i32_0 : i32, i32, i32
  }
  func.func @transform_1(%arg0: i32) -> (i32, i32, i32) {
    %c0_i32 = arith.constant 0 : i32
    %c0_i32_0 = arith.constant 0 : i32
    %c0_i32_1 = arith.constant 0 : i32
    return %arg0, %c0_i32, %c0_i32_0 : i32, i32, i32
  }
  func.func @transform_2(%arg0: i32) -> (i32, i32, i32) {
    %c0_i32 = arith.constant 0 : i32
    %c0_i32_0 = arith.constant 0 : i32
    %c0_i32_1 = arith.constant 0 : i32
    return %arg0, %c0_i32, %c0_i32_0 : i32, i32, i32
  }
  func.func @transform_3(%arg0: i32) -> (i32, i32) {
    %c0_i32 = arith.constant 0 : i32
    %c0_i32_0 = arith.constant 0 : i32
    %c0_i32_1 = arith.constant 0 : i32
    return %c0_i32, %c0_i32_0 : i32, i32
  }
  func.func @transform_4(%arg0: i32) -> (i32, i32) {
    %c0_i32 = arith.constant 0 : i32
    %c0_i32_0 = arith.constant 0 : i32
    %c0_i32_1 = arith.constant 0 : i32
    return %c0_i32, %c0_i32_0 : i32, i32
  }
  func.func @transform_5(%arg0: i32) -> (i32, i32) {
    %c0_i32 = arith.constant 0 : i32
    %c0_i32_0 = arith.constant 0 : i32
    return %arg0, %c0_i32 : i32, i32
  }
}

</mosaic_0001>

<llo_original>
// kernel: tpu_custom_call.1
$region0: #{tpu_custom_call.1}
  #allocation0 [shape = 'u32[]', space=smem, size = 0x4, offset = 0x4, fixed_abs, tag = 'smem constant byte address 0x4 - core index']
  #allocation1 [shape = 'u32[144,128]{1,0:T(1,128)}', space=vmem, size = 0x12000, scoped, tag = 'internal scratch']
  %s0 = inlined_call_operand.vmem [shape: f32[128,1,1], index: 0, kind: input, shape index: {}]
  %s1 = inlined_call_operand.vmem [shape: f32[128,16,32], index: 1, kind: input, shape index: {}]
  %s2 = inlined_call_operand.vmem [shape: f32[128,1,32], index: 2, kind: input, shape index: {}]
  %s3 = inlined_call_operand.vmem [shape: f32[32,64], index: 3, kind: input, shape index: {}]
  %s4 = inlined_call_operand.vmem [shape: f32[32,64], index: 4, kind: input, shape index: {}]
  %s5 = inlined_call_operand.vmem [shape: f32[128,64], index: 5, kind: output, shape index: {}]
  %s6 = sld [smem:[#allocation0]]
  $region53: #{tpu_custom_call.1} parent=0
    _
  %s8 = ssub.s32 1, %s6
  %s9 = scalar_select 0, %s8, %s6
  loop: start=0, step=1, limit=4
  $region2: #{tpu_custom_call.1} parent=0 // loop_pre_header
    _
  $region3: #{tpu_custom_call.1} parent=0 // loop_header
    %s11 = sphi 0, %s15
    %p12 = scmp.ge.s32.totalorder %s11, 4
    %s21 = sphi 0, %s23
    %s24 = sphi 0, %s21
    %s25 = sphi 0, %s24
    %s41 = sphi 0, %s25
    %s47 = sphi 0, %s49
    %s50 = sphi 0, %s47
    %s51 = sphi 0, %s50
    %s67 = sphi 0, %s51
    %s73 = sphi 0, %s75
    %s76 = sphi 0, %s73
    %s77 = sphi 0, %s76
    %s93 = sphi 0, %s77
    %s97 = sphi 0, %s97
    %s99 = sphi 0, %s97
    %s100 = sphi 0, %s99
    %s114 = sphi 0, %s100
    %s118 = sphi 0, %s118
    %s120 = sphi 0, %s118
    %s121 = sphi 0, %s120
    %s135 = sphi 0, %s121
    %s141 = sphi 0, %s143
    %s144 = sphi 0, %s141
    %s145 = sphi 0, %s144
    %s161 = sphi 0, %s145
  $region4: #{tpu_custom_call.1} parent=0 // loop_header_branch
    %14 = sbr.rel (%p12) target = $region8
  $region5: #{tpu_custom_call.1} parent=0 // loop_body
    %s16 = ssub.s32 %s11, 1
    %s17 = ssub.s32 %s11, 2
    %s18 = sadd.s32 %s11, 1
    %s19 = ssub.s32 %s11, %s18
    %p20 = scmp.eq.s32.totalorder %s19, 0
    %s22 = sadd.s32 %s21, 1
    %s23 = scalar_select %p20, %s21, %s22
    %p26 = pneg %p20
    %p27 = scmp.eq.s32.totalorder %s11, 1
    %p28 = por %p26, %p27
    %p29 = scmp.ne.s32.totalorder %s21, %s24
    %p30 = scmp.eq.s32.totalorder %s11, 0
    %p31 = por %p29, %p30
    %p32 = scmp.ne.s32.totalorder %s21, %s24
    %p33 = scmp.eq.s32.totalorder %s16, 1
    %p34 = por %p32, %p33
    %p35 = scmp.ne.s32.totalorder %s24, %s25
    %p36 = scmp.eq.s32.totalorder %s16, 0
    %p37 = por %p35, %p36
    %p38 = scmp.ne.s32.totalorder %s24, %s25
    %p39 = scmp.eq.s32.totalorder %s17, 1
    %p40 = por %p38, %p39
    %p42 = scmp.ne.s32.totalorder %s25, %s41
    %p43 = scmp.eq.s32.totalorder %s17, 0
    %p44 = por %p42, %p43
    %s45 = ssub.s32 %s11, %s18
    %p46 = scmp.eq.s32.totalorder %s45, 0
    %s48 = sadd.s32 %s47, 1
    %s49 = scalar_select %p46, %s47, %s48
    %p52 = pneg %p46
    %p53 = scmp.eq.s32.totalorder %s11, 1
    %p54 = por %p52, %p53
    %p55 = scmp.ne.s32.totalorder %s47, %s50
    %p56 = scmp.eq.s32.totalorder %s11, 0
    %p57 = por %p55, %p56
    %p58 = scmp.ne.s32.totalorder %s47, %s50
    %p59 = scmp.eq.s32.totalorder %s16, 1
    %p60 = por %p58, %p59
    %p61 = scmp.ne.s32.totalorder %s50, %s51
    %p62 = scmp.eq.s32.totalorder %s16, 0
    %p63 = por %p61, %p62
    %p64 = scmp.ne.s32.totalorder %s50, %s51
    %p65 = scmp.eq.s32.totalorder %s17, 1
    %p66 = por %p64, %p65
    %p68 = scmp.ne.s32.totalorder %s51, %s67
    %p69 = scmp.eq.s32.totalorder %s17, 0
    %p70 = por %p68, %p69
    %s71 = ssub.s32 %s11, %s18
    %p72 = scmp.eq.s32.totalorder %s71, 0
    %s74 = sadd.s32 %s73, 1
    %s75 = scalar_select %p72, %s73, %s74
    %p78 = pneg %p72
    %p79 = scmp.eq.s32.totalorder %s11, 1
    %p80 = por %p78, %p79
    %p81 = scmp.ne.s32.totalorder %s73, %s76
    %p82 = scmp.eq.s32.totalorder %s11, 0
    %p83 = por %p81, %p82
    %p84 = scmp.ne.s32.totalorder %s73, %s76
    %p85 = scmp.eq.s32.totalorder %s16, 1
    %p86 = por %p84, %p85
    %p87 = scmp.ne.s32.totalorder %s76, %s77
    %p88 = scmp.eq.s32.totalorder %s16, 0
    %p89 = por %p87, %p88
    %p90 = scmp.ne.s32.totalorder %s76, %s77
    %p91 = scmp.eq.s32.totalorder %s17, 1
    %p92 = por %p90, %p91
    %p94 = scmp.ne.s32.totalorder %s77, %s93
    %p95 = scmp.eq.s32.totalorder %s17, 0
    %p96 = por %p94, %p95
    %s98 = sadd.s32 %s97, 1
    %p101 = scmp.eq.s32.totalorder %s11, 1
    %p102 = scmp.ne.s32.totalorder %s97, %s99
    %p103 = scmp.eq.s32.totalorder %s11, 0
    %p104 = por %p102, %p103
    %p105 = scmp.ne.s32.totalorder %s97, %s99
    %p106 = scmp.eq.s32.totalorder %s16, 1
    %p107 = por %p105, %p106
    %p108 = scmp.ne.s32.totalorder %s99, %s100
    %p109 = scmp.eq.s32.totalorder %s16, 0
    %p110 = por %p108, %p109
    %p111 = scmp.ne.s32.totalorder %s99, %s100
    %p112 = scmp.eq.s32.totalorder %s17, 1
    %p113 = por %p111, %p112
    %p115 = scmp.ne.s32.totalorder %s100, %s114
    %p116 = scmp.eq.s32.totalorder %s17, 0
    %p117 = por %p115, %p116
    %s119 = sadd.s32 %s118, 1
    %p122 = scmp.eq.s32.totalorder %s11, 1
    %p123 = scmp.ne.s32.totalorder %s118, %s120
    %p124 = scmp.eq.s32.totalorder %s11, 0
    %p125 = por %p123, %p124
    %p126 = scmp.ne.s32.totalorder %s118, %s120
    %p127 = scmp.eq.s32.totalorder %s16, 1
    %p128 = por %p126, %p127
    %p129 = scmp.ne.s32.totalorder %s120, %s121
    %p130 = scmp.eq.s32.totalorder %s16, 0
    %p131 = por %p129, %p130
    %p132 = scmp.ne.s32.totalorder %s120, %s121
    %p133 = scmp.eq.s32.totalorder %s17, 1
    %p134 = por %p132, %p133
    %p136 = scmp.ne.s32.totalorder %s121, %s135
    %p137 = scmp.eq.s32.totalorder %s17, 0
    %p138 = por %p136, %p137
    %s139 = ssub.s32 %s11, %s18
    %p140 = scmp.eq.s32.totalorder %s139, 0
    %s142 = sadd.s32 %s141, 1
    %s143 = scalar_select %p140, %s141, %s142
    %p146 = pneg %p140
    %p147 = scmp.eq.s32.totalorder %s11, 1
    %p148 = por %p146, %p147
    %p149 = scmp.ne.s32.totalorder %s141, %s144
    %p150 = scmp.eq.s32.totalorder %s11, 0
    %p151 = por %p149, %p150
    %p152 = scmp.ne.s32.totalorder %s141, %s144
    %p153 = scmp.eq.s32.totalorder %s16, 1
    %p154 = por %p152, %p153
    %p155 = scmp.ne.s32.totalorder %s144, %s145
    %p156 = scmp.eq.s32.totalorder %s16, 0
    %p157 = por %p155, %p156
    %p158 = scmp.ne.s32.totalorder %s144, %s145
    %p159 = scmp.eq.s32.totalorder %s17, 1
    %p160 = por %p158, %p159
    %p162 = scmp.ne.s32.totalorder %s145, %s161
    %p163 = scmp.eq.s32.totalorder %s17, 0
    %p164 = por %p162, %p163
    %p165 = scmp.le.s32.totalorder 1, %s11
    %p166 = scmp.lt.s32.totalorder %s11, 3
    %p167 = pnand %p165, %p166
    %p168 = pneg %p167
    // Predicated region
    $region9: #{tpu_custom_call.1} parent=5 // pred_check
      _
    $region10: #{tpu_custom_call.1} parent=5 // pred_check_branch
      %170 = sbr.rel (%p167) target = $region12
    $region11: #{tpu_custom_call.1} parent=5 // pred_region
      %s171 = ssub.s32 %s11, 1
      // Predicated region
      $region13: #{tpu_custom_call.1} parent=11 // pred_check
        %p172 = pneg %p110
      $region14: #{tpu_custom_call.1} parent=11 // pred_check_branch
        %174 = sbr.rel (%p172) target = $region16
      $region15: #{tpu_custom_call.1} parent=11 // pred_region
        _
      $region16: #{tpu_custom_call.1} parent=11 // pred_fallthru
        _
      // Predicated region
      $region17: #{tpu_custom_call.1} parent=11 // pred_check
        %p175 = pneg %p131
      $region18: #{tpu_custom_call.1} parent=11 // pred_check_branch
        %177 = sbr.rel (%p175) target = $region20
      $region19: #{tpu_custom_call.1} parent=11 // pred_region
        _
      $region20: #{tpu_custom_call.1} parent=11 // pred_fallthru
        _
    $region12: #{tpu_custom_call.1} parent=5 // pred_fallthru
      _
    %p178 = scmp.lt.s32.totalorder %s11, 2
    // Predicated region
    $region21: #{tpu_custom_call.1} parent=5 // pred_check
      %p179 = pneg %p178
    $region22: #{tpu_custom_call.1} parent=5 // pred_check_branch
      %181 = sbr.rel (%p179) target = $region24
    $region23: #{tpu_custom_call.1} parent=5 // pred_region
      // Predicated region
      $region25: #{tpu_custom_call.1} parent=23 // pred_check
        %p182 = pneg %p31
      $region26: #{tpu_custom_call.1} parent=23 // pred_check_branch
        %184 = sbr.rel (%p182) target = $region28
      $region27: #{tpu_custom_call.1} parent=23 // pred_region
        %s185 = smul.u32 64, %s11
        %p186 = scmp.lt.s32.totalorder %s185, 127
        %s187 = scalar_select %p186, %s185, 127
        %s188 = scalar_lea.vmem %s0, %s187
        %s189 = smul.u32 64, %s11
      $region28: #{tpu_custom_call.1} parent=23 // pred_fallthru
        _
      // Predicated region
      $region29: #{tpu_custom_call.1} parent=23 // pred_check
        %p190 = pneg %p57
      $region30: #{tpu_custom_call.1} parent=23 // pred_check_branch
        %192 = sbr.rel (%p190) target = $region32
      $region31: #{tpu_custom_call.1} parent=23 // pred_region
        %s193 = smul.u32 64, %s11
        %p194 = scmp.lt.s32.totalorder %s193, 127
        %s195 = scalar_select %p194, %s193, 127
        %s196 = smul.addr %s195, 2
        %s197 = smul.addr %s196, 8
        %s198 = scalar_lea.vmem %s1, %s197
        %s199 = smul.u32 64, %s11
      $region32: #{tpu_custom_call.1} parent=23 // pred_fallthru
        _
      // Predicated region
      $region33: #{tpu_custom_call.1} parent=23 // pred_check
        %p200 = pneg %p83
      $region34: #{tpu_custom_call.1} parent=23 // pred_check_branch
        %202 = sbr.rel (%p200) target = $region36
      $region35: #{tpu_custom_call.1} parent=23 // pred_region
        %s203 = smul.u32 64, %s11
        %p204 = scmp.lt.s32.totalorder %s203, 127
        %s205 = scalar_select %p204, %s203, 127
        %s206 = scalar_lea.vmem %s2, %s205
        %s207 = smul.u32 64, %s11
      $region36: #{tpu_custom_call.1} parent=23 // pred_fallthru
        _
    $region24: #{tpu_custom_call.1} parent=5 // pred_fallthru
      _
    %p208 = scmp.le.s32.totalorder 1, %s11
    %p209 = scmp.lt.s32.totalorder %s11, 3
    %p210 = pnand %p208, %p209
    %p211 = pneg %p210
    // Predicated region
    $region37: #{tpu_custom_call.1} parent=5 // pred_check
      _
    $region38: #{tpu_custom_call.1} parent=5 // pred_check_branch
      %213 = sbr.rel (%p210) target = $region40
    $region39: #{tpu_custom_call.1} parent=5 // pred_region
      %s214 = ssub.s32 %s11, 1
      %s215 = smul.u32 64, %s16
      %p216 = scmp.lt.s32.totalorder %s215, 127
      %s217 = scalar_select %p216, %s215, 127
      %s218 = scalar_lea.vmem %s0, %s217
      %p219 = pneg %p37
      %p220 = pneg %p34
      %s221 = smul.u32 64, %s16
      %p222 = scmp.lt.s32.totalorder %s221, 127
      %s223 = scalar_select %p222, %s221, 127
      %s224 = smul.addr %s223, 2
      %s225 = smul.addr %s224, 8
      %s226 = scalar_lea.vmem %s1, %s225
      %p227 = pneg %p63
      %p228 = pneg %p60
      %s229 = smul.u32 64, %s16
      %p230 = scmp.lt.s32.totalorder %s229, 127
      %s231 = scalar_select %p230, %s229, 127
      %s232 = scalar_lea.vmem %s2, %s231
      %p233 = pneg %p89
      %p234 = pneg %p86
      %p235 = pneg %p110
      %p236 = pneg %p107
      %p237 = pneg %p131
      %p238 = pneg %p128
      %p239 = pneg %p157
      %p240 = pneg %p154
      %s241 = smul.u32 8, %s16
      %p242 = scmp.lt.s32.totalorder %s241, 15
      %s243 = scalar_select %p242, %s241, 15
      %s244 = smul.addr %s243, 8
      %s245 = scalar_lea.vmem %s5, %s244
      %s246 = smul.u32 64, %s16
      %p247 = scmp.lt.s32.totalorder %s246, 127
      %s248 = scalar_select %p247, %s246, 127
      %s249 = scalar_lea.vmem %s0, %s248
      %s250 = smul.u32 64, %s16
      %s251 = smul.u32 64, %s16
      %p252 = scmp.lt.s32.totalorder %s251, 127
      %s253 = scalar_select %p252, %s251, 127
      %s254 = smul.addr %s253, 2
      %s255 = smul.addr %s254, 8
      %s256 = scalar_lea.vmem %s1, %s255
      %s257 = smul.u32 64, %s16
      %s258 = smul.u32 64, %s16
      %p259 = scmp.lt.s32.totalorder %s258, 127
      %s260 = scalar_select %p259, %s258, 127
      %s261 = scalar_lea.vmem %s2, %s260
      %s262 = smul.u32 64, %s16
      %s263 = smul.u32 8, %s16
      %p264 = scmp.lt.s32.totalorder %s263, 15
      %s265 = scalar_select %p264, %s263, 15
      %s266 = smul.addr %s265, 8
      %s267 = scalar_lea.vmem %s5, %s266
      %s268 = smul.u32 8, %s16
      %v269 = vld [vmem:[%s256] sm:$0xff]
      %v270 = vld [vmem:[%s256 + $0x8] sm:$0xff]
      %v271 = vld [vmem:[%s256 + $0x10] sm:$0xff]
      %v272 = vld [vmem:[%s256 + $0x18] sm:$0xff]
      %v273 = vld [vmem:[%s256 + $0x20] sm:$0xff]
      %v274 = vld [vmem:[%s256 + $0x28] sm:$0xff]
      %v275 = vld [vmem:[%s256 + $0x30] sm:$0xff]
      %v276 = vld [vmem:[%s256 + $0x38] sm:$0xff]
      %v277 = vld [vmem:[%s256 + $0x40] sm:$0xff]
      %v278 = vld [vmem:[%s256 + $0x48] sm:$0xff]
      %v279 = vld [vmem:[%s256 + $0x50] sm:$0xff]
      %v280 = vld [vmem:[%s256 + $0x58] sm:$0xff]
      %v281 = vld [vmem:[%s256 + $0x60] sm:$0xff]
      %v282 = vld [vmem:[%s256 + $0x68] sm:$0xff]
      %v283 = vld [vmem:[%s256 + $0x70] sm:$0xff]
      %v284 = vld [vmem:[%s256 + $0x78] sm:$0xff]
      %v285 = vld [vmem:[%s256 + $0x80] sm:$0xff]
      %v286 = vld [vmem:[%s256 + $0x88] sm:$0xff]
      %v287 = vld [vmem:[%s256 + $0x90] sm:$0xff]
      %v288 = vld [vmem:[%s256 + $0x98] sm:$0xff]
      %v289 = vld [vmem:[%s256 + $0xa0] sm:$0xff]
      %v290 = vld [vmem:[%s256 + $0xa8] sm:$0xff]
      %v291 = vld [vmem:[%s256 + $0xb0] sm:$0xff]
      %v292 = vld [vmem:[%s256 + $0xb8] sm:$0xff]
      %v293 = vld [vmem:[%s256 + $0xc0] sm:$0xff]
      %v294 = vld [vmem:[%s256 + $0xc8] sm:$0xff]
      %v295 = vld [vmem:[%s256 + $0xd0] sm:$0xff]
      %v296 = vld [vmem:[%s256 + $0xd8] sm:$0xff]
      %v297 = vld [vmem:[%s256 + $0xe0] sm:$0xff]
      %v298 = vld [vmem:[%s256 + $0xe8] sm:$0xff]
      %v299 = vld [vmem:[%s256 + $0xf0] sm:$0xff]
      %v300 = vld [vmem:[%s256 + $0xf8] sm:$0xff]
      %v301 = vld [vmem:[%s256 + $0x100] sm:$0xff]
      %v302 = vld [vmem:[%s256 + $0x108] sm:$0xff]
      %v303 = vld [vmem:[%s256 + $0x110] sm:$0xff]
      %v304 = vld [vmem:[%s256 + $0x118] sm:$0xff]
      %v305 = vld [vmem:[%s256 + $0x120] sm:$0xff]
      %v306 = vld [vmem:[%s256 + $0x128] sm:$0xff]
      %v307 = vld [vmem:[%s256 + $0x130] sm:$0xff]
      %v308 = vld [vmem:[%s256 + $0x138] sm:$0xff]
      %v309 = vld [vmem:[%s256 + $0x140] sm:$0xff]
      %v310 = vld [vmem:[%s256 + $0x148] sm:$0xff]
      %v311 = vld [vmem:[%s256 + $0x150] sm:$0xff]
      %v312 = vld [vmem:[%s256 + $0x158] sm:$0xff]
      %v313 = vld [vmem:[%s256 + $0x160] sm:$0xff]
      %v314 = vld [vmem:[%s256 + $0x168] sm:$0xff]
      %v315 = vld [vmem:[%s256 + $0x170] sm:$0xff]
      %v316 = vld [vmem:[%s256 + $0x178] sm:$0xff]
      %v317 = vld [vmem:[%s256 + $0x180] sm:$0xff]
      %v318 = vld [vmem:[%s256 + $0x188] sm:$0xff]
      %v319 = vld [vmem:[%s256 + $0x190] sm:$0xff]
      %v320 = vld [vmem:[%s256 + $0x198] sm:$0xff]
      %v321 = vld [vmem:[%s256 + $0x1a0] sm:$0xff]
      %v322 = vld [vmem:[%s256 + $0x1a8] sm:$0xff]
      %v323 = vld [vmem:[%s256 + $0x1b0] sm:$0xff]
      %v324 = vld [vmem:[%s256 + $0x1b8] sm:$0xff]
      %v325 = vld [vmem:[%s256 + $0x1c0] sm:$0xff]
      %v326 = vld [vmem:[%s256 + $0x1c8] sm:$0xff]
      %v327 = vld [vmem:[%s256 + $0x1d0] sm:$0xff]
      %v328 = vld [vmem:[%s256 + $0x1d8] sm:$0xff]
      %v329 = vld [vmem:[%s256 + $0x1e0] sm:$0xff]
      %v330 = vld [vmem:[%s256 + $0x1e8] sm:$0xff]
      %v331 = vld [vmem:[%s256 + $0x1f0] sm:$0xff]
      %v332 = vld [vmem:[%s256 + $0x1f8] sm:$0xff]
      %v333 = vld [vmem:[%s256 + $0x200] sm:$0xff]
      %v334 = vld [vmem:[%s256 + $0x208] sm:$0xff]
      %v335 = vld [vmem:[%s256 + $0x210] sm:$0xff]
      %v336 = vld [vmem:[%s256 + $0x218] sm:$0xff]
      %v337 = vld [vmem:[%s256 + $0x220] sm:$0xff]
      %v338 = vld [vmem:[%s256 + $0x228] sm:$0xff]
      %v339 = vld [vmem:[%s256 + $0x230] sm:$0xff]
      %v340 = vld [vmem:[%s256 + $0x238] sm:$0xff]
      %v341 = vld [vmem:[%s256 + $0x240] sm:$0xff]
      %v342 = vld [vmem:[%s256 + $0x248] sm:$0xff]
      %v343 = vld [vmem:[%s256 + $0x250] sm:$0xff]
      %v344 = vld [vmem:[%s256 + $0x258] sm:$0xff]
      %v345 = vld [vmem:[%s256 + $0x260] sm:$0xff]
      %v346 = vld [vmem:[%s256 + $0x268] sm:$0xff]
      %v347 = vld [vmem:[%s256 + $0x270] sm:$0xff]
      %v348 = vld [vmem:[%s256 + $0x278] sm:$0xff]
      %v349 = vld [vmem:[%s256 + $0x280] sm:$0xff]
      %v350 = vld [vmem:[%s256 + $0x288] sm:$0xff]
      %v351 = vld [vmem:[%s256 + $0x290] sm:$0xff]
      %v352 = vld [vmem:[%s256 + $0x298] sm:$0xff]
      %v353 = vld [vmem:[%s256 + $0x2a0] sm:$0xff]
      %v354 = vld [vmem:[%s256 + $0x2a8] sm:$0xff]
      %v355 = vld [vmem:[%s256 + $0x2b0] sm:$0xff]
      %v356 = vld [vmem:[%s256 + $0x2b8] sm:$0xff]
      %v357 = vld [vmem:[%s256 + $0x2c0] sm:$0xff]
      %v358 = vld [vmem:[%s256 + $0x2c8] sm:$0xff]
      %v359 = vld [vmem:[%s256 + $0x2d0] sm:$0xff]
      %v360 = vld [vmem:[%s256 + $0x2d8] sm:$0xff]
      %v361 = vld [vmem:[%s256 + $0x2e0] sm:$0xff]
      %v362 = vld [vmem:[%s256 + $0x2e8] sm:$0xff]
      %v363 = vld [vmem:[%s256 + $0x2f0] sm:$0xff]
      %v364 = vld [vmem:[%s256 + $0x2f8] sm:$0xff]
      %v365 = vld [vmem:[%s256 + $0x300] sm:$0xff]
      %v366 = vld [vmem:[%s256 + $0x308] sm:$0xff]
      %v367 = vld [vmem:[%s256 + $0x310] sm:$0xff]
      %v368 = vld [vmem:[%s256 + $0x318] sm:$0xff]
      %v369 = vld [vmem:[%s256 + $0x320] sm:$0xff]
      %v370 = vld [vmem:[%s256 + $0x328] sm:$0xff]
      %v371 = vld [vmem:[%s256 + $0x330] sm:$0xff]
      %v372 = vld [vmem:[%s256 + $0x338] sm:$0xff]
      %v373 = vld [vmem:[%s256 + $0x340] sm:$0xff]
      %v374 = vld [vmem:[%s256 + $0x348] sm:$0xff]
      %v375 = vld [vmem:[%s256 + $0x350] sm:$0xff]
      %v376 = vld [vmem:[%s256 + $0x358] sm:$0xff]
      %v377 = vld [vmem:[%s256 + $0x360] sm:$0xff]
      %v378 = vld [vmem:[%s256 + $0x368] sm:$0xff]
      %v379 = vld [vmem:[%s256 + $0x370] sm:$0xff]
      %v380 = vld [vmem:[%s256 + $0x378] sm:$0xff]
      %v381 = vld [vmem:[%s256 + $0x380] sm:$0xff]
      %v382 = vld [vmem:[%s256 + $0x388] sm:$0xff]
      %v383 = vld [vmem:[%s256 + $0x390] sm:$0xff]
      %v384 = vld [vmem:[%s256 + $0x398] sm:$0xff]
      %v385 = vld [vmem:[%s256 + $0x3a0] sm:$0xff]
      %v386 = vld [vmem:[%s256 + $0x3a8] sm:$0xff]
      %v387 = vld [vmem:[%s256 + $0x3b0] sm:$0xff]
      %v388 = vld [vmem:[%s256 + $0x3b8] sm:$0xff]
      %v389 = vld [vmem:[%s256 + $0x3c0] sm:$0xff]
      %v390 = vld [vmem:[%s256 + $0x3c8] sm:$0xff]
      %v391 = vld [vmem:[%s256 + $0x3d0] sm:$0xff]
      %v392 = vld [vmem:[%s256 + $0x3d8] sm:$0xff]
      %v393 = vld [vmem:[%s256 + $0x3e0] sm:$0xff]
      %v394 = vld [vmem:[%s256 + $0x3e8] sm:$0xff]
      %v395 = vld [vmem:[%s256 + $0x3f0] sm:$0xff]
      %v396 = vld [vmem:[%s256 + $0x3f8] sm:$0xff]
      %v397 = vld [vmem:[%s261] sm:$0x1]
      %v398 = vld [vmem:[%s261 + $0x1] sm:$0x1]
      %v399 = vld [vmem:[%s261 + $0x2] sm:$0x1]
      %v400 = vld [vmem:[%s261 + $0x3] sm:$0x1]
      %v401 = vld [vmem:[%s261 + $0x4] sm:$0x1]
      %v402 = vld [vmem:[%s261 + $0x5] sm:$0x1]
      %v403 = vld [vmem:[%s261 + $0x6] sm:$0x1]
      %v404 = vld [vmem:[%s261 + $0x7] sm:$0x1]
      %v405 = vld [vmem:[%s261 + $0x8] sm:$0x1]
      %v406 = vld [vmem:[%s261 + $0x9] sm:$0x1]
      %v407 = vld [vmem:[%s261 + $0xa] sm:$0x1]
      %v408 = vld [vmem:[%s261 + $0xb] sm:$0x1]
      %v409 = vld [vmem:[%s261 + $0xc] sm:$0x1]
      %v410 = vld [vmem:[%s261 + $0xd] sm:$0x1]
      %v411 = vld [vmem:[%s261 + $0xe] sm:$0x1]
      %v412 = vld [vmem:[%s261 + $0xf] sm:$0x1]
      %v413 = vld [vmem:[%s261 + $0x10] sm:$0x1]
      %v414 = vld [vmem:[%s261 + $0x11] sm:$0x1]
      %v415 = vld [vmem:[%s261 + $0x12] sm:$0x1]
      %v416 = vld [vmem:[%s261 + $0x13] sm:$0x1]
      %v417 = vld [vmem:[%s261 + $0x14] sm:$0x1]
      %v418 = vld [vmem:[%s261 + $0x15] sm:$0x1]
      %v419 = vld [vmem:[%s261 + $0x16] sm:$0x1]
      %v420 = vld [vmem:[%s261 + $0x17] sm:$0x1]
      %v421 = vld [vmem:[%s261 + $0x18] sm:$0x1]
      %v422 = vld [vmem:[%s261 + $0x19] sm:$0x1]
      %v423 = vld [vmem:[%s261 + $0x1a] sm:$0x1]
      %v424 = vld [vmem:[%s261 + $0x1b] sm:$0x1]
      %v425 = vld [vmem:[%s261 + $0x1c] sm:$0x1]
      %v426 = vld [vmem:[%s261 + $0x1d] sm:$0x1]
      %v427 = vld [vmem:[%s261 + $0x1e] sm:$0x1]
      %v428 = vld [vmem:[%s261 + $0x1f] sm:$0x1]
      %v429 = vld [vmem:[%s261 + $0x20] sm:$0x1]
      %v430 = vld [vmem:[%s261 + $0x21] sm:$0x1]
      %v431 = vld [vmem:[%s261 + $0x22] sm:$0x1]
      %v432 = vld [vmem:[%s261 + $0x23] sm:$0x1]
      %v433 = vld [vmem:[%s261 + $0x24] sm:$0x1]
      %v434 = vld [vmem:[%s261 + $0x25] sm:$0x1]
      %v435 = vld [vmem:[%s261 + $0x26] sm:$0x1]
      %v436 = vld [vmem:[%s261 + $0x27] sm:$0x1]
      %v437 = vld [vmem:[%s261 + $0x28] sm:$0x1]
      %v438 = vld [vmem:[%s261 + $0x29] sm:$0x1]
      %v439 = vld [vmem:[%s261 + $0x2a] sm:$0x1]
      %v440 = vld [vmem:[%s261 + $0x2b] sm:$0x1]
      %v441 = vld [vmem:[%s261 + $0x2c] sm:$0x1]
      %v442 = vld [vmem:[%s261 + $0x2d] sm:$0x1]
      %v443 = vld [vmem:[%s261 + $0x2e] sm:$0x1]
      %v444 = vld [vmem:[%s261 + $0x2f] sm:$0x1]
      %v445 = vld [vmem:[%s261 + $0x30] sm:$0x1]
      %v446 = vld [vmem:[%s261 + $0x31] sm:$0x1]
      %v447 = vld [vmem:[%s261 + $0x32] sm:$0x1]
      %v448 = vld [vmem:[%s261 + $0x33] sm:$0x1]
      %v449 = vld [vmem:[%s261 + $0x34] sm:$0x1]
      %v450 = vld [vmem:[%s261 + $0x35] sm:$0x1]
      %v451 = vld [vmem:[%s261 + $0x36] sm:$0x1]
      %v452 = vld [vmem:[%s261 + $0x37] sm:$0x1]
      %v453 = vld [vmem:[%s261 + $0x38] sm:$0x1]
      %v454 = vld [vmem:[%s261 + $0x39] sm:$0x1]
      %v455 = vld [vmem:[%s261 + $0x3a] sm:$0x1]
      %v456 = vld [vmem:[%s261 + $0x3b] sm:$0x1]
      %v457 = vld [vmem:[%s261 + $0x3c] sm:$0x1]
      %v458 = vld [vmem:[%s261 + $0x3d] sm:$0x1]
      %v459 = vld [vmem:[%s261 + $0x3e] sm:$0x1]
      %v460 = vld [vmem:[%s261 + $0x3f] sm:$0x1]
      %vm461 = vcmask 261120
      %v463 = vsel %vm461, %v397, 0
      %v466 = vsel %vm461, %v269, 0
      %v469 = vsel %vm461, %v270, 0
      %471 = vmatprep.subr.mxu0 0.0
      %472 = vmatpush1.xpose.msra.mxu0 %v466
      %473 = vmatprep.subr.mxu0 0.0
      %474 = vmatpush1.xpose.msra.mxu0 %v469
      %475 = vmatprep.subr.mxu0 0.0
      %476 = vmatpush1.xpose.msra.mxu0 0.0
      %477 = vmatprep.subr.mxu0 0.0
      %478 = vmatpush1.xpose.msra.mxu0 0.0
      %479 = vmatprep.subr.mxu0 0.0
      %480 = vmatpush1.xpose.msra.mxu0 0.0
      %481 = vmatprep.subr.mxu0 0.0
      %482 = vmatpush1.xpose.msra.mxu0 0.0
      %483 = vmatprep.subr.mxu0 0.0
      %484 = vmatpush1.xpose.msra.mxu0 0.0
      %485 = vmatprep.subr.mxu0 0.0
      %486 = vmatpush1.xpose.msra.mxu0 0.0
      %487 = vmatprep.subr.mxu0 0.0
      %488 = vmatpush1.xpose.msra.mxu0 0.0
      %489 = vmatprep.subr.mxu0 0.0
      %490 = vmatpush1.xpose.msra.mxu0 0.0
      %491 = vmatprep.subr.mxu0 0.0
      %492 = vmatpush1.xpose.msra.mxu0 0.0
      %493 = vmatprep.subr.mxu0 0.0
      %494 = vmatpush1.xpose.msra.mxu0 0.0
      %495 = vmatprep.subr.mxu0 0.0
      %496 = vmatpush1.xpose.msra.mxu0 0.0
      %497 = vmatprep.subr.mxu0 0.0
      %498 = vmatpush1.xpose.msra.mxu0 0.0
      %499 = vmatprep.subr.mxu0 0.0
      %500 = vmatpush1.xpose.msra.mxu0 0.0
      %501 = vmatprep.subr.mxu0 0.0
      %502 = vmatpush1.xpose.msra.mxu0 0.0
      %503 = vmatprep.subr.mxu0 0.0
      %504 = vmatpush1.xpose.msra.mxu0 0.0
      %505 = vmatprep.subr.mxu0 0.0
      %506 = vmatpush1.xpose.msra.mxu0 0.0
      %507 = vmatprep.subr.mxu0 0.0
      %508 = vmatpush1.xpose.msra.mxu0 0.0
      %509 = vmatprep.subr.mxu0 0.0
      %510 = vmatpush1.xpose.msra.mxu0 0.0
      %511 = vmatprep.subr.mxu0 0.0
      %512 = vmatpush1.xpose.msra.mxu0 0.0
      %513 = vmatprep.subr.mxu0 0.0
      %514 = vmatpush1.xpose.msra.mxu0 0.0
      %515 = vmatprep.subr.mxu0 0.0
      %516 = vmatpush1.xpose.msra.mxu0 0.0
      %517 = vmatprep.subr.mxu0 0.0
      %518 = vmatpush1.xpose.msra.mxu0 0.0
      %519 = vmatprep.subr.mxu0 0.0
      %520 = vmatpush1.xpose.msra.mxu0 0.0
      %521 = vmatprep.subr.mxu0 0.0
      %522 = vmatpush1.xpose.msra.mxu0 0.0
      %523 = vmatprep.subr.mxu0 0.0
      %524 = vmatpush1.xpose.msra.mxu0 0.0
      %525 = vmatprep.subr.mxu0 0.0
      %526 = vmatpush1.xpose.msra.mxu0 0.0
      %527 = vmatprep.subr.mxu0 0.0
      %528 = vmatpush1.xpose.msra.mxu0 0.0
      %529 = vmatprep.subr.mxu0 0.0
      %530 = vmatpush1.xpose.msra.mxu0 0.0
      %531 = vmatprep.subr.mxu0 0.0
      %532 = vmatpush1.xpose.msra.mxu0 0.0
      %533 = vmatprep.subr.mxu0 0.0
      %534 = vmatpush1.xpose.msra.mxu0 0.0
      %535 = vmatprep.mubr.f32.mxu0 0.0
      %536 = vmatmul.mubr.f32.gmra.mrb[0].mxu0 %v463
      %v537 = vpop.f32.mrb[0].mxu0
      %v538 = vadd.f32 0.0, %v537
      %v539 = vpop.f32.mrb[0].mxu0
      %540 = vdwg.mxu0
      %v542 = vsel %vm461, %v398, 0
      %v545 = vsel %vm461, %v271, 0
      %v548 = vsel %vm461, %v272, 0
      %550 = vmatprep.subr.mxu0 0.0
      %551 = vmatpush1.xpose.msra.mxu0 %v545
      %552 = vmatprep.subr.mxu0 0.0
      %553 = vmatpush1.xpose.msra.mxu0 %v548
      %554 = vmatprep.subr.mxu0 0.0
      %555 = vmatpush1.xpose.msra.mxu0 0.0
      %556 = vmatprep.subr.mxu0 0.0
      %557 = vmatpush1.xpose.msra.mxu0 0.0
      %558 = vmatprep.subr.mxu0 0.0
      %559 = vmatpush1.xpose.msra.mxu0 0.0
      %560 = vmatprep.subr.mxu0 0.0
      %561 = vmatpush1.xpose.msra.mxu0 0.0
      %562 = vmatprep.subr.mxu0 0.0
      %563 = vmatpush1.xpose.msra.mxu0 0.0
      %564 = vmatprep.subr.mxu0 0.0
      %565 = vmatpush1.xpose.msra.mxu0 0.0
      %566 = vmatprep.subr.mxu0 0.0
      %567 = vmatpush1.xpose.msra.mxu0 0.0
      %568 = vmatprep.subr.mxu0 0.0
      %569 = vmatpush1.xpose.msra.mxu0 0.0
      %570 = vmatprep.subr.mxu0 0.0
      %571 = vmatpush1.xpose.msra.mxu0 0.0
      %572 = vmatprep.subr.mxu0 0.0
      %573 = vmatpush1.xpose.msra.mxu0 0.0
      %574 = vmatprep.subr.mxu0 0.0
      %575 = vmatpush1.xpose.msra.mxu0 0.0
      %576 = vmatprep.subr.mxu0 0.0
      %577 = vmatpush1.xpose.msra.mxu0 0.0
      %578 = vmatprep.subr.mxu0 0.0
      %579 = vmatpush1.xpose.msra.mxu0 0.0
      %580 = vmatprep.subr.mxu0 0.0
      %581 = vmatpush1.xpose.msra.mxu0 0.0
      %582 = vmatprep.subr.mxu0 0.0
      %583 = vmatpush1.xpose.msra.mxu0 0.0
      %584 = vmatprep.subr.mxu0 0.0
      %585 = vmatpush1.xpose.msra.mxu0 0.0
      %586 = vmatprep.subr.mxu0 0.0
      %587 = vmatpush1.xpose.msra.mxu0 0.0
      %588 = vmatprep.subr.mxu0 0.0
      %589 = vmatpush1.xpose.msra.mxu0 0.0
      %590 = vmatprep.subr.mxu0 0.0
      %591 = vmatpush1.xpose.msra.mxu0 0.0
      %592 = vmatprep.subr.mxu0 0.0
      %593 = vmatpush1.xpose.msra.mxu0 0.0
      %594 = vmatprep.subr.mxu0 0.0
      %595 = vmatpush1.xpose.msra.mxu0 0.0
      %596 = vmatprep.subr.mxu0 0.0
      %597 = vmatpush1.xpose.msra.mxu0 0.0
      %598 = vmatprep.subr.mxu0 0.0
      %599 = vmatpush1.xpose.msra.mxu0 0.0
      %600 = vmatprep.subr.mxu0 0.0
      %601 = vmatpush1.xpose.msra.mxu0 0.0
      %602 = vmatprep.subr.mxu0 0.0
      %603 = vmatpush1.xpose.msra.mxu0 0.0
      %604 = vmatprep.subr.mxu0 0.0
      %605 = vmatpush1.xpose.msra.mxu0 0.0
      %606 = vmatprep.subr.mxu0 0.0
      %607 = vmatpush1.xpose.msra.mxu0 0.0
      %608 = vmatprep.subr.mxu0 0.0
      %609 = vmatpush1.xpose.msra.mxu0 0.0
      %610 = vmatprep.subr.mxu0 0.0
      %611 = vmatpush1.xpose.msra.mxu0 0.0
      %612 = vmatprep.subr.mxu0 0.0
      %613 = vmatpush1.xpose.msra.mxu0 0.0
      %614 = vmatprep.mubr.f32.mxu0 0.0
      %615 = vmatmul.mubr.f32.gmra.mrb[0].mxu0 %v542
      %v616 = vpop.f32.mrb[0].mxu0
      %v617 = vadd.f32 0.0, %v616
      %v618 = vpop.f32.mrb[0].mxu0
      %619 = vdwg.mxu0
      %v621 = vsel %vm461, %v399, 0
      %v624 = vsel %vm461, %v273, 0
      %v627 = vsel %vm461, %v274, 0
      %629 = vmatprep.subr.mxu0 0.0
      %630 = vmatpush1.xpose.msra.mxu0 %v624
      %631 = vmatprep.subr.mxu0 0.0
      %632 = vmatpush1.xpose.msra.mxu0 %v627
      %633 = vmatprep.subr.mxu0 0.0
      %634 = vmatpush1.xpose.msra.mxu0 0.0
      %635 = vmatprep.subr.mxu0 0.0
      %636 = vmatpush1.xpose.msra.mxu0 0.0
      %637 = vmatprep.subr.mxu0 0.0
      %638 = vmatpush1.xpose.msra.mxu0 0.0
      %639 = vmatprep.subr.mxu0 0.0
      %640 = vmatpush1.xpose.msra.mxu0 0.0
      %641 = vmatprep.subr.mxu0 0.0
      %642 = vmatpush1.xpose.msra.mxu0 0.0
      %643 = vmatprep.subr.mxu0 0.0
      %644 = vmatpush1.xpose.msra.mxu0 0.0
      %645 = vmatprep.subr.mxu0 0.0
      %646 = vmatpush1.xpose.msra.mxu0 0.0
      %647 = vmatprep.subr.mxu0 0.0
      %648 = vmatpush1.xpose.msra.mxu0 0.0
      %649 = vmatprep.subr.mxu0 0.0
      %650 = vmatpush1.xpose.msra.mxu0 0.0
      %651 = vmatprep.subr.mxu0 0.0
      %652 = vmatpush1.xpose.msra.mxu0 0.0
      %653 = vmatprep.subr.mxu0 0.0
      %654 = vmatpush1.xpose.msra.mxu0 0.0
      %655 = vmatprep.subr.mxu0 0.0
      %656 = vmatpush1.xpose.msra.mxu0 0.0
      %657 = vmatprep.subr.mxu0 0.0
      %658 = vmatpush1.xpose.msra.mxu0 0.0
      %659 = vmatprep.subr.mxu0 0.0
      %660 = vmatpush1.xpose.msra.mxu0 0.0
      %661 = vmatprep.subr.mxu0 0.0
      %662 = vmatpush1.xpose.msra.mxu0 0.0
      %663 = vmatprep.subr.mxu0 0.0
      %664 = vmatpush1.xpose.msra.mxu0 0.0
      %665 = vmatprep.subr.mxu0 0.0
      %666 = vmatpush1.xpose.msra.mxu0 0.0
      %667 = vmatprep.subr.mxu0 0.0
      %668 = vmatpush1.xpose.msra.mxu0 0.0
      %669 = vmatprep.subr.mxu0 0.0
      %670 = vmatpush1.xpose.msra.mxu0 0.0
      %671 = vmatprep.subr.mxu0 0.0
      %672 = vmatpush1.xpose.msra.mxu0 0.0
      %673 = vmatprep.subr.mxu0 0.0
      %674 = vmatpush1.xpose.msra.mxu0 0.0
      %675 = vmatprep.subr.mxu0 0.0
      %676 = vmatpush1.xpose.msra.mxu0 0.0
      %677 = vmatprep.subr.mxu0 0.0
      %678 = vmatpush1.xpose.msra.mxu0 0.0
      %679 = vmatprep.subr.mxu0 0.0
      %680 = vmatpush1.xpose.msra.mxu0 0.0
      %681 = vmatprep.subr.mxu0 0.0
      %682 = vmatpush1.xpose.msra.mxu0 0.0
      %683 = vmatprep.subr.mxu0 0.0
      %684 = vmatpush1.xpose.msra.mxu0 0.0
      %685 = vmatprep.subr.mxu0 0.0
      %686 = vmatpush1.xpose.msra.mxu0 0.0
      %687 = vmatprep.subr.mxu0 0.0
      %688 = vmatpush1.xpose.msra.mxu0 0.0
      %689 = vmatprep.subr.mxu0 0.0
      %690 = vmatpush1.xpose.msra.mxu0 0.0
      %691 = vmatprep.subr.mxu0 0.0
      %692 = vmatpush1.xpose.msra.mxu0 0.0
      %693 = vmatprep.mubr.f32.mxu0 0.0
      %694 = vmatmul.mubr.f32.gmra.mrb[0].mxu0 %v621
      %v695 = vpop.f32.mrb[0].mxu0
      %v696 = vadd.f32 0.0, %v695
      %v697 = vpop.f32.mrb[0].mxu0
      %698 = vdwg.mxu0
      %v700 = vsel %vm461, %v400, 0
      %v703 = vsel %vm461, %v275, 0
      %v706 = vsel %vm461, %v276, 0
      %708 = vmatprep.subr.mxu0 0.0
      %709 = vmatpush1.xpose.msra.mxu0 %v703
      %710 = vmatprep.subr.mxu0 0.0
      %711 = vmatpush1.xpose.msra.mxu0 %v706
      %712 = vmatprep.subr.mxu0 0.0
      %713 = vmatpush1.xpose.msra.mxu0 0.0
      %714 = vmatprep.subr.mxu0 0.0
      %715 = vmatpush1.xpose.msra.mxu0 0.0
      %716 = vmatprep.subr.mxu0 0.0
      %717 = vmatpush1.xpose.msra.mxu0 0.0
      %718 = vmatprep.subr.mxu0 0.0
      %719 = vmatpush1.xpose.msra.mxu0 0.0
      %720 = vmatprep.subr.mxu0 0.0
      %721 = vmatpush1.xpose.msra.mxu0 0.0
      %722 = vmatprep.subr.mxu0 0.0
      %723 = vmatpush1.xpose.msra.mxu0 0.0
      %724 = vmatprep.subr.mxu0 0.0
      %725 = vmatpush1.xpose.msra.mxu0 0.0
      %726 = vmatprep.subr.mxu0 0.0
      %727 = vmatpush1.xpose.msra.mxu0 0.0
      %728 = vmatprep.subr.mxu0 0.0
      %729 = vmatpush1.xpose.msra.mxu0 0.0
      %730 = vmatprep.subr.mxu0 0.0
      %731 = vmatpush1.xpose.msra.mxu0 0.0
      %732 = vmatprep.subr.mxu0 0.0
      %733 = vmatpush1.xpose.msra.mxu0 0.0
      %734 = vmatprep.subr.mxu0 0.0
      %735 = vmatpush1.xpose.msra.mxu0 0.0
      %736 = vmatprep.subr.mxu0 0.0
      %737 = vmatpush1.xpose.msra.mxu0 0.0
      %738 = vmatprep.subr.mxu0 0.0
      %739 = vmatpush1.xpose.msra.mxu0 0.0
      %740 = vmatprep.subr.mxu0 0.0
      %741 = vmatpush1.xpose.msra.mxu0 0.0
      %742 = vmatprep.subr.mxu0 0.0
      %743 = vmatpush1.xpose.msra.mxu0 0.0
      %744 = vmatprep.subr.mxu0 0.0
      %745 = vmatpush1.xpose.msra.mxu0 0.0
      %746 = vmatprep.subr.mxu0 0.0
      %747 = vmatpush1.xpose.msra.mxu0 0.0
      %748 = vmatprep.subr.mxu0 0.0
      %749 = vmatpush1.xpose.msra.mxu0 0.0
      %750 = vmatprep.subr.mxu0 0.0
      %751 = vmatpush1.xpose.msra.mxu0 0.0
      %752 = vmatprep.subr.mxu0 0.0
      %753 = vmatpush1.xpose.msra.mxu0 0.0
      %754 = vmatprep.subr.mxu0 0.0
      %755 = vmatpush1.xpose.msra.mxu0 0.0
      %756 = vmatprep.subr.mxu0 0.0
      %757 = vmatpush1.xpose.msra.mxu0 0.0
      %758 = vmatprep.subr.mxu0 0.0
      %759 = vmatpush1.xpose.msra.mxu0 0.0
      %760 = vmatprep.subr.mxu0 0.0
      %761 = vmatpush1.xpose.msra.mxu0 0.0
      %762 = vmatprep.subr.mxu0 0.0
      %763 = vmatpush1.xpose.msra.mxu0 0.0
      %764 = vmatprep.subr.mxu0 0.0
      %765 = vmatpush1.xpose.msra.mxu0 0.0
      %766 = vmatprep.subr.mxu0 0.0
      %767 = vmatpush1.xpose.msra.mxu0 0.0
      %768 = vmatprep.subr.mxu0 0.0
      %769 = vmatpush1.xpose.msra.mxu0 0.0
      %770 = vmatprep.subr.mxu0 0.0
      %771 = vmatpush1.xpose.msra.mxu0 0.0
      %772 = vmatprep.mubr.f32.mxu0 0.0
      %773 = vmatmul.mubr.f32.gmra.mrb[0].mxu0 %v700
      %v774 = vpop.f32.mrb[0].mxu0
      %v775 = vadd.f32 0.0, %v774
      %v776 = vpop.f32.mrb[0].mxu0
      %777 = vdwg.mxu0
      %v779 = vsel %vm461, %v401, 0
      %v782 = vsel %vm461, %v277, 0
      %v785 = vsel %vm461, %v278, 0
      %787 = vmatprep.subr.mxu0 0.0
      %788 = vmatpush1.xpose.msra.mxu0 %v782
      %789 = vmatprep.subr.mxu0 0.0
      %790 = vmatpush1.xpose.msra.mxu0 %v785
      %791 = vmatprep.subr.mxu0 0.0
      %792 = vmatpush1.xpose.msra.mxu0 0.0
      %793 = vmatprep.subr.mxu0 0.0
      %794 = vmatpush1.xpose.msra.mxu0 0.0
      %795 = vmatprep.subr.mxu0 0.0
      %796 = vmatpush1.xpose.msra.mxu0 0.0
      %797 = vmatprep.subr.mxu0 0.0
      %798 = vmatpush1.xpose.msra.mxu0 0.0
      %799 = vmatprep.subr.mxu0 0.0
      %800 = vmatpush1.xpose.msra.mxu0 0.0
      %801 = vmatprep.subr.mxu0 0.0
      %802 = vmatpush1.xpose.msra.mxu0 0.0
      %803 = vmatprep.subr.mxu0 0.0
      %804 = vmatpush1.xpose.msra.mxu0 0.0
      %805 = vmatprep.subr.mxu0 0.0
      %806 = vmatpush1.xpose.msra.mxu0 0.0
      %807 = vmatprep.subr.mxu0 0.0
      %808 = vmatpush1.xpose.msra.mxu0 0.0
      %809 = vmatprep.subr.mxu0 0.0
      %810 = vmatpush1.xpose.msra.mxu0 0.0
      %811 = vmatprep.subr.mxu0 0.0
      %812 = vmatpush1.xpose.msra.mxu0 0.0
      %813 = vmatprep.subr.mxu0 0.0
      %814 = vmatpush1.xpose.msra.mxu0 0.0
      %815 = vmatprep.subr.mxu0 0.0
      %816 = vmatpush1.xpose.msra.mxu0 0.0
      %817 = vmatprep.subr.mxu0 0.0
      %818 = vmatpush1.xpose.msra.mxu0 0.0
      %819 = vmatprep.subr.mxu0 0.0
      %820 = vmatpush1.xpose.msra.mxu0 0.0
      %821 = vmatprep.subr.mxu0 0.0
      %822 = vmatpush1.xpose.msra.mxu0 0.0
      %823 = vmatprep.subr.mxu0 0.0
      %824 = vmatpush1.xpose.msra.mxu0 0.0
      %825 = vmatprep.subr.mxu0 0.0
      %826 = vmatpush1.xpose.msra.mxu0 0.0
      %827 = vmatprep.subr.mxu0 0.0
      %828 = vmatpush1.xpose.msra.mxu0 0.0
      %829 = vmatprep.subr.mxu0 0.0
      %830 = vmatpush1.xpose.msra.mxu0 0.0
      %831 = vmatprep.subr.mxu0 0.0
      %832 = vmatpush1.xpose.msra.mxu0 0.0
      %833 = vmatprep.subr.mxu0 0.0
      %834 = vmatpush1.xpose.msra.mxu0 0.0
      %835 = vmatprep.subr.mxu0 0.0
      %836 = vmatpush1.xpose.msra.mxu0 0.0
      %837 = vmatprep.subr.mxu0 0.0
      %838 = vmatpush1.xpose.msra.mxu0 0.0
      %839 = vmatprep.subr.mxu0 0.0
      %840 = vmatpush1.xpose.msra.mxu0 0.0
      %841 = vmatprep.subr.mxu0 0.0
      %842 = vmatpush1.xpose.msra.mxu0 0.0
      %843 = vmatprep.subr.mxu0 0.0
      %844 = vmatpush1.xpose.msra.mxu0 0.0
      %845 = vmatprep.subr.mxu0 0.0
      %846 = vmatpush1.xpose.msra.mxu0 0.0
      %847 = vmatprep.subr.mxu0 0.0
      %848 = vmatpush1.xpose.msra.mxu0 0.0
      %849 = vmatprep.subr.mxu0 0.0
      %850 = vmatpush1.xpose.msra.mxu0 0.0
      %851 = vmatprep.mubr.f32.mxu0 0.0
      %852 = vmatmul.mubr.f32.gmra.mrb[0].mxu0 %v779
      %v853 = vpop.f32.mrb[0].mxu0
      %v854 = vadd.f32 0.0, %v853
      %v855 = vpop.f32.mrb[0].mxu0
      %856 = vdwg.mxu0
      %v858 = vsel %vm461, %v402, 0
      %v861 = vsel %vm461, %v279, 0
      %v864 = vsel %vm461, %v280, 0
      %866 = vmatprep.subr.mxu0 0.0
      %867 = vmatpush1.xpose.msra.mxu0 %v861
      %868 = vmatprep.subr.mxu0 0.0
      %869 = vmatpush1.xpose.msra.mxu0 %v864
      %870 = vmatprep.subr.mxu0 0.0
      %871 = vmatpush1.xpose.msra.mxu0 0.0
      %872 = vmatprep.subr.mxu0 0.0
      %873 = vmatpush1.xpose.msra.mxu0 0.0
      %874 = vmatprep.subr.mxu0 0.0
      %875 = vmatpush1.xpose.msra.mxu0 0.0
      %876 = vmatprep.subr.mxu0 0.0
      %877 = vmatpush1.xpose.msra.mxu0 0.0
      %878 = vmatprep.subr.mxu0 0.0
      %879 = vmatpush1.xpose.msra.mxu0 0.0
      %880 = vmatprep.subr.mxu0 0.0
      %881 = vmatpush1.xpose.msra.mxu0 0.0
      %882 = vmatprep.subr.mxu0 0.0
      %883 = vmatpush1.xpose.msra.mxu0 0.0
      %884 = vmatprep.subr.mxu0 0.0
      %885 = vmatpush1.xpose.msra.mxu0 0.0
      %886 = vmatprep.subr.mxu0 0.0
      %887 = vmatpush1.xpose.msra.mxu0 0.0
      %888 = vmatprep.subr.mxu0 0.0
      %889 = vmatpush1.xpose.msra.mxu0 0.0
      %890 = vmatprep.subr.mxu0 0.0
      %891 = vmatpush1.xpose.msra.mxu0 0.0
      %892 = vmatprep.subr.mxu0 0.0
      %893 = vmatpush1.xpose.msra.mxu0 0.0
      %894 = vmatprep.subr.mxu0 0.0
      %895 = vmatpush1.xpose.msra.mxu0 0.0
      %896 = vmatprep.subr.mxu0 0.0
      %897 = vmatpush1.xpose.msra.mxu0 0.0
      %898 = vmatprep.subr.mxu0 0.0
      %899 = vmatpush1.xpose.msra.mxu0 0.0
      %900 = vmatprep.subr.mxu0 0.0
      %901 = vmatpush1.xpose.msra.mxu0 0.0
      %902 = vmatprep.subr.mxu0 0.0
      %903 = vmatpush1.xpose.msra.mxu0 0.0
      %904 = vmatprep.subr.mxu0 0.0
      %905 = vmatpush1.xpose.msra.mxu0 0.0
      %906 = vmatprep.subr.mxu0 0.0
      %907 = vmatpush1.xpose.msra.mxu0 0.0
      %908 = vmatprep.subr.mxu0 0.0
      %909 = vmatpush1.xpose.msra.mxu0 0.0
      %910 = vmatprep.subr.mxu0 0.0
      %911 = vmatpush1.xpose.msra.mxu0 0.0
      %912 = vmatprep.subr.mxu0 0.0
      %913 = vmatpush1.xpose.msra.mxu0 0.0
      %914 = vmatprep.subr.mxu0 0.0
      %915 = vmatpush1.xpose.msra.mxu0 0.0
      %916 = vmatprep.subr.mxu0 0.0
      %917 = vmatpush1.xpose.msra.mxu0 0.0
      %918 = vmatprep.subr.mxu0 0.0
      %919 = vmatpush1.xpose.msra.mxu0 0.0
      %920 = vmatprep.subr.mxu0 0.0
      %921 = vmatpush1.xpose.msra.mxu0 0.0
      %922 = vmatprep.subr.mxu0 0.0
      %923 = vmatpush1.xpose.msra.mxu0 0.0
      %924 = vmatprep.subr.mxu0 0.0
      %925 = vmatpush1.xpose.msra.mxu0 0.0
      %926 = vmatprep.subr.mxu0 0.0
      %927 = vmatpush1.xpose.msra.mxu0 0.0
      %928 = vmatprep.subr.mxu0 0.0
      %929 = vmatpush1.xpose.msra.mxu0 0.0
      %930 = vmatprep.mubr.f32.mxu0 0.0
      %931 = vmatmul.mubr.f32.gmra.mrb[0].mxu0 %v858
      %v932 = vpop.f32.mrb[0].mxu0
      %v933 = vadd.f32 0.0, %v932
      %v934 = vpop.f32.mrb[0].mxu0
      %935 = vdwg.mxu0
      %v937 = vsel %vm461, %v403, 0
      %v940 = vsel %vm461, %v281, 0
      %v943 = vsel %vm461, %v282, 0
      %945 = vmatprep.subr.mxu0 0.0
      %946 = vmatpush1.xpose.msra.mxu0 %v940
      %947 = vmatprep.subr.mxu0 0.0
      %948 = vmatpush1.xpose.msra.mxu0 %v943
      %949 = vmatprep.subr.mxu0 0.0
      %950 = vmatpush1.xpose.msra.mxu0 0.0
      %951 = vmatprep.subr.mxu0 0.0
      %952 = vmatpush1.xpose.msra.mxu0 0.0
      %953 = vmatprep.subr.mxu0 0.0
      %954 = vmatpush1.xpose.msra.mxu0 0.0
      %955 = vmatprep.subr.mxu0 0.0
      %956 = vmatpush1.xpose.msra.mxu0 0.0
      %957 = vmatprep.subr.mxu0 0.0
      %958 = vmatpush1.xpose.msra.mxu0 0.0
      %959 = vmatprep.subr.mxu0 0.0
      %960 = vmatpush1.xpose.msra.mxu0 0.0
      %961 = vmatprep.subr.mxu0 0.0
      %962 = vmatpush1.xpose.msra.mxu0 0.0
      %963 = vmatprep.subr.mxu0 0.0
      %964 = vmatpush1.xpose.msra.mxu0 0.0
      %965 = vmatprep.subr.mxu0 0.0
      %966 = vmatpush1.xpose.msra.mxu0 0.0
      %967 = vmatprep.subr.mxu0 0.0
      %968 = vmatpush1.xpose.msra.mxu0 0.0
      %969 = vmatprep.subr.mxu0 0.0
      %970 = vmatpush1.xpose.msra.mxu0 0.0
      %971 = vmatprep.subr.mxu0 0.0
      %972 = vmatpush1.xpose.msra.mxu0 0.0
      %973 = vmatprep.subr.mxu0 0.0
      %974 = vmatpush1.xpose.msra.mxu0 0.0
      %975 = vmatprep.subr.mxu0 0.0
      %976 = vmatpush1.xpose.msra.mxu0 0.0
      %977 = vmatprep.subr.mxu0 0.0
      %978 = vmatpush1.xpose.msra.mxu0 0.0
      %979 = vmatprep.subr.mxu0 0.0
      %980 = vmatpush1.xpose.msra.mxu0 0.0
      %981 = vmatprep.subr.mxu0 0.0
      %982 = vmatpush1.xpose.msra.mxu0 0.0
      %983 = vmatprep.subr.mxu0 0.0
      %984 = vmatpush1.xpose.msra.mxu0 0.0
      %985 = vmatprep.subr.mxu0 0.0
      %986 = vmatpush1.xpose.msra.mxu0 0.0
      %987 = vmatprep.subr.mxu0 0.0
      %988 = vmatpush1.xpose.msra.mxu0 0.0
      %989 = vmatprep.subr.mxu0 0.0
      %990 = vmatpush1.xpose.msra.mxu0 0.0
      %991 = vmatprep.subr.mxu0 0.0
      %992 = vmatpush1.xpose.msra.mxu0 0.0
      %993 = vmatprep.subr.mxu0 0.0
      %994 = vmatpush1.xpose.msra.mxu0 0.0
      %995 = vmatprep.subr.mxu0 0.0
      %996 = vmatpush1.xpose.msra.mxu0 0.0
      %997 = vmatprep.subr.mxu0 0.0
      %998 = vmatpush1.xpose.msra.mxu0 0.0
      %999 = vmatprep.subr.mxu0 0.0
      %1000 = vmatpush1.xpose.msra.mxu0 0.0
      %1001 = vmatprep.subr.mxu0 0.0
      %1002 = vmatpush1.xpose.msra.mxu0 0.0
      %1003 = vmatprep.subr.mxu0 0.0
      %1004 = vmatpush1.xpose.msra.mxu0 0.0
      %1005 = vmatprep.subr.mxu0 0.0
      %1006 = vmatpush1.xpose.msra.mxu0 0.0
      %1007 = vmatprep.subr.mxu0 0.0
      %1008 = vmatpush1.xpose.msra.mxu0 0.0
      %1009 = vmatprep.mubr.f32.mxu0 0.0
      %1010 = vmatmul.mubr.f32.gmra.mrb[0].mxu0 %v937
      %v1011 = vpop.f32.mrb[0].mxu0
      %v1012 = vadd.f32 0.0, %v1011
      %v1013 = vpop.f32.mrb[0].mxu0
      %1014 = vdwg.mxu0
      %v1016 = vsel %vm461, %v404, 0
      %v1019 = vsel %vm461, %v283, 0
      %v1022 = vsel %vm461, %v284, 0
      %1024 = vmatprep.subr.mxu0 0.0
      %1025 = vmatpush1.xpose.msra.mxu0 %v1019
      %1026 = vmatprep.subr.mxu0 0.0
      %1027 = vmatpush1.xpose.msra.mxu0 %v1022
      %1028 = vmatprep.subr.mxu0 0.0
      %1029 = vmatpush1.xpose.msra.mxu0 0.0
      %1030 = vmatprep.subr.mxu0 0.0
      %1031 = vmatpush1.xpose.msra.mxu0 0.0
      %1032 = vmatprep.subr.mxu0 0.0
      %1033 = vmatpush1.xpose.msra.mxu0 0.0
      %1034 = vmatprep.subr.mxu0 0.0
      %1035 = vmatpush1.xpose.msra.mxu0 0.0
      %1036 = vmatprep.subr.mxu0 0.0
      %1037 = vmatpush1.xpose.msra.mxu0 0.0
      %1038 = vmatprep.subr.mxu0 0.0
      %1039 = vmatpush1.xpose.msra.mxu0 0.0
      %1040 = vmatprep.subr.mxu0 0.0
      %1041 = vmatpush1.xpose.msra.mxu0 0.0
      %1042 = vmatprep.subr.mxu0 0.0
      %1043 = vmatpush1.xpose.msra.mxu0 0.0
      %1044 = vmatprep.subr.mxu0 0.0
      %1045 = vmatpush1.xpose.msra.mxu0 0.0
      %1046 = vmatprep.subr.mxu0 0.0
      %1047 = vmatpush1.xpose.msra.mxu0 0.0
      %1048 = vmatprep.subr.mxu0 0.0
      %1049 = vmatpush1.xpose.msra.mxu0 0.0
      %1050 = vmatprep.subr.mxu0 0.0
      %1051 = vmatpush1.xpose.msra.mxu0 0.0
      %1052 = vmatprep.subr.mxu0 0.0
      %1053 = vmatpush1.xpose.msra.mxu0 0.0
      %1054 = vmatprep.subr.mxu0 0.0
      %1055 = vmatpush1.xpose.msra.mxu0 0.0
      %1056 = vmatprep.subr.mxu0 0.0
      %1057 = vmatpush1.xpose.msra.mxu0 0.0
      %1058 = vmatprep.subr.mxu0 0.0
      %1059 = vmatpush1.xpose.msra.mxu0 0.0
      %1060 = vmatprep.subr.mxu0 0.0
      %1061 = vmatpush1.xpose.msra.mxu0 0.0
      %1062 = vmatprep.subr.mxu0 0.0
      %1063 = vmatpush1.xpose.msra.mxu0 0.0
      %1064 = vmatprep.subr.mxu0 0.0
      %1065 = vmatpush1.xpose.msra.mxu0 0.0
      %1066 = vmatprep.subr.mxu0 0.0
      %1067 = vmatpush1.xpose.msra.mxu0 0.0
      %1068 = vmatprep.subr.mxu0 0.0
      %1069 = vmatpush1.xpose.msra.mxu0 0.0
      %1070 = vmatprep.subr.mxu0 0.0
      %1071 = vmatpush1.xpose.msra.mxu0 0.0
      %1072 = vmatprep.subr.mxu0 0.0
      %1073 = vmatpush1.xpose.msra.mxu0 0.0
      %1074 = vmatprep.subr.mxu0 0.0
      %1075 = vmatpush1.xpose.msra.mxu0 0.0
      %1076 = vmatprep.subr.mxu0 0.0
      %1077 = vmatpush1.xpose.msra.mxu0 0.0
      %1078 = vmatprep.subr.mxu0 0.0
      %1079 = vmatpush1.xpose.msra.mxu0 0.0
      %1080 = vmatprep.subr.mxu0 0.0
      %1081 = vmatpush1.xpose.msra.mxu0 0.0
      %1082 = vmatprep.subr.mxu0 0.0
      %1083 = vmatpush1.xpose.msra.mxu0 0.0
      %1084 = vmatprep.subr.mxu0 0.0
      %1085 = vmatpush1.xpose.msra.mxu0 0.0
      %1086 = vmatprep.subr.mxu0 0.0
      %1087 = vmatpush1.xpose.msra.mxu0 0.0
      %1088 = vmatprep.mubr.f32.mxu0 0.0
      %1089 = vmatmul.mubr.f32.gmra.mrb[0].mxu0 %v1016
      %v1090 = vpop.f32.mrb[0].mxu0
      %v1091 = vadd.f32 0.0, %v1090
      %v1092 = vpop.f32.mrb[0].mxu0
      %1093 = vdwg.mxu0
      %v1095 = vsel %vm461, %v405, 0
      %v1098 = vsel %vm461, %v285, 0
      %v1101 = vsel %vm461, %v286, 0
      %1103 = vmatprep.subr.mxu0 0.0
      %1104 = vmatpush1.xpose.msra.mxu0 %v1098
      %1105 = vmatprep.subr.mxu0 0.0
      %1106 = vmatpush1.xpose.msra.mxu0 %v1101
      %1107 = vmatprep.subr.mxu0 0.0
      %1108 = vmatpush1.xpose.msra.mxu0 0.0
      %1109 = vmatprep.subr.mxu0 0.0
      %1110 = vmatpush1.xpose.msra.mxu0 0.0
      %1111 = vmatprep.subr.mxu0 0.0
      %1112 = vmatpush1.xpose.msra.mxu0 0.0
      %1113 = vmatprep.subr.mxu0 0.0
      %1114 = vmatpush1.xpose.msra.mxu0 0.0
      %1115 = vmatprep.subr.mxu0 0.0
      %1116 = vmatpush1.xpose.msra.mxu0 0.0
      %1117 = vmatprep.subr.mxu0 0.0
      %1118 = vmatpush1.xpose.msra.mxu0 0.0
      %1119 = vmatprep.subr.mxu0 0.0
      %1120 = vmatpush1.xpose.msra.mxu0 0.0
      %1121 = vmatprep.subr.mxu0 0.0
      %1122 = vmatpush1.xpose.msra.mxu0 0.0
      %1123 = vmatprep.subr.mxu0 0.0
      %1124 = vmatpush1.xpose.msra.mxu0 0.0
      %1125 = vmatprep.subr.mxu0 0.0
      %1126 = vmatpush1.xpose.msra.mxu0 0.0
      %1127 = vmatprep.subr.mxu0 0.0
      %1128 = vmatpush1.xpose.msra.mxu0 0.0
      %1129 = vmatprep.subr.mxu0 0.0
      %1130 = vmatpush1.xpose.msra.mxu0 0.0
      %1131 = vmatprep.subr.mxu0 0.0
      %1132 = vmatpush1.xpose.msra.mxu0 0.0
      %1133 = vmatprep.subr.mxu0 0.0
      %1134 = vmatpush1.xpose.msra.mxu0 0.0
      %1135 = vmatprep.subr.mxu0 0.0
      %1136 = vmatpush1.xpose.msra.mxu0 0.0
      %1137 = vmatprep.subr.mxu0 0.0
      %1138 = vmatpush1.xpose.msra.mxu0 0.0
      %1139 = vmatprep.subr.mxu0 0.0
      %1140 = vmatpush1.xpose.msra.mxu0 0.0
      %1141 = vmatprep.subr.mxu0 0.0
      %1142 = vmatpush1.xpose.msra.mxu0 0.0
      %1143 = vmatprep.subr.mxu0 0.0
      %1144 = vmatpush1.xpose.msra.mxu0 0.0
      %1145 = vmatprep.subr.mxu0 0.0
      %1146 = vmatpush1.xpose.msra.mxu0 0.0
      %1147 = vmatprep.subr.mxu0 0.0
      %1148 = vmatpush1.xpose.msra.mxu0 0.0
      %1149 = vmatprep.subr.mxu0 0.0
      %1150 = vmatpush1.xpose.msra.mxu0 0.0
      %1151 = vmatprep.subr.mxu0 0.0
      %1152 = vmatpush1.xpose.msra.mxu0 0.0
      %1153 = vmatprep.subr.mxu0 0.0
      %1154 = vmatpush1.xpose.msra.mxu0 0.0
      %1155 = vmatprep.subr.mxu0 0.0
      %1156 = vmatpush1.xpose.msra.mxu0 0.0
      %1157 = vmatprep.subr.mxu0 0.0
      %1158 = vmatpush1.xpose.msra.mxu0 0.0
      %1159 = vmatprep.subr.mxu0 0.0
      %1160 = vmatpush1.xpose.msra.mxu0 0.0
      %1161 = vmatprep.subr.mxu0 0.0
      %1162 = vmatpush1.xpose.msra.mxu0 0.0
      %1163 = vmatprep.subr.mxu0 0.0
      %1164 = vmatpush1.xpose.msra.mxu0 0.0
      %1165 = vmatprep.subr.mxu0 0.0
      %1166 = vmatpush1.xpose.msra.mxu0 0.0
      %1167 = vmatprep.mubr.f32.mxu0 0.0
      %1168 = vmatmul.mubr.f32.gmra.mrb[0].mxu0 %v1095
      %v1169 = vpop.f32.mrb[0].mxu0
      %v1170 = vadd.f32 0.0, %v1169
      %v1171 = vpop.f32.mrb[0].mxu0
      %1172 = vdwg.mxu0
      %v1174 = vsel %vm461, %v406, 0
      %v1177 = vsel %vm461, %v287, 0
      %v1180 = vsel %vm461, %v288, 0
      %1182 = vmatprep.subr.mxu0 0.0
      %1183 = vmatpush1.xpose.msra.mxu0 %v1177
      %1184 = vmatprep.subr.mxu0 0.0
      %1185 = vmatpush1.xpose.msra.mxu0 %v1180
      %1186 = vmatprep.subr.mxu0 0.0
      %1187 = vmatpush1.xpose.msra.mxu0 0.0
      %1188 = vmatprep.subr.mxu0 0.0
      %1189 = vmatpush1.xpose.msra.mxu0 0.0
      %1190 = vmatprep.subr.mxu0 0.0
      %1191 = vmatpush1.xpose.msra.mxu0 0.0
      %1192 = vmatprep.subr.mxu0 0.0
      %1193 = vmatpush1.xpose.msra.mxu0 0.0
      %1194 = vmatprep.subr.mxu0 0.0
      %1195 = vmatpush1.xpose.msra.mxu0 0.0
      %1196 = vmatprep.subr.mxu0 0.0
      %1197 = vmatpush1.xpose.msra.mxu0 0.0
      %1198 = vmatprep.subr.mxu0 0.0
      %1199 = vmatpush1.xpose.msra.mxu0 0.0
      %1200 = vmatprep.subr.mxu0 0.0
      %1201 = vmatpush1.xpose.msra.mxu0 0.0
      %1202 = vmatprep.subr.mxu0 0.0
      %1203 = vmatpush1.xpose.msra.mxu0 0.0
      %1204 = vmatprep.subr.mxu0 0.0
      %1205 = vmatpush1.xpose.msra.mxu0 0.0
      %1206 = vmatprep.subr.mxu0 0.0
      %1207 = vmatpush1.xpose.msra.mxu0 0.0
      %1208 = vmatprep.subr.mxu0 0.0
      %1209 = vmatpush1.xpose.msra.mxu0 0.0
      %1210 = vmatprep.subr.mxu0 0.0
      %1211 = vmatpush1.xpose.msra.mxu0 0.0
      %1212 = vmatprep.subr.mxu0 0.0
      %1213 = vmatpush1.xpose.msra.mxu0 0.0
      %1214 = vmatprep.subr.mxu0 0.0
      %1215 = vmatpush1.xpose.msra.mxu0 0.0
      %1216 = vmatprep.subr.mxu0 0.0
      %1217 = vmatpush1.xpose.msra.mxu0 0.0
      %1218 = vmatprep.subr.mxu0 0.0
      %1219 = vmatpush1.xpose.msra.mxu0 0.0
      %1220 = vmatprep.subr.mxu0 0.0
      %1221 = vmatpush1.xpose.msra.mxu0 0.0
      %1222 = vmatprep.subr.mxu0 0.0
      %1223 = vmatpush1.xpose.msra.mxu0 0.0
      %1224 = vmatprep.subr.mxu0 0.0
      %1225 = vmatpush1.xpose.msra.mxu0 0.0
      %1226 = vmatprep.subr.mxu0 0.0
      %1227 = vmatpush1.xpose.msra.mxu0 0.0
      %1228 = vmatprep.subr.mxu0 0.0
      %1229 = vmatpush1.xpose.msra.mxu0 0.0
      %1230 = vmatprep.subr.mxu0 0.0
      %1231 = vmatpush1.xpose.msra.mxu0 0.0
      %1232 = vmatprep.subr.mxu0 0.0
      %1233 = vmatpush1.xpose.msra.mxu0 0.0
      %1234 = vmatprep.subr.mxu0 0.0
      %1235 = vmatpush1.xpose.msra.mxu0 0.0
      %1236 = vmatprep.subr.mxu0 0.0
      %1237 = vmatpush1.xpose.msra.mxu0 0.0
      %1238 = vmatprep.subr.mxu0 0.0
      %1239 = vmatpush1.xpose.msra.mxu0 0.0
      %1240 = vmatprep.subr.mxu0 0.0
      %1241 = vmatpush1.xpose.msra.mxu0 0.0
      %1242 = vmatprep.subr.mxu0 0.0
      %1243 = vmatpush1.xpose.msra.mxu0 0.0
      %1244 = vmatprep.subr.mxu0 0.0
      %1245 = vmatpush1.xpose.msra.mxu0 0.0
      %1246 = vmatprep.mubr.f32.mxu0 0.0
      %1247 = vmatmul.mubr.f32.gmra.mrb[0].mxu0 %v1174
      %v1248 = vpop.f32.mrb[0].mxu0
      %v1249 = vadd.f32 0.0, %v1248
      %v1250 = vpop.f32.mrb[0].mxu0
      %1251 = vdwg.mxu0
      %v1253 = vsel %vm461, %v407, 0
      %v1256 = vsel %vm461, %v289, 0
      %v1259 = vsel %vm461, %v290, 0
      %1261 = vmatprep.subr.mxu0 0.0
      %1262 = vmatpush1.xpose.msra.mxu0 %v1256
      %1263 = vmatprep.subr.mxu0 0.0
      %1264 = vmatpush1.xpose.msra.mxu0 %v1259
      %1265 = vmatprep.subr.mxu0 0.0
      %1266 = vmatpush1.xpose.msra.mxu0 0.0
      %1267 = vmatprep.subr.mxu0 0.0
      %1268 = vmatpush1.xpose.msra.mxu0 0.0
      %1269 = vmatprep.subr.mxu0 0.0
      %1270 = vmatpush1.xpose.msra.mxu0 0.0
      %1271 = vmatprep.subr.mxu0 0.0
      %1272 = vmatpush1.xpose.msra.mxu0 0.0
      %1273 = vmatprep.subr.mxu0 0.0
      %1274 = vmatpush1.xpose.msra.mxu0 0.0
      %1275 = vmatprep.subr.mxu0 0.0
      %1276 = vmatpush1.xpose.msra.mxu0 0.0
      %1277 = vmatprep.subr.mxu0 0.0
      %1278 = vmatpush1.xpose.msra.mxu0 0.0
      %1279 = vmatprep.subr.mxu0 0.0
      %1280 = vmatpush1.xpose.msra.mxu0 0.0
      %1281 = vmatprep.subr.mxu0 0.0
      %1282 = vmatpush1.xpose.msra.mxu0 0.0
      %1283 = vmatprep.subr.mxu0 0.0
      %1284 = vmatpush1.xpose.msra.mxu0 0.0
      %1285 = vmatprep.subr.mxu0 0.0
      %1286 = vmatpush1.xpose.msra.mxu0 0.0
      %1287 = vmatprep.subr.mxu0 0.0
      %1288 = vmatpush1.xpose.msra.mxu0 0.0
      %1289 = vmatprep.subr.mxu0 0.0
      %1290 = vmatpush1.xpose.msra.mxu0 0.0
      %1291 = vmatprep.subr.mxu0 0.0
      %1292 = vmatpush1.xpose.msra.mxu0 0.0
      %1293 = vmatprep.subr.mxu0 0.0
      %1294 = vmatpush1.xpose.msra.mxu0 0.0
      %1295 = vmatprep.subr.mxu0 0.0
      %1296 = vmatpush1.xpose.msra.mxu0 0.0
      %1297 = vmatprep.subr.mxu0 0.0
      %1298 = vmatpush1.xpose.msra.mxu0 0.0
      %1299 = vmatprep.subr.mxu0 0.0
      %1300 = vmatpush1.xpose.msra.mxu0 0.0
      %1301 = vmatprep.subr.mxu0 0.0
      %1302 = vmatpush1.xpose.msra.mxu0 0.0
      %1303 = vmatprep.subr.mxu0 0.0
      %1304 = vmatpush1.xpose.msra.mxu0 0.0
      %1305 = vmatprep.subr.mxu0 0.0
      %1306 = vmatpush1.xpose.msra.mxu0 0.0
      %1307 = vmatprep.subr.mxu0 0.0
      %1308 = vmatpush1.xpose.msra.mxu0 0.0
      %1309 = vmatprep.subr.mxu0 0.0
      %1310 = vmatpush1.xpose.msra.mxu0 0.0
      %1311 = vmatprep.subr.mxu0 0.0
      %1312 = vmatpush1.xpose.msra.mxu0 0.0
      %1313 = vmatprep.subr.mxu0 0.0
      %1314 = vmatpush1.xpose.msra.mxu0 0.0
      %1315 = vmatprep.subr.mxu0 0.0
      %1316 = vmatpush1.xpose.msra.mxu0 0.0
      %1317 = vmatprep.subr.mxu0 0.0
      %1318 = vmatpush1.xpose.msra.mxu0 0.0
      %1319 = vmatprep.subr.mxu0 0.0
      %1320 = vmatpush1.xpose.msra.mxu0 0.0
      %1321 = vmatprep.subr.mxu0 0.0
      %1322 = vmatpush1.xpose.msra.mxu0 0.0
      %1323 = vmatprep.subr.mxu0 0.0
      %1324 = vmatpush1.xpose.msra.mxu0 0.0
      %1325 = vmatprep.mubr.f32.mxu0 0.0
      %1326 = vmatmul.mubr.f32.gmra.mrb[0].mxu0 %v1253
      %v1327 = vpop.f32.mrb[0].mxu0
      %v1328 = vadd.f32 0.0, %v1327
      %v1329 = vpop.f32.mrb[0].mxu0
      %1330 = vdwg.mxu0
      %v1332 = vsel %vm461, %v408, 0
      %v1335 = vsel %vm461, %v291, 0
      %v1338 = vsel %vm461, %v292, 0
      %1340 = vmatprep.subr.mxu0 0.0
      %1341 = vmatpush1.xpose.msra.mxu0 %v1335
      %1342 = vmatprep.subr.mxu0 0.0
      %1343 = vmatpush1.xpose.msra.mxu0 %v1338
      %1344 = vmatprep.subr.mxu0 0.0
      %1345 = vmatpush1.xpose.msra.mxu0 0.0
      %1346 = vmatprep.subr.mxu0 0.0
      %1347 = vmatpush1.xpose.msra.mxu0 0.0
      %1348 = vmatprep.subr.mxu0 0.0
      %1349 = vmatpush1.xpose.msra.mxu0 0.0
      %1350 = vmatprep.subr.mxu0 0.0
      %1351 = vmatpush1.xpose.msra.mxu0 0.0
      %1352 = vmatprep.subr.mxu0 0.0
      %1353 = vmatpush1.xpose.msra.mxu0 0.0
      %1354 = vmatprep.subr.mxu0 0.0
      %1355 = vmatpush1.xpose.msra.mxu0 0.0
      %1356 = vmatprep.subr.mxu0 0.0
      %1357 = vmatpush1.xpose.msra.mxu0 0.0
      %1358 = vmatprep.subr.mxu0 0.0
      %1359 = vmatpush1.xpose.msra.mxu0 0.0
      %1360 = vmatprep.subr.mxu0 0.0
      %1361 = vmatpush1.xpose.msra.mxu0 0.0
      %1362 = vmatprep.subr.mxu0 0.0
      %1363 = vmatpush1.xpose.msra.mxu0 0.0
      %1364 = vmatprep.subr.mxu0 0.0
      %1365 = vmatpush1.xpose.msra.mxu0 0.0
      %1366 = vmatprep.subr.mxu0 0.0
      %1367 = vmatpush1.xpose.msra.mxu0 0.0
      %1368 = vmatprep.subr.mxu0 0.0
      %1369 = vmatpush1.xpose.msra.mxu0 0.0
      %1370 = vmatprep.subr.mxu0 0.0
      %1371 = vmatpush1.xpose.msra.mxu0 0.0
      %1372 = vmatprep.subr.mxu0 0.0
      %1373 = vmatpush1.xpose.msra.mxu0 0.0
      %1374 = vmatprep.subr.mxu0 0.0
      %1375 = vmatpush1.xpose.msra.mxu0 0.0
      %1376 = vmatprep.subr.mxu0 0.0
      %1377 = vmatpush1.xpose.msra.mxu0 0.0
      %1378 = vmatprep.subr.mxu0 0.0
      %1379 = vmatpush1.xpose.msra.mxu0 0.0
      %1380 = vmatprep.subr.mxu0 0.0
      %1381 = vmatpush1.xpose.msra.mxu0 0.0
      %1382 = vmatprep.subr.mxu0 0.0
      %1383 = vmatpush1.xpose.msra.mxu0 0.0
      %1384 = vmatprep.subr.mxu0 0.0
      %1385 = vmatpush1.xpose.msra.mxu0 0.0
      %1386 = vmatprep.subr.mxu0 0.0
      %1387 = vmatpush1.xpose.msra.mxu0 0.0
      %1388 = vmatprep.subr.mxu0 0.0
      %1389 = vmatpush1.xpose.msra.mxu0 0.0
      %1390 = vmatprep.subr.mxu0 0.0
      %1391 = vmatpush1.xpose.msra.mxu0 0.0
      %1392 = vmatprep.subr.mxu0 0.0
      %1393 = vmatpush1.xpose.msra.mxu0 0.0
      %1394 = vmatprep.subr.mxu0 0.0
      %1395 = vmatpush1.xpose.msra.mxu0 0.0
      %1396 = vmatprep.subr.mxu0 0.0
      %1397 = vmatpush1.xpose.msra.mxu0 0.0
      %1398 = vmatprep.subr.mxu0 0.0
      %1399 = vmatpush1.xpose.msra.mxu0 0.0
      %1400 = vmatprep.subr.mxu0 0.0
      %1401 = vmatpush1.xpose.msra.mxu0 0.0
      %1402 = vmatprep.subr.mxu0 0.0
      %1403 = vmatpush1.xpose.msra.mxu0 0.0
      %1404 = vmatprep.mubr.f32.mxu0 0.0
      %1405 = vmatmul.mubr.f32.gmra.mrb[0].mxu0 %v1332
      %v1406 = vpop.f32.mrb[0].mxu0
      %v1407 = vadd.f32 0.0, %v1406
      %v1408 = vpop.f32.mrb[0].mxu0
      %1409 = vdwg.mxu0
      %v1411 = vsel %vm461, %v409, 0
      %v1414 = vsel %vm461, %v293, 0
      %v1417 = vsel %vm461, %v294, 0
      %1419 = vmatprep.subr.mxu0 0.0
      %1420 = vmatpush1.xpose.msra.mxu0 %v1414
      %1421 = vmatprep.subr.mxu0 0.0
      %1422 = vmatpush1.xpose.msra.mxu0 %v1417
      %1423 = vmatprep.subr.mxu0 0.0
      %1424 = vmatpush1.xpose.msra.mxu0 0.0
      %1425 = vmatprep.subr.mxu0 0.0
      %1426 = vmatpush1.xpose.msra.mxu0 0.0
      %1427 = vmatprep.subr.mxu0 0.0
      %1428 = vmatpush1.xpose.msra.mxu0 0.0
      %1429 = vmatprep.subr.mxu0 0.0
      %1430 = vmatpush1.xpose.msra.mxu0 0.0
      %1431 = vmatprep.subr.mxu0 0.0
      %1432 = vmatpush1.xpose.msra.mxu0 0.0
      %1433 = vmatprep.subr.mxu0 0.0
      %1434 = vmatpush1.xpose.msra.mxu0 0.0
      %1435 = vmatprep.subr.mxu0 0.0
      %1436 = vmatpush1.xpose.msra.mxu0 0.0
      %1437 = vmatprep.subr.mxu0 0.0
      %1438 = vmatpush1.xpose.msra.mxu0 0.0
      %1439 = vmatprep.subr.mxu0 0.0
      %1440 = vmatpush1.xpose.msra.mxu0 0.0
      %1441 = vmatprep.subr.mxu0 0.0
      %1442 = vmatpush1.xpose.msra.mxu0 0.0
      %1443 = vmatprep.subr.mxu0 0.0
      %1444 = vmatpush1.xpose.msra.mxu0 0.0
      %1445 = vmatprep.subr.mxu0 0.0
      %1446 = vmatpush1.xpose.msra.mxu0 0.0
      %1447 = vmatprep.subr.mxu0 0.0
      %1448 = vmatpush1.xpose.msra.mxu0 0.0
      %1449 = vmatprep.subr.mxu0 0.0
      %1450 = vmatpush1.xpose.msra.mxu0 0.0
      %1451 = vmatprep.subr.mxu0 0.0
      %1452 = vmatpush1.xpose.msra.mxu0 0.0
      %1453 = vmatprep.subr.mxu0 0.0
      %1454 = vmatpush1.xpose.msra.mxu0 0.0
      %1455 = vmatprep.subr.mxu0 0.0
      %1456 = vmatpush1.xpose.msra.mxu0 0.0
      %1457 = vmatprep.subr.mxu0 0.0
      %1458 = vmatpush1.xpose.msra.mxu0 0.0
      %1459 = vmatprep.subr.mxu0 0.0
      %1460 = vmatpush1.xpose.msra.mxu0 0.0
      %1461 = vmatprep.subr.mxu0 0.0
      %1462 = vmatpush1.xpose.msra.mxu0 0.0
      %1463 = vmatprep.subr.mxu0 0.0
      %1464 = vmatpush1.xpose.msra.mxu0 0.0
      %1465 = vmatprep.subr.mxu0 0.0
      %1466 = vmatpush1.xpose.msra.mxu0 0.0
      %1467 = vmatprep.subr.mxu0 0.0
      %1468 = vmatpush1.xpose.msra.mxu0 0.0
      %1469 = vmatprep.subr.mxu0 0.0
      %1470 = vmatpush1.xpose.msra.mxu0 0.0
      %1471 = vmatprep.subr.mxu0 0.0
      %1472 = vmatpush1.xpose.msra.mxu0 0.0
      %1473 = vmatprep.subr.mxu0 0.0
      %1474 = vmatpush1.xpose.msra.mxu0 0.0
      %1475 = vmatprep.subr.mxu0 0.0
      %1476 = vmatpush1.xpose.msra.mxu0 0.0
      %1477 = vmatprep.subr.mxu0 0.0
      %1478 = vmatpush1.xpose.msra.mxu0 0.0
      %1479 = vmatprep.subr.mxu0 0.0
      %1480 = vmatpush1.xpose.msra.mxu0 0.0
      %1481 = vmatprep.subr.mxu0 0.0
      %1482 = vmatpush1.xpose.msra.mxu0 0.0
      %1483 = vmatprep.mubr.f32.mxu0 0.0
      %1484 = vmatmul.mubr.f32.gmra.mrb[0].mxu0 %v1411
      %v1485 = vpop.f32.mrb[0].mxu0
      %v1486 = vadd.f32 0.0, %v1485
      %v1487 = vpop.f32.mrb[0].mxu0
      %1488 = vdwg.mxu0
      %v1490 = vsel %vm461, %v410, 0
      %v1493 = vsel %vm461, %v295, 0
      %v1496 = vsel %vm461, %v296, 0
      %1498 = vmatprep.subr.mxu0 0.0
      %1499 = vmatpush1.xpose.msra.mxu0 %v1493
      %1500 = vmatprep.subr.mxu0 0.0
      %1501 = vmatpush1.xpose.msra.mxu0 %v1496
      %1502 = vmatprep.subr.mxu0 0.0
      %1503 = vmatpush1.xpose.msra.mxu0 0.0
      %1504 = vmatprep.subr.mxu0 0.0
      %1505 = vmatpush1.xpose.msra.mxu0 0.0
      %1506 = vmatprep.subr.mxu0 0.0
      %1507 = vmatpush1.xpose.msra.mxu0 0.0
      %1508 = vmatprep.subr.mxu0 0.0
      %1509 = vmatpush1.xpose.msra.mxu0 0.0
      %1510 = vmatprep.subr.mxu0 0.0
      %1511 = vmatpush1.xpose.msra.mxu0 0.0
      %1512 = vmatprep.subr.mxu0 0.0
      %1513 = vmatpush1.xpose.msra.mxu0 0.0
      %1514 = vmatprep.subr.mxu0 0.0
      %1515 = vmatpush1.xpose.msra.mxu0 0.0
      %1516 = vmatprep.subr.mxu0 0.0
      %1517 = vmatpush1.xpose.msra.mxu0 0.0
      %1518 = vmatprep.subr.mxu0 0.0
      %1519 = vmatpush1.xpose.msra.mxu0 0.0
      %1520 = vmatprep.subr.mxu0 0.0
      %1521 = vmatpush1.xpose.msra.mxu0 0.0
      %1522 = vmatprep.subr.mxu0 0.0
      %1523 = vmatpush1.xpose.msra.mxu0 0.0
      %1524 = vmatprep.subr.mxu0 0.0
      %1525 = vmatpush1.xpose.msra.mxu0 0.0
      %1526 = vmatprep.subr.mxu0 0.0
      %1527 = vmatpush1.xpose.msra.mxu0 0.0
      %1528 = vmatprep.subr.mxu0 0.0
      %1529 = vmatpush1.xpose.msra.mxu0 0.0
      %1530 = vmatprep.subr.mxu0 0.0
      %1531 = vmatpush1.xpose.msra.mxu0 0.0
      %1532 = vmatprep.subr.mxu0 0.0
      %1533 = vmatpush1.xpose.msra.mxu0 0.0
      %1534 = vmatprep.subr.mxu0 0.0
      %1535 = vmatpush1.xpose.msra.mxu0 0.0
      %1536 = vmatprep.subr.mxu0 0.0
      %1537 = vmatpush1.xpose.msra.mxu0 0.0
      %1538 = vmatprep.subr.mxu0 0.0
      %1539 = vmatpush1.xpose.msra.mxu0 0.0
      %1540 = vmatprep.subr.mxu0 0.0
      %1541 = vmatpush1.xpose.msra.mxu0 0.0
      %1542 = vmatprep.subr.mxu0 0.0
      %1543 = vmatpush1.xpose.msra.mxu0 0.0
      %1544 = vmatprep.subr.mxu0 0.0
      %1545 = vmatpush1.xpose.msra.mxu0 0.0
      %1546 = vmatprep.subr.mxu0 0.0
      %1547 = vmatpush1.xpose.msra.mxu0 0.0
      %1548 = vmatprep.subr.mxu0 0.0
      %1549 = vmatpush1.xpose.msra.mxu0 0.0
      %1550 = vmatprep.subr.mxu0 0.0
      %1551 = vmatpush1.xpose.msra.mxu0 0.0
      %1552 = vmatprep.subr.mxu0 0.0
      %1553 = vmatpush1.xpose.msra.mxu0 0.0
      %1554 = vmatprep.subr.mxu0 0.0
      %1555 = vmatpush1.xpose.msra.mxu0 0.0
      %1556 = vmatprep.subr.mxu0 0.0
      %1557 = vmatpush1.xpose.msra.mxu0 0.0
      %1558 = vmatprep.subr.mxu0 0.0
      %1559 = vmatpush1.xpose.msra.mxu0 0.0
      %1560 = vmatprep.subr.mxu0 0.0
      %1561 = vmatpush1.xpose.msra.mxu0 0.0
      %1562 = vmatprep.mubr.f32.mxu0 0.0
      %1563 = vmatmul.mubr.f32.gmra.mrb[0].mxu0 %v1490
      %v1564 = vpop.f32.mrb[0].mxu0
      %v1565 = vadd.f32 0.0, %v1564
      %v1566 = vpop.f32.mrb[0].mxu0
      %1567 = vdwg.mxu0
      %v1569 = vsel %vm461, %v411, 0
      %v1572 = vsel %vm461, %v297, 0
      %v1575 = vsel %vm461, %v298, 0
      %1577 = vmatprep.subr.mxu0 0.0
      %1578 = vmatpush1.xpose.msra.mxu0 %v1572
      %1579 = vmatprep.subr.mxu0 0.0
      %1580 = vmatpush1.xpose.msra.mxu0 %v1575
      %1581 = vmatprep.subr.mxu0 0.0
      %1582 = vmatpush1.xpose.msra.mxu0 0.0
      %1583 = vmatprep.subr.mxu0 0.0
      %1584 = vmatpush1.xpose.msra.mxu0 0.0
      %1585 = vmatprep.subr.mxu0 0.0
      %1586 = vmatpush1.xpose.msra.mxu0 0.0
      %1587 = vmatprep.subr.mxu0 0.0
      %1588 = vmatpush1.xpose.msra.mxu0 0.0
      %1589 = vmatprep.subr.mxu0 0.0
      %1590 = vmatpush1.xpose.msra.mxu0 0.0
      %1591 = vmatprep.subr.mxu0 0.0
      %1592 = vmatpush1.xpose.msra.mxu0 0.0
      %1593 = vmatprep.subr.mxu0 0.0
      %1594 = vmatpush1.xpose.msra.mxu0 0.0
      %1595 = vmatprep.subr.mxu0 0.0
      %1596 = vmatpush1.xpose.msra.mxu0 0.0
      %1597 = vmatprep.subr.mxu0 0.0
      %1598 = vmatpush1.xpose.msra.mxu0 0.0
      %1599 = vmatprep.subr.mxu0 0.0
      %1600 = vmatpush1.xpose.msra.mxu0 0.0
      %1601 = vmatprep.subr.mxu0 0.0
      %1602 = vmatpush1.xpose.msra.mxu0 0.0
      %1603 = vmatprep.subr.mxu0 0.0
      %1604 = vmatpush1.xpose.msra.mxu0 0.0
      %1605 = vmatprep.subr.mxu0 0.0
      %1606 = vmatpush1.xpose.msra.mxu0 0.0
      %1607 = vmatprep.subr.mxu0 0.0
      %1608 = vmatpush1.xpose.msra.mxu0 0.0
      %1609 = vmatprep.subr.mxu0 0.0
      %1610 = vmatpush1.xpose.msra.mxu0 0.0
      %1611 = vmatprep.subr.mxu0 0.0
      %1612 = vmatpush1.xpose.msra.mxu0 0.0
      %1613 = vmatprep.subr.mxu0 0.0
      %1614 = vmatpush1.xpose.msra.mxu0 0.0
      %1615 = vmatprep.subr.mxu0 0.0
      %1616 = vmatpush1.xpose.msra.mxu0 0.0
      %1617 = vmatprep.subr.mxu0 0.0
      %1618 = vmatpush1.xpose.msra.mxu0 0.0
      %1619 = vmatprep.subr.mxu0 0.0
      %1620 = vmatpush1.xpose.msra.mxu0 0.0
      %1621 = vmatprep.subr.mxu0 0.0
      %1622 = vmatpush1.xpose.msra.mxu0 0.0
      %1623 = vmatprep.subr.mxu0 0.0
      %1624 = vmatpush1.xpose.msra.mxu0 0.0
      %1625 = vmatprep.subr.mxu0 0.0
      %1626 = vmatpush1.xpose.msra.mxu0 0.0
      %1627 = vmatprep.subr.mxu0 0.0
      %1628 = vmatpush1.xpose.msra.mxu0 0.0
      %1629 = vmatprep.subr.mxu0 0.0
      %1630 = vmatpush1.xpose.msra.mxu0 0.0
      %1631 = vmatprep.subr.mxu0 0.0
      %1632 = vmatpush1.xpose.msra.mxu0 0.0
      %1633 = vmatprep.subr.mxu0 0.0
      %1634 = vmatpush1.xpose.msra.mxu0 0.0
      %1635 = vmatprep.subr.mxu0 0.0
      %1636 = vmatpush1.xpose.msra.mxu0 0.0
      %1637 = vmatprep.subr.mxu0 0.0
      %1638 = vmatpush1.xpose.msra.mxu0 0.0
      %1639 = vmatprep.subr.mxu0 0.0
      %1640 = vmatpush1.xpose.msra.mxu0 0.0
      %1641 = vmatprep.mubr.f32.mxu0 0.0
      %1642 = vmatmul.mubr.f32.gmra.mrb[0].mxu0 %v1569
      %v1643 = vpop.f32.mrb[0].mxu0
      %v1644 = vadd.f32 0.0, %v1643
      %v1645 = vpop.f32.mrb[0].mxu0
      %1646 = vdwg.mxu0
      %v1648 = vsel %vm461, %v412, 0
      %v1651 = vsel %vm461, %v299, 0
      %v1654 = vsel %vm461, %v300, 0
      %1656 = vmatprep.subr.mxu0 0.0
      %1657 = vmatpush1.xpose.msra.mxu0 %v1651
      %1658 = vmatprep.subr.mxu0 0.0
      %1659 = vmatpush1.xpose.msra.mxu0 %v1654
      %1660 = vmatprep.subr.mxu0 0.0
      %1661 = vmatpush1.xpose.msra.mxu0 0.0
      %1662 = vmatprep.subr.mxu0 0.0
      %1663 = vmatpush1.xpose.msra.mxu0 0.0
      %1664 = vmatprep.subr.mxu0 0.0
      %1665 = vmatpush1.xpose.msra.mxu0 0.0
      %1666 = vmatprep.subr.mxu0 0.0
      %1667 = vmatpush1.xpose.msra.mxu0 0.0
      %1668 = vmatprep.subr.mxu0 0.0
      %1669 = vmatpush1.xpose.msra.mxu0 0.0
      %1670 = vmatprep.subr.mxu0 0.0
      %1671 = vmatpush1.xpose.msra.mxu0 0.0
      %1672 = vmatprep.subr.mxu0 0.0
      %1673 = vmatpush1.xpose.msra.mxu0 0.0
      %1674 = vmatprep.subr.mxu0 0.0
      %1675 = vmatpush1.xpose.msra.mxu0 0.0
      %1676 = vmatprep.subr.mxu0 0.0
      %1677 = vmatpush1.xpose.msra.mxu0 0.0
      %1678 = vmatprep.subr.mxu0 0.0
      %1679 = vmatpush1.xpose.msra.mxu0 0.0
      %1680 = vmatprep.subr.mxu0 0.0
      %1681 = vmatpush1.xpose.msra.mxu0 0.0
      %1682 = vmatprep.subr.mxu0 0.0
      %1683 = vmatpush1.xpose.msra.mxu0 0.0
      %1684 = vmatprep.subr.mxu0 0.0
      %1685 = vmatpush1.xpose.msra.mxu0 0.0
      %1686 = vmatprep.subr.mxu0 0.0
      %1687 = vmatpush1.xpose.msra.mxu0 0.0
      %1688 = vmatprep.subr.mxu0 0.0
      %1689 = vmatpush1.xpose.msra.mxu0 0.0
      %1690 = vmatprep.subr.mxu0 0.0
      %1691 = vmatpush1.xpose.msra.mxu0 0.0
      %1692 = vmatprep.subr.mxu0 0.0
      %1693 = vmatpush1.xpose.msra.mxu0 0.0
      %1694 = vmatprep.subr.mxu0 0.0
      %1695 = vmatpush1.xpose.msra.mxu0 0.0
      %1696 = vmatprep.subr.mxu0 0.0
      %1697 = vmatpush1.xpose.msra.mxu0 0.0
      %1698 = vmatprep.subr.mxu0 0.0
      %1699 = vmatpush1.xpose.msra.mxu0 0.0
      %1700 = vmatprep.subr.mxu0 0.0
      %1701 = vmatpush1.xpose.msra.mxu0 0.0
      %1702 = vmatprep.subr.mxu0 0.0
      %1703 = vmatpush1.xpose.msra.mxu0 0.0
      %1704 = vmatprep.subr.mxu0 0.0
      %1705 = vmatpush1.xpose.msra.mxu0 0.0
      %1706 = vmatprep.subr.mxu0 0.0
      %1707 = vmatpush1.xpose.msra.mxu0 0.0
      %1708 = vmatprep.subr.mxu0 0.0
      %1709 = vmatpush1.xpose.msra.mxu0 0.0
      %1710 = vmatprep.subr.mxu0 0.0
      %1711 = vmatpush1.xpose.msra.mxu0 0.0
      %1712 = vmatprep.subr.mxu0 0.0
      %1713 = vmatpush1.xpose.msra.mxu0 0.0
      %1714 = vmatprep.subr.mxu0 0.0
      %1715 = vmatpush1.xpose.msra.mxu0 0.0
      %1716 = vmatprep.subr.mxu0 0.0
      %1717 = vmatpush1.xpose.msra.mxu0 0.0
      %1718 = vmatprep.subr.mxu0 0.0
      %1719 = vmatpush1.xpose.msra.mxu0 0.0
      %1720 = vmatprep.mubr.f32.mxu0 0.0
      %1721 = vmatmul.mubr.f32.gmra.mrb[0].mxu0 %v1648
      %v1722 = vpop.f32.mrb[0].mxu0
      %v1723 = vadd.f32 0.0, %v1722
      %v1724 = vpop.f32.mrb[0].mxu0
      %1725 = vdwg.mxu0
      %v1727 = vsel %vm461, %v413, 0
      %v1730 = vsel %vm461, %v301, 0
      %v1733 = vsel %vm461, %v302, 0
      %1735 = vmatprep.subr.mxu0 0.0
      %1736 = vmatpush1.xpose.msra.mxu0 %v1730
      %1737 = vmatprep.subr.mxu0 0.0
      %1738 = vmatpush1.xpose.msra.mxu0 %v1733
      %1739 = vmatprep.subr.mxu0 0.0
      %1740 = vmatpush1.xpose.msra.mxu0 0.0
      %1741 = vmatprep.subr.mxu0 0.0
      %1742 = vmatpush1.xpose.msra.mxu0 0.0
      %1743 = vmatprep.subr.mxu0 0.0
      %1744 = vmatpush1.xpose.msra.mxu0 0.0
      %1745 = vmatprep.subr.mxu0 0.0
      %1746 = vmatpush1.xpose.msra.mxu0 0.0
      %1747 = vmatprep.subr.mxu0 0.0
      %1748 = vmatpush1.xpose.msra.mxu0 0.0
      %1749 = vmatprep.subr.mxu0 0.0
      %1750 = vmatpush1.xpose.msra.mxu0 0.0
      %1751 = vmatprep.subr.mxu0 0.0
      %1752 = vmatpush1.xpose.msra.mxu0 0.0
      %1753 = vmatprep.subr.mxu0 0.0
      %1754 = vmatpush1.xpose.msra.mxu0 0.0
      %1755 = vmatprep.subr.mxu0 0.0
      %1756 = vmatpush1.xpose.msra.mxu0 0.0
      %1757 = vmatprep.subr.mxu0 0.0
      %1758 = vmatpush1.xpose.msra.mxu0 0.0
      %1759 = vmatprep.subr.mxu0 0.0
      %1760 = vmatpush1.xpose.msra.mxu0 0.0
      %1761 = vmatprep.subr.mxu0 0.0
      %1762 = vmatpush1.xpose.msra.mxu0 0.0
      %1763 = vmatprep.subr.mxu0 0.0
      %1764 = vmatpush1.xpose.msra.mxu0 0.0
      %1765 = vmatprep.subr.mxu0 0.0
      %1766 = vmatpush1.xpose.msra.mxu0 0.0
      %1767 = vmatprep.subr.mxu0 0.0
      %1768 = vmatpush1.xpose.msra.mxu0 0.0
      %1769 = vmatprep.subr.mxu0 0.0
      %1770 = vmatpush1.xpose.msra.mxu0 0.0
      %1771 = vmatprep.subr.mxu0 0.0
      %1772 = vmatpush1.xpose.msra.mxu0 0.0
      %1773 = vmatprep.subr.mxu0 0.0
      %1774 = vmatpush1.xpose.msra.mxu0 0.0
      %1775 = vmatprep.subr.mxu0 0.0
      %1776 = vmatpush1.xpose.msra.mxu0 0.0
      %1777 = vmatprep.subr.mxu0 0.0
      %1778 = vmatpush1.xpose.msra.mxu0 0.0
      %1779 = vmatprep.subr.mxu0 0.0
      %1780 = vmatpush1.xpose.msra.mxu0 0.0
      %1781 = vmatprep.subr.mxu0 0.0
      %1782 = vmatpush1.xpose.msra.mxu0 0.0
      %1783 = vmatprep.subr.mxu0 0.0
      %1784 = vmatpush1.xpose.msra.mxu0 0.0
      %1785 = vmatprep.subr.mxu0 0.0
      %1786 = vmatpush1.xpose.msra.mxu0 0.0
      %1787 = vmatprep.subr.mxu0 0.0
      %1788 = vmatpush1.xpose.msra.mxu0 0.0
      %1789 = vmatprep.subr.mxu0 0.0
      %1790 = vmatpush1.xpose.msra.mxu0 0.0
      %1791 = vmatprep.subr.mxu0 0.0
      %1792 = vmatpush1.xpose.msra.mxu0 0.0
      %1793 = vmatprep.subr.mxu0 0.0
      %1794 = vmatpush1.xpose.msra.mxu0 0.0
      %1795 = vmatprep.subr.mxu0 0.0
      %1796 = vmatpush1.xpose.msra.mxu0 0.0
      %1797 = vmatprep.subr.mxu0 0.0
      %1798 = vmatpush1.xpose.msra.mxu0 0.0
      %1799 = vmatprep.mubr.f32.mxu0 0.0
      %1800 = vmatmul.mubr.f32.gmra.mrb[0].mxu0 %v1727
      %v1801 = vpop.f32.mrb[0].mxu0
      %v1802 = vadd.f32 0.0, %v1801
      %v1803 = vpop.f32.mrb[0].mxu0
      %1804 = vdwg.mxu0
      %v1806 = vsel %vm461, %v414, 0
      %v1809 = vsel %vm461, %v303, 0
      %v1812 = vsel %vm461, %v304, 0
      %1814 = vmatprep.subr.mxu0 0.0
      %1815 = vmatpush1.xpose.msra.mxu0 %v1809
      %1816 = vmatprep.subr.mxu0 0.0
      %1817 = vmatpush1.xpose.msra.mxu0 %v1812
      %1818 = vmatprep.subr.mxu0 0.0
      %1819 = vmatpush1.xpose.msra.mxu0 0.0
      %1820 = vmatprep.subr.mxu0 0.0
      %1821 = vmatpush1.xpose.msra.mxu0 0.0
      %1822 = vmatprep.subr.mxu0 0.0
      %1823 = vmatpush1.xpose.msra.mxu0 0.0
      %1824 = vmatprep.subr.mxu0 0.0
      %1825 = vmatpush1.xpose.msra.mxu0 0.0
      %1826 = vmatprep.subr.mxu0 0.0
      %1827 = vmatpush1.xpose.msra.mxu0 0.0
      %1828 = vmatprep.subr.mxu0 0.0
      %1829 = vmatpush1.xpose.msra.mxu0 0.0
      %1830 = vmatprep.subr.mxu0 0.0
      %1831 = vmatpush1.xpose.msra.mxu0 0.0
      %1832 = vmatprep.subr.mxu0 0.0
      %1833 = vmatpush1.xpose.msra.mxu0 0.0
      %1834 = vmatprep.subr.mxu0 0.0
      %1835 = vmatpush1.xpose.msra.mxu0 0.0
      %1836 = vmatprep.subr.mxu0 0.0
      %1837 = vmatpush1.xpose.msra.mxu0 0.0
      %1838 = vmatprep.subr.mxu0 0.0
      %1839 = vmatpush1.xpose.msra.mxu0 0.0
      %1840 = vmatprep.subr.mxu0 0.0
      %1841 = vmatpush1.xpose.msra.mxu0 0.0
      %1842 = vmatprep.subr.mxu0 0.0
      %1843 = vmatpush1.xpose.msra.mxu0 0.0
      %1844 = vmatprep.subr.mxu0 0.0
      %1845 = vmatpush1.xpose.msra.mxu0 0.0
      %1846 = vmatprep.subr.mxu0 0.0
      %1847 = vmatpush1.xpose.msra.mxu0 0.0
      %1848 = vmatprep.subr.mxu0 0.0
      %1849 = vmatpush1.xpose.msra.mxu0 0.0
      %1850 = vmatprep.subr.mxu0 0.0
      %1851 = vmatpush1.xpose.msra.mxu0 0.0
      %1852 = vmatprep.subr.mxu0 0.0
      %1853 = vmatpush1.xpose.msra.mxu0 0.0
      %1854 = vmatprep.subr.mxu0 0.0
      %1855 = vmatpush1.xpose.msra.mxu0 0.0
      %1856 = vmatprep.subr.mxu0 0.0
      %1857 = vmatpush1.xpose.msra.mxu0 0.0
      %1858 = vmatprep.subr.mxu0 0.0
      %1859 = vmatpush1.xpose.msra.mxu0 0.0
      %1860 = vmatprep.subr.mxu0 0.0
      %1861 = vmatpush1.xpose.msra.mxu0 0.0
      %1862 = vmatprep.subr.mxu0 0.0
      %1863 = vmatpush1.xpose.msra.mxu0 0.0
      %1864 = vmatprep.subr.mxu0 0.0
      %1865 = vmatpush1.xpose.msra.mxu0 0.0
      %1866 = vmatprep.subr.mxu0 0.0
      %1867 = vmatpush1.xpose.msra.mxu0 0.0
      %1868 = vmatprep.subr.mxu0 0.0
      %1869 = vmatpush1.xpose.msra.mxu0 0.0
      %1870 = vmatprep.subr.mxu0 0.0
      %1871 = vmatpush1.xpose.msra.mxu0 0.0
      %1872 = vmatprep.subr.mxu0 0.0
      %1873 = vmatpush1.xpose.msra.mxu0 0.0
      %1874 = vmatprep.subr.mxu0 0.0
      %1875 = vmatpush1.xpose.msra.mxu0 0.0
      %1876 = vmatprep.subr.mxu0 0.0
      %1877 = vmatpush1.xpose.msra.mxu0 0.0
      %1878 = vmatprep.mubr.f32.mxu0 0.0
      %1879 = vmatmul.mubr.f32.gmra.mrb[0].mxu0 %v1806
      %v1880 = vpop.f32.mrb[0].mxu0
      %v1881 = vadd.f32 0.0, %v1880
      %v1882 = vpop.f32.mrb[0].mxu0
      %1883 = vdwg.mxu0
      %v1885 = vsel %vm461, %v415, 0
      %v1888 = vsel %vm461, %v305, 0
      %v1891 = vsel %vm461, %v306, 0
      %1893 = vmatprep.subr.mxu0 0.0
      %1894 = vmatpush1.xpose.msra.mxu0 %v1888
      %1895 = vmatprep.subr.mxu0 0.0
      %1896 = vmatpush1.xpose.msra.mxu0 %v1891
      %1897 = vmatprep.subr.mxu0 0.0
      %1898 = vmatpush1.xpose.msra.mxu0 0.0
      %1899 = vmatprep.subr.mxu0 0.0
      %1900 = vmatpush1.xpose.msra.mxu0 0.0
      %1901 = vmatprep.subr.mxu0 0.0
      %1902 = vmatpush1.xpose.msra.mxu0 0.0
      %1903 = vmatprep.subr.mxu0 0.0
      %1904 = vmatpush1.xpose.msra.mxu0 0.0
      %1905 = vmatprep.subr.mxu0 0.0
      %1906 = vmatpush1.xpose.msra.mxu0 0.0
      %1907 = vmatprep.subr.mxu0 0.0
      %1908 = vmatpush1.xpose.msra.mxu0 0.0
      %1909 = vmatprep.subr.mxu0 0.0
      %1910 = vmatpush1.xpose.msra.mxu0 0.0
      %1911 = vmatprep.subr.mxu0 0.0
      %1912 = vmatpush1.xpose.msra.mxu0 0.0
      %1913 = vmatprep.subr.mxu0 0.0
      %1914 = vmatpush1.xpose.msra.mxu0 0.0
      %1915 = vmatprep.subr.mxu0 0.0
      %1916 = vmatpush1.xpose.msra.mxu0 0.0
      %1917 = vmatprep.subr.mxu0 0.0
      %1918 = vmatpush1.xpose.msra.mxu0 0.0
      %1919 = vmatprep.subr.mxu0 0.0
      %1920 = vmatpush1.xpose.msra.mxu0 0.0
      %1921 = vmatprep.subr.mxu0 0.0
      %1922 = vmatpush1.xpose.msra.mxu0 0.0
      %1923 = vmatprep.subr.mxu0 0.0
      %1924 = vmatpush1.xpose.msra.mxu0 0.0
      %1925 = vmatprep.subr.mxu0 0.0
      %1926 = vmatpush1.xpose.msra.mxu0 0.0
      %1927 = vmatprep.subr.mxu0 0.0
      %1928 = vmatpush1.xpose.msra.mxu0 0.0
      %1929 = vmatprep.subr.mxu0 0.0
      %1930 = vmatpush1.xpose.msra.mxu0 0.0
      %1931 = vmatprep.subr.mxu0 0.0
      %1932 = vmatpush1.xpose.msra.mxu0 0.0
      %1933 = vmatprep.subr.mxu0 0.0
      %1934 = vmatpush1.xpose.msra.mxu0 0.0
      %1935 = vmatprep.subr.mxu0 0.0
      %1936 = vmatpush1.xpose.msra.mxu0 0.0
      %1937 = vmatprep.subr.mxu0 0.0
      %1938 = vmatpush1.xpose.msra.mxu0 0.0
      %1939 = vmatprep.subr.mxu0 0.0
      %1940 = vmatpush1.xpose.msra.mxu0 0.0
      %1941 = vmatprep.subr.mxu0 0.0
      %1942 = vmatpush1.xpose.msra.mxu0 0.0
      %1943 = vmatprep.subr.mxu0 0.0
      %1944 = vmatpush1.xpose.msra.mxu0 0.0
      %1945 = vmatprep.subr.mxu0 0.0
      %1946 = vmatpush1.xpose.msra.mxu0 0.0
      %1947 = vmatprep.subr.mxu0 0.0
      %1948 = vmatpush1.xpose.msra.mxu0 0.0
      %1949 = vmatprep.subr.mxu0 0.0
      %1950 = vmatpush1.xpose.msra.mxu0 0.0
      %1951 = vmatprep.subr.mxu0 0.0
      %1952 = vmatpush1.xpose.msra.mxu0 0.0
      %1953 = vmatprep.subr.mxu0 0.0
      %1954 = vmatpush1.xpose.msra.mxu0 0.0
      %1955 = vmatprep.subr.mxu0 0.0
      %1956 = vmatpush1.xpose.msra.mxu0 0.0
      %1957 = vmatprep.mubr.f32.mxu0 0.0
      %1958 = vmatmul.mubr.f32.gmra.mrb[0].mxu0 %v1885
      %v1959 = vpop.f32.mrb[0].mxu0
      %v1960 = vadd.f32 0.0, %v1959
      %v1961 = vpop.f32.mrb[0].mxu0
      %1962 = vdwg.mxu0
      %v1964 = vsel %vm461, %v416, 0
      %v1967 = vsel %vm461, %v307, 0
      %v1970 = vsel %vm461, %v308, 0
      %1972 = vmatprep.subr.mxu0 0.0
      %1973 = vmatpush1.xpose.msra.mxu0 %v1967
      %1974 = vmatprep.subr.mxu0 0.0
      %1975 = vmatpush1.xpose.msra.mxu0 %v1970
      %1976 = vmatprep.subr.mxu0 0.0
      %1977 = vmatpush1.xpose.msra.mxu0 0.0
      %1978 = vmatprep.subr.mxu0 0.0
      %1979 = vmatpush1.xpose.msra.mxu0 0.0
      %1980 = vmatprep.subr.mxu0 0.0
      %1981 = vmatpush1.xpose.msra.mxu0 0.0
      %1982 = vmatprep.subr.mxu0 0.0
      %1983 = vmatpush1.xpose.msra.mxu0 0.0
      %1984 = vmatprep.subr.mxu0 0.0
      %1985 = vmatpush1.xpose.msra.mxu0 0.0
      %1986 = vmatprep.subr.mxu0 0.0
      %1987 = vmatpush1.xpose.msra.mxu0 0.0
      %1988 = vmatprep.subr.mxu0 0.0
      %1989 = vmatpush1.xpose.msra.mxu0 0.0
      %1990 = vmatprep.subr.mxu0 0.0
      %1991 = vmatpush1.xpose.msra.mxu0 0.0
      %1992 = vmatprep.subr.mxu0 0.0
      %1993 = vmatpush1.xpose.msra.mxu0 0.0
      %1994 = vmatprep.subr.mxu0 0.0
      %1995 = vmatpush1.xpose.msra.mxu0 0.0
      %1996 = vmatprep.subr.mxu0 0.0
      %1997 = vmatpush1.xpose.msra.mxu0 0.0
      %1998 = vmatprep.subr.mxu0 0.0
      %1999 = vmatpush1.xpose.msra.mxu0 0.0
      %2000 = vmatprep.subr.mxu0 0.0
      %2001 = vmatpush1.xpose.msra.mxu0 0.0
      %2002 = vmatprep.subr.mxu0 0.0
      %2003 = vmatpush1.xpose.msra.mxu0 0.0
      %2004 = vmatprep.subr.mxu0 0.0
      %2005 = vmatpush1.xpose.msra.mxu0 0.0
      %2006 = vmatprep.subr.mxu0 0.0
      %2007 = vmatpush1.xpose.msra.mxu0 0.0
      %2008 = vmatprep.subr.mxu0 0.0
      %2009 = vmatpush1.xpose.msra.mxu0 0.0
      %2010 = vmatprep.subr.mxu0 0.0
      %2011 = vmatpush1.xpose.msra.mxu0 0.0
      %2012 = vmatprep.subr.mxu0 0.0
      %2013 = vmatpush1.xpose.msra.mxu0 0.0
      %2014 = vmatprep.subr.mxu0 0.0
      %2015 = vmatpush1.xpose.msra.mxu0 0.0
      %2016 = vmatprep.subr.mxu0 0.0
      %2017 = vmatpush1.xpose.msra.mxu0 0.0
      %2018 = vmatprep.subr.mxu0 0.0
      %2019 = vmatpush1.xpose.msra.mxu0 0.0
      %2020 = vmatprep.subr.mxu0 0.0
      %2021 = vmatpush1.xpose.msra.mxu0 0.0
      %2022 = vmatprep.subr.mxu0 0.0
      %2023 = vmatpush1.xpose.msra.mxu0 0.0
      %2024 = vmatprep.subr.mxu0 0.0
      %2025 = vmatpush1.xpose.msra.mxu0 0.0
      %2026 = vmatprep.subr.mxu0 0.0
      %2027 = vmatpush1.xpose.msra.mxu0 0.0
      %2028 = vmatprep.subr.mxu0 0.0
      %2029 = vmatpush1.xpose.msra.mxu0 0.0
      %2030 = vmatprep.subr.mxu0 0.0
      %2031 = vmatpush1.xpose.msra.mxu0 0.0
      %2032 = vmatprep.subr.mxu0 0.0
      %2033 = vmatpush1.xpose.msra.mxu0 0.0
      %2034 = vmatprep.subr.mxu0 0.0
      %2035 = vmatpush1.xpose.msra.mxu0 0.0
      %2036 = vmatprep.mubr.f32.mxu0 0.0
      %2037 = vmatmul.mubr.f32.gmra.mrb[0].mxu0 %v1964
      %v2038 = vpop.f32.mrb[0].mxu0
      %v2039 = vadd.f32 0.0, %v2038
      %v2040 = vpop.f32.mrb[0].mxu0
      %2041 = vdwg.mxu0
      %v2043 = vsel %vm461, %v417, 0
      %v2046 = vsel %vm461, %v309, 0
      %v2049 = vsel %vm461, %v310, 0
      %2051 = vmatprep.subr.mxu0 0.0
      %2052 = vmatpush1.xpose.msra.mxu0 %v2046
      %2053 = vmatprep.subr.mxu0 0.0
      %2054 = vmatpush1.xpose.msra.mxu0 %v2049
      %2055 = vmatprep.subr.mxu0 0.0
      %2056 = vmatpush1.xpose.msra.mxu0 0.0
      %2057 = vmatprep.subr.mxu0 0.0
      %2058 = vmatpush1.xpose.msra.mxu0 0.0
      %2059 = vmatprep.subr.mxu0 0.0
      %2060 = vmatpush1.xpose.msra.mxu0 0.0
      %2061 = vmatprep.subr.mxu0 0.0
      %2062 = vmatpush1.xpose.msra.mxu0 0.0
      %2063 = vmatprep.subr.mxu0 0.0
      %2064 = vmatpush1.xpose.msra.mxu0 0.0
      %2065 = vmatprep.subr.mxu0 0.0
      %2066 = vmatpush1.xpose.msra.mxu0 0.0
      %2067 = vmatprep.subr.mxu0 0.0
      %2068 = vmatpush1.xpose.msra.mxu0 0.0
      %2069 = vmatprep.subr.mxu0 0.0
      %2070 = vmatpush1.xpose.msra.mxu0 0.0
      %2071 = vmatprep.subr.mxu0 0.0
      %2072 = vmatpush1.xpose.msra.mxu0 0.0
      %2073 = vmatprep.subr.mxu0 0.0
      %2074 = vmatpush1.xpose.msra.mxu0 0.0
      %2075 = vmatprep.subr.mxu0 0.0
      %2076 = vmatpush1.xpose.msra.mxu0 0.0
      %2077 = vmatprep.subr.mxu0 0.0
      %2078 = vmatpush1.xpose.msra.mxu0 0.0
      %2079 = vmatprep.subr.mxu0 0.0
      %2080 = vmatpush1.xpose.msra.mxu0 0.0
      %2081 = vmatprep.subr.mxu0 0.0
      %2082 = vmatpush1.xpose.msra.mxu0 0.0
      %2083 = vmatprep.subr.mxu0 0.0
      %2084 = vmatpush1.xpose.msra.mxu0 0.0
      %2085 = vmatprep.subr.mxu0 0.0
      %2086 = vmatpush1.xpose.msra.mxu0 0.0
      %2087 = vmatprep.subr.mxu0 0.0
      %2088 = vmatpush1.xpose.msra.mxu0 0.0
      %2089 = vmatprep.subr.mxu0 0.0
      %2090 = vmatpush1.xpose.msra.mxu0 0.0
      %2091 = vmatprep.subr.mxu0 0.0
      %2092 = vmatpush1.xpose.msra.mxu0 0.0
      %2093 = vmatprep.subr.mxu0 0.0
      %2094 = vmatpush1.xpose.msra.mxu0 0.0
      %2095 = vmatprep.subr.mxu0 0.0
      %2096 = vmatpush1.xpose.msra.mxu0 0.0
      %2097 = vmatprep.subr.mxu0 0.0
      %2098 = vmatpush1.xpose.msra.mxu0 0.0
      %2099 = vmatprep.subr.mxu0 0.0
      %2100 = vmatpush1.xpose.msra.mxu0 0.0
      %2101 = vmatprep.subr.mxu0 0.0
      %2102 = vmatpush1.xpose.msra.mxu0 0.0
      %2103 = vmatprep.subr.mxu0 0.0
      %2104 = vmatpush1.xpose.msra.mxu0 0.0
      %2105 = vmatprep.subr.mxu0 0.0
      %2106 = vmatpush1.xpose.msra.mxu0 0.0
      %2107 = vmatprep.subr.mxu0 0.0
      %2108 = vmatpush1.xpose.msra.mxu0 0.0
      %2109 = vmatprep.subr.mxu0 0.0
      %2110 = vmatpush1.xpose.msra.mxu0 0.0
      %2111 = vmatprep.subr.mxu0 0.0
      %2112 = vmatpush1.xpose.msra.mxu0 0.0
      %2113 = vmatprep.subr.mxu0 0.0
      %2114 = vmatpush1.xpose.msra.mxu0 0.0
      %2115 = vmatprep.mubr.f32.mxu0 0.0
      %2116 = vmatmul.mubr.f32.gmra.mrb[0].mxu0 %v2043
      %v2117 = vpop.f32.mrb[0].mxu0
      %v2118 = vadd.f32 0.0, %v2117
      %v2119 = vpop.f32.mrb[0].mxu0
      %2120 = vdwg.mxu0
      %v2122 = vsel %vm461, %v418, 0
      %v2125 = vsel %vm461, %v311, 0
      %v2128 = vsel %vm461, %v312, 0
      %2130 = vmatprep.subr.mxu0 0.0
      %2131 = vmatpush1.xpose.msra.mxu0 %v2125
      %2132 = vmatprep.subr.mxu0 0.0
      %2133 = vmatpush1.xpose.msra.mxu0 %v2128
      %2134 = vmatprep.subr.mxu0 0.0
      %2135 = vmatpush1.xpose.msra.mxu0 0.0
      %2136 = vmatprep.subr.mxu0 0.0
      %2137 = vmatpush1.xpose.msra.mxu0 0.0
      %2138 = vmatprep.subr.mxu0 0.0
      %2139 = vmatpush1.xpose.msra.mxu0 0.0
      %2140 = vmatprep.subr.mxu0 0.0
      %2141 = vmatpush1.xpose.msra.mxu0 0.0
      %2142 = vmatprep.subr.mxu0 0.0
      %2143 = vmatpush1.xpose.msra.mxu0 0.0
      %2144 = vmatprep.subr.mxu0 0.0
      %2145 = vmatpush1.xpose.msra.mxu0 0.0
      %2146 = vmatprep.subr.mxu0 0.0
      %2147 = vmatpush1.xpose.msra.mxu0 0.0
      %2148 = vmatprep.subr.mxu0 0.0
      %2149 = vmatpush1.xpose.msra.mxu0 0.0
      %2150 = vmatprep.subr.mxu0 0.0
      %2151 = vmatpush1.xpose.msra.mxu0 0.0
      %2152 = vmatprep.subr.mxu0 0.0
      %2153 = vmatpush1.xpose.msra.mxu0 0.0
      %2154 = vmatprep.subr.mxu0 0.0
      %2155 = vmatpush1.xpose.msra.mxu0 0.0
      %2156 = vmatprep.subr.mxu0 0.0
      %2157 = vmatpush1.xpose.msra.mxu0 0.0
      %2158 = vmatprep.subr.mxu0 0.0
      %2159 = vmatpush1.xpose.msra.mxu0 0.0
      %2160 = vmatprep.subr.mxu0 0.0
      %2161 = vmatpush1.xpose.msra.mxu0 0.0
      %2162 = vmatprep.subr.mxu0 0.0
      %2163 = vmatpush1.xpose.msra.mxu0 0.0
      %2164 = vmatprep.subr.mxu0 0.0
      %2165 = vmatpush1.xpose.msra.mxu0 0.0
      %2166 = vmatprep.subr.mxu0 0.0
      %2167 = vmatpush1.xpose.msra.mxu0 0.0
      %2168 = vmatprep.subr.mxu0 0.0
      %2169 = vmatpush1.xpose.msra.mxu0 0.0
      %2170 = vmatprep.subr.mxu0 0.0
      %2171 = vmatpush1.xpose.msra.mxu0 0.0
      %2172 = vmatprep.subr.mxu0 0.0
      %2173 = vmatpush1.xpose.msra.mxu0 0.0
      %2174 = vmatprep.subr.mxu0 0.0
      %2175 = vmatpush1.xpose.msra.mxu0 0.0
      %2176 = vmatprep.subr.mxu0 0.0
      %2177 = vmatpush1.xpose.msra.mxu0 0.0
      %2178 = vmatprep.subr.mxu0 0.0
      %2179 = vmatpush1.xpose.msra.mxu0 0.0
      %2180 = vmatprep.subr.mxu0 0.0
      %2181 = vmatpush1.xpose.msra.mxu0 0.0
      %2182 = vmatprep.subr.mxu0 0.0
      %2183 = vmatpush1.xpose.msra.mxu0 0.0
      %2184 = vmatprep.subr.mxu0 0.0
      %2185 = vmatpush1.xpose.msra.mxu0 0.0
      %2186 = vmatprep.subr.mxu0 0.0
      %2187 = vmatpush1.xpose.msra.mxu0 0.0
      %2188 = vmatprep.subr.mxu0 0.0
      %2189 = vmatpush1.xpose.msra.mxu0 0.0
      %2190 = vmatprep.subr.mxu0 0.0
      %2191 = vmatpush1.xpose.msra.mxu0 0.0
      %2192 = vmatprep.subr.mxu0 0.0
      %2193 = vmatpush1.xpose.msra.mxu0 0.0
      %2194 = vmatprep.mubr.f32.mxu0 0.0
      %2195 = vmatmul.mubr.f32.gmra.mrb[0].mxu0 %v2122
      %v2196 = vpop.f32.mrb[0].mxu0
      %v2197 = vadd.f32 0.0, %v2196
      %v2198 = vpop.f32.mrb[0].mxu0
      %2199 = vdwg.mxu0
      %v2201 = vsel %vm461, %v419, 0
      %v2204 = vsel %vm461, %v313, 0
      %v2207 = vsel %vm461, %v314, 0
      %2209 = vmatprep.subr.mxu0 0.0
      %2210 = vmatpush1.xpose.msra.mxu0 %v2204
      %2211 = vmatprep.subr.mxu0 0.0
      %2212 = vmatpush1.xpose.msra.mxu0 %v2207
      %2213 = vmatprep.subr.mxu0 0.0
      %2214 = vmatpush1.xpose.msra.mxu0 0.0
      %2215 = vmatprep.subr.mxu0 0.0
      %2216 = vmatpush1.xpose.msra.mxu0 0.0
      %2217 = vmatprep.subr.mxu0 0.0
      %2218 = vmatpush1.xpose.msra.mxu0 0.0
      %2219 = vmatprep.subr.mxu0 0.0
      %2220 = vmatpush1.xpose.msra.mxu0 0.0
      %2221 = vmatprep.subr.mxu0 0.0
      %2222 = vmatpush1.xpose.msra.mxu0 0.0
      %2223 = vmatprep.subr.mxu0 0.0
      %2224 = vmatpush1.xpose.msra.mxu0 0.0
      %2225 = vmatprep.subr.mxu0 0.0
      %2226 = vmatpush1.xpose.msra.mxu0 0.0
      %2227 = vmatprep.subr.mxu0 0.0
      %2228 = vmatpush1.xpose.msra.mxu0 0.0
      %2229 = vmatprep.subr.mxu0 0.0
      %2230 = vmatpush1.xpose.msra.mxu0 0.0
      %2231 = vmatprep.subr.mxu0 0.0
      %2232 = vmatpush1.xpose.msra.mxu0 0.0
      %2233 = vmatprep.subr.mxu0 0.0
      %2234 = vmatpush1.xpose.msra.mxu0 0.0
      %2235 = vmatprep.subr.mxu0 0.0
      %2236 = vmatpush1.xpose.msra.mxu0 0.0
      %2237 = vmatprep.subr.mxu0 0.0
      %2238 = vmatpush1.xpose.msra.mxu0 0.0
      %2239 = vmatprep.subr.mxu0 0.0
      %2240 = vmatpush1.xpose.msra.mxu0 0.0
      %2241 = vmatprep.subr.mxu0 0.0
      %2242 = vmatpush1.xpose.msra.mxu0 0.0
      %2243 = vmatprep.subr.mxu0 0.0
      %2244 = vmatpush1.xpose.msra.mxu0 0.0
      %2245 = vmatprep.subr.mxu0 0.0
      %2246 = vmatpush1.xpose.msra.mxu0 0.0
      %2247 = vmatprep.subr.mxu0 0.0
      %2248 = vmatpush1.xpose.msra.mxu0 0.0
      %2249 = vmatprep.subr.mxu0 0.0
      %2250 = vmatpush1.xpose.msra.mxu0 0.0
      %2251 = vmatprep.subr.mxu0 0.0
      %2252 = vmatpush1.xpose.msra.mxu0 0.0
      %2253 = vmatprep.subr.mxu0 0.0
      %2254 = vmatpush1.xpose.msra.mxu0 0.0
      %2255 = vmatprep.subr.mxu0 0.0
      %2256 = vmatpush1.xpose.msra.mxu0 0.0
      %2257 = vmatprep.subr.mxu0 0.0
      %2258 = vmatpush1.xpose.msra.mxu0 0.0
      %2259 = vmatprep.subr.mxu0 0.0
      %2260 = vmatpush1.xpose.msra.mxu0 0.0
      %2261 = vmatprep.subr.mxu0 0.0
      %2262 = vmatpush1.xpose.msra.mxu0 0.0
      %2263 = vmatprep.subr.mxu0 0.0
      %2264 = vmatpush1.xpose.msra.mxu0 0.0
      %2265 = vmatprep.subr.mxu0 0.0
      %2266 = vmatpush1.xpose.msra.mxu0 0.0
      %2267 = vmatprep.subr.mxu0 0.0
      %2268 = vmatpush1.xpose.msra.mxu0 0.0
      %2269 = vmatprep.subr.mxu0 0.0
      %2270 = vmatpush1.xpose.msra.mxu0 0.0
      %2271 = vmatprep.subr.mxu0 0.0
      %2272 = vmatpush1.xpose.msra.mxu0 0.0
      %2273 = vmatprep.mubr.f32.mxu0 0.0
      %2274 = vmatmul.mubr.f32.gmra.mrb[0].mxu0 %v2201
      %v2275 = vpop.f32.mrb[0].mxu0
      %v2276 = vadd.f32 0.0, %v2275
      %v2277 = vpop.f32.mrb[0].mxu0
      %2278 = vdwg.mxu0
      %v2280 = vsel %vm461, %v420, 0
      %v2283 = vsel %vm461, %v315, 0
      %v2286 = vsel %vm461, %v316, 0
      %2288 = vmatprep.subr.mxu0 0.0
      %2289 = vmatpush1.xpose.msra.mxu0 %v2283
      %2290 = vmatprep.subr.mxu0 0.0
      %2291 = vmatpush1.xpose.msra.mxu0 %v2286
      %2292 = vmatprep.subr.mxu0 0.0
      %2293 = vmatpush1.xpose.msra.mxu0 0.0
      %2294 = vmatprep.subr.mxu0 0.0
      %2295 = vmatpush1.xpose.msra.mxu0 0.0
      %2296 = vmatprep.subr.mxu0 0.0
      %2297 = vmatpush1.xpose.msra.mxu0 0.0
      %2298 = vmatprep.subr.mxu0 0.0
      %2299 = vmatpush1.xpose.msra.mxu0 0.0
      %2300 = vmatprep.subr.mxu0 0.0
      %2301 = vmatpush1.xpose.msra.mxu0 0.0
      %2302 = vmatprep.subr.mxu0 0.0
      %2303 = vmatpush1.xpose.msra.mxu0 0.0
      %2304 = vmatprep.subr.mxu0 0.0
      %2305 = vmatpush1.xpose.msra.mxu0 0.0
      %2306 = vmatprep.subr.mxu0 0.0
      %2307 = vmatpush1.xpose.msra.mxu0 0.0
      %2308 = vmatprep.subr.mxu0 0.0
      %2309 = vmatpush1.xpose.msra.mxu0 0.0
      %2310 = vmatprep.subr.mxu0 0.0
      %2311 = vmatpush1.xpose.msra.mxu0 0.0
      %2312 = vmatprep.subr.mxu0 0.0
      %2313 = vmatpush1.xpose.msra.mxu0 0.0
      %2314 = vmatprep.subr.mxu0 0.0
      %2315 = vmatpush1.xpose.msra.mxu0 0.0
      %2316 = vmatprep.subr.mxu0 0.0
      %2317 = vmatpush1.xpose.msra.mxu0 0.0
      %2318 = vmatprep.subr.mxu0 0.0
      %2319 = vmatpush1.xpose.msra.mxu0 0.0
      %2320 = vmatprep.subr.mxu0 0.0
      %2321 = vmatpush1.xpose.msra.mxu0 0.0
      %2322 = vmatprep.subr.mxu0 0.0
      %2323 = vmatpush1.xpose.msra.mxu0 0.0
      %2324 = vmatprep.subr.mxu0 0.0
      %2325 = vmatpush1.xpose.msra.mxu0 0.0
      %2326 = vmatprep.subr.mxu0 0.0
      %2327 = vmatpush1.xpose.msra.mxu0 0.0
      %2328 = vmatprep.subr.mxu0 0.0
      %2329 = vmatpush1.xpose.msra.mxu0 0.0
      %2330 = vmatprep.subr.mxu0 0.0
      %2331 = vmatpush1.xpose.msra.mxu0 0.0
      %2332 = vmatprep.subr.mxu0 0.0
      %2333 = vmatpush1.xpose.msra.mxu0 0.0
      %2334 = vmatprep.subr.mxu0 0.0
      %2335 = vmatpush1.xpose.msra.mxu0 0.0
      %2336 = vmatprep.subr.mxu0 0.0
      %2337 = vmatpush1.xpose.msra.mxu0 0.0
      %2338 = vmatprep.subr.mxu0 0.0
      %2339 = vmatpush1.xpose.msra.mxu0 0.0
      %2340 = vmatprep.subr.mxu0 0.0
      %2341 = vmatpush1.xpose.msra.mxu0 0.0
      %2342 = vmatprep.subr.mxu0 0.0
      %2343 = vmatpush1.xpose.msra.mxu0 0.0
      %2344 = vmatprep.subr.mxu0 0.0
      %2345 = vmatpush1.xpose.msra.mxu0 0.0
      %2346 = vmatprep.subr.mxu0 0.0
      %2347 = vmatpush1.xpose.msra.mxu0 0.0
      %2348 = vmatprep.subr.mxu0 0.0
      %2349 = vmatpush1.xpose.msra.mxu0 0.0
      %2350 = vmatprep.subr.mxu0 0.0
      %2351 = vmatpush1.xpose.msra.mxu0 0.0
      %2352 = vmatprep.mubr.f32.mxu0 0.0
      %2353 = vmatmul.mubr.f32.gmra.mrb[0].mxu0 %v2280
      %v2354 = vpop.f32.mrb[0].mxu0
      %v2355 = vadd.f32 0.0, %v2354
      %v2356 = vpop.f32.mrb[0].mxu0
      %2357 = vdwg.mxu0
      %v2359 = vsel %vm461, %v421, 0
      %v2362 = vsel %vm461, %v317, 0
      %v2365 = vsel %vm461, %v318, 0
      %2367 = vmatprep.subr.mxu0 0.0
      %2368 = vmatpush1.xpose.msra.mxu0 %v2362
      %2369 = vmatprep.subr.mxu0 0.0
      %2370 = vmatpush1.xpose.msra.mxu0 %v2365
      %2371 = vmatprep.subr.mxu0 0.0
      %2372 = vmatpush1.xpose.msra.mxu0 0.0
      %2373 = vmatprep.subr.mxu0 0.0
      %2374 = vmatpush1.xpose.msra.mxu0 0.0
      %2375 = vmatprep.subr.mxu0 0.0
      %2376 = vmatpush1.xpose.msra.mxu0 0.0
      %2377 = vmatprep.subr.mxu0 0.0
      %2378 = vmatpush1.xpose.msra.mxu0 0.0
      %2379 = vmatprep.subr.mxu0 0.0
      %2380 = vmatpush1.xpose.msra.mxu0 0.0
      %2381 = vmatprep.subr.mxu0 0.0
      %2382 = vmatpush1.xpose.msra.mxu0 0.0
      %2383 = vmatprep.subr.mxu0 0.0
      %2384 = vmatpush1.xpose.msra.mxu0 0.0
      %2385 = vmatprep.subr.mxu0 0.0
      %2386 = vmatpush1.xpose.msra.mxu0 0.0
      %2387 = vmatprep.subr.mxu0 0.0
      %2388 = vmatpush1.xpose.msra.mxu0 0.0
      %2389 = vmatprep.subr.mxu0 0.0
      %2390 = vmatpush1.xpose.msra.mxu0 0.0
      %2391 = vmatprep.subr.mxu0 0.0
      %2392 = vmatpush1.xpose.msra.mxu0 0.0
      %2393 = vmatprep.subr.mxu0 0.0
      %2394 = vmatpush1.xpose.msra.mxu0 0.0
      %2395 = vmatprep.subr.mxu0 0.0
      %2396 = vmatpush1.xpose.msra.mxu0 0.0
      %2397 = vmatprep.subr.mxu0 0.0
      %2398 = vmatpush1.xpose.msra.mxu0 0.0
      %2399 = vmatprep.subr.mxu0 0.0
      %2400 = vmatpush1.xpose.msra.mxu0 0.0
      %2401 = vmatprep.subr.mxu0 0.0
      %2402 = vmatpush1.xpose.msra.mxu0 0.0
      %2403 = vmatprep.subr.mxu0 0.0
      %2404 = vmatpush1.xpose.msra.mxu0 0.0
      %2405 = vmatprep.subr.mxu0 0.0
      %2406 = vmatpush1.xpose.msra.mxu0 0.0
      %2407 = vmatprep.subr.mxu0 0.0
      %2408 = vmatpush1.xpose.msra.mxu0 0.0
      %2409 = vmatprep.subr.mxu0 0.0
      %2410 = vmatpush1.xpose.msra.mxu0 0.0
      %2411 = vmatprep.subr.mxu0 0.0
      %2412 = vmatpush1.xpose.msra.mxu0 0.0
      %2413 = vmatprep.subr.mxu0 0.0
      %2414 = vmatpush1.xpose.msra.mxu0 0.0
      %2415 = vmatprep.subr.mxu0 0.0
      %2416 = vmatpush1.xpose.msra.mxu0 0.0
      %2417 = vmatprep.subr.mxu0 0.0
      %2418 = vmatpush1.xpose.msra.mxu0 0.0
      %2419 = vmatprep.subr.mxu0 0.0
      %2420 = vmatpush1.xpose.msra.mxu0 0.0
      %2421 = vmatprep.subr.mxu0 0.0
      %2422 = vmatpush1.xpose.msra.mxu0 0.0
      %2423 = vmatprep.subr.mxu0 0.0
      %2424 = vmatpush1.xpose.msra.mxu0 0.0
      %2425 = vmatprep.subr.mxu0 0.0
      %2426 = vmatpush1.xpose.msra.mxu0 0.0
      %2427 = vmatprep.subr.mxu0 0.0
      %2428 = vmatpush1.xpose.msra.mxu0 0.0
      %2429 = vmatprep.subr.mxu0 0.0
      %2430 = vmatpush1.xpose.msra.mxu0 0.0
      %2431 = vmatprep.mubr.f32.mxu0 0.0
      %2432 = vmatmul.mubr.f32.gmra.mrb[0].mxu0 %v2359
      %v2433 = vpop.f32.mrb[0].mxu0
      %v2434 = vadd.f32 0.0, %v2433
      %v2435 = vpop.f32.mrb[0].mxu0
      %2436 = vdwg.mxu0
      %v2438 = vsel %vm461, %v422, 0
      %v2441 = vsel %vm461, %v319, 0
      %v2444 = vsel %vm461, %v320, 0
      %2446 = vmatprep.subr.mxu0 0.0
      %2447 = vmatpush1.xpose.msra.mxu0 %v2441
      %2448 = vmatprep.subr.mxu0 0.0
      %2449 = vmatpush1.xpose.msra.mxu0 %v2444
      %2450 = vmatprep.subr.mxu0 0.0
      %2451 = vmatpush1.xpose.msra.mxu0 0.0
      %2452 = vmatprep.subr.mxu0 0.0
      %2453 = vmatpush1.xpose.msra.mxu0 0.0
      %2454 = vmatprep.subr.mxu0 0.0
      %2455 = vmatpush1.xpose.msra.mxu0 0.0
      %2456 = vmatprep.subr.mxu0 0.0
      %2457 = vmatpush1.xpose.msra.mxu0 0.0
      %2458 = vmatprep.subr.mxu0 0.0
      %2459 = vmatpush1.xpose.msra.mxu0 0.0
      %2460 = vmatprep.subr.mxu0 0.0
      %2461 = vmatpush1.xpose.msra.mxu0 0.0
      %2462 = vmatprep.subr.mxu0 0.0
      %2463 = vmatpush1.xpose.msra.mxu0 0.0
      %2464 = vmatprep.subr.mxu0 0.0
      %2465 = vmatpush1.xpose.msra.mxu0 0.0
      %2466 = vmatprep.subr.mxu0 0.0
      %2467 = vmatpush1.xpose.msra.mxu0 0.0
      %2468 = vmatprep.subr.mxu0 0.0
      %2469 = vmatpush1.xpose.msra.mxu0 0.0
      %2470 = vmatprep.subr.mxu0 0.0
      %2471 = vmatpush1.xpose.msra.mxu0 0.0
      %2472 = vmatprep.subr.mxu0 0.0
      %2473 = vmatpush1.xpose.msra.mxu0 0.0
      %2474 = vmatprep.subr.mxu0 0.0
      %2475 = vmatpush1.xpose.msra.mxu0 0.0
      %2476 = vmatprep.subr.mxu0 0.0
      %2477 = vmatpush1.xpose.msra.mxu0 0.0
      %2478 = vmatprep.subr.mxu0 0.0
      %2479 = vmatpush1.xpose.msra.mxu0 0.0
      %2480 = vmatprep.subr.mxu0 0.0
      %2481 = vmatpush1.xpose.msra.mxu0 0.0
      %2482 = vmatprep.subr.mxu0 0.0
      %2483 = vmatpush1.xpose.msra.mxu0 0.0
      %2484 = vmatprep.subr.mxu0 0.0
      %2485 = vmatpush1.xpose.msra.mxu0 0.0
      %2486 = vmatprep.subr.mxu0 0.0
      %2487 = vmatpush1.xpose.msra.mxu0 0.0
      %2488 = vmatprep.subr.mxu0 0.0
      %2489 = vmatpush1.xpose.msra.mxu0 0.0
      %2490 = vmatprep.subr.mxu0 0.0
      %2491 = vmatpush1.xpose.msra.mxu0 0.0
      %2492 = vmatprep.subr.mxu0 0.0
      %2493 = vmatpush1.xpose.msra.mxu0 0.0
      %2494 = vmatprep.subr.mxu0 0.0
      %2495 = vmatpush1.xpose.msra.mxu0 0.0
      %2496 = vmatprep.subr.mxu0 0.0
      %2497 = vmatpush1.xpose.msra.mxu0 0.0
      %2498 = vmatprep.subr.mxu0 0.0
      %2499 = vmatpush1.xpose.msra.mxu0 0.0
      %2500 = vmatprep.subr.mxu0 0.0
      %2501 = vmatpush1.xpose.msra.mxu0 0.0
      %2502 = vmatprep.subr.mxu0 0.0
      %2503 = vmatpush1.xpose.msra.mxu0 0.0
      %2504 = vmatprep.subr.mxu0 0.0
      %2505 = vmatpush1.xpose.msra.mxu0 0.0
      %2506 = vmatprep.subr.mxu0 0.0
      %2507 = vmatpush1.xpose.msra.mxu0 0.0
      %2508 = vmatprep.subr.mxu0 0.0
      %2509 = vmatpush1.xpose.msra.mxu0 0.0
      %2510 = vmatprep.mubr.f32.mxu0 0.0
      %2511 = vmatmul.mubr.f32.gmra.mrb[0].mxu0 %v2438
      %v2512 = vpop.f32.mrb[0].mxu0
      %v2513 = vadd.f32 0.0, %v2512
      %v2514 = vpop.f32.mrb[0].mxu0
      %2515 = vdwg.mxu0
      %v2517 = vsel %vm461, %v423, 0
      %v2520 = vsel %vm461, %v321, 0
      %v2523 = vsel %vm461, %v322, 0
      %2525 = vmatprep.subr.mxu0 0.0
      %2526 = vmatpush1.xpose.msra.mxu0 %v2520
      %2527 = vmatprep.subr.mxu0 0.0
      %2528 = vmatpush1.xpose.msra.mxu0 %v2523
      %2529 = vmatprep.subr.mxu0 0.0
      %2530 = vmatpush1.xpose.msra.mxu0 0.0
      %2531 = vmatprep.subr.mxu0 0.0
      %2532 = vmatpush1.xpose.msra.mxu0 0.0
      %2533 = vmatprep.subr.mxu0 0.0
      %2534 = vmatpush1.xpose.msra.mxu0 0.0
      %2535 = vmatprep.subr.mxu0 0.0
      %2536 = vmatpush1.xpose.msra.mxu0 0.0
      %2537 = vmatprep.subr.mxu0 0.0
      %2538 = vmatpush1.xpose.msra.mxu0 0.0
      %2539 = vmatprep.subr.mxu0 0.0
      %2540 = vmatpush1.xpose.msra.mxu0 0.0
      %2541 = vmatprep.subr.mxu0 0.0
      %2542 = vmatpush1.xpose.msra.mxu0 0.0
      %2543 = vmatprep.subr.mxu0 0.0
      %2544 = vmatpush1.xpose.msra.mxu0 0.0
      %2545 = vmatprep.subr.mxu0 0.0
      %2546 = vmatpush1.xpose.msra.mxu0 0.0
      %2547 = vmatprep.subr.mxu0 0.0
      %2548 = vmatpush1.xpose.msra.mxu0 0.0
      %2549 = vmatprep.subr.mxu0 0.0
      %2550 = vmatpush1.xpose.msra.mxu0 0.0
      %2551 = vmatprep.subr.mxu0 0.0
      %2552 = vmatpush1.xpose.msra.mxu0 0.0
      %2553 = vmatprep.subr.mxu0 0.0
      %2554 = vmatpush1.xpose.msra.mxu0 0.0
      %2555 = vmatprep.subr.mxu0 0.0
      %2556 = vmatpush1.xpose.msra.mxu0 0.0
      %2557 = vmatprep.subr.mxu0 0.0
      %2558 = vmatpush1.xpose.msra.mxu0 0.0
      %2559 = vmatprep.subr.mxu0 0.0
      %2560 = vmatpush1.xpose.msra.mxu0 0.0
      %2561 = vmatprep.subr.mxu0 0.0
      %2562 = vmatpush1.xpose.msra.mxu0 0.0
      %2563 = vmatprep.subr.mxu0 0.0
      %2564 = vmatpush1.xpose.msra.mxu0 0.0
      %2565 = vmatprep.subr.mxu0 0.0
      %2566 = vmatpush1.xpose.msra.mxu0 0.0
      %2567 = vmatprep.subr.mxu0 0.0
      %2568 = vmatpush1.xpose.msra.mxu0 0.0
      %2569 = vmatprep.subr.mxu0 0.0
      %2570 = vmatpush1.xpose.msra.mxu0 0.0
      %2571 = vmatprep.subr.mxu0 0.0
      %2572 = vmatpush1.xpose.msra.mxu0 0.0
      %2573 = vmatprep.subr.mxu0 0.0
      %2574 = vmatpush1.xpose.msra.mxu0 0.0
      %2575 = vmatprep.subr.mxu0 0.0
      %2576 = vmatpush1.xpose.msra.mxu0 0.0
      %2577 = vmatprep.subr.mxu0 0.0
      %2578 = vmatpush1.xpose.msra.mxu0 0.0
      %2579 = vmatprep.subr.mxu0 0.0
      %2580 = vmatpush1.xpose.msra.mxu0 0.0
      %2581 = vmatprep.subr.mxu0 0.0
      %2582 = vmatpush1.xpose.msra.mxu0 0.0
      %2583 = vmatprep.subr.mxu0 0.0
      %2584 = vmatpush1.xpose.msra.mxu0 0.0
      %2585 = vmatprep.subr.mxu0 0.0
      %2586 = vmatpush1.xpose.msra.mxu0 0.0
      %2587 = vmatprep.subr.mxu0 0.0
      %2588 = vmatpush1.xpose.msra.mxu0 0.0
      %2589 = vmatprep.mubr.f32.mxu0 0.0
      %2590 = vmatmul.mubr.f32.gmra.mrb[0].mxu0 %v2517
      %v2591 = vpop.f32.mrb[0].mxu0
      %v2592 = vadd.f32 0.0, %v2591
      %v2593 = vpop.f32.mrb[0].mxu0
      %2594 = vdwg.mxu0
      %v2596 = vsel %vm461, %v424, 0
      %v2599 = vsel %vm461, %v323, 0
      %v2602 = vsel %vm461, %v324, 0
      %2604 = vmatprep.subr.mxu0 0.0
      %2605 = vmatpush1.xpose.msra.mxu0 %v2599
      %2606 = vmatprep.subr.mxu0 0.0
      %2607 = vmatpush1.xpose.msra.mxu0 %v2602
      %2608 = vmatprep.subr.mxu0 0.0
      %2609 = vmatpush1.xpose.msra.mxu0 0.0
      %2610 = vmatprep.subr.mxu0 0.0
      %2611 = vmatpush1.xpose.msra.mxu0 0.0
      %2612 = vmatprep.subr.mxu0 0.0
      %2613 = vmatpush1.xpose.msra.mxu0 0.0
      %2614 = vmatprep.subr.mxu0 0.0
      %2615 = vmatpush1.xpose.msra.mxu0 0.0
      %2616 = vmatprep.subr.mxu0 0.0
      %2617 = vmatpush1.xpose.msra.mxu0 0.0
      %2618 = vmatprep.subr.mxu0 0.0
      %2619 = vmatpush1.xpose.msra.mxu0 0.0
      %2620 = vmatprep.subr.mxu0 0.0
      %2621 = vmatpush1.xpose.msra.mxu0 0.0
      %2622 = vmatprep.subr.mxu0 0.0
      %2623 = vmatpush1.xpose.msra.mxu0 0.0
      %2624 = vmatprep.subr.mxu0 0.0
      %2625 = vmatpush1.xpose.msra.mxu0 0.0
      %2626 = vmatprep.subr.mxu0 0.0
      %2627 = vmatpush1.xpose.msra.mxu0 0.0
      %2628 = vmatprep.subr.mxu0 0.0
      %2629 = vmatpush1.xpose.msra.mxu0 0.0
      %2630 = vmatprep.subr.mxu0 0.0
      %2631 = vmatpush1.xpose.msra.mxu0 0.0
      %2632 = vmatprep.subr.mxu0 0.0
      %2633 = vmatpush1.xpose.msra.mxu0 0.0
      %2634 = vmatprep.subr.mxu0 0.0
      %2635 = vmatpush1.xpose.msra.mxu0 0.0
      %2636 = vmatprep.subr.mxu0 0.0
      %2637 = vmatpush1.xpose.msra.mxu0 0.0
      %2638 = vmatprep.subr.mxu0 0.0
      %2639 = vmatpush1.xpose.msra.mxu0 0.0
      %2640 = vmatprep.subr.mxu0 0.0
      %2641 = vmatpush1.xpose.msra.mxu0 0.0
      %2642 = vmatprep.subr.mxu0 0.0
      %2643 = vmatpush1.xpose.msra.mxu0 0.0
      %2644 = vmatprep.subr.mxu0 0.0
      %2645 = vmatpush1.xpose.msra.mxu0 0.0
      %2646 = vmatprep.subr.mxu0 0.0
      %2647 = vmatpush1.xpose.msra.mxu0 0.0
      %2648 = vmatprep.subr.mxu0 0.0
      %2649 = vmatpush1.xpose.msra.mxu0 0.0
      %2650 = vmatprep.subr.mxu0 0.0
      %2651 = vmatpush1.xpose.msra.mxu0 0.0
      %2652 = vmatprep.subr.mxu0 0.0
      %2653 = vmatpush1.xpose.msra.mxu0 0.0
      %2654 = vmatprep.subr.mxu0 0.0
      %2655 = vmatpush1.xpose.msra.mxu0 0.0
      %2656 = vmatprep.subr.mxu0 0.0
      %2657 = vmatpush1.xpose.msra.mxu0 0.0
      %2658 = vmatprep.subr.mxu0 0.0
      %2659 = vmatpush1.xpose.msra.mxu0 0.0
      %2660 = vmatprep.subr.mxu0 0.0
      %2661 = vmatpush1.xpose.msra.mxu0 0.0
      %2662 = vmatprep.subr.mxu0 0.0
      %2663 = vmatpush1.xpose.msra.mxu0 0.0
      %2664 = vmatprep.subr.mxu0 0.0
      %2665 = vmatpush1.xpose.msra.mxu0 0.0
      %2666 = vmatprep.subr.mxu0 0.0
      %2667 = vmatpush1.xpose.msra.mxu0 0.0
      %2668 = vmatprep.mubr.f32.mxu0 0.0
      %2669 = vmatmul.mubr.f32.gmra.mrb[0].mxu0 %v2596
      %v2670 = vpop.f32.mrb[0].mxu0
      %v2671 = vadd.f32 0.0, %v2670
      %v2672 = vpop.f32.mrb[0].mxu0
      %2673 = vdwg.mxu0
      %v2675 = vsel %vm461, %v425, 0
      %v2678 = vsel %vm461, %v325, 0
      %v2681 = vsel %vm461, %v326, 0
      %2683 = vmatprep.subr.mxu0 0.0
      %2684 = vmatpush1.xpose.msra.mxu0 %v2678
      %2685 = vmatprep.subr.mxu0 0.0
      %2686 = vmatpush1.xpose.msra.mxu0 %v2681
      %2687 = vmatprep.subr.mxu0 0.0
      %2688 = vmatpush1.xpose.msra.mxu0 0.0
      %2689 = vmatprep.subr.mxu0 0.0
      %2690 = vmatpush1.xpose.msra.mxu0 0.0
      %2691 = vmatprep.subr.mxu0 0.0
      %2692 = vmatpush1.xpose.msra.mxu0 0.0
      %2693 = vmatprep.subr.mxu0 0.0
      %2694 = vmatpush1.xpose.msra.mxu0 0.0
      %2695 = vmatprep.subr.mxu0 0.0
      %2696 = vmatpush1.xpose.msra.mxu0 0.0
      %2697 = vmatprep.subr.mxu0 0.0
      %2698 = vmatpush1.xpose.msra.mxu0 0.0
      %2699 = vmatprep.subr.mxu0 0.0
      %2700 = vmatpush1.xpose.msra.mxu0 0.0
      %2701 = vmatprep.subr.mxu0 0.0
      %2702 = vmatpush1.xpose.msra.mxu0 0.0
      %2703 = vmatprep.subr.mxu0 0.0
      %2704 = vmatpush1.xpose.msra.mxu0 0.0
      %2705 = vmatprep.subr.mxu0 0.0
      %2706 = vmatpush1.xpose.msra.mxu0 0.0
      %2707 = vmatprep.subr.mxu0 0.0
      %2708 = vmatpush1.xpose.msra.mxu0 0.0
      %2709 = vmatprep.subr.mxu0 0.0
      %2710 = vmatpush1.xpose.msra.mxu0 0.0
      %2711 = vmatprep.subr.mxu0 0.0
      %2712 = vmatpush1.xpose.msra.mxu0 0.0
      %2713 = vmatprep.subr.mxu0 0.0
      %2714 = vmatpush1.xpose.msra.mxu0 0.0
      %2715 = vmatprep.subr.mxu0 0.0
      %2716 = vmatpush1.xpose.msra.mxu0 0.0
      %2717 = vmatprep.subr.mxu0 0.0
      %2718 = vmatpush1.xpose.msra.mxu0 0.0
      %2719 = vmatprep.subr.mxu0 0.0
      %2720 = vmatpush1.xpose.msra.mxu0 0.0
      %2721 = vmatprep.subr.mxu0 0.0
      %2722 = vmatpush1.xpose.msra.mxu0 0.0
      %2723 = vmatprep.subr.mxu0 0.0
      %2724 = vmatpush1.xpose.msra.mxu0 0.0
      %2725 = vmatprep.subr.mxu0 0.0
      %2726 = vmatpush1.xpose.msra.mxu0 0.0
      %2727 = vmatprep.subr.mxu0 0.0
      %2728 = vmatpush1.xpose.msra.mxu0 0.0
      %2729 = vmatprep.subr.mxu0 0.0
      %2730 = vmatpush1.xpose.msra.mxu0 0.0
      %2731 = vmatprep.subr.mxu0 0.0
      %2732 = vmatpush1.xpose.msra.mxu0 0.0
      %2733 = vmatprep.subr.mxu0 0.0
      %2734 = vmatpush1.xpose.msra.mxu0 0.0
      %2735 = vmatprep.subr.mxu0 0.0
      %2736 = vmatpush1.xpose.msra.mxu0 0.0
      %2737 = vmatprep.subr.mxu0 0.0
      %2738 = vmatpush1.xpose.msra.mxu0 0.0
      %2739 = vmatprep.subr.mxu0 0.0
      %2740 = vmatpush1.xpose.msra.mxu0 0.0
      %2741 = vmatprep.subr.mxu0 0.0
      %2742 = vmatpush1.xpose.msra.mxu0 0.0
      %2743 = vmatprep.subr.mxu0 0.0
      %2744 = vmatpush1.xpose.msra.mxu0 0.0
      %2745 = vmatprep.subr.mxu0 0.0
      %2746 = vmatpush1.xpose.msra.mxu0 0.0
      %2747 = vmatprep.mubr.f32.mxu0 0.0
      %2748 = vmatmul.mubr.f32.gmra.mrb[0].mxu0 %v2675
      %v2749 = vpop.f32.mrb[0].mxu0
      %v2750 = vadd.f32 0.0, %v2749
      %v2751 = vpop.f32.mrb[0].mxu0
      %2752 = vdwg.mxu0
      %v2754 = vsel %vm461, %v426, 0
      %v2757 = vsel %vm461, %v327, 0
      %v2760 = vsel %vm461, %v328, 0
      %2762 = vmatprep.subr.mxu0 0.0
      %2763 = vmatpush1.xpose.msra.mxu0 %v2757
      %2764 = vmatprep.subr.mxu0 0.0
      %2765 = vmatpush1.xpose.msra.mxu0 %v2760
      %2766 = vmatprep.subr.mxu0 0.0
      %2767 = vmatpush1.xpose.msra.mxu0 0.0
      %2768 = vmatprep.subr.mxu0 0.0
      %2769 = vmatpush1.xpose.msra.mxu0 0.0
      %2770 = vmatprep.subr.mxu0 0.0
      %2771 = vmatpush1.xpose.msra.mxu0 0.0
      %2772 = vmatprep.subr.mxu0 0.0
      %2773 = vmatpush1.xpose.msra.mxu0 0.0
      %2774 = vmatprep.subr.mxu0 0.0
      %2775 = vmatpush1.xpose.msra.mxu0 0.0
      %2776 = vmatprep.subr.mxu0 0.0
      %2777 = vmatpush1.xpose.msra.mxu0 0.0
      %2778 = vmatprep.subr.mxu0 0.0
      %2779 = vmatpush1.xpose.msra.mxu0 0.0
      %2780 = vmatprep.subr.mxu0 0.0
      %2781 = vmatpush1.xpose.msra.mxu0 0.0
      %2782 = vmatprep.subr.mxu0 0.0
      %2783 = vmatpush1.xpose.msra.mxu0 0.0
      %2784 = vmatprep.subr.mxu0 0.0
      %2785 = vmatpush1.xpose.msra.mxu0 0.0
      %2786 = vmatprep.subr.mxu0 0.0
      %2787 = vmatpush1.xpose.msra.mxu0 0.0
      %2788 = vmatprep.subr.mxu0 0.0
      %2789 = vmatpush1.xpose.msra.mxu0 0.0
      %2790 = vmatprep.subr.mxu0 0.0
      %2791 = vmatpush1.xpose.msra.mxu0 0.0
      %2792 = vmatprep.subr.mxu0 0.0
      %2793 = vmatpush1.xpose.msra.mxu0 0.0
      %2794 = vmatprep.subr.mxu0 0.0
      %2795 = vmatpush1.xpose.msra.mxu0 0.0
      %2796 = vmatprep.subr.mxu0 0.0
      %2797 = vmatpush1.xpose.msra.mxu0 0.0
      %2798 = vmatprep.subr.mxu0 0.0
      %2799 = vmatpush1.xpose.msra.mxu0 0.0
      %2800 = vmatprep.subr.mxu0 0.0
      %2801 = vmatpush1.xpose.msra.mxu0 0.0
      %2802 = vmatprep.subr.mxu0 0.0
      %2803 = vmatpush1.xpose.msra.mxu0 0.0
      %2804 = vmatprep.subr.mxu0 0.0
      %2805 = vmatpush1.xpose.msra.mxu0 0.0
      %2806 = vmatprep.subr.mxu0 0.0
      %2807 = vmatpush1.xpose.msra.mxu0 0.0
      %2808 = vmatprep.subr.mxu0 0.0
      %2809 = vmatpush1.xpose.msra.mxu0 0.0
      %2810 = vmatprep.subr.mxu0 0.0
      %2811 = vmatpush1.xpose.msra.mxu0 0.0
      %2812 = vmatprep.subr.mxu0 0.0
      %2813 = vmatpush1.xpose.msra.mxu0 0.0
      %2814 = vmatprep.subr.mxu0 0.0
      %2815 = vmatpush1.xpose.msra.mxu0 0.0
      %2816 = vmatprep.subr.mxu0 0.0
      %2817 = vmatpush1.xpose.msra.mxu0 0.0
      %2818 = vmatprep.subr.mxu0 0.0
      %2819 = vmatpush1.xpose.msra.mxu0 0.0
      %2820 = vmatprep.subr.mxu0 0.0
      %2821 = vmatpush1.xpose.msra.mxu0 0.0
      %2822 = vmatprep.subr.mxu0 0.0
      %2823 = vmatpush1.xpose.msra.mxu0 0.0
      %2824 = vmatprep.subr.mxu0 0.0
      %2825 = vmatpush1.xpose.msra.mxu0 0.0
      %2826 = vmatprep.mubr.f32.mxu0 0.0
      %2827 = vmatmul.mubr.f32.gmra.mrb[0].mxu0 %v2754
      %v2828 = vpop.f32.mrb[0].mxu0
      %v2829 = vadd.f32 0.0, %v2828
      %v2830 = vpop.f32.mrb[0].mxu0
      %2831 = vdwg.mxu0
      %v2833 = vsel %vm461, %v427, 0
      %v2836 = vsel %vm461, %v329, 0
      %v2839 = vsel %vm461, %v330, 0
      %2841 = vmatprep.subr.mxu0 0.0
      %2842 = vmatpush1.xpose.msra.mxu0 %v2836
      %2843 = vmatprep.subr.mxu0 0.0
      %2844 = vmatpush1.xpose.msra.mxu0 %v2839
      %2845 = vmatprep.subr.mxu0 0.0
      %2846 = vmatpush1.xpose.msra.mxu0 0.0
      %2847 = vmatprep.subr.mxu0 0.0
      %2848 = vmatpush1.xpose.msra.mxu0 0.0
      %2849 = vmatprep.subr.mxu0 0.0
      %2850 = vmatpush1.xpose.msra.mxu0 0.0
      %2851 = vmatprep.subr.mxu0 0.0
      %2852 = vmatpush1.xpose.msra.mxu0 0.0
      %2853 = vmatprep.subr.mxu0 0.0
      %2854 = vmatpush1.xpose.msra.mxu0 0.0
      %2855 = vmatprep.subr.mxu0 0.0
      %2856 = vmatpush1.xpose.msra.mxu0 0.0
      %2857 = vmatprep.subr.mxu0 0.0
      %2858 = vmatpush1.xpose.msra.mxu0 0.0
      %2859 = vmatprep.subr.mxu0 0.0
      %2860 = vmatpush1.xpose.msra.mxu0 0.0
      %2861 = vmatprep.subr.mxu0 0.0
      %2862 = vmatpush1.xpose.msra.mxu0 0.0
      %2863 = vmatprep.subr.mxu0 0.0
      %2864 = vmatpush1.xpose.msra.mxu0 0.0
      %2865 = vmatprep.subr.mxu0 0.0
      %2866 = vmatpush1.xpose.msra.mxu0 0.0
      %2867 = vmatprep.subr.mxu0 0.0
      %2868 = vmatpush1.xpose.msra.mxu0 0.0
      %2869 = vmatprep.subr.mxu0 0.0
      %2870 = vmatpush1.xpose.msra.mxu0 0.0
      %2871 = vmatprep.subr.mxu0 0.0
      %2872 = vmatpush1.xpose.msra.mxu0 0.0
      %2873 = vmatprep.subr.mxu0 0.0
      %2874 = vmatpush1.xpose.msra.mxu0 0.0
      %2875 = vmatprep.subr.mxu0 0.0
      %2876 = vmatpush1.xpose.msra.mxu0 0.0
      %2877 = vmatprep.subr.mxu0 0.0
      %2878 = vmatpush1.xpose.msra.mxu0 0.0
      %2879 = vmatprep.subr.mxu0 0.0
      %2880 = vmatpush1.xpose.msra.mxu0 0.0
      %2881 = vmatprep.subr.mxu0 0.0
      %2882 = vmatpush1.xpose.msra.mxu0 0.0
      %2883 = vmatprep.subr.mxu0 0.0
      %2884 = vmatpush1.xpose.msra.mxu0 0.0
      %2885 = vmatprep.subr.mxu0 0.0
      %2886 = vmatpush1.xpose.msra.mxu0 0.0
      %2887 = vmatprep.subr.mxu0 0.0
      %2888 = vmatpush1.xpose.msra.mxu0 0.0
      %2889 = vmatprep.subr.mxu0 0.0
      %2890 = vmatpush1.xpose.msra.mxu0 0.0
      %2891 = vmatprep.subr.mxu0 0.0
      %2892 = vmatpush1.xpose.msra.mxu0 0.0
      %2893 = vmatprep.subr.mxu0 0.0
      %2894 = vmatpush1.xpose.msra.mxu0 0.0
      %2895 = vmatprep.subr.mxu0 0.0
      %2896 = vmatpush1.xpose.msra.mxu0 0.0
      %2897 = vmatprep.subr.mxu0 0.0
      %2898 = vmatpush1.xpose.msra.mxu0 0.0
      %2899 = vmatprep.subr.mxu0 0.0
      %2900 = vmatpush1.xpose.msra.mxu0 0.0
      %2901 = vmatprep.subr.mxu0 0.0
      %2902 = vmatpush1.xpose.msra.mxu0 0.0
      %2903 = vmatprep.subr.mxu0 0.0
      %2904 = vmatpush1.xpose.msra.mxu0 0.0
      %2905 = vmatprep.mubr.f32.mxu0 0.0
      %2906 = vmatmul.mubr.f32.gmra.mrb[0].mxu0 %v2833
      %v2907 = vpop.f32.mrb[0].mxu0
      %v2908 = vadd.f32 0.0, %v2907
      %v2909 = vpop.f32.mrb[0].mxu0
      %2910 = vdwg.mxu0
      %v2912 = vsel %vm461, %v428, 0
      %v2915 = vsel %vm461, %v331, 0
      %v2918 = vsel %vm461, %v332, 0
      %2920 = vmatprep.subr.mxu0 0.0
      %2921 = vmatpush1.xpose.msra.mxu0 %v2915
      %2922 = vmatprep.subr.mxu0 0.0
      %2923 = vmatpush1.xpose.msra.mxu0 %v2918
      %2924 = vmatprep.subr.mxu0 0.0
      %2925 = vmatpush1.xpose.msra.mxu0 0.0
      %2926 = vmatprep.subr.mxu0 0.0
      %2927 = vmatpush1.xpose.msra.mxu0 0.0
      %2928 = vmatprep.subr.mxu0 0.0
      %2929 = vmatpush1.xpose.msra.mxu0 0.0
      %2930 = vmatprep.subr.mxu0 0.0
      %2931 = vmatpush1.xpose.msra.mxu0 0.0
      %2932 = vmatprep.subr.mxu0 0.0
      %2933 = vmatpush1.xpose.msra.mxu0 0.0
      %2934 = vmatprep.subr.mxu0 0.0
      %2935 = vmatpush1.xpose.msra.mxu0 0.0
      %2936 = vmatprep.subr.mxu0 0.0
      %2937 = vmatpush1.xpose.msra.mxu0 0.0
      %2938 = vmatprep.subr.mxu0 0.0
      %2939 = vmatpush1.xpose.msra.mxu0 0.0
      %2940 = vmatprep.subr.mxu0 0.0
      %2941 = vmatpush1.xpose.msra.mxu0 0.0
      %2942 = vmatprep.subr.mxu0 0.0
      %2943 = vmatpush1.xpose.msra.mxu0 0.0
      %2944 = vmatprep.subr.mxu0 0.0
      %2945 = vmatpush1.xpose.msra.mxu0 0.0
      %2946 = vmatprep.subr.mxu0 0.0
      %2947 = vmatpush1.xpose.msra.mxu0 0.0
      %2948 = vmatprep.subr.mxu0 0.0
      %2949 = vmatpush1.xpose.msra.mxu0 0.0
      %2950 = vmatprep.subr.mxu0 0.0
      %2951 = vmatpush1.xpose.msra.mxu0 0.0
      %2952 = vmatprep.subr.mxu0 0.0
      %2953 = vmatpush1.xpose.msra.mxu0 0.0
      %2954 = vmatprep.subr.mxu0 0.0
      %2955 = vmatpush1.xpose.msra.mxu0 0.0
      %2956 = vmatprep.subr.mxu0 0.0
      %2957 = vmatpush1.xpose.msra.mxu0 0.0
      %2958 = vmatprep.subr.mxu0 0.0
      %2959 = vmatpush1.xpose.msra.mxu0 0.0
      %2960 = vmatprep.subr.mxu0 0.0
      %2961 = vmatpush1.xpose.msra.mxu0 0.0
      %2962 = vmatprep.subr.mxu0 0.0
      %2963 = vmatpush1.xpose.msra.mxu0 0.0
      %2964 = vmatprep.subr.mxu0 0.0
      %2965 = vmatpush1.xpose.msra.mxu0 0.0
      %2966 = vmatprep.subr.mxu0 0.0
      %2967 = vmatpush1.xpose.msra.mxu0 0.0
      %2968 = vmatprep.subr.mxu0 0.0
      %2969 = vmatpush1.xpose.msra.mxu0 0.0
      %2970 = vmatprep.subr.mxu0 0.0
      %2971 = vmatpush1.xpose.msra.mxu0 0.0
      %2972 = vmatprep.subr.mxu0 0.0
      %2973 = vmatpush1.xpose.msra.mxu0 0.0
      %2974 = vmatprep.subr.mxu0 0.0
      %2975 = vmatpush1.xpose.msra.mxu0 0.0
      %2976 = vmatprep.subr.mxu0 0.0
      %2977 = vmatpush1.xpose.msra.mxu0 0.0
      %2978 = vmatprep.subr.mxu0 0.0
      %2979 = vmatpush1.xpose.msra.mxu0 0.0
      %2980 = vmatprep.subr.mxu0 0.0
      %2981 = vmatpush1.xpose.msra.mxu0 0.0
      %2982 = vmatprep.subr.mxu0 0.0
      %2983 = vmatpush1.xpose.msra.mxu0 0.0
      %2984 = vmatprep.mubr.f32.mxu0 0.0
      %2985 = vmatmul.mubr.f32.gmra.mrb[0].mxu0 %v2912
      %v2986 = vpop.f32.mrb[0].mxu0
      %v2987 = vadd.f32 0.0, %v2986
      %v2988 = vpop.f32.mrb[0].mxu0
      %2989 = vdwg.mxu0
      %v2991 = vsel %vm461, %v429, 0
      %v2994 = vsel %vm461, %v333, 0
      %v2997 = vsel %vm461, %v334, 0
      %2999 = vmatprep.subr.mxu0 0.0
      %3000 = vmatpush1.xpose.msra.mxu0 %v2994
      %3001 = vmatprep.subr.mxu0 0.0
      %3002 = vmatpush1.xpose.msra.mxu0 %v2997
      %3003 = vmatprep.subr.mxu0 0.0
      %3004 = vmatpush1.xpose.msra.mxu0 0.0
      %3005 = vmatprep.subr.mxu0 0.0
      %3006 = vmatpush1.xpose.msra.mxu0 0.0
      %3007 = vmatprep.subr.mxu0 0.0
      %3008 = vmatpush1.xpose.msra.mxu0 0.0
      %3009 = vmatprep.subr.mxu0 0.0
      %3010 = vmatpush1.xpose.msra.mxu0 0.0
      %3011 = vmatprep.subr.mxu0 0.0
      %3012 = vmatpush1.xpose.msra.mxu0 0.0
      %3013 = vmatprep.subr.mxu0 0.0
      %3014 = vmatpush1.xpose.msra.mxu0 0.0
      %3015 = vmatprep.subr.mxu0 0.0
      %3016 = vmatpush1.xpose.msra.mxu0 0.0
      %3017 = vmatprep.subr.mxu0 0.0
      %3018 = vmatpush1.xpose.msra.mxu0 0.0
      %3019 = vmatprep.subr.mxu0 0.0
      %3020 = vmatpush1.xpose.msra.mxu0 0.0
      %3021 = vmatprep.subr.mxu0 0.0
      %3022 = vmatpush1.xpose.msra.mxu0 0.0
      %3023 = vmatprep.subr.mxu0 0.0
      %3024 = vmatpush1.xpose.msra.mxu0 0.0
      %3025 = vmatprep.subr.mxu0 0.0
      %3026 = vmatpush1.xpose.msra.mxu0 0.0
      %3027 = vmatprep.subr.mxu0 0.0
      %3028 = vmatpush1.xpose.msra.mxu0 0.0
      %3029 = vmatprep.subr.mxu0 0.0
      %3030 = vmatpush1.xpose.msra.mxu0 0.0
      %3031 = vmatprep.subr.mxu0 0.0
      %3032 = vmatpush1.xpose.msra.mxu0 0.0
      %3033 = vmatprep.subr.mxu0 0.0
      %3034 = vmatpush1.xpose.msra.mxu0 0.0
      %3035 = vmatprep.subr.mxu0 0.0
      %3036 = vmatpush1.xpose.msra.mxu0 0.0
      %3037 = vmatprep.subr.mxu0 0.0
      %3038 = vmatpush1.xpose.msra.mxu0 0.0
      %3039 = vmatprep.subr.mxu0 0.0
      %3040 = vmatpush1.xpose.msra.mxu0 0.0
      %3041 = vmatprep.subr.mxu0 0.0
      %3042 = vmatpush1.xpose.msra.mxu0 0.0
      %3043 = vmatprep.subr.mxu0 0.0
      %3044 = vmatpush1.xpose.msra.mxu0 0.0
      %3045 = vmatprep.subr.mxu0 0.0
      %3046 = vmatpush1.xpose.msra.mxu0 0.0
      %3047 = vmatprep.subr.mxu0 0.0
      %3048 = vmatpush1.xpose.msra.mxu0 0.0
      %3049 = vmatprep.subr.mxu0 0.0
      %3050 = vmatpush1.xpose.msra.mxu0 0.0
      %3051 = vmatprep.subr.mxu0 0.0
      %3052 = vmatpush1.xpose.msra.mxu0 0.0
      %3053 = vmatprep.subr.mxu0 0.0
      %3054 = vmatpush1.xpose.msra.mxu0 0.0
      %3055 = vmatprep.subr.mxu0 0.0
      %3056 = vmatpush1.xpose.msra.mxu0 0.0
      %3057 = vmatprep.subr.mxu0 0.0
      %3058 = vmatpush1.xpose.msra.mxu0 0.0
      %3059 = vmatprep.subr.mxu0 0.0
      %3060 = vmatpush1.xpose.msra.mxu0 0.0
      %3061 = vmatprep.subr.mxu0 0.0
      %3062 = vmatpush1.xpose.msra.mxu0 0.0
      %3063 = vmatprep.mubr.f32.mxu0 0.0
      %3064 = vmatmul.mubr.f32.gmra.mrb[0].mxu0 %v2991
      %v3065 = vpop.f32.mrb[0].mxu0
      %v3066 = vadd.f32 0.0, %v3065
      %v3067 = vpop.f32.mrb[0].mxu0
      %3068 = vdwg.mxu0
      %v3070 = vsel %vm461, %v430, 0
      %v3073 = vsel %vm461, %v335, 0
      %v3076 = vsel %vm461, %v336, 0
      %3078 = vmatprep.subr.mxu0 0.0
      %3079 = vmatpush1.xpose.msra.mxu0 %v3073
      %3080 = vmatprep.subr.mxu0 0.0
      %3081 = vmatpush1.xpose.msra.mxu0 %v3076
      %3082 = vmatprep.subr.mxu0 0.0
      %3083 = vmatpush1.xpose.msra.mxu0 0.0
      %3084 = vmatprep.subr.mxu0 0.0
      %3085 = vmatpush1.xpose.msra.mxu0 0.0
      %3086 = vmatprep.subr.mxu0 0.0
      %3087 = vmatpush1.xpose.msra.mxu0 0.0
      %3088 = vmatprep.subr.mxu0 0.0
      %3089 = vmatpush1.xpose.msra.mxu0 0.0
      %3090 = vmatprep.subr.mxu0 0.0
      %3091 = vmatpush1.xpose.msra.mxu0 0.0
      %3092 = vmatprep.subr.mxu0 0.0
      %3093 = vmatpush1.xpose.msra.mxu0 0.0
      %3094 = vmatprep.subr.mxu0 0.0
      %3095 = vmatpush1.xpose.msra.mxu0 0.0
      %3096 = vmatprep.subr.mxu0 0.0
      %3097 = vmatpush1.xpose.msra.mxu0 0.0
      %3098 = vmatprep.subr.mxu0 0.0
      %3099 = vmatpush1.xpose.msra.mxu0 0.0
      %3100 = vmatprep.subr.mxu0 0.0
      %3101 = vmatpush1.xpose.msra.mxu0 0.0
      %3102 = vmatprep.subr.mxu0 0.0
      %3103 = vmatpush1.xpose.msra.mxu0 0.0
      %3104 = vmatprep.subr.mxu0 0.0
      %3105 = vmatpush1.xpose.msra.mxu0 0.0
      %3106 = vmatprep.subr.mxu0 0.0
      %3107 = vmatpush1.xpose.msra.mxu0 0.0
      %3108 = vmatprep.subr.mxu0 0.0
      %3109 = vmatpush1.xpose.msra.mxu0 0.0
      %3110 = vmatprep.subr.mxu0 0.0
      %3111 = vmatpush1.xpose.msra.mxu0 0.0
      %3112 = vmatprep.subr.mxu0 0.0
      %3113 = vmatpush1.xpose.msra.mxu0 0.0
      %3114 = vmatprep.subr.mxu0 0.0
      %3115 = vmatpush1.xpose.msra.mxu0 0.0
      %3116 = vmatprep.subr.mxu0 0.0
      %3117 = vmatpush1.xpose.msra.mxu0 0.0
      %3118 = vmatprep.subr.mxu0 0.0
      %3119 = vmatpush1.xpose.msra.mxu0 0.0
      %3120 = vmatprep.subr.mxu0 0.0
      %3121 = vmatpush1.xpose.msra.mxu0 0.0
      %3122 = vmatprep.subr.mxu0 0.0
      %3123 = vmatpush1.xpose.msra.mxu0 0.0
      %3124 = vmatprep.subr.mxu0 0.0
      %3125 = vmatpush1.xpose.msra.mxu0 0.0
      %3126 = vmatprep.subr.mxu0 0.0
      %3127 = vmatpush1.xpose.msra.mxu0 0.0
      %3128 = vmatprep.subr.mxu0 0.0
      %3129 = vmatpush1.xpose.msra.mxu0 0.0
      %3130 = vmatprep.subr.mxu0 0.0
      %3131 = vmatpush1.xpose.msra.mxu0 0.0
      %3132 = vmatprep.subr.mxu0 0.0
      %3133 = vmatpush1.xpose.msra.mxu0 0.0
      %3134 = vmatprep.subr.mxu0 0.0
      %3135 = vmatpush1.xpose.msra.mxu0 0.0
      %3136 = vmatprep.subr.mxu0 0.0
      %3137 = vmatpush1.xpose.msra.mxu0 0.0
      %3138 = vmatprep.subr.mxu0 0.0
      %3139 = vmatpush1.xpose.msra.mxu0 0.0
      %3140 = vmatprep.subr.mxu0 0.0
      %3141 = vmatpush1.xpose.msra.mxu0 0.0
      %3142 = vmatprep.mubr.f32.mxu0 0.0
      %3143 = vmatmul.mubr.f32.gmra.mrb[0].mxu0 %v3070
      %v3144 = vpop.f32.mrb[0].mxu0
      %v3145 = vadd.f32 0.0, %v3144
      %v3146 = vpop.f32.mrb[0].mxu0
      %3147 = vdwg.mxu0
      %v3149 = vsel %vm461, %v431, 0
      %v3152 = vsel %vm461, %v337, 0
      %v3155 = vsel %vm461, %v338, 0
      %3157 = vmatprep.subr.mxu0 0.0
      %3158 = vmatpush1.xpose.msra.mxu0 %v3152
      %3159 = vmatprep.subr.mxu0 0.0
      %3160 = vmatpush1.xpose.msra.mxu0 %v3155
      %3161 = vmatprep.subr.mxu0 0.0
      %3162 = vmatpush1.xpose.msra.mxu0 0.0
      %3163 = vmatprep.subr.mxu0 0.0
      %3164 = vmatpush1.xpose.msra.mxu0 0.0
      %3165 = vmatprep.subr.mxu0 0.0
      %3166 = vmatpush1.xpose.msra.mxu0 0.0
      %3167 = vmatprep.subr.mxu0 0.0
      %3168 = vmatpush1.xpose.msra.mxu0 0.0
      %3169 = vmatprep.subr.mxu0 0.0
      %3170 = vmatpush1.xpose.msra.mxu0 0.0
      %3171 = vmatprep.subr.mxu0 0.0
      %3172 = vmatpush1.xpose.msra.mxu0 0.0
      %3173 = vmatprep.subr.mxu0 0.0
      %3174 = vmatpush1.xpose.msra.mxu0 0.0
      %3175 = vmatprep.subr.mxu0 0.0
      %3176 = vmatpush1.xpose.msra.mxu0 0.0
      %3177 = vmatprep.subr.mxu0 0.0
      %3178 = vmatpush1.xpose.msra.mxu0 0.0
      %3179 = vmatprep.subr.mxu0 0.0
      %3180 = vmatpush1.xpose.msra.mxu0 0.0
      %3181 = vmatprep.subr.mxu0 0.0
      %3182 = vmatpush1.xpose.msra.mxu0 0.0
      %3183 = vmatprep.subr.mxu0 0.0
      %3184 = vmatpush1.xpose.msra.mxu0 0.0
      %3185 = vmatprep.subr.mxu0 0.0
      %3186 = vmatpush1.xpose.msra.mxu0 0.0
      %3187 = vmatprep.subr.mxu0 0.0
      %3188 = vmatpush1.xpose.msra.mxu0 0.0
      %3189 = vmatprep.subr.mxu0 0.0
      %3190 = vmatpush1.xpose.msra.mxu0 0.0
      %3191 = vmatprep.subr.mxu0 0.0
      %3192 = vmatpush1.xpose.msra.mxu0 0.0
      %3193 = vmatprep.subr.mxu0 0.0
      %3194 = vmatpush1.xpose.msra.mxu0 0.0
      %3195 = vmatprep.subr.mxu0 0.0
      %3196 = vmatpush1.xpose.msra.mxu0 0.0
      %3197 = vmatprep.subr.mxu0 0.0
      %3198 = vmatpush1.xpose.msra.mxu0 0.0
      %3199 = vmatprep.subr.mxu0 0.0
      %3200 = vmatpush1.xpose.msra.mxu0 0.0
      %3201 = vmatprep.subr.mxu0 0.0
      %3202 = vmatpush1.xpose.msra.mxu0 0.0
      %3203 = vmatprep.subr.mxu0 0.0
      %3204 = vmatpush1.xpose.msra.mxu0 0.0
      %3205 = vmatprep.subr.mxu0 0.0
      %3206 = vmatpush1.xpose.msra.mxu0 0.0
      %3207 = vmatprep.subr.mxu0 0.0
      %3208 = vmatpush1.xpose.msra.mxu0 0.0
      %3209 = vmatprep.subr.mxu0 0.0
      %3210 = vmatpush1.xpose.msra.mxu0 0.0
      %3211 = vmatprep.subr.mxu0 0.0
      %3212 = vmatpush1.xpose.msra.mxu0 0.0
      %3213 = vmatprep.subr.mxu0 0.0
      %3214 = vmatpush1.xpose.msra.mxu0 0.0
      %3215 = vmatprep.subr.mxu0 0.0
      %3216 = vmatpush1.xpose.msra.mxu0 0.0
      %3217 = vmatprep.subr.mxu0 0.0
      %3218 = vmatpush1.xpose.msra.mxu0 0.0
      %3219 = vmatprep.subr.mxu0 0.0
      %3220 = vmatpush1.xpose.msra.mxu0 0.0
      %3221 = vmatprep.mubr.f32.mxu0 0.0
      %3222 = vmatmul.mubr.f32.gmra.mrb[0].mxu0 %v3149
      %v3223 = vpop.f32.mrb[0].mxu0
      %v3224 = vadd.f32 0.0, %v3223
      %v3225 = vpop.f32.mrb[0].mxu0
      %3226 = vdwg.mxu0
      %v3228 = vsel %vm461, %v432, 0
      %v3231 = vsel %vm461, %v339, 0
      %v3234 = vsel %vm461, %v340, 0
      %3236 = vmatprep.subr.mxu0 0.0
      %3237 = vmatpush1.xpose.msra.mxu0 %v3231
      %3238 = vmatprep.subr.mxu0 0.0
      %3239 = vmatpush1.xpose.msra.mxu0 %v3234
      %3240 = vmatprep.subr.mxu0 0.0
      %3241 = vmatpush1.xpose.msra.mxu0 0.0
      %3242 = vmatprep.subr.mxu0 0.0
      %3243 = vmatpush1.xpose.msra.mxu0 0.0
      %3244 = vmatprep.subr.mxu0 0.0
      %3245 = vmatpush1.xpose.msra.mxu0 0.0
      %3246 = vmatprep.subr.mxu0 0.0
      %3247 = vmatpush1.xpose.msra.mxu0 0.0
      %3248 = vmatprep.subr.mxu0 0.0
      %3249 = vmatpush1.xpose.msra.mxu0 0.0
      %3250 = vmatprep.subr.mxu0 0.0
      %3251 = vmatpush1.xpose.msra.mxu0 0.0
      %3252 = vmatprep.subr.mxu0 0.0
      %3253 = vmatpush1.xpose.msra.mxu0 0.0
      %3254 = vmatprep.subr.mxu0 0.0
      %3255 = vmatpush1.xpose.msra.mxu0 0.0
      %3256 = vmatprep.subr.mxu0 0.0
      %3257 = vmatpush1.xpose.msra.mxu0 0.0
      %3258 = vmatprep.subr.mxu0 0.0
      %3259 = vmatpush1.xpose.msra.mxu0 0.0
      %3260 = vmatprep.subr.mxu0 0.0
      %3261 = vmatpush1.xpose.msra.mxu0 0.0
      %3262 = vmatprep.subr.mxu0 0.0
      %3263 = vmatpush1.xpose.msra.mxu0 0.0
      %3264 = vmatprep.subr.mxu0 0.0
      %3265 = vmatpush1.xpose.msra.mxu0 0.0
      %3266 = vmatprep.subr.mxu0 0.0
      %3267 = vmatpush1.xpose.msra.mxu0 0.0
      %3268 = vmatprep.subr.mxu0 0.0
      %3269 = vmatpush1.xpose.msra.mxu0 0.0
      %3270 = vmatprep.subr.mxu0 0.0
      %3271 = vmatpush1.xpose.msra.mxu0 0.0
      %3272 = vmatprep.subr.mxu0 0.0
      %3273 = vmatpush1.xpose.msra.mxu0 0.0
      %3274 = vmatprep.subr.mxu0 0.0
      %3275 = vmatpush1.xpose.msra.mxu0 0.0
      %3276 = vmatprep.subr.mxu0 0.0
      %3277 = vmatpush1.xpose.msra.mxu0 0.0
      %3278 = vmatprep.subr.mxu0 0.0
      %3279 = vmatpush1.xpose.msra.mxu0 0.0
      %3280 = vmatprep.subr.mxu0 0.0
      %3281 = vmatpush1.xpose.msra.mxu0 0.0
      %3282 = vmatprep.subr.mxu0 0.0
      %3283 = vmatpush1.xpose.msra.mxu0 0.0
      %3284 = vmatprep.subr.mxu0 0.0
      %3285 = vmatpush1.xpose.msra.mxu0 0.0
      %3286 = vmatprep.subr.mxu0 0.0
      %3287 = vmatpush1.xpose.msra.mxu0 0.0
      %3288 = vmatprep.subr.mxu0 0.0
      %3289 = vmatpush1.xpose.msra.mxu0 0.0
      %3290 = vmatprep.subr.mxu0 0.0
      %3291 = vmatpush1.xpose.msra.mxu0 0.0
      %3292 = vmatprep.subr.mxu0 0.0
      %3293 = vmatpush1.xpose.msra.mxu0 0.0
      %3294 = vmatprep.subr.mxu0 0.0
      %3295 = vmatpush1.xpose.msra.mxu0 0.0
      %3296 = vmatprep.subr.mxu0 0.0
      %3297 = vmatpush1.xpose.msra.mxu0 0.0
      %3298 = vmatprep.subr.mxu0 0.0
      %3299 = vmatpush1.xpose.msra.mxu0 0.0
      %3300 = vmatprep.mubr.f32.mxu0 0.0
      %3301 = vmatmul.mubr.f32.gmra.mrb[0].mxu0 %v3228
      %v3302 = vpop.f32.mrb[0].mxu0
      %v3303 = vadd.f32 0.0, %v3302
      %v3304 = vpop.f32.mrb[0].mxu0
      %3305 = vdwg.mxu0
      %v3307 = vsel %vm461, %v433, 0
      %v3310 = vsel %vm461, %v341, 0
      %v3313 = vsel %vm461, %v342, 0
      %3315 = vmatprep.subr.mxu0 0.0
      %3316 = vmatpush1.xpose.msra.mxu0 %v3310
      %3317 = vmatprep.subr.mxu0 0.0
      %3318 = vmatpush1.xpose.msra.mxu0 %v3313
      %3319 = vmatprep.subr.mxu0 0.0
      %3320 = vmatpush1.xpose.msra.mxu0 0.0
      %3321 = vmatprep.subr.mxu0 0.0
      %3322 = vmatpush1.xpose.msra.mxu0 0.0
      %3323 = vmatprep.subr.mxu0 0.0
      %3324 = vmatpush1.xpose.msra.mxu0 0.0
      %3325 = vmatprep.subr.mxu0 0.0
      %3326 = vmatpush1.xpose.msra.mxu0 0.0
      %3327 = vmatprep.subr.mxu0 0.0
      %3328 = vmatpush1.xpose.msra.mxu0 0.0
      %3329 = vmatprep.subr.mxu0 0.0
      %3330 = vmatpush1.xpose.msra.mxu0 0.0
      %3331 = vmatprep.subr.mxu0 0.0
      %3332 = vmatpush1.xpose.msra.mxu0 0.0
      %3333 = vmatprep.subr.mxu0 0.0
      %3334 = vmatpush1.xpose.msra.mxu0 0.0
      %3335 = vmatprep.subr.mxu0 0.0
      %3336 = vmatpush1.xpose.msra.mxu0 0.0
      %3337 = vmatprep.subr.mxu0 0.0
      %3338 = vmatpush1.xpose.msra.mxu0 0.0
      %3339 = vmatprep.subr.mxu0 0.0
      %3340 = vmatpush1.xpose.msra.mxu0 0.0
      %3341 = vmatprep.subr.mxu0 0.0
      %3342 = vmatpush1.xpose.msra.mxu0 0.0
      %3343 = vmatprep.subr.mxu0 0.0
      %3344 = vmatpush1.xpose.msra.mxu0 0.0
      %3345 = vmatprep.subr.mxu0 0.0
      %3346 = vmatpush1.xpose.msra.mxu0 0.0
      %3347 = vmatprep.subr.mxu0 0.0
      %3348 = vmatpush1.xpose.msra.mxu0 0.0
      %3349 = vmatprep.subr.mxu0 0.0
      %3350 = vmatpush1.xpose.msra.mxu0 0.0
      %3351 = vmatprep.subr.mxu0 0.0
      %3352 = vmatpush1.xpose.msra.mxu0 0.0
      %3353 = vmatprep.subr.mxu0 0.0
      %3354 = vmatpush1.xpose.msra.mxu0 0.0
      %3355 = vmatprep.subr.mxu0 0.0
      %3356 = vmatpush1.xpose.msra.mxu0 0.0
      %3357 = vmatprep.subr.mxu0 0.0
      %3358 = vmatpush1.xpose.msra.mxu0 0.0
      %3359 = vmatprep.subr.mxu0 0.0
      %3360 = vmatpush1.xpose.msra.mxu0 0.0
      %3361 = vmatprep.subr.mxu0 0.0
      %3362 = vmatpush1.xpose.msra.mxu0 0.0
      %3363 = vmatprep.subr.mxu0 0.0
      %3364 = vmatpush1.xpose.msra.mxu0 0.0
      %3365 = vmatprep.subr.mxu0 0.0
      %3366 = vmatpush1.xpose.msra.mxu0 0.0
      %3367 = vmatprep.subr.mxu0 0.0
      %3368 = vmatpush1.xpose.msra.mxu0 0.0
      %3369 = vmatprep.subr.mxu0 0.0
      %3370 = vmatpush1.xpose.msra.mxu0 0.0
      %3371 = vmatprep.subr.mxu0 0.0
      %3372 = vmatpush1.xpose.msra.mxu0 0.0
      %3373 = vmatprep.subr.mxu0 0.0
      %3374 = vmatpush1.xpose.msra.mxu0 0.0
      %3375 = vmatprep.subr.mxu0 0.0
      %3376 = vmatpush1.xpose.msra.mxu0 0.0
      %3377 = vmatprep.subr.mxu0 0.0
      %3378 = vmatpush1.xpose.msra.mxu0 0.0
      %3379 = vmatprep.mubr.f32.mxu0 0.0
      %3380 = vmatmul.mubr.f32.gmra.mrb[0].mxu0 %v3307
      %v3381 = vpop.f32.mrb[0].mxu0
      %v3382 = vadd.f32 0.0, %v3381
      %v3383 = vpop.f32.mrb[0].mxu0
      %3384 = vdwg.mxu0
      %v3386 = vsel %vm461, %v434, 0
      %v3389 = vsel %vm461, %v343, 0
      %v3392 = vsel %vm461, %v344, 0
      %3394 = vmatprep.subr.mxu0 0.0
      %3395 = vmatpush1.xpose.msra.mxu0 %v3389
      %3396 = vmatprep.subr.mxu0 0.0
      %3397 = vmatpush1.xpose.msra.mxu0 %v3392
      %3398 = vmatprep.subr.mxu0 0.0
      %3399 = vmatpush1.xpose.msra.mxu0 0.0
      %3400 = vmatprep.subr.mxu0 0.0
      %3401 = vmatpush1.xpose.msra.mxu0 0.0
      %3402 = vmatprep.subr.mxu0 0.0
      %3403 = vmatpush1.xpose.msra.mxu0 0.0
      %3404 = vmatprep.subr.mxu0 0.0
      %3405 = vmatpush1.xpose.msra.mxu0 0.0
      %3406 = vmatprep.subr.mxu0 0.0
      %3407 = vmatpush1.xpose.msra.mxu0 0.0
      %3408 = vmatprep.subr.mxu0 0.0
      %3409 = vmatpush1.xpose.msra.mxu0 0.0
      %3410 = vmatprep.subr.mxu0 0.0
      %3411 = vmatpush1.xpose.msra.mxu0 0.0
      %3412 = vmatprep.subr.mxu0 0.0
      %3413 = vmatpush1.xpose.msra.mxu0 0.0
      %3414 = vmatprep.subr.mxu0 0.0
      %3415 = vmatpush1.xpose.msra.mxu0 0.0
      %3416 = vmatprep.subr.mxu0 0.0
      %3417 = vmatpush1.xpose.msra.mxu0 0.0
      %3418 = vmatprep.subr.mxu0 0.0
      %3419 = vmatpush1.xpose.msra.mxu0 0.0
      %3420 = vmatprep.subr.mxu0 0.0
      %3421 = vmatpush1.xpose.msra.mxu0 0.0
      %3422 = vmatprep.subr.mxu0 0.0
      %3423 = vmatpush1.xpose.msra.mxu0 0.0
      %3424 = vmatprep.subr.mxu0 0.0
      %3425 = vmatpush1.xpose.msra.mxu0 0.0
      %3426 = vmatprep.subr.mxu0 0.0
      %3427 = vmatpush1.xpose.msra.mxu0 0.0
      %3428 = vmatprep.subr.mxu0 0.0
      %3429 = vmatpush1.xpose.msra.mxu0 0.0
      %3430 = vmatprep.subr.mxu0 0.0
      %3431 = vmatpush1.xpose.msra.mxu0 0.0
      %3432 = vmatprep.subr.mxu0 0.0
      %3433 = vmatpush1.xpose.msra.mxu0 0.0
      %3434 = vmatprep.subr.mxu0 0.0
      %3435 = vmatpush1.xpose.msra.mxu0 0.0
      %3436 = vmatprep.subr.mxu0 0.0
      %3437 = vmatpush1.xpose.msra.mxu0 0.0
      %3438 = vmatprep.subr.mxu0 0.0
      %3439 = vmatpush1.xpose.msra.mxu0 0.0
      %3440 = vmatprep.subr.mxu0 0.0
      %3441 = vmatpush1.xpose.msra.mxu0 0.0
      %3442 = vmatprep.subr.mxu0 0.0
      %3443 = vmatpush1.xpose.msra.mxu0 0.0
      %3444 = vmatprep.subr.mxu0 0.0
      %3445 = vmatpush1.xpose.msra.mxu0 0.0
      %3446 = vmatprep.subr.mxu0 0.0
      %3447 = vmatpush1.xpose.msra.mxu0 0.0
      %3448 = vmatprep.subr.mxu0 0.0
      %3449 = vmatpush1.xpose.msra.mxu0 0.0
      %3450 = vmatprep.subr.mxu0 0.0
      %3451 = vmatpush1.xpose.msra.mxu0 0.0
      %3452 = vmatprep.subr.mxu0 0.0
      %3453 = vmatpush1.xpose.msra.mxu0 0.0
      %3454 = vmatprep.subr.mxu0 0.0
      %3455 = vmatpush1.xpose.msra.mxu0 0.0
      %3456 = vmatprep.subr.mxu0 0.0
      %3457 = vmatpush1.xpose.msra.mxu0 0.0
      %3458 = vmatprep.mubr.f32.mxu0 0.0
      %3459 = vmatmul.mubr.f32.gmra.mrb[0].mxu0 %v3386
      %v3460 = vpop.f32.mrb[0].mxu0
      %v3461 = vadd.f32 0.0, %v3460
      %v3462 = vpop.f32.mrb[0].mxu0
      %3463 = vdwg.mxu0
      %v3465 = vsel %vm461, %v435, 0
      %v3468 = vsel %vm461, %v345, 0
      %v3471 = vsel %vm461, %v346, 0
      %3473 = vmatprep.subr.mxu0 0.0
      %3474 = vmatpush1.xpose.msra.mxu0 %v3468
      %3475 = vmatprep.subr.mxu0 0.0
      %3476 = vmatpush1.xpose.msra.mxu0 %v3471
      %3477 = vmatprep.subr.mxu0 0.0
      %3478 = vmatpush1.xpose.msra.mxu0 0.0
      %3479 = vmatprep.subr.mxu0 0.0
      %3480 = vmatpush1.xpose.msra.mxu0 0.0
      %3481 = vmatprep.subr.mxu0 0.0
      %3482 = vmatpush1.xpose.msra.mxu0 0.0
      %3483 = vmatprep.subr.mxu0 0.0
      %3484 = vmatpush1.xpose.msra.mxu0 0.0
      %3485 = vmatprep.subr.mxu0 0.0
      %3486 = vmatpush1.xpose.msra.mxu0 0.0
      %3487 = vmatprep.subr.mxu0 0.0
      %3488 = vmatpush1.xpose.msra.mxu0 0.0
      %3489 = vmatprep.subr.mxu0 0.0
      %3490 = vmatpush1.xpose.msra.mxu0 0.0
      %3491 = vmatprep.subr.mxu0 0.0
      %3492 = vmatpush1.xpose.msra.mxu0 0.0
      %3493 = vmatprep.subr.mxu0 0.0
      %3494 = vmatpush1.xpose.msra.mxu0 0.0
      %3495 = vmatprep.subr.mxu0 0.0
      %3496 = vmatpush1.xpose.msra.mxu0 0.0
      %3497 = vmatprep.subr.mxu0 0.0
      %3498 = vmatpush1.xpose.msra.mxu0 0.0
      %3499 = vmatprep.subr.mxu0 0.0
      %3500 = vmatpush1.xpose.msra.mxu0 0.0
      %3501 = vmatprep.subr.mxu0 0.0
      %3502 = vmatpush1.xpose.msra.mxu0 0.0
      %3503 = vmatprep.subr.mxu0 0.0
      %3504 = vmatpush1.xpose.msra.mxu0 0.0
      %3505 = vmatprep.subr.mxu0 0.0
      %3506 = vmatpush1.xpose.msra.mxu0 0.0
      %3507 = vmatprep.subr.mxu0 0.0
      %3508 = vmatpush1.xpose.msra.mxu0 0.0
      %3509 = vmatprep.subr.mxu0 0.0
      %3510 = vmatpush1.xpose.msra.mxu0 0.0
      %3511 = vmatprep.subr.mxu0 0.0
      %3512 = vmatpush1.xpose.msra.mxu0 0.0
      %3513 = vmatprep.subr.mxu0 0.0
      %3514 = vmatpush1.xpose.msra.mxu0 0.0
      %3515 = vmatprep.subr.mxu0 0.0
      %3516 = vmatpush1.xpose.msra.mxu0 0.0
      %3517 = vmatprep.subr.mxu0 0.0
      %3518 = vmatpush1.xpose.msra.mxu0 0.0
      %3519 = vmatprep.subr.mxu0 0.0
      %3520 = vmatpush1.xpose.msra.mxu0 0.0
      %3521 = vmatprep.subr.mxu0 0.0
      %3522 = vmatpush1.xpose.msra.mxu0 0.0
      %3523 = vmatprep.subr.mxu0 0.0
      %3524 = vmatpush1.xpose.msra.mxu0 0.0
      %3525 = vmatprep.subr.mxu0 0.0
      %3526 = vmatpush1.xpose.msra.mxu0 0.0
      %3527 = vmatprep.subr.mxu0 0.0
      %3528 = vmatpush1.xpose.msra.mxu0 0.0
      %3529 = vmatprep.subr.mxu0 0.0
      %3530 = vmatpush1.xpose.msra.mxu0 0.0
      %3531 = vmatprep.subr.mxu0 0.0
      %3532 = vmatpush1.xpose.msra.mxu0 0.0
      %3533 = vmatprep.subr.mxu0 0.0
      %3534 = vmatpush1.xpose.msra.mxu0 0.0
      %3535 = vmatprep.subr.mxu0 0.0
      %3536 = vmatpush1.xpose.msra.mxu0 0.0
      %3537 = vmatprep.mubr.f32.mxu0 0.0
      %3538 = vmatmul.mubr.f32.gmra.mrb[0].mxu0 %v3465
      %v3539 = vpop.f32.mrb[0].mxu0
      %v3540 = vadd.f32 0.0, %v3539
      %v3541 = vpop.f32.mrb[0].mxu0
      %3542 = vdwg.mxu0
      %v3544 = vsel %vm461, %v436, 0
      %v3547 = vsel %vm461, %v347, 0
      %v3550 = vsel %vm461, %v348, 0
      %3552 = vmatprep.subr.mxu0 0.0
      %3553 = vmatpush1.xpose.msra.mxu0 %v3547
      %3554 = vmatprep.subr.mxu0 0.0
      %3555 = vmatpush1.xpose.msra.mxu0 %v3550
      %3556 = vmatprep.subr.mxu0 0.0
      %3557 = vmatpush1.xpose.msra.mxu0 0.0
      %3558 = vmatprep.subr.mxu0 0.0
      %3559 = vmatpush1.xpose.msra.mxu0 0.0
      %3560 = vmatprep.subr.mxu0 0.0
      %3561 = vmatpush1.xpose.msra.mxu0 0.0
      %3562 = vmatprep.subr.mxu0 0.0
      %3563 = vmatpush1.xpose.msra.mxu0 0.0
      %3564 = vmatprep.subr.mxu0 0.0
      %3565 = vmatpush1.xpose.msra.mxu0 0.0
      %3566 = vmatprep.subr.mxu0 0.0
      %3567 = vmatpush1.xpose.msra.mxu0 0.0
      %3568 = vmatprep.subr.mxu0 0.0
      %3569 = vmatpush1.xpose.msra.mxu0 0.0
      %3570 = vmatprep.subr.mxu0 0.0
      %3571 = vmatpush1.xpose.msra.mxu0 0.0
      %3572 = vmatprep.subr.mxu0 0.0
      %3573 = vmatpush1.xpose.msra.mxu0 0.0
      %3574 = vmatprep.subr.mxu0 0.0
      %3575 = vmatpush1.xpose.msra.mxu0 0.0
      %3576 = vmatprep.subr.mxu0 0.0
      %3577 = vmatpush1.xpose.msra.mxu0 0.0
      %3578 = vmatprep.subr.mxu0 0.0
      %3579 = vmatpush1.xpose.msra.mxu0 0.0
      %3580 = vmatprep.subr.mxu0 0.0
      %3581 = vmatpush1.xpose.msra.mxu0 0.0
      %3582 = vmatprep.subr.mxu0 0.0
      %3583 = vmatpush1.xpose.msra.mxu0 0.0
      %3584 = vmatprep.subr.mxu0 0.0
      %3585 = vmatpush1.xpose.msra.mxu0 0.0
      %3586 = vmatprep.subr.mxu0 0.0
      %3587 = vmatpush1.xpose.msra.mxu0 0.0
      %3588 = vmatprep.subr.mxu0 0.0
      %3589 = vmatpush1.xpose.msra.mxu0 0.0
      %3590 = vmatprep.subr.mxu0 0.0
      %3591 = vmatpush1.xpose.msra.mxu0 0.0
      %3592 = vmatprep.subr.mxu0 0.0
      %3593 = vmatpush1.xpose.msra.mxu0 0.0
      %3594 = vmatprep.subr.mxu0 0.0
      %3595 = vmatpush1.xpose.msra.mxu0 0.0
      %3596 = vmatprep.subr.mxu0 0.0
      %3597 = vmatpush1.xpose.msra.mxu0 0.0
      %3598 = vmatprep.subr.mxu0 0.0
      %3599 = vmatpush1.xpose.msra.mxu0 0.0
      %3600 = vmatprep.subr.mxu0 0.0
      %3601 = vmatpush1.xpose.msra.mxu0 0.0
      %3602 = vmatprep.subr.mxu0 0.0
      %3603 = vmatpush1.xpose.msra.mxu0 0.0
      %3604 = vmatprep.subr.mxu0 0.0
      %3605 = vmatpush1.xpose.msra.mxu0 0.0
      %3606 = vmatprep.subr.mxu0 0.0
      %3607 = vmatpush1.xpose.msra.mxu0 0.0
      %3608 = vmatprep.subr.mxu0 0.0
      %3609 = vmatpush1.xpose.msra.mxu0 0.0
      %3610 = vmatprep.subr.mxu0 0.0
      %3611 = vmatpush1.xpose.msra.mxu0 0.0
      %3612 = vmatprep.subr.mxu0 0.0
      %3613 = vmatpush1.xpose.msra.mxu0 0.0
      %3614 = vmatprep.subr.mxu0 0.0
      %3615 = vmatpush1.xpose.msra.mxu0 0.0
      %3616 = vmatprep.mubr.f32.mxu0 0.0
      %3617 = vmatmul.mubr.f32.gmra.mrb[0].mxu0 %v3544
      %v3618 = vpop.f32.mrb[0].mxu0
      %v3619 = vadd.f32 0.0, %v3618
      %v3620 = vpop.f32.mrb[0].mxu0
      %3621 = vdwg.mxu0
      %v3623 = vsel %vm461, %v437, 0
      %v3626 = vsel %vm461, %v349, 0
      %v3629 = vsel %vm461, %v350, 0
      %3631 = vmatprep.subr.mxu0 0.0
      %3632 = vmatpush1.xpose.msra.mxu0 %v3626
      %3633 = vmatprep.subr.mxu0 0.0
      %3634 = vmatpush1.xpose.msra.mxu0 %v3629
      %3635 = vmatprep.subr.mxu0 0.0
      %3636 = vmatpush1.xpose.msra.mxu0 0.0
      %3637 = vmatprep.subr.mxu0 0.0
      %3638 = vmatpush1.xpose.msra.mxu0 0.0
      %3639 = vmatprep.subr.mxu0 0.0
      %3640 = vmatpush1.xpose.msra.mxu0 0.0
      %3641 = vmatprep.subr.mxu0 0.0
      %3642 = vmatpush1.xpose.msra.mxu0 0.0
      %3643 = vmatprep.subr.mxu0 0.0
      %3644 = vmatpush1.xpose.msra.mxu0 0.0
      %3645 = vmatprep.subr.mxu0 0.0
      %3646 = vmatpush1.xpose.msra.mxu0 0.0
      %3647 = vmatprep.subr.mxu0 0.0
      %3648 = vmatpush1.xpose.msra.mxu0 0.0
      %3649 = vmatprep.subr.mxu0 0.0
      %3650 = vmatpush1.xpose.msra.mxu0 0.0
      %3651 = vmatprep.subr.mxu0 0.0
      %3652 = vmatpush1.xpose.msra.mxu0 0.0
      %3653 = vmatprep.subr.mxu0 0.0
      %3654 = vmatpush1.xpose.msra.mxu0 0.0
      %3655 = vmatprep.subr.mxu0 0.0
      %3656 = vmatpush1.xpose.msra.mxu0 0.0
      %3657 = vmatprep.subr.mxu0 0.0
      %3658 = vmatpush1.xpose.msra.mxu0 0.0
      %3659 = vmatprep.subr.mxu0 0.0
      %3660 = vmatpush1.xpose.msra.mxu0 0.0
      %3661 = vmatprep.subr.mxu0 0.0
      %3662 = vmatpush1.xpose.msra.mxu0 0.0
      %3663 = vmatprep.subr.mxu0 0.0
      %3664 = vmatpush1.xpose.msra.mxu0 0.0
      %3665 = vmatprep.subr.mxu0 0.0
      %3666 = vmatpush1.xpose.msra.mxu0 0.0
      %3667 = vmatprep.subr.mxu0 0.0
      %3668 = vmatpush1.xpose.msra.mxu0 0.0
      %3669 = vmatprep.subr.mxu0 0.0
      %3670 = vmatpush1.xpose.msra.mxu0 0.0
      %3671 = vmatprep.subr.mxu0 0.0
      %3672 = vmatpush1.xpose.msra.mxu0 0.0
      %3673 = vmatprep.subr.mxu0 0.0
      %3674 = vmatpush1.xpose.msra.mxu0 0.0
      %3675 = vmatprep.subr.mxu0 0.0
      %3676 = vmatpush1.xpose.msra.mxu0 0.0
      %3677 = vmatprep.subr.mxu0 0.0
      %3678 = vmatpush1.xpose.msra.mxu0 0.0
      %3679 = vmatprep.subr.mxu0 0.0
      %3680 = vmatpush1.xpose.msra.mxu0 0.0
      %3681 = vmatprep.subr.mxu0 0.0
      %3682 = vmatpush1.xpose.msra.mxu0 0.0
      %3683 = vmatprep.subr.mxu0 0.0
      %3684 = vmatpush1.xpose.msra.mxu0 0.0
      %3685 = vmatprep.subr.mxu0 0.0
      %3686 = vmatpush1.xpose.msra.mxu0 0.0
      %3687 = vmatprep.subr.mxu0 0.0
      %3688 = vmatpush1.xpose.msra.mxu0 0.0
      %3689 = vmatprep.subr.mxu0 0.0
      %3690 = vmatpush1.xpose.msra.mxu0 0.0
      %3691 = vmatprep.subr.mxu0 0.0
      %3692 = vmatpush1.xpose.msra.mxu0 0.0
      %3693 = vmatprep.subr.mxu0 0.0
      %3694 = vmatpush1.xpose.msra.mxu0 0.0
      %3695 = vmatprep.mubr.f32.mxu0 0.0
      %3696 = vmatmul.mubr.f32.gmra.mrb[0].mxu0 %v3623
      %v3697 = vpop.f32.mrb[0].mxu0
      %v3698 = vadd.f32 0.0, %v3697
      %v3699 = vpop.f32.mrb[0].mxu0
      %3700 = vdwg.mxu0
      %v3702 = vsel %vm461, %v438, 0
      %v3705 = vsel %vm461, %v351, 0
      %v3708 = vsel %vm461, %v352, 0
      %3710 = vmatprep.subr.mxu0 0.0
      %3711 = vmatpush1.xpose.msra.mxu0 %v3705
      %3712 = vmatprep.subr.mxu0 0.0
      %3713 = vmatpush1.xpose.msra.mxu0 %v3708
      %3714 = vmatprep.subr.mxu0 0.0
      %3715 = vmatpush1.xpose.msra.mxu0 0.0
      %3716 = vmatprep.subr.mxu0 0.0
      %3717 = vmatpush1.xpose.msra.mxu0 0.0
      %3718 = vmatprep.subr.mxu0 0.0
      %3719 = vmatpush1.xpose.msra.mxu0 0.0
      %3720 = vmatprep.subr.mxu0 0.0
      %3721 = vmatpush1.xpose.msra.mxu0 0.0
      %3722 = vmatprep.subr.mxu0 0.0
      %3723 = vmatpush1.xpose.msra.mxu0 0.0
      %3724 = vmatprep.subr.mxu0 0.0
      %3725 = vmatpush1.xpose.msra.mxu0 0.0
      %3726 = vmatprep.subr.mxu0 0.0
      %3727 = vmatpush1.xpose.msra.mxu0 0.0
      %3728 = vmatprep.subr.mxu0 0.0
      %3729 = vmatpush1.xpose.msra.mxu0 0.0
      %3730 = vmatprep.subr.mxu0 0.0
      %3731 = vmatpush1.xpose.msra.mxu0 0.0
      %3732 = vmatprep.subr.mxu0 0.0
      %3733 = vmatpush1.xpose.msra.mxu0 0.0
      %3734 = vmatprep.subr.mxu0 0.0
      %3735 = vmatpush1.xpose.msra.mxu0 0.0
      %3736 = vmatprep.subr.mxu0 0.0
      %3737 = vmatpush1.xpose.msra.mxu0 0.0
      %3738 = vmatprep.subr.mxu0 0.0
      %3739 = vmatpush1.xpose.msra.mxu0 0.0
      %3740 = vmatprep.subr.mxu0 0.0
      %3741 = vmatpush1.xpose.msra.mxu0 0.0
      %3742 = vmatprep.subr.mxu0 0.0
      %3743 = vmatpush1.xpose.msra.mxu0 0.0
      %3744 = vmatprep.subr.mxu0 0.0
      %3745 = vmatpush1.xpose.msra.mxu0 0.0
      %3746 = vmatprep.subr.mxu0 0.0
      %3747 = vmatpush1.xpose.msra.mxu0 0.0
      %3748 = vmatprep.subr.mxu0 0.0
      %3749 = vmatpush1.xpose.msra.mxu0 0.0
      %3750 = vmatprep.subr.mxu0 0.0
      %3751 = vmatpush1.xpose.msra.mxu0 0.0
      %3752 = vmatprep.subr.mxu0 0.0
      %3753 = vmatpush1.xpose.msra.mxu0 0.0
      %3754 = vmatprep.subr.mxu0 0.0
      %3755 = vmatpush1.xpose.msra.mxu0 0.0
      %3756 = vmatprep.subr.mxu0 0.0
      %3757 = vmatpush1.xpose.msra.mxu0 0.0
      %3758 = vmatprep.subr.mxu0 0.0
      %3759 = vmatpush1.xpose.msra.mxu0 0.0
      %3760 = vmatprep.subr.mxu0 0.0
      %3761 = vmatpush1.xpose.msra.mxu0 0.0
      %3762 = vmatprep.subr.mxu0 0.0
      %3763 = vmatpush1.xpose.msra.mxu0 0.0
      %3764 = vmatprep.subr.mxu0 0.0
      %3765 = vmatpush1.xpose.msra.mxu0 0.0
      %3766 = vmatprep.subr.mxu0 0.0
      %3767 = vmatpush1.xpose.msra.mxu0 0.0
      %3768 = vmatprep.subr.mxu0 0.0
      %3769 = vmatpush1.xpose.msra.mxu0 0.0
      %3770 = vmatprep.subr.mxu0 0.0
      %3771 = vmatpush1.xpose.msra.mxu0 0.0
      %3772 = vmatprep.subr.mxu0 0.0
      %3773 = vmatpush1.xpose.msra.mxu0 0.0
      %3774 = vmatprep.mubr.f32.mxu0 0.0
      %3775 = vmatmul.mubr.f32.gmra.mrb[0].mxu0 %v3702
      %v3776 = vpop.f32.mrb[0].mxu0
      %v3777 = vadd.f32 0.0, %v3776
      %v3778 = vpop.f32.mrb[0].mxu0
      %3779 = vdwg.mxu0
      %v3781 = vsel %vm461, %v439, 0
      %v3784 = vsel %vm461, %v353, 0
      %v3787 = vsel %vm461, %v354, 0
      %3789 = vmatprep.subr.mxu0 0.0
      %3790 = vmatpush1.xpose.msra.mxu0 %v3784
      %3791 = vmatprep.subr.mxu0 0.0
      %3792 = vmatpush1.xpose.msra.mxu0 %v3787
      %3793 = vmatprep.subr.mxu0 0.0
      %3794 = vmatpush1.xpose.msra.mxu0 0.0
      %3795 = vmatprep.subr.mxu0 0.0
      %3796 = vmatpush1.xpose.msra.mxu0 0.0
      %3797 = vmatprep.subr.mxu0 0.0
      %3798 = vmatpush1.xpose.msra.mxu0 0.0
      %3799 = vmatprep.subr.mxu0 0.0
      %3800 = vmatpush1.xpose.msra.mxu0 0.0
      %3801 = vmatprep.subr.mxu0 0.0
      %3802 = vmatpush1.xpose.msra.mxu0 0.0
      %3803 = vmatprep.subr.mxu0 0.0
      %3804 = vmatpush1.xpose.msra.mxu0 0.0
      %3805 = vmatprep.subr.mxu0 0.0
      %3806 = vmatpush1.xpose.msra.mxu0 0.0
      %3807 = vmatprep.subr.mxu0 0.0
      %3808 = vmatpush1.xpose.msra.mxu0 0.0
      %3809 = vmatprep.subr.mxu0 0.0
      %3810 = vmatpush1.xpose.msra.mxu0 0.0
      %3811 = vmatprep.subr.mxu0 0.0
      %3812 = vmatpush1.xpose.msra.mxu0 0.0
      %3813 = vmatprep.subr.mxu0 0.0
      %3814 = vmatpush1.xpose.msra.mxu0 0.0
      %3815 = vmatprep.subr.mxu0 0.0
      %3816 = vmatpush1.xpose.msra.mxu0 0.0
      %3817 = vmatprep.subr.mxu0 0.0
      %3818 = vmatpush1.xpose.msra.mxu0 0.0
      %3819 = vmatprep.subr.mxu0 0.0
      %3820 = vmatpush1.xpose.msra.mxu0 0.0
      %3821 = vmatprep.subr.mxu0 0.0
      %3822 = vmatpush1.xpose.msra.mxu0 0.0
      %3823 = vmatprep.subr.mxu0 0.0
      %3824 = vmatpush1.xpose.msra.mxu0 0.0
      %3825 = vmatprep.subr.mxu0 0.0
      %3826 = vmatpush1.xpose.msra.mxu0 0.0
      %3827 = vmatprep.subr.mxu0 0.0
      %3828 = vmatpush1.xpose.msra.mxu0 0.0
      %3829 = vmatprep.subr.mxu0 0.0
      %3830 = vmatpush1.xpose.msra.mxu0 0.0
      %3831 = vmatprep.subr.mxu0 0.0
      %3832 = vmatpush1.xpose.msra.mxu0 0.0
      %3833 = vmatprep.subr.mxu0 0.0
      %3834 = vmatpush1.xpose.msra.mxu0 0.0
      %3835 = vmatprep.subr.mxu0 0.0
      %3836 = vmatpush1.xpose.msra.mxu0 0.0
      %3837 = vmatprep.subr.mxu0 0.0
      %3838 = vmatpush1.xpose.msra.mxu0 0.0
      %3839 = vmatprep.subr.mxu0 0.0
      %3840 = vmatpush1.xpose.msra.mxu0 0.0
      %3841 = vmatprep.subr.mxu0 0.0
      %3842 = vmatpush1.xpose.msra.mxu0 0.0
      %3843 = vmatprep.subr.mxu0 0.0
      %3844 = vmatpush1.xpose.msra.mxu0 0.0
      %3845 = vmatprep.subr.mxu0 0.0
      %3846 = vmatpush1.xpose.msra.mxu0 0.0
      %3847 = vmatprep.subr.mxu0 0.0
      %3848 = vmatpush1.xpose.msra.mxu0 0.0
      %3849 = vmatprep.subr.mxu0 0.0
      %3850 = vmatpush1.xpose.msra.mxu0 0.0
      %3851 = vmatprep.subr.mxu0 0.0
      %3852 = vmatpush1.xpose.msra.mxu0 0.0
      %3853 = vmatprep.mubr.f32.mxu0 0.0
      %3854 = vmatmul.mubr.f32.gmra.mrb[0].mxu0 %v3781
      %v3855 = vpop.f32.mrb[0].mxu0
      %v3856 = vadd.f32 0.0, %v3855
      %v3857 = vpop.f32.mrb[0].mxu0
      %3858 = vdwg.mxu0
      %v3860 = vsel %vm461, %v440, 0
      %v3863 = vsel %vm461, %v355, 0
      %v3866 = vsel %vm461, %v356, 0
      %3868 = vmatprep.subr.mxu0 0.0
      %3869 = vmatpush1.xpose.msra.mxu0 %v3863
      %3870 = vmatprep.subr.mxu0 0.0
      %3871 = vmatpush1.xpose.msra.mxu0 %v3866
      %3872 = vmatprep.subr.mxu0 0.0
      %3873 = vmatpush1.xpose.msra.mxu0 0.0
      %3874 = vmatprep.subr.mxu0 0.0
      %3875 = vmatpush1.xpose.msra.mxu0 0.0
      %3876 = vmatprep.subr.mxu0 0.0
      %3877 = vmatpush1.xpose.msra.mxu0 0.0
      %3878 = vmatprep.subr.mxu0 0.0
      %3879 = vmatpush1.xpose.msra.mxu0 0.0
      %3880 = vmatprep.subr.mxu0 0.0
      %3881 = vmatpush1.xpose.msra.mxu0 0.0
      %3882 = vmatprep.subr.mxu0 0.0
      %3883 = vmatpush1.xpose.msra.mxu0 0.0
      %3884 = vmatprep.subr.mxu0 0.0
      %3885 = vmatpush1.xpose.msra.mxu0 0.0
      %3886 = vmatprep.subr.mxu0 0.0
      %3887 = vmatpush1.xpose.msra.mxu0 0.0
      %3888 = vmatprep.subr.mxu0 0.0
      %3889 = vmatpush1.xpose.msra.mxu0 0.0
      %3890 = vmatprep.subr.mxu0 0.0
      %3891 = vmatpush1.xpose.msra.mxu0 0.0
      %3892 = vmatprep.subr.mxu0 0.0
      %3893 = vmatpush1.xpose.msra.mxu0 0.0
      %3894 = vmatprep.subr.mxu0 0.0
      %3895 = vmatpush1.xpose.msra.mxu0 0.0
      %3896 = vmatprep.subr.mxu0 0.0
      %3897 = vmatpush1.xpose.msra.mxu0 0.0
      %3898 = vmatprep.subr.mxu0 0.0
      %3899 = vmatpush1.xpose.msra.mxu0 0.0
      %3900 = vmatprep.subr.mxu0 0.0
      %3901 = vmatpush1.xpose.msra.mxu0 0.0
      %3902 = vmatprep.subr.mxu0 0.0
      %3903 = vmatpush1.xpose.msra.mxu0 0.0
      %3904 = vmatprep.subr.mxu0 0.0
      %3905 = vmatpush1.xpose.msra.mxu0 0.0
      %3906 = vmatprep.subr.mxu0 0.0
      %3907 = vmatpush1.xpose.msra.mxu0 0.0
      %3908 = vmatprep.subr.mxu0 0.0
      %3909 = vmatpush1.xpose.msra.mxu0 0.0
      %3910 = vmatprep.subr.mxu0 0.0
      %3911 = vmatpush1.xpose.msra.mxu0 0.0
      %3912 = vmatprep.subr.mxu0 0.0
      %3913 = vmatpush1.xpose.msra.mxu0 0.0
      %3914 = vmatprep.subr.mxu0 0.0
      %3915 = vmatpush1.xpose.msra.mxu0 0.0
      %3916 = vmatprep.subr.mxu0 0.0
      %3917 = vmatpush1.xpose.msra.mxu0 0.0
      %3918 = vmatprep.subr.mxu0 0.0
      %3919 = vmatpush1.xpose.msra.mxu0 0.0
      %3920 = vmatprep.subr.mxu0 0.0
      %3921 = vmatpush1.xpose.msra.mxu0 0.0
      %3922 = vmatprep.subr.mxu0 0.0
      %3923 = vmatpush1.xpose.msra.mxu0 0.0
      %3924 = vmatprep.subr.mxu0 0.0
      %3925 = vmatpush1.xpose.msra.mxu0 0.0
      %3926 = vmatprep.subr.mxu0 0.0
      %3927 = vmatpush1.xpose.msra.mxu0 0.0
      %3928 = vmatprep.subr.mxu0 0.0
      %3929 = vmatpush1.xpose.msra.mxu0 0.0
      %3930 = vmatprep.subr.mxu0 0.0
      %3931 = vmatpush1.xpose.msra.mxu0 0.0
      %3932 = vmatprep.mubr.f32.mxu0 0.0
      %3933 = vmatmul.mubr.f32.gmra.mrb[0].mxu0 %v3860
      %v3934 = vpop.f32.mrb[0].mxu0
      %v3935 = vadd.f32 0.0, %v3934
      %v3936 = vpop.f32.mrb[0].mxu0
      %3937 = vdwg.mxu0
      %v3939 = vsel %vm461, %v441, 0
      %v3942 = vsel %vm461, %v357, 0
      %v3945 = vsel %vm461, %v358, 0
      %3947 = vmatprep.subr.mxu0 0.0
      %3948 = vmatpush1.xpose.msra.mxu0 %v3942
      %3949 = vmatprep.subr.mxu0 0.0
      %3950 = vmatpush1.xpose.msra.mxu0 %v3945
      %3951 = vmatprep.subr.mxu0 0.0
      %3952 = vmatpush1.xpose.msra.mxu0 0.0
      %3953 = vmatprep.subr.mxu0 0.0
      %3954 = vmatpush1.xpose.msra.mxu0 0.0
      %3955 = vmatprep.subr.mxu0 0.0
      %3956 = vmatpush1.xpose.msra.mxu0 0.0
      %3957 = vmatprep.subr.mxu0 0.0
      %3958 = vmatpush1.xpose.msra.mxu0 0.0
      %3959 = vmatprep.subr.mxu0 0.0
      %3960 = vmatpush1.xpose.msra.mxu0 0.0
      %3961 = vmatprep.subr.mxu0 0.0
      %3962 = vmatpush1.xpose.msra.mxu0 0.0
      %3963 = vmatprep.subr.mxu0 0.0
      %3964 = vmatpush1.xpose.msra.mxu0 0.0
      %3965 = vmatprep.subr.mxu0 0.0
      %3966 = vmatpush1.xpose.msra.mxu0 0.0
      %3967 = vmatprep.subr.mxu0 0.0
      %3968 = vmatpush1.xpose.msra.mxu0 0.0
      %3969 = vmatprep.subr.mxu0 0.0
      %3970 = vmatpush1.xpose.msra.mxu0 0.0
      %3971 = vmatprep.subr.mxu0 0.0
      %3972 = vmatpush1.xpose.msra.mxu0 0.0
      %3973 = vmatprep.subr.mxu0 0.0
      %3974 = vmatpush1.xpose.msra.mxu0 0.0
      %3975 = vmatprep.subr.mxu0 0.0
      %3976 = vmatpush1.xpose.msra.mxu0 0.0
      %3977 = vmatprep.subr.mxu0 0.0
      %3978 = vmatpush1.xpose.msra.mxu0 0.0
      %3979 = vmatprep.subr.mxu0 0.0
      %3980 = vmatpush1.xpose.msra.mxu0 0.0
      %3981 = vmatprep.subr.mxu0 0.0
      %3982 = vmatpush1.xpose.msra.mxu0 0.0
      %3983 = vmatprep.subr.mxu0 0.0
      %3984 = vmatpush1.xpose.msra.mxu0 0.0
      %3985 = vmatprep.subr.mxu0 0.0
      %3986 = vmatpush1.xpose.msra.mxu0 0.0
      %3987 = vmatprep.subr.mxu0 0.0
      %3988 = vmatpush1.xpose.msra.mxu0 0.0
      %3989 = vmatprep.subr.mxu0 0.0
      %3990 = vmatpush1.xpose.msra.mxu0 0.0
      %3991 = vmatprep.subr.mxu0 0.0
      %3992 = vmatpush1.xpose.msra.mxu0 0.0
      %3993 = vmatprep.subr.mxu0 0.0
      %3994 = vmatpush1.xpose.msra.mxu0 0.0
      %3995 = vmatprep.subr.mxu0 0.0
      %3996 = vmatpush1.xpose.msra.mxu0 0.0
      %3997 = vmatprep.subr.mxu0 0.0
      %3998 = vmatpush1.xpose.msra.mxu0 0.0
      %3999 = vmatprep.subr.mxu0 0.0
      %4000 = vmatpush1.xpose.msra.mxu0 0.0
      %4001 = vmatprep.subr.mxu0 0.0
      %4002 = vmatpush1.xpose.msra.mxu0 0.0
      %4003 = vmatprep.subr.mxu0 0.0
      %4004 = vmatpush1.xpose.msra.mxu0 0.0
      %4005 = vmatprep.subr.mxu0 0.0
      %4006 = vmatpush1.xpose.msra.mxu0 0.0
      %4007 = vmatprep.subr.mxu0 0.0
      %4008 = vmatpush1.xpose.msra.mxu0 0.0
      %4009 = vmatprep.subr.mxu0 0.0
      %4010 = vmatpush1.xpose.msra.mxu0 0.0
      %4011 = vmatprep.mubr.f32.mxu0 0.0
      %4012 = vmatmul.mubr.f32.gmra.mrb[0].mxu0 %v3939
      %v4013 = vpop.f32.mrb[0].mxu0
      %v4014 = vadd.f32 0.0, %v4013
      %v4015 = vpop.f32.mrb[0].mxu0
      %4016 = vdwg.mxu0
      %v4018 = vsel %vm461, %v442, 0
      %v4021 = vsel %vm461, %v359, 0
      %v4024 = vsel %vm461, %v360, 0
      %4026 = vmatprep.subr.mxu0 0.0
      %4027 = vmatpush1.xpose.msra.mxu0 %v4021
      %4028 = vmatprep.subr.mxu0 0.0
      %4029 = vmatpush1.xpose.msra.mxu0 %v4024
      %4030 = vmatprep.subr.mxu0 0.0
      %4031 = vmatpush1.xpose.msra.mxu0 0.0
      %4032 = vmatprep.subr.mxu0 0.0
      %4033 = vmatpush1.xpose.msra.mxu0 0.0
      %4034 = vmatprep.subr.mxu0 0.0
      %4035 = vmatpush1.xpose.msra.mxu0 0.0
      %4036 = vmatprep.subr.mxu0 0.0
      %4037 = vmatpush1.xpose.msra.mxu0 0.0
      %4038 = vmatprep.subr.mxu0 0.0
      %4039 = vmatpush1.xpose.msra.mxu0 0.0
      %4040 = vmatprep.subr.mxu0 0.0
      %4041 = vmatpush1.xpose.msra.mxu0 0.0
      %4042 = vmatprep.subr.mxu0 0.0
      %4043 = vmatpush1.xpose.msra.mxu0 0.0
      %4044 = vmatprep.subr.mxu0 0.0
      %4045 = vmatpush1.xpose.msra.mxu0 0.0
      %4046 = vmatprep.subr.mxu0 0.0
      %4047 = vmatpush1.xpose.msra.mxu0 0.0
      %4048 = vmatprep.subr.mxu0 0.0
      %4049 = vmatpush1.xpose.msra.mxu0 0.0
      %4050 = vmatprep.subr.mxu0 0.0
      %4051 = vmatpush1.xpose.msra.mxu0 0.0
      %4052 = vmatprep.subr.mxu0 0.0
      %4053 = vmatpush1.xpose.msra.mxu0 0.0
      %4054 = vmatprep.subr.mxu0 0.0
      %4055 = vmatpush1.xpose.msra.mxu0 0.0
      %4056 = vmatprep.subr.mxu0 0.0
      %4057 = vmatpush1.xpose.msra.mxu0 0.0
      %4058 = vmatprep.subr.mxu0 0.0
      %4059 = vmatpush1.xpose.msra.mxu0 0.0
      %4060 = vmatprep.subr.mxu0 0.0
      %4061 = vmatpush1.xpose.msra.mxu0 0.0
      %4062 = vmatprep.subr.mxu0 0.0
      %4063 = vmatpush1.xpose.msra.mxu0 0.0
      %4064 = vmatprep.subr.mxu0 0.0
      %4065 = vmatpush1.xpose.msra.mxu0 0.0
      %4066 = vmatprep.subr.mxu0 0.0
      %4067 = vmatpush1.xpose.msra.mxu0 0.0
      %4068 = vmatprep.subr.mxu0 0.0
      %4069 = vmatpush1.xpose.msra.mxu0 0.0
      %4070 = vmatprep.subr.mxu0 0.0
      %4071 = vmatpush1.xpose.msra.mxu0 0.0
      %4072 = vmatprep.subr.mxu0 0.0
      %4073 = vmatpush1.xpose.msra.mxu0 0.0
      %4074 = vmatprep.subr.mxu0 0.0
      %4075 = vmatpush1.xpose.msra.mxu0 0.0
      %4076 = vmatprep.subr.mxu0 0.0
      %4077 = vmatpush1.xpose.msra.mxu0 0.0
      %4078 = vmatprep.subr.mxu0 0.0
      %4079 = vmatpush1.xpose.msra.mxu0 0.0
      %4080 = vmatprep.subr.mxu0 0.0
      %4081 = vmatpush1.xpose.msra.mxu0 0.0
      %4082 = vmatprep.subr.mxu0 0.0
      %4083 = vmatpush1.xpose.msra.mxu0 0.0
      %4084 = vmatprep.subr.mxu0 0.0
      %4085 = vmatpush1.xpose.msra.mxu0 0.0
      %4086 = vmatprep.subr.mxu0 0.0
      %4087 = vmatpush1.xpose.msra.mxu0 0.0
      %4088 = vmatprep.subr.mxu0 0.0
      %4089 = vmatpush1.xpose.msra.mxu0 0.0
      %4090 = vmatprep.mubr.f32.mxu0 0.0
      %4091 = vmatmul.mubr.f32.gmra.mrb[0].mxu0 %v4018
      %v4092 = vpop.f32.mrb[0].mxu0
      %v4093 = vadd.f32 0.0, %v4092
      %v4094 = vpop.f32.mrb[0].mxu0
      %4095 = vdwg.mxu0
      %v4097 = vsel %vm461, %v443, 0
      %v4100 = vsel %vm461, %v361, 0
      %v4103 = vsel %vm461, %v362, 0
      %4105 = vmatprep.subr.mxu0 0.0
      %4106 = vmatpush1.xpose.msra.mxu0 %v4100
      %4107 = vmatprep.subr.mxu0 0.0
      %4108 = vmatpush1.xpose.msra.mxu0 %v4103
      %4109 = vmatprep.subr.mxu0 0.0
      %4110 = vmatpush1.xpose.msra.mxu0 0.0
      %4111 = vmatprep.subr.mxu0 0.0
      %4112 = vmatpush1.xpose.msra.mxu0 0.0
      %4113 = vmatprep.subr.mxu0 0.0
      %4114 = vmatpush1.xpose.msra.mxu0 0.0
      %4115 = vmatprep.subr.mxu0 0.0
      %4116 = vmatpush1.xpose.msra.mxu0 0.0
      %4117 = vmatprep.subr.mxu0 0.0
      %4118 = vmatpush1.xpose.msra.mxu0 0.0
      %4119 = vmatprep.subr.mxu0 0.0
      %4120 = vmatpush1.xpose.msra.mxu0 0.0
      %4121 = vmatprep.subr.mxu0 0.0
      %4122 = vmatpush1.xpose.msra.mxu0 0.0
      %4123 = vmatprep.subr.mxu0 0.0
      %4124 = vmatpush1.xpose.msra.mxu0 0.0
      %4125 = vmatprep.subr.mxu0 0.0
      %4126 = vmatpush1.xpose.msra.mxu0 0.0
      %4127 = vmatprep.subr.mxu0 0.0
      %4128 = vmatpush1.xpose.msra.mxu0 0.0
      %4129 = vmatprep.subr.mxu0 0.0
      %4130 = vmatpush1.xpose.msra.mxu0 0.0
      %4131 = vmatprep.subr.mxu0 0.0
      %4132 = vmatpush1.xpose.msra.mxu0 0.0
      %4133 = vmatprep.subr.mxu0 0.0
      %4134 = vmatpush1.xpose.msra.mxu0 0.0
      %4135 = vmatprep.subr.mxu0 0.0
      %4136 = vmatpush1.xpose.msra.mxu0 0.0
      %4137 = vmatprep.subr.mxu0 0.0
      %4138 = vmatpush1.xpose.msra.mxu0 0.0
      %4139 = vmatprep.subr.mxu0 0.0
      %4140 = vmatpush1.xpose.msra.mxu0 0.0
      %4141 = vmatprep.subr.mxu0 0.0
      %4142 = vmatpush1.xpose.msra.mxu0 0.0
      %4143 = vmatprep.subr.mxu0 0.0
      %4144 = vmatpush1.xpose.msra.mxu0 0.0
      %4145 = vmatprep.subr.mxu0 0.0
      %4146 = vmatpush1.xpose.msra.mxu0 0.0
      %4147 = vmatprep.subr.mxu0 0.0
      %4148 = vmatpush1.xpose.msra.mxu0 0.0
      %4149 = vmatprep.subr.mxu0 0.0
      %4150 = vmatpush1.xpose.msra.mxu0 0.0
      %4151 = vmatprep.subr.mxu0 0.0
      %4152 = vmatpush1.xpose.msra.mxu0 0.0
      %4153 = vmatprep.subr.mxu0 0.0
      %4154 = vmatpush1.xpose.msra.mxu0 0.0
      %4155 = vmatprep.subr.mxu0 0.0
      %4156 = vmatpush1.xpose.msra.mxu0 0.0
      %4157 = vmatprep.subr.mxu0 0.0
      %4158 = vmatpush1.xpose.msra.mxu0 0.0
      %4159 = vmatprep.subr.mxu0 0.0
      %4160 = vmatpush1.xpose.msra.mxu0 0.0
      %4161 = vmatprep.subr.mxu0 0.0
      %4162 = vmatpush1.xpose.msra.mxu0 0.0
      %4163 = vmatprep.subr.mxu0 0.0
      %4164 = vmatpush1.xpose.msra.mxu0 0.0
      %4165 = vmatprep.subr.mxu0 0.0
      %4166 = vmatpush1.xpose.msra.mxu0 0.0
      %4167 = vmatprep.subr.mxu0 0.0
      %4168 = vmatpush1.xpose.msra.mxu0 0.0
      %4169 = vmatprep.mubr.f32.mxu0 0.0
      %4170 = vmatmul.mubr.f32.gmra.mrb[0].mxu0 %v4097
      %v4171 = vpop.f32.mrb[0].mxu0
      %v4172 = vadd.f32 0.0, %v4171
      %v4173 = vpop.f32.mrb[0].mxu0
      %4174 = vdwg.mxu0
      %v4176 = vsel %vm461, %v444, 0
      %v4179 = vsel %vm461, %v363, 0
      %v4182 = vsel %vm461, %v364, 0
      %4184 = vmatprep.subr.mxu0 0.0
      %4185 = vmatpush1.xpose.msra.mxu0 %v4179
      %4186 = vmatprep.subr.mxu0 0.0
      %4187 = vmatpush1.xpose.msra.mxu0 %v4182
      %4188 = vmatprep.subr.mxu0 0.0
      %4189 = vmatpush1.xpose.msra.mxu0 0.0
      %4190 = vmatprep.subr.mxu0 0.0
      %4191 = vmatpush1.xpose.msra.mxu0 0.0
      %4192 = vmatprep.subr.mxu0 0.0
      %4193 = vmatpush1.xpose.msra.mxu0 0.0
      %4194 = vmatprep.subr.mxu0 0.0
      %4195 = vmatpush1.xpose.msra.mxu0 0.0
      %4196 = vmatprep.subr.mxu0 0.0
      %4197 = vmatpush1.xpose.msra.mxu0 0.0
      %4198 = vmatprep.subr.mxu0 0.0
      %4199 = vmatpush1.xpose.msra.mxu0 0.0
      %4200 = vmatprep.subr.mxu0 0.0
      %4201 = vmatpush1.xpose.msra.mxu0 0.0
      %4202 = vmatprep.subr.mxu0 0.0
      %4203 = vmatpush1.xpose.msra.mxu0 0.0
      %4204 = vmatprep.subr.mxu0 0.0
      %4205 = vmatpush1.xpose.msra.mxu0 0.0
      %4206 = vmatprep.subr.mxu0 0.0
      %4207 = vmatpush1.xpose.msra.mxu0 0.0
      %4208 = vmatprep.subr.mxu0 0.0
      %4209 = vmatpush1.xpose.msra.mxu0 0.0
      %4210 = vmatprep.subr.mxu0 0.0
      %4211 = vmatpush1.xpose.msra.mxu0 0.0
      %4212 = vmatprep.subr.mxu0 0.0
      %4213 = vmatpush1.xpose.msra.mxu0 0.0
      %4214 = vmatprep.subr.mxu0 0.0
      %4215 = vmatpush1.xpose.msra.mxu0 0.0
      %4216 = vmatprep.subr.mxu0 0.0
      %4217 = vmatpush1.xpose.msra.mxu0 0.0
      %4218 = vmatprep.subr.mxu0 0.0
      %4219 = vmatpush1.xpose.msra.mxu0 0.0
      %4220 = vmatprep.subr.mxu0 0.0
      %4221 = vmatpush1.xpose.msra.mxu0 0.0
      %4222 = vmatprep.subr.mxu0 0.0
      %4223 = vmatpush1.xpose.msra.mxu0 0.0
      %4224 = vmatprep.subr.mxu0 0.0
      %4225 = vmatpush1.xpose.msra.mxu0 0.0
      %4226 = vmatprep.subr.mxu0 0.0
      %4227 = vmatpush1.xpose.msra.mxu0 0.0
      %4228 = vmatprep.subr.mxu0 0.0
      %4229 = vmatpush1.xpose.msra.mxu0 0.0
      %4230 = vmatprep.subr.mxu0 0.0
      %4231 = vmatpush1.xpose.msra.mxu0 0.0
      %4232 = vmatprep.subr.mxu0 0.0
      %4233 = vmatpush1.xpose.msra.mxu0 0.0
      %4234 = vmatprep.subr.mxu0 0.0
      %4235 = vmatpush1.xpose.msra.mxu0 0.0
      %4236 = vmatprep.subr.mxu0 0.0
      %4237 = vmatpush1.xpose.msra.mxu0 0.0
      %4238 = vmatprep.subr.mxu0 0.0
      %4239 = vmatpush1.xpose.msra.mxu0 0.0
      %4240 = vmatprep.subr.mxu0 0.0
      %4241 = vmatpush1.xpose.msra.mxu0 0.0
      %4242 = vmatprep.subr.mxu0 0.0
      %4243 = vmatpush1.xpose.msra.mxu0 0.0
      %4244 = vmatprep.subr.mxu0 0.0
      %4245 = vmatpush1.xpose.msra.mxu0 0.0
      %4246 = vmatprep.subr.mxu0 0.0
      %4247 = vmatpush1.xpose.msra.mxu0 0.0
      %4248 = vmatprep.mubr.f32.mxu0 0.0
      %4249 = vmatmul.mubr.f32.gmra.mrb[0].mxu0 %v4176
      %v4250 = vpop.f32.mrb[0].mxu0
      %v4251 = vadd.f32 0.0, %v4250
      %v4252 = vpop.f32.mrb[0].mxu0
      %4253 = vdwg.mxu0
      %v4255 = vsel %vm461, %v445, 0
      %v4258 = vsel %vm461, %v365, 0
      %v4261 = vsel %vm461, %v366, 0
      %4263 = vmatprep.subr.mxu0 0.0
      %4264 = vmatpush1.xpose.msra.mxu0 %v4258
      %4265 = vmatprep.subr.mxu0 0.0
      %4266 = vmatpush1.xpose.msra.mxu0 %v4261
      %4267 = vmatprep.subr.mxu0 0.0
      %4268 = vmatpush1.xpose.msra.mxu0 0.0
      %4269 = vmatprep.subr.mxu0 0.0
      %4270 = vmatpush1.xpose.msra.mxu0 0.0
      %4271 = vmatprep.subr.mxu0 0.0
      %4272 = vmatpush1.xpose.msra.mxu0 0.0
      %4273 = vmatprep.subr.mxu0 0.0
      %4274 = vmatpush1.xpose.msra.mxu0 0.0
      %4275 = vmatprep.subr.mxu0 0.0
      %4276 = vmatpush1.xpose.msra.mxu0 0.0
      %4277 = vmatprep.subr.mxu0 0.0
      %4278 = vmatpush1.xpose.msra.mxu0 0.0
      %4279 = vmatprep.subr.mxu0 0.0
      %4280 = vmatpush1.xpose.msra.mxu0 0.0
      %4281 = vmatprep.subr.mxu0 0.0
      %4282 = vmatpush1.xpose.msra.mxu0 0.0
      %4283 = vmatprep.subr.mxu0 0.0
      %4284 = vmatpush1.xpose.msra.mxu0 0.0
      %4285 = vmatprep.subr.mxu0 0.0
      %4286 = vmatpush1.xpose.msra.mxu0 0.0
      %4287 = vmatprep.subr.mxu0 0.0
      %4288 = vmatpush1.xpose.msra.mxu0 0.0
      %4289 = vmatprep.subr.mxu0 0.0
      %4290 = vmatpush1.xpose.msra.mxu0 0.0
      %4291 = vmatprep.subr.mxu0 0.0
      %4292 = vmatpush1.xpose.msra.mxu0 0.0
      %4293 = vmatprep.subr.mxu0 0.0
      %4294 = vmatpush1.xpose.msra.mxu0 0.0
      %4295 = vmatprep.subr.mxu0 0.0
      %4296 = vmatpush1.xpose.msra.mxu0 0.0
      %4297 = vmatprep.subr.mxu0 0.0
      %4298 = vmatpush1.xpose.msra.mxu0 0.0
      %4299 = vmatprep.subr.mxu0 0.0
      %4300 = vmatpush1.xpose.msra.mxu0 0.0
      %4301 = vmatprep.subr.mxu0 0.0
      %4302 = vmatpush1.xpose.msra.mxu0 0.0
      %4303 = vmatprep.subr.mxu0 0.0
      %4304 = vmatpush1.xpose.msra.mxu0 0.0
      %4305 = vmatprep.subr.mxu0 0.0
      %4306 = vmatpush1.xpose.msra.mxu0 0.0
      %4307 = vmatprep.subr.mxu0 0.0
      %4308 = vmatpush1.xpose.msra.mxu0 0.0
      %4309 = vmatprep.subr.mxu0 0.0
      %4310 = vmatpush1.xpose.msra.mxu0 0.0
      %4311 = vmatprep.subr.mxu0 0.0
      %4312 = vmatpush1.xpose.msra.mxu0 0.0
      %4313 = vmatprep.subr.mxu0 0.0
      %4314 = vmatpush1.xpose.msra.mxu0 0.0
      %4315 = vmatprep.subr.mxu0 0.0
      %4316 = vmatpush1.xpose.msra.mxu0 0.0
      %4317 = vmatprep.subr.mxu0 0.0
      %4318 = vmatpush1.xpose.msra.mxu0 0.0
      %4319 = vmatprep.subr.mxu0 0.0
      %4320 = vmatpush1.xpose.msra.mxu0 0.0
      %4321 = vmatprep.subr.mxu0 0.0
      %4322 = vmatpush1.xpose.msra.mxu0 0.0
      %4323 = vmatprep.subr.mxu0 0.0
      %4324 = vmatpush1.xpose.msra.mxu0 0.0
      %4325 = vmatprep.subr.mxu0 0.0
      %4326 = vmatpush1.xpose.msra.mxu0 0.0
      %4327 = vmatprep.mubr.f32.mxu0 0.0
      %4328 = vmatmul.mubr.f32.gmra.mrb[0].mxu0 %v4255
      %v4329 = vpop.f32.mrb[0].mxu0
      %v4330 = vadd.f32 0.0, %v4329
      %v4331 = vpop.f32.mrb[0].mxu0
      %4332 = vdwg.mxu0
      %v4334 = vsel %vm461, %v446, 0
      %v4337 = vsel %vm461, %v367, 0
      %v4340 = vsel %vm461, %v368, 0
      %4342 = vmatprep.subr.mxu0 0.0
      %4343 = vmatpush1.xpose.msra.mxu0 %v4337
      %4344 = vmatprep.subr.mxu0 0.0
      %4345 = vmatpush1.xpose.msra.mxu0 %v4340
      %4346 = vmatprep.subr.mxu0 0.0
      %4347 = vmatpush1.xpose.msra.mxu0 0.0
      %4348 = vmatprep.subr.mxu0 0.0
      %4349 = vmatpush1.xpose.msra.mxu0 0.0
      %4350 = vmatprep.subr.mxu0 0.0
      %4351 = vmatpush1.xpose.msra.mxu0 0.0
      %4352 = vmatprep.subr.mxu0 0.0
      %4353 = vmatpush1.xpose.msra.mxu0 0.0
      %4354 = vmatprep.subr.mxu0 0.0
      %4355 = vmatpush1.xpose.msra.mxu0 0.0
      %4356 = vmatprep.subr.mxu0 0.0
      %4357 = vmatpush1.xpose.msra.mxu0 0.0
      %4358 = vmatprep.subr.mxu0 0.0
      %4359 = vmatpush1.xpose.msra.mxu0 0.0
      %4360 = vmatprep.subr.mxu0 0.0
      %4361 = vmatpush1.xpose.msra.mxu0 0.0
      %4362 = vmatprep.subr.mxu0 0.0
      %4363 = vmatpush1.xpose.msra.mxu0 0.0
      %4364 = vmatprep.subr.mxu0 0.0
      %4365 = vmatpush1.xpose.msra.mxu0 0.0
      %4366 = vmatprep.subr.mxu0 0.0
      %4367 = vmatpush1.xpose.msra.mxu0 0.0
      %4368 = vmatprep.subr.mxu0 0.0
      %4369 = vmatpush1.xpose.msra.mxu0 0.0
      %4370 = vmatprep.subr.mxu0 0.0
      %4371 = vmatpush1.xpose.msra.mxu0 0.0
      %4372 = vmatprep.subr.mxu0 0.0
      %4373 = vmatpush1.xpose.msra.mxu0 0.0
      %4374 = vmatprep.subr.mxu0 0.0
      %4375 = vmatpush1.xpose.msra.mxu0 0.0
      %4376 = vmatprep.subr.mxu0 0.0
      %4377 = vmatpush1.xpose.msra.mxu0 0.0
      %4378 = vmatprep.subr.mxu0 0.0
      %4379 = vmatpush1.xpose.msra.mxu0 0.0
      %4380 = vmatprep.subr.mxu0 0.0
      %4381 = vmatpush1.xpose.msra.mxu0 0.0
      %4382 = vmatprep.subr.mxu0 0.0
      %4383 = vmatpush1.xpose.msra.mxu0 0.0
      %4384 = vmatprep.subr.mxu0 0.0
      %4385 = vmatpush1.xpose.msra.mxu0 0.0
      %4386 = vmatprep.subr.mxu0 0.0
      %4387 = vmatpush1.xpose.msra.mxu0 0.0
      %4388 = vmatprep.subr.mxu0 0.0
      %4389 = vmatpush1.xpose.msra.mxu0 0.0
      %4390 = vmatprep.subr.mxu0 0.0
      %4391 = vmatpush1.xpose.msra.mxu0 0.0
      %4392 = vmatprep.subr.mxu0 0.0
      %4393 = vmatpush1.xpose.msra.mxu0 0.0
      %4394 = vmatprep.subr.mxu0 0.0
      %4395 = vmatpush1.xpose.msra.mxu0 0.0
      %4396 = vmatprep.subr.mxu0 0.0
      %4397 = vmatpush1.xpose.msra.mxu0 0.0
      %4398 = vmatprep.subr.mxu0 0.0
      %4399 = vmatpush1.xpose.msra.mxu0 0.0
      %4400 = vmatprep.subr.mxu0 0.0
      %4401 = vmatpush1.xpose.msra.mxu0 0.0
      %4402 = vmatprep.subr.mxu0 0.0
      %4403 = vmatpush1.xpose.msra.mxu0 0.0
      %4404 = vmatprep.subr.mxu0 0.0
      %4405 = vmatpush1.xpose.msra.mxu0 0.0
      %4406 = vmatprep.mubr.f32.mxu0 0.0
      %4407 = vmatmul.mubr.f32.gmra.mrb[0].mxu0 %v4334
      %v4408 = vpop.f32.mrb[0].mxu0
      %v4409 = vadd.f32 0.0, %v4408
      %v4410 = vpop.f32.mrb[0].mxu0
      %4411 = vdwg.mxu0
      %v4413 = vsel %vm461, %v447, 0
      %v4416 = vsel %vm461, %v369, 0
      %v4419 = vsel %vm461, %v370, 0
      %4421 = vmatprep.subr.mxu0 0.0
      %4422 = vmatpush1.xpose.msra.mxu0 %v4416
      %4423 = vmatprep.subr.mxu0 0.0
      %4424 = vmatpush1.xpose.msra.mxu0 %v4419
      %4425 = vmatprep.subr.mxu0 0.0
      %4426 = vmatpush1.xpose.msra.mxu0 0.0
      %4427 = vmatprep.subr.mxu0 0.0
      %4428 = vmatpush1.xpose.msra.mxu0 0.0
      %4429 = vmatprep.subr.mxu0 0.0
      %4430 = vmatpush1.xpose.msra.mxu0 0.0
      %4431 = vmatprep.subr.mxu0 0.0
      %4432 = vmatpush1.xpose.msra.mxu0 0.0
      %4433 = vmatprep.subr.mxu0 0.0
      %4434 = vmatpush1.xpose.msra.mxu0 0.0
      %4435 = vmatprep.subr.mxu0 0.0
      %4436 = vmatpush1.xpose.msra.mxu0 0.0
      %4437 = vmatprep.subr.mxu0 0.0
      %4438 = vmatpush1.xpose.msra.mxu0 0.0
      %4439 = vmatprep.subr.mxu0 0.0
      %4440 = vmatpush1.xpose.msra.mxu0 0.0
      %4441 = vmatprep.subr.mxu0 0.0
      %4442 = vmatpush1.xpose.msra.mxu0 0.0
      %4443 = vmatprep.subr.mxu0 0.0
      %4444 = vmatpush1.xpose.msra.mxu0 0.0
      %4445 = vmatprep.subr.mxu0 0.0
      %4446 = vmatpush1.xpose.msra.mxu0 0.0
      %4447 = vmatprep.subr.mxu0 0.0
      %4448 = vmatpush1.xpose.msra.mxu0 0.0
      %4449 = vmatprep.subr.mxu0 0.0
      %4450 = vmatpush1.xpose.msra.mxu0 0.0
      %4451 = vmatprep.subr.mxu0 0.0
      %4452 = vmatpush1.xpose.msra.mxu0 0.0
      %4453 = vmatprep.subr.mxu0 0.0
      %4454 = vmatpush1.xpose.msra.mxu0 0.0
      %4455 = vmatprep.subr.mxu0 0.0
      %4456 = vmatpush1.xpose.msra.mxu0 0.0
      %4457 = vmatprep.subr.mxu0 0.0
      %4458 = vmatpush1.xpose.msra.mxu0 0.0
      %4459 = vmatprep.subr.mxu0 0.0
      %4460 = vmatpush1.xpose.msra.mxu0 0.0
      %4461 = vmatprep.subr.mxu0 0.0
      %4462 = vmatpush1.xpose.msra.mxu0 0.0
      %4463 = vmatprep.subr.mxu0 0.0
      %4464 = vmatpush1.xpose.msra.mxu0 0.0
      %4465 = vmatprep.subr.mxu0 0.0
      %4466 = vmatpush1.xpose.msra.mxu0 0.0
      %4467 = vmatprep.subr.mxu0 0.0
      %4468 = vmatpush1.xpose.msra.mxu0 0.0
      %4469 = vmatprep.subr.mxu0 0.0
      %4470 = vmatpush1.xpose.msra.mxu0 0.0
      %4471 = vmatprep.subr.mxu0 0.0
      %4472 = vmatpush1.xpose.msra.mxu0 0.0
      %4473 = vmatprep.subr.mxu0 0.0
      %4474 = vmatpush1.xpose.msra.mxu0 0.0
      %4475 = vmatprep.subr.mxu0 0.0
      %4476 = vmatpush1.xpose.msra.mxu0 0.0
      %4477 = vmatprep.subr.mxu0 0.0
      %4478 = vmatpush1.xpose.msra.mxu0 0.0
      %4479 = vmatprep.subr.mxu0 0.0
      %4480 = vmatpush1.xpose.msra.mxu0 0.0
      %4481 = vmatprep.subr.mxu0 0.0
      %4482 = vmatpush1.xpose.msra.mxu0 0.0
      %4483 = vmatprep.subr.mxu0 0.0
      %4484 = vmatpush1.xpose.msra.mxu0 0.0
      %4485 = vmatprep.mubr.f32.mxu0 0.0
      %4486 = vmatmul.mubr.f32.gmra.mrb[0].mxu0 %v4413
      %v4487 = vpop.f32.mrb[0].mxu0
      %v4488 = vadd.f32 0.0, %v4487
      %v4489 = vpop.f32.mrb[0].mxu0
      %4490 = vdwg.mxu0
      %v4492 = vsel %vm461, %v448, 0
      %v4495 = vsel %vm461, %v371, 0
      %v4498 = vsel %vm461, %v372, 0
      %4500 = vmatprep.subr.mxu0 0.0
      %4501 = vmatpush1.xpose.msra.mxu0 %v4495
      %4502 = vmatprep.subr.mxu0 0.0
      %4503 = vmatpush1.xpose.msra.mxu0 %v4498
      %4504 = vmatprep.subr.mxu0 0.0
      %4505 = vmatpush1.xpose.msra.mxu0 0.0
      %4506 = vmatprep.subr.mxu0 0.0
      %4507 = vmatpush1.xpose.msra.mxu0 0.0
      %4508 = vmatprep.subr.mxu0 0.0
      %4509 = vmatpush1.xpose.msra.mxu0 0.0
      %4510 = vmatprep.subr.mxu0 0.0
      %4511 = vmatpush1.xpose.msra.mxu0 0.0
      %4512 = vmatprep.subr.mxu0 0.0
      %4513 = vmatpush1.xpose.msra.mxu0 0.0
      %4514 = vmatprep.subr.mxu0 0.0
      %4515 = vmatpush1.xpose.msra.mxu0 0.0
      %4516 = vmatprep.subr.mxu0 0.0
      %4517 = vmatpush1.xpose.msra.mxu0 0.0
      %4518 = vmatprep.subr.mxu0 0.0
      %4519 = vmatpush1.xpose.msra.mxu0 0.0
      %4520 = vmatprep.subr.mxu0 0.0
      %4521 = vmatpush1.xpose.msra.mxu0 0.0
      %4522 = vmatprep.subr.mxu0 0.0
      %4523 = vmatpush1.xpose.msra.mxu0 0.0
      %4524 = vmatprep.subr.mxu0 0.0
      %4525 = vmatpush1.xpose.msra.mxu0 0.0
      %4526 = vmatprep.subr.mxu0 0.0
      %4527 = vmatpush1.xpose.msra.mxu0 0.0
      %4528 = vmatprep.subr.mxu0 0.0
      %4529 = vmatpush1.xpose.msra.mxu0 0.0
      %4530 = vmatprep.subr.mxu0 0.0
      %4531 = vmatpush1.xpose.msra.mxu0 0.0
      %4532 = vmatprep.subr.mxu0 0.0
      %4533 = vmatpush1.xpose.msra.mxu0 0.0
      %4534 = vmatprep.subr.mxu0 0.0
      %4535 = vmatpush1.xpose.msra.mxu0 0.0
      %4536 = vmatprep.subr.mxu0 0.0
      %4537 = vmatpush1.xpose.msra.mxu0 0.0
      %4538 = vmatprep.subr.mxu0 0.0
      %4539 = vmatpush1.xpose.msra.mxu0 0.0
      %4540 = vmatprep.subr.mxu0 0.0
      %4541 = vmatpush1.xpose.msra.mxu0 0.0
      %4542 = vmatprep.subr.mxu0 0.0
      %4543 = vmatpush1.xpose.msra.mxu0 0.0
      %4544 = vmatprep.subr.mxu0 0.0
      %4545 = vmatpush1.xpose.msra.mxu0 0.0
      %4546 = vmatprep.subr.mxu0 0.0
      %4547 = vmatpush1.xpose.msra.mxu0 0.0
      %4548 = vmatprep.subr.mxu0 0.0
      %4549 = vmatpush1.xpose.msra.mxu0 0.0
      %4550 = vmatprep.subr.mxu0 0.0
      %4551 = vmatpush1.xpose.msra.mxu0 0.0
      %4552 = vmatprep.subr.mxu0 0.0
      %4553 = vmatpush1.xpose.msra.mxu0 0.0
      %4554 = vmatprep.subr.mxu0 0.0
      %4555 = vmatpush1.xpose.msra.mxu0 0.0
      %4556 = vmatprep.subr.mxu0 0.0
      %4557 = vmatpush1.xpose.msra.mxu0 0.0
      %4558 = vmatprep.subr.mxu0 0.0
      %4559 = vmatpush1.xpose.msra.mxu0 0.0
      %4560 = vmatprep.subr.mxu0 0.0
      %4561 = vmatpush1.xpose.msra.mxu0 0.0
      %4562 = vmatprep.subr.mxu0 0.0
      %4563 = vmatpush1.xpose.msra.mxu0 0.0
      %4564 = vmatprep.mubr.f32.mxu0 0.0
      %4565 = vmatmul.mubr.f32.gmra.mrb[0].mxu0 %v4492
      %v4566 = vpop.f32.mrb[0].mxu0
      %v4567 = vadd.f32 0.0, %v4566
      %v4568 = vpop.f32.mrb[0].mxu0
      %4569 = vdwg.mxu0
      %v4571 = vsel %vm461, %v449, 0
      %v4574 = vsel %vm461, %v373, 0
      %v4577 = vsel %vm461, %v374, 0
      %4579 = vmatprep.subr.mxu0 0.0
      %4580 = vmatpush1.xpose.msra.mxu0 %v4574
      %4581 = vmatprep.subr.mxu0 0.0
      %4582 = vmatpush1.xpose.msra.mxu0 %v4577
      %4583 = vmatprep.subr.mxu0 0.0
      %4584 = vmatpush1.xpose.msra.mxu0 0.0
      %4585 = vmatprep.subr.mxu0 0.0
      %4586 = vmatpush1.xpose.msra.mxu0 0.0
      %4587 = vmatprep.subr.mxu0 0.0
      %4588 = vmatpush1.xpose.msra.mxu0 0.0
      %4589 = vmatprep.subr.mxu0 0.0
      %4590 = vmatpush1.xpose.msra.mxu0 0.0
      %4591 = vmatprep.subr.mxu0 0.0
      %4592 = vmatpush1.xpose.msra.mxu0 0.0
      %4593 = vmatprep.subr.mxu0 0.0
      %4594 = vmatpush1.xpose.msra.mxu0 0.0
      %4595 = vmatprep.subr.mxu0 0.0
      %4596 = vmatpush1.xpose.msra.mxu0 0.0
      %4597 = vmatprep.subr.mxu0 0.0
      %4598 = vmatpush1.xpose.msra.mxu0 0.0
      %4599 = vmatprep.subr.mxu0 0.0
      %4600 = vmatpush1.xpose.msra.mxu0 0.0
      %4601 = vmatprep.subr.mxu0 0.0
      %4602 = vmatpush1.xpose.msra.mxu0 0.0
      %4603 = vmatprep.subr.mxu0 0.0
      %4604 = vmatpush1.xpose.msra.mxu0 0.0
      %4605 = vmatprep.subr.mxu0 0.0
      %4606 = vmatpush1.xpose.msra.mxu0 0.0
      %4607 = vmatprep.subr.mxu0 0.0
      %4608 = vmatpush1.xpose.msra.mxu0 0.0
      %4609 = vmatprep.subr.mxu0 0.0
      %4610 = vmatpush1.xpose.msra.mxu0 0.0
      %4611 = vmatprep.subr.mxu0 0.0
      %4612 = vmatpush1.xpose.msra.mxu0 0.0
      %4613 = vmatprep.subr.mxu0 0.0
      %4614 = vmatpush1.xpose.msra.mxu0 0.0
      %4615 = vmatprep.subr.mxu0 0.0
      %4616 = vmatpush1.xpose.msra.mxu0 0.0
      %4617 = vmatprep.subr.mxu0 0.0
      %4618 = vmatpush1.xpose.msra.mxu0 0.0
      %4619 = vmatprep.subr.mxu0 0.0
      %4620 = vmatpush1.xpose.msra.mxu0 0.0
      %4621 = vmatprep.subr.mxu0 0.0
      %4622 = vmatpush1.xpose.msra.mxu0 0.0
      %4623 = vmatprep.subr.mxu0 0.0
      %4624 = vmatpush1.xpose.msra.mxu0 0.0
      %4625 = vmatprep.subr.mxu0 0.0
      %4626 = vmatpush1.xpose.msra.mxu0 0.0
      %4627 = vmatprep.subr.mxu0 0.0
      %4628 = vmatpush1.xpose.msra.mxu0 0.0
      %4629 = vmatprep.subr.mxu0 0.0
      %4630 = vmatpush1.xpose.msra.mxu0 0.0
      %4631 = vmatprep.subr.mxu0 0.0
      %4632 = vmatpush1.xpose.msra.mxu0 0.0
      %4633 = vmatprep.subr.mxu0 0.0
      %4634 = vmatpush1.xpose.msra.mxu0 0.0
      %4635 = vmatprep.subr.mxu0 0.0
      %4636 = vmatpush1.xpose.msra.mxu0 0.0
      %4637 = vmatprep.subr.mxu0 0.0
      %4638 = vmatpush1.xpose.msra.mxu0 0.0
      %4639 = vmatprep.subr.mxu0 0.0
      %4640 = vmatpush1.xpose.msra.mxu0 0.0
      %4641 = vmatprep.subr.mxu0 0.0
      %4642 = vmatpush1.xpose.msra.mxu0 0.0
      %4643 = vmatprep.mubr.f32.mxu0 0.0
      %4644 = vmatmul.mubr.f32.gmra.mrb[0].mxu0 %v4571
      %v4645 = vpop.f32.mrb[0].mxu0
      %v4646 = vadd.f32 0.0, %v4645
      %v4647 = vpop.f32.mrb[0].mxu0
      %4648 = vdwg.mxu0
      %v4650 = vsel %vm461, %v450, 0
      %v4653 = vsel %vm461, %v375, 0
      %v4656 = vsel %vm461, %v376, 0
      %4658 = vmatprep.subr.mxu0 0.0
      %4659 = vmatpush1.xpose.msra.mxu0 %v4653
      %4660 = vmatprep.subr.mxu0 0.0
      %4661 = vmatpush1.xpose.msra.mxu0 %v4656
      %4662 = vmatprep.subr.mxu0 0.0
      %4663 = vmatpush1.xpose.msra.mxu0 0.0
      %4664 = vmatprep.subr.mxu0 0.0
      %4665 = vmatpush1.xpose.msra.mxu0 0.0
      %4666 = vmatprep.subr.mxu0 0.0
      %4667 = vmatpush1.xpose.msra.mxu0 0.0
      %4668 = vmatprep.subr.mxu0 0.0
      %4669 = vmatpush1.xpose.msra.mxu0 0.0
      %4670 = vmatprep.subr.mxu0 0.0
      %4671 = vmatpush1.xpose.msra.mxu0 0.0
      %4672 = vmatprep.subr.mxu0 0.0
      %4673 = vmatpush1.xpose.msra.mxu0 0.0
      %4674 = vmatprep.subr.mxu0 0.0
      %4675 = vmatpush1.xpose.msra.mxu0 0.0
      %4676 = vmatprep.subr.mxu0 0.0
      %4677 = vmatpush1.xpose.msra.mxu0 0.0
      %4678 = vmatprep.subr.mxu0 0.0
      %4679 = vmatpush1.xpose.msra.mxu0 0.0
      %4680 = vmatprep.subr.mxu0 0.0
      %4681 = vmatpush1.xpose.msra.mxu0 0.0
      %4682 = vmatprep.subr.mxu0 0.0
      %4683 = vmatpush1.xpose.msra.mxu0 0.0
      %4684 = vmatprep.subr.mxu0 0.0
      %4685 = vmatpush1.xpose.msra.mxu0 0.0
      %4686 = vmatprep.subr.mxu0 0.0
      %4687 = vmatpush1.xpose.msra.mxu0 0.0
      %4688 = vmatprep.subr.mxu0 0.0
      %4689 = vmatpush1.xpose.msra.mxu0 0.0
      %4690 = vmatprep.subr.mxu0 0.0
      %4691 = vmatpush1.xpose.msra.mxu0 0.0
      %4692 = vmatprep.subr.mxu0 0.0
      %4693 = vmatpush1.xpose.msra.mxu0 0.0
      %4694 = vmatprep.subr.mxu0 0.0
      %4695 = vmatpush1.xpose.msra.mxu0 0.0
      %4696 = vmatprep.subr.mxu0 0.0
      %4697 = vmatpush1.xpose.msra.mxu0 0.0
      %4698 = vmatprep.subr.mxu0 0.0
      %4699 = vmatpush1.xpose.msra.mxu0 0.0
      %4700 = vmatprep.subr.mxu0 0.0
      %4701 = vmatpush1.xpose.msra.mxu0 0.0
      %4702 = vmatprep.subr.mxu0 0.0
      %4703 = vmatpush1.xpose.msra.mxu0 0.0
      %4704 = vmatprep.subr.mxu0 0.0
      %4705 = vmatpush1.xpose.msra.mxu0 0.0
      %4706 = vmatprep.subr.mxu0 0.0
      %4707 = vmatpush1.xpose.msra.mxu0 0.0
      %4708 = vmatprep.subr.mxu0 0.0
      %4709 = vmatpush1.xpose.msra.mxu0 0.0
      %4710 = vmatprep.subr.mxu0 0.0
      %4711 = vmatpush1.xpose.msra.mxu0 0.0
      %4712 = vmatprep.subr.mxu0 0.0
      %4713 = vmatpush1.xpose.msra.mxu0 0.0
      %4714 = vmatprep.subr.mxu0 0.0
      %4715 = vmatpush1.xpose.msra.mxu0 0.0
      %4716 = vmatprep.subr.mxu0 0.0
      %4717 = vmatpush1.xpose.msra.mxu0 0.0
      %4718 = vmatprep.subr.mxu0 0.0
      %4719 = vmatpush1.xpose.msra.mxu0 0.0
      %4720 = vmatprep.subr.mxu0 0.0
      %4721 = vmatpush1.xpose.msra.mxu0 0.0
      %4722 = vmatprep.mubr.f32.mxu0 0.0
      %4723 = vmatmul.mubr.f32.gmra.mrb[0].mxu0 %v4650
      %v4724 = vpop.f32.mrb[0].mxu0
      %v4725 = vadd.f32 0.0, %v4724
      %v4726 = vpop.f32.mrb[0].mxu0
      %4727 = vdwg.mxu0
      %v4729 = vsel %vm461, %v451, 0
      %v4732 = vsel %vm461, %v377, 0
      %v4735 = vsel %vm461, %v378, 0
      %4737 = vmatprep.subr.mxu0 0.0
      %4738 = vmatpush1.xpose.msra.mxu0 %v4732
      %4739 = vmatprep.subr.mxu0 0.0
      %4740 = vmatpush1.xpose.msra.mxu0 %v4735
      %4741 = vmatprep.subr.mxu0 0.0
      %4742 = vmatpush1.xpose.msra.mxu0 0.0
      %4743 = vmatprep.subr.mxu0 0.0
      %4744 = vmatpush1.xpose.msra.mxu0 0.0
      %4745 = vmatprep.subr.mxu0 0.0
      %4746 = vmatpush1.xpose.msra.mxu0 0.0
      %4747 = vmatprep.subr.mxu0 0.0
      %4748 = vmatpush1.xpose.msra.mxu0 0.0
      %4749 = vmatprep.subr.mxu0 0.0
      %4750 = vmatpush1.xpose.msra.mxu0 0.0
      %4751 = vmatprep.subr.mxu0 0.0
      %4752 = vmatpush1.xpose.msra.mxu0 0.0
      %4753 = vmatprep.subr.mxu0 0.0
      %4754 = vmatpush1.xpose.msra.mxu0 0.0
      %4755 = vmatprep.subr.mxu0 0.0
      %4756 = vmatpush1.xpose.msra.mxu0 0.0
      %4757 = vmatprep.subr.mxu0 0.0
      %4758 = vmatpush1.xpose.msra.mxu0 0.0
      %4759 = vmatprep.subr.mxu0 0.0
      %4760 = vmatpush1.xpose.msra.mxu0 0.0
      %4761 = vmatprep.subr.mxu0 0.0
      %4762 = vmatpush1.xpose.msra.mxu0 0.0
      %4763 = vmatprep.subr.mxu0 0.0
      %4764 = vmatpush1.xpose.msra.mxu0 0.0
      %4765 = vmatprep.subr.mxu0 0.0
      %4766 = vmatpush1.xpose.msra.mxu0 0.0
      %4767 = vmatprep.subr.mxu0 0.0
      %4768 = vmatpush1.xpose.msra.mxu0 0.0
      %4769 = vmatprep.subr.mxu0 0.0
      %4770 = vmatpush1.xpose.msra.mxu0 0.0
      %4771 = vmatprep.subr.mxu0 0.0
      %4772 = vmatpush1.xpose.msra.mxu0 0.0
      %4773 = vmatprep.subr.mxu0 0.0
      %4774 = vmatpush1.xpose.msra.mxu0 0.0
      %4775 = vmatprep.subr.mxu0 0.0
      %4776 = vmatpush1.xpose.msra.mxu0 0.0
      %4777 = vmatprep.subr.mxu0 0.0
      %4778 = vmatpush1.xpose.msra.mxu0 0.0
      %4779 = vmatprep.subr.mxu0 0.0
      %4780 = vmatpush1.xpose.msra.mxu0 0.0
      %4781 = vmatprep.subr.mxu0 0.0
      %4782 = vmatpush1.xpose.msra.mxu0 0.0
      %4783 = vmatprep.subr.mxu0 0.0
      %4784 = vmatpush1.xpose.msra.mxu0 0.0
      %4785 = vmatprep.subr.mxu0 0.0
      %4786 = vmatpush1.xpose.msra.mxu0 0.0
      %4787 = vmatprep.subr.mxu0 0.0
      %4788 = vmatpush1.xpose.msra.mxu0 0.0
      %4789 = vmatprep.subr.mxu0 0.0
      %4790 = vmatpush1.xpose.msra.mxu0 0.0
      %4791 = vmatprep.subr.mxu0 0.0
      %4792 = vmatpush1.xpose.msra.mxu0 0.0
      %4793 = vmatprep.subr.mxu0 0.0
      %4794 = vmatpush1.xpose.msra.mxu0 0.0
      %4795 = vmatprep.subr.mxu0 0.0
      %4796 = vmatpush1.xpose.msra.mxu0 0.0
      %4797 = vmatprep.subr.mxu0 0.0
      %4798 = vmatpush1.xpose.msra.mxu0 0.0
      %4799 = vmatprep.subr.mxu0 0.0
      %4800 = vmatpush1.xpose.msra.mxu0 0.0
      %4801 = vmatprep.mubr.f32.mxu0 0.0
      %4802 = vmatmul.mubr.f32.gmra.mrb[0].mxu0 %v4729
      %v4803 = vpop.f32.mrb[0].mxu0
      %v4804 = vadd.f32 0.0, %v4803
      %v4805 = vpop.f32.mrb[0].mxu0
      %4806 = vdwg.mxu0
      %v4808 = vsel %vm461, %v452, 0
      %v4811 = vsel %vm461, %v379, 0
      %v4814 = vsel %vm461, %v380, 0
      %4816 = vmatprep.subr.mxu0 0.0
      %4817 = vmatpush1.xpose.msra.mxu0 %v4811
      %4818 = vmatprep.subr.mxu0 0.0
      %4819 = vmatpush1.xpose.msra.mxu0 %v4814
      %4820 = vmatprep.subr.mxu0 0.0
      %4821 = vmatpush1.xpose.msra.mxu0 0.0
      %4822 = vmatprep.subr.mxu0 0.0
      %4823 = vmatpush1.xpose.msra.mxu0 0.0
      %4824 = vmatprep.subr.mxu0 0.0
      %4825 = vmatpush1.xpose.msra.mxu0 0.0
      %4826 = vmatprep.subr.mxu0 0.0
      %4827 = vmatpush1.xpose.msra.mxu0 0.0
      %4828 = vmatprep.subr.mxu0 0.0
      %4829 = vmatpush1.xpose.msra.mxu0 0.0
      %4830 = vmatprep.subr.mxu0 0.0
      %4831 = vmatpush1.xpose.msra.mxu0 0.0
      %4832 = vmatprep.subr.mxu0 0.0
      %4833 = vmatpush1.xpose.msra.mxu0 0.0
      %4834 = vmatprep.subr.mxu0 0.0
      %4835 = vmatpush1.xpose.msra.mxu0 0.0
      %4836 = vmatprep.subr.mxu0 0.0
      %4837 = vmatpush1.xpose.msra.mxu0 0.0
      %4838 = vmatprep.subr.mxu0 0.0
      %4839 = vmatpush1.xpose.msra.mxu0 0.0
      %4840 = vmatprep.subr.mxu0 0.0
      %4841 = vmatpush1.xpose.msra.mxu0 0.0
      %4842 = vmatprep.subr.mxu0 0.0
      %4843 = vmatpush1.xpose.msra.mxu0 0.0
      %4844 = vmatprep.subr.mxu0 0.0
      %4845 = vmatpush1.xpose.msra.mxu0 0.0
      %4846 = vmatprep.subr.mxu0 0.0
      %4847 = vmatpush1.xpose.msra.mxu0 0.0
      %4848 = vmatprep.subr.mxu0 0.0
      %4849 = vmatpush1.xpose.msra.mxu0 0.0
      %4850 = vmatprep.subr.mxu0 0.0
      %4851 = vmatpush1.xpose.msra.mxu0 0.0
      %4852 = vmatprep.subr.mxu0 0.0
      %4853 = vmatpush1.xpose.msra.mxu0 0.0
      %4854 = vmatprep.subr.mxu0 0.0
      %4855 = vmatpush1.xpose.msra.mxu0 0.0
      %4856 = vmatprep.subr.mxu0 0.0
      %4857 = vmatpush1.xpose.msra.mxu0 0.0
      %4858 = vmatprep.subr.mxu0 0.0
      %4859 = vmatpush1.xpose.msra.mxu0 0.0
      %4860 = vmatprep.subr.mxu0 0.0
      %4861 = vmatpush1.xpose.msra.mxu0 0.0
      %4862 = vmatprep.subr.mxu0 0.0
      %4863 = vmatpush1.xpose.msra.mxu0 0.0
      %4864 = vmatprep.subr.mxu0 0.0
      %4865 = vmatpush1.xpose.msra.mxu0 0.0
      %4866 = vmatprep.subr.mxu0 0.0
      %4867 = vmatpush1.xpose.msra.mxu0 0.0
      %4868 = vmatprep.subr.mxu0 0.0
      %4869 = vmatpush1.xpose.msra.mxu0 0.0
      %4870 = vmatprep.subr.mxu0 0.0
      %4871 = vmatpush1.xpose.msra.mxu0 0.0
      %4872 = vmatprep.subr.mxu0 0.0
      %4873 = vmatpush1.xpose.msra.mxu0 0.0
      %4874 = vmatprep.subr.mxu0 0.0
      %4875 = vmatpush1.xpose.msra.mxu0 0.0
      %4876 = vmatprep.subr.mxu0 0.0
      %4877 = vmatpush1.xpose.msra.mxu0 0.0
      %4878 = vmatprep.subr.mxu0 0.0
      %4879 = vmatpush1.xpose.msra.mxu0 0.0
      %4880 = vmatprep.mubr.f32.mxu0 0.0
      %4881 = vmatmul.mubr.f32.gmra.mrb[0].mxu0 %v4808
      %v4882 = vpop.f32.mrb[0].mxu0
      %v4883 = vadd.f32 0.0, %v4882
      %v4884 = vpop.f32.mrb[0].mxu0
      %4885 = vdwg.mxu0
      %v4887 = vsel %vm461, %v453, 0
      %v4890 = vsel %vm461, %v381, 0
      %v4893 = vsel %vm461, %v382, 0
      %4895 = vmatprep.subr.mxu0 0.0
      %4896 = vmatpush1.xpose.msra.mxu0 %v4890
      %4897 = vmatprep.subr.mxu0 0.0
      %4898 = vmatpush1.xpose.msra.mxu0 %v4893
      %4899 = vmatprep.subr.mxu0 0.0
      %4900 = vmatpush1.xpose.msra.mxu0 0.0
      %4901 = vmatprep.subr.mxu0 0.0
      %4902 = vmatpush1.xpose.msra.mxu0 0.0
      %4903 = vmatprep.subr.mxu0 0.0
      %4904 = vmatpush1.xpose.msra.mxu0 0.0
      %4905 = vmatprep.subr.mxu0 0.0
      %4906 = vmatpush1.xpose.msra.mxu0 0.0
      %4907 = vmatprep.subr.mxu0 0.0
      %4908 = vmatpush1.xpose.msra.mxu0 0.0
      %4909 = vmatprep.subr.mxu0 0.0
      %4910 = vmatpush1.xpose.msra.mxu0 0.0
      %4911 = vmatprep.subr.mxu0 0.0
      %4912 = vmatpush1.xpose.msra.mxu0 0.0
      %4913 = vmatprep.subr.mxu0 0.0
      %4914 = vmatpush1.xpose.msra.mxu0 0.0
      %4915 = vmatprep.subr.mxu0 0.0
      %4916 = vmatpush1.xpose.msra.mxu0 0.0
      %4917 = vmatprep.subr.mxu0 0.0
      %4918 = vmatpush1.xpose.msra.mxu0 0.0
      %4919 = vmatprep.subr.mxu0 0.0
      %4920 = vmatpush1.xpose.msra.mxu0 0.0
      %4921 = vmatprep.subr.mxu0 0.0
      %4922 = vmatpush1.xpose.msra.mxu0 0.0
      %4923 = vmatprep.subr.mxu0 0.0
      %4924 = vmatpush1.xpose.msra.mxu0 0.0
      %4925 = vmatprep.subr.mxu0 0.0
      %4926 = vmatpush1.xpose.msra.mxu0 0.0
      %4927 = vmatprep.subr.mxu0 0.0
      %4928 = vmatpush1.xpose.msra.mxu0 0.0
      %4929 = vmatprep.subr.mxu0 0.0
      %4930 = vmatpush1.xpose.msra.mxu0 0.0
      %4931 = vmatprep.subr.mxu0 0.0
      %4932 = vmatpush1.xpose.msra.mxu0 0.0
      %4933 = vmatprep.subr.mxu0 0.0
      %4934 = vmatpush1.xpose.msra.mxu0 0.0
      %4935 = vmatprep.subr.mxu0 0.0
      %4936 = vmatpush1.xpose.msra.mxu0 0.0
      %4937 = vmatprep.subr.mxu0 0.0
      %4938 = vmatpush1.xpose.msra.mxu0 0.0
      %4939 = vmatprep.subr.mxu0 0.0
      %4940 = vmatpush1.xpose.msra.mxu0 0.0
      %4941 = vmatprep.subr.mxu0 0.0
      %4942 = vmatpush1.xpose.msra.mxu0 0.0
      %4943 = vmatprep.subr.mxu0 0.0
      %4944 = vmatpush1.xpose.msra.mxu0 0.0
      %4945 = vmatprep.subr.mxu0 0.0
      %4946 = vmatpush1.xpose.msra.mxu0 0.0
      %4947 = vmatprep.subr.mxu0 0.0
      %4948 = vmatpush1.xpose.msra.mxu0 0.0
      %4949 = vmatprep.subr.mxu0 0.0
      %4950 = vmatpush1.xpose.msra.mxu0 0.0
      %4951 = vmatprep.subr.mxu0 0.0
      %4952 = vmatpush1.xpose.msra.mxu0 0.0
      %4953 = vmatprep.subr.mxu0 0.0
      %4954 = vmatpush1.xpose.msra.mxu0 0.0
      %4955 = vmatprep.subr.mxu0 0.0
      %4956 = vmatpush1.xpose.msra.mxu0 0.0
      %4957 = vmatprep.subr.mxu0 0.0
      %4958 = vmatpush1.xpose.msra.mxu0 0.0
      %4959 = vmatprep.mubr.f32.mxu0 0.0
      %4960 = vmatmul.mubr.f32.gmra.mrb[0].mxu0 %v4887
      %v4961 = vpop.f32.mrb[0].mxu0
      %v4962 = vadd.f32 0.0, %v4961
      %v4963 = vpop.f32.mrb[0].mxu0
      %4964 = vdwg.mxu0
      %v4966 = vsel %vm461, %v454, 0
      %v4969 = vsel %vm461, %v383, 0
      %v4972 = vsel %vm461, %v384, 0
      %4974 = vmatprep.subr.mxu0 0.0
      %4975 = vmatpush1.xpose.msra.mxu0 %v4969
      %4976 = vmatprep.subr.mxu0 0.0
      %4977 = vmatpush1.xpose.msra.mxu0 %v4972
      %4978 = vmatprep.subr.mxu0 0.0
      %4979 = vmatpush1.xpose.msra.mxu0 0.0
      %4980 = vmatprep.subr.mxu0 0.0
      %4981 = vmatpush1.xpose.msra.mxu0 0.0
      %4982 = vmatprep.subr.mxu0 0.0
      %4983 = vmatpush1.xpose.msra.mxu0 0.0
      %4984 = vmatprep.subr.mxu0 0.0
      %4985 = vmatpush1.xpose.msra.mxu0 0.0
      %4986 = vmatprep.subr.mxu0 0.0
      %4987 = vmatpush1.xpose.msra.mxu0 0.0
      %4988 = vmatprep.subr.mxu0 0.0
      %4989 = vmatpush1.xpose.msra.mxu0 0.0
      %4990 = vmatprep.subr.mxu0 0.0
      %4991 = vmatpush1.xpose.msra.mxu0 0.0
      %4992 = vmatprep.subr.mxu0 0.0
      %4993 = vmatpush1.xpose.msra.mxu0 0.0
      %4994 = vmatprep.subr.mxu0 0.0
      %4995 = vmatpush1.xpose.msra.mxu0 0.0
      %4996 = vmatprep.subr.mxu0 0.0
      %4997 = vmatpush1.xpose.msra.mxu0 0.0
      %4998 = vmatprep.subr.mxu0 0.0
      %4999 = vmatpush1.xpose.msra.mxu0 0.0
      %5000 = vmatprep.subr.mxu0 0.0
      %5001 = vmatpush1.xpose.msra.mxu0 0.0
      %5002 = vmatprep.subr.mxu0 0.0
      %5003 = vmatpush1.xpose.msra.mxu0 0.0
      %5004 = vmatprep.subr.mxu0 0.0
      %5005 = vmatpush1.xpose.msra.mxu0 0.0
      %5006 = vmatprep.subr.mxu0 0.0
      %5007 = vmatpush1.xpose.msra.mxu0 0.0
      %5008 = vmatprep.subr.mxu0 0.0
      %5009 = vmatpush1.xpose.msra.mxu0 0.0
      %5010 = vmatprep.subr.mxu0 0.0
      %5011 = vmatpush1.xpose.msra.mxu0 0.0
      %5012 = vmatprep.subr.mxu0 0.0
      %5013 = vmatpush1.xpose.msra.mxu0 0.0
      %5014 = vmatprep.subr.mxu0 0.0
      %5015 = vmatpush1.xpose.msra.mxu0 0.0
      %5016 = vmatprep.subr.mxu0 0.0
      %5017 = vmatpush1.xpose.msra.mxu0 0.0
      %5018 = vmatprep.subr.mxu0 0.0
      %5019 = vmatpush1.xpose.msra.mxu0 0.0
      %5020 = vmatprep.subr.mxu0 0.0
      %5021 = vmatpush1.xpose.msra.mxu0 0.0
      %5022 = vmatprep.subr.mxu0 0.0
      %5023 = vmatpush1.xpose.msra.mxu0 0.0
      %5024 = vmatprep.subr.mxu0 0.0
      %5025 = vmatpush1.xpose.msra.mxu0 0.0
      %5026 = vmatprep.subr.mxu0 0.0
      %5027 = vmatpush1.xpose.msra.mxu0 0.0
      %5028 = vmatprep.subr.mxu0 0.0
      %5029 = vmatpush1.xpose.msra.mxu0 0.0
      %5030 = vmatprep.subr.mxu0 0.0
      %5031 = vmatpush1.xpose.msra.mxu0 0.0
      %5032 = vmatprep.subr.mxu0 0.0
      %5033 = vmatpush1.xpose.msra.mxu0 0.0
      %5034 = vmatprep.subr.mxu0 0.0
      %5035 = vmatpush1.xpose.msra.mxu0 0.0
      %5036 = vmatprep.subr.mxu0 0.0
      %5037 = vmatpush1.xpose.msra.mxu0 0.0
      %5038 = vmatprep.mubr.f32.mxu0 0.0
      %5039 = vmatmul.mubr.f32.gmra.mrb[0].mxu0 %v4966
      %v5040 = vpop.f32.mrb[0].mxu0
      %v5041 = vadd.f32 0.0, %v5040
      %v5042 = vpop.f32.mrb[0].mxu0
      %5043 = vdwg.mxu0
      %v5045 = vsel %vm461, %v455, 0
      %v5048 = vsel %vm461, %v385, 0
      %v5051 = vsel %vm461, %v386, 0
      %5053 = vmatprep.subr.mxu0 0.0
      %5054 = vmatpush1.xpose.msra.mxu0 %v5048
      %5055 = vmatprep.subr.mxu0 0.0
      %5056 = vmatpush1.xpose.msra.mxu0 %v5051
      %5057 = vmatprep.subr.mxu0 0.0
      %5058 = vmatpush1.xpose.msra.mxu0 0.0
      %5059 = vmatprep.subr.mxu0 0.0
      %5060 = vmatpush1.xpose.msra.mxu0 0.0
      %5061 = vmatprep.subr.mxu0 0.0
      %5062 = vmatpush1.xpose.msra.mxu0 0.0
      %5063 = vmatprep.subr.mxu0 0.0
      %5064 = vmatpush1.xpose.msra.mxu0 0.0
      %5065 = vmatprep.subr.mxu0 0.0
      %5066 = vmatpush1.xpose.msra.mxu0 0.0
      %5067 = vmatprep.subr.mxu0 0.0
      %5068 = vmatpush1.xpose.msra.mxu0 0.0
      %5069 = vmatprep.subr.mxu0 0.0
      %5070 = vmatpush1.xpose.msra.mxu0 0.0
      %5071 = vmatprep.subr.mxu0 0.0
      %5072 = vmatpush1.xpose.msra.mxu0 0.0
      %5073 = vmatprep.subr.mxu0 0.0
      %5074 = vmatpush1.xpose.msra.mxu0 0.0
      %5075 = vmatprep.subr.mxu0 0.0
      %5076 = vmatpush1.xpose.msra.mxu0 0.0
      %5077 = vmatprep.subr.mxu0 0.0
      %5078 = vmatpush1.xpose.msra.mxu0 0.0
      %5079 = vmatprep.subr.mxu0 0.0
      %5080 = vmatpush1.xpose.msra.mxu0 0.0
      %5081 = vmatprep.subr.mxu0 0.0
      %5082 = vmatpush1.xpose.msra.mxu0 0.0
      %5083 = vmatprep.subr.mxu0 0.0
      %5084 = vmatpush1.xpose.msra.mxu0 0.0
      %5085 = vmatprep.subr.mxu0 0.0
      %5086 = vmatpush1.xpose.msra.mxu0 0.0
      %5087 = vmatprep.subr.mxu0 0.0
      %5088 = vmatpush1.xpose.msra.mxu0 0.0
      %5089 = vmatprep.subr.mxu0 0.0
      %5090 = vmatpush1.xpose.msra.mxu0 0.0
      %5091 = vmatprep.subr.mxu0 0.0
      %5092 = vmatpush1.xpose.msra.mxu0 0.0
      %5093 = vmatprep.subr.mxu0 0.0
      %5094 = vmatpush1.xpose.msra.mxu0 0.0
      %5095 = vmatprep.subr.mxu0 0.0
      %5096 = vmatpush1.xpose.msra.mxu0 0.0
      %5097 = vmatprep.subr.mxu0 0.0
      %5098 = vmatpush1.xpose.msra.mxu0 0.0
      %5099 = vmatprep.subr.mxu0 0.0
      %5100 = vmatpush1.xpose.msra.mxu0 0.0
      %5101 = vmatprep.subr.mxu0 0.0
      %5102 = vmatpush1.xpose.msra.mxu0 0.0
      %5103 = vmatprep.subr.mxu0 0.0
      %5104 = vmatpush1.xpose.msra.mxu0 0.0
      %5105 = vmatprep.subr.mxu0 0.0
      %5106 = vmatpush1.xpose.msra.mxu0 0.0
      %5107 = vmatprep.subr.mxu0 0.0
      %5108 = vmatpush1.xpose.msra.mxu0 0.0
      %5109 = vmatprep.subr.mxu0 0.0
      %5110 = vmatpush1.xpose.msra.mxu0 0.0
      %5111 = vmatprep.subr.mxu0 0.0
      %5112 = vmatpush1.xpose.msra.mxu0 0.0
      %5113 = vmatprep.subr.mxu0 0.0
      %5114 = vmatpush1.xpose.msra.mxu0 0.0
      %5115 = vmatprep.subr.mxu0 0.0
      %5116 = vmatpush1.xpose.msra.mxu0 0.0
      %5117 = vmatprep.mubr.f32.mxu0 0.0
      %5118 = vmatmul.mubr.f32.gmra.mrb[0].mxu0 %v5045
      %v5119 = vpop.f32.mrb[0].mxu0
      %v5120 = vadd.f32 0.0, %v5119
      %v5121 = vpop.f32.mrb[0].mxu0
      %5122 = vdwg.mxu0
      %v5124 = vsel %vm461, %v456, 0
      %v5127 = vsel %vm461, %v387, 0
      %v5130 = vsel %vm461, %v388, 0
      %5132 = vmatprep.subr.mxu0 0.0
      %5133 = vmatpush1.xpose.msra.mxu0 %v5127
      %5134 = vmatprep.subr.mxu0 0.0
      %5135 = vmatpush1.xpose.msra.mxu0 %v5130
      %5136 = vmatprep.subr.mxu0 0.0
      %5137 = vmatpush1.xpose.msra.mxu0 0.0
      %5138 = vmatprep.subr.mxu0 0.0
      %5139 = vmatpush1.xpose.msra.mxu0 0.0
      %5140 = vmatprep.subr.mxu0 0.0
      %5141 = vmatpush1.xpose.msra.mxu0 0.0
      %5142 = vmatprep.subr.mxu0 0.0
      %5143 = vmatpush1.xpose.msra.mxu0 0.0
      %5144 = vmatprep.subr.mxu0 0.0
      %5145 = vmatpush1.xpose.msra.mxu0 0.0
      %5146 = vmatprep.subr.mxu0 0.0
      %5147 = vmatpush1.xpose.msra.mxu0 0.0
      %5148 = vmatprep.subr.mxu0 0.0
      %5149 = vmatpush1.xpose.msra.mxu0 0.0
      %5150 = vmatprep.subr.mxu0 0.0
      %5151 = vmatpush1.xpose.msra.mxu0 0.0
      %5152 = vmatprep.subr.mxu0 0.0
      %5153 = vmatpush1.xpose.msra.mxu0 0.0
      %5154 = vmatprep.subr.mxu0 0.0
      %5155 = vmatpush1.xpose.msra.mxu0 0.0
      %5156 = vmatprep.subr.mxu0 0.0
      %5157 = vmatpush1.xpose.msra.mxu0 0.0
      %5158 = vmatprep.subr.mxu0 0.0
      %5159 = vmatpush1.xpose.msra.mxu0 0.0
      %5160 = vmatprep.subr.mxu0 0.0
      %5161 = vmatpush1.xpose.msra.mxu0 0.0
      %5162 = vmatprep.subr.mxu0 0.0
      %5163 = vmatpush1.xpose.msra.mxu0 0.0
      %5164 = vmatprep.subr.mxu0 0.0
      %5165 = vmatpush1.xpose.msra.mxu0 0.0
      %5166 = vmatprep.subr.mxu0 0.0
      %5167 = vmatpush1.xpose.msra.mxu0 0.0
      %5168 = vmatprep.subr.mxu0 0.0
      %5169 = vmatpush1.xpose.msra.mxu0 0.0
      %5170 = vmatprep.subr.mxu0 0.0
      %5171 = vmatpush1.xpose.msra.mxu0 0.0
      %5172 = vmatprep.subr.mxu0 0.0
      %5173 = vmatpush1.xpose.msra.mxu0 0.0
      %5174 = vmatprep.subr.mxu0 0.0
      %5175 = vmatpush1.xpose.msra.mxu0 0.0
      %5176 = vmatprep.subr.mxu0 0.0
      %5177 = vmatpush1.xpose.msra.mxu0 0.0
      %5178 = vmatprep.subr.mxu0 0.0
      %5179 = vmatpush1.xpose.msra.mxu0 0.0
      %5180 = vmatprep.subr.mxu0 0.0
      %5181 = vmatpush1.xpose.msra.mxu0 0.0
      %5182 = vmatprep.subr.mxu0 0.0
      %5183 = vmatpush1.xpose.msra.mxu0 0.0
      %5184 = vmatprep.subr.mxu0 0.0
      %5185 = vmatpush1.xpose.msra.mxu0 0.0
      %5186 = vmatprep.subr.mxu0 0.0
      %5187 = vmatpush1.xpose.msra.mxu0 0.0
      %5188 = vmatprep.subr.mxu0 0.0
      %5189 = vmatpush1.xpose.msra.mxu0 0.0
      %5190 = vmatprep.subr.mxu0 0.0
      %5191 = vmatpush1.xpose.msra.mxu0 0.0
      %5192 = vmatprep.subr.mxu0 0.0
      %5193 = vmatpush1.xpose.msra.mxu0 0.0
      %5194 = vmatprep.subr.mxu0 0.0
      %5195 = vmatpush1.xpose.msra.mxu0 0.0
      %5196 = vmatprep.mubr.f32.mxu0 0.0
      %5197 = vmatmul.mubr.f32.gmra.mrb[0].mxu0 %v5124
      %v5198 = vpop.f32.mrb[0].mxu0
      %v5199 = vadd.f32 0.0, %v5198
      %v5200 = vpop.f32.mrb[0].mxu0
      %5201 = vdwg.mxu0
      %v5203 = vsel %vm461, %v457, 0
      %v5206 = vsel %vm461, %v389, 0
      %v5209 = vsel %vm461, %v390, 0
      %5211 = vmatprep.subr.mxu0 0.0
      %5212 = vmatpush1.xpose.msra.mxu0 %v5206
      %5213 = vmatprep.subr.mxu0 0.0
      %5214 = vmatpush1.xpose.msra.mxu0 %v5209
      %5215 = vmatprep.subr.mxu0 0.0
      %5216 = vmatpush1.xpose.msra.mxu0 0.0
      %5217 = vmatprep.subr.mxu0 0.0
      %5218 = vmatpush1.xpose.msra.mxu0 0.0
      %5219 = vmatprep.subr.mxu0 0.0
      %5220 = vmatpush1.xpose.msra.mxu0 0.0
      %5221 = vmatprep.subr.mxu0 0.0
      %5222 = vmatpush1.xpose.msra.mxu0 0.0
      %5223 = vmatprep.subr.mxu0 0.0
      %5224 = vmatpush1.xpose.msra.mxu0 0.0
      %5225 = vmatprep.subr.mxu0 0.0
      %5226 = vmatpush1.xpose.msra.mxu0 0.0
      %5227 = vmatprep.subr.mxu0 0.0
      %5228 = vmatpush1.xpose.msra.mxu0 0.0
      %5229 = vmatprep.subr.mxu0 0.0
      %5230 = vmatpush1.xpose.msra.mxu0 0.0
      %5231 = vmatprep.subr.mxu0 0.0
      %5232 = vmatpush1.xpose.msra.mxu0 0.0
      %5233 = vmatprep.subr.mxu0 0.0
      %5234 = vmatpush1.xpose.msra.mxu0 0.0
      %5235 = vmatprep.subr.mxu0 0.0
      %5236 = vmatpush1.xpose.msra.mxu0 0.0
      %5237 = vmatprep.subr.mxu0 0.0
      %5238 = vmatpush1.xpose.msra.mxu0 0.0
      %5239 = vmatprep.subr.mxu0 0.0
      %5240 = vmatpush1.xpose.msra.mxu0 0.0
      %5241 = vmatprep.subr.mxu0 0.0
      %5242 = vmatpush1.xpose.msra.mxu0 0.0
      %5243 = vmatprep.subr.mxu0 0.0
      %5244 = vmatpush1.xpose.msra.mxu0 0.0
      %5245 = vmatprep.subr.mxu0 0.0
      %5246 = vmatpush1.xpose.msra.mxu0 0.0
      %5247 = vmatprep.subr.mxu0 0.0
      %5248 = vmatpush1.xpose.msra.mxu0 0.0
      %5249 = vmatprep.subr.mxu0 0.0
      %5250 = vmatpush1.xpose.msra.mxu0 0.0
      %5251 = vmatprep.subr.mxu0 0.0
      %5252 = vmatpush1.xpose.msra.mxu0 0.0
      %5253 = vmatprep.subr.mxu0 0.0
      %5254 = vmatpush1.xpose.msra.mxu0 0.0
      %5255 = vmatprep.subr.mxu0 0.0
      %5256 = vmatpush1.xpose.msra.mxu0 0.0
      %5257 = vmatprep.subr.mxu0 0.0
      %5258 = vmatpush1.xpose.msra.mxu0 0.0
      %5259 = vmatprep.subr.mxu0 0.0
      %5260 = vmatpush1.xpose.msra.mxu0 0.0
      %5261 = vmatprep.subr.mxu0 0.0
      %5262 = vmatpush1.xpose.msra.mxu0 0.0
      %5263 = vmatprep.subr.mxu0 0.0
      %5264 = vmatpush1.xpose.msra.mxu0 0.0
      %5265 = vmatprep.subr.mxu0 0.0
      %5266 = vmatpush1.xpose.msra.mxu0 0.0
      %5267 = vmatprep.subr.mxu0 0.0
      %5268 = vmatpush1.xpose.msra.mxu0 0.0
      %5269 = vmatprep.subr.mxu0 0.0
      %5270 = vmatpush1.xpose.msra.mxu0 0.0
      %5271 = vmatprep.subr.mxu0 0.0
      %5272 = vmatpush1.xpose.msra.mxu0 0.0
      %5273 = vmatprep.subr.mxu0 0.0
      %5274 = vmatpush1.xpose.msra.mxu0 0.0
      %5275 = vmatprep.mubr.f32.mxu0 0.0
      %5276 = vmatmul.mubr.f32.gmra.mrb[0].mxu0 %v5203
      %v5277 = vpop.f32.mrb[0].mxu0
      %v5278 = vadd.f32 0.0, %v5277
      %v5279 = vpop.f32.mrb[0].mxu0
      %5280 = vdwg.mxu0
      %v5282 = vsel %vm461, %v458, 0
      %v5285 = vsel %vm461, %v391, 0
      %v5288 = vsel %vm461, %v392, 0
      %5290 = vmatprep.subr.mxu0 0.0
      %5291 = vmatpush1.xpose.msra.mxu0 %v5285
      %5292 = vmatprep.subr.mxu0 0.0
      %5293 = vmatpush1.xpose.msra.mxu0 %v5288
      %5294 = vmatprep.subr.mxu0 0.0
      %5295 = vmatpush1.xpose.msra.mxu0 0.0
      %5296 = vmatprep.subr.mxu0 0.0
      %5297 = vmatpush1.xpose.msra.mxu0 0.0
      %5298 = vmatprep.subr.mxu0 0.0
      %5299 = vmatpush1.xpose.msra.mxu0 0.0
      %5300 = vmatprep.subr.mxu0 0.0
      %5301 = vmatpush1.xpose.msra.mxu0 0.0
      %5302 = vmatprep.subr.mxu0 0.0
      %5303 = vmatpush1.xpose.msra.mxu0 0.0
      %5304 = vmatprep.subr.mxu0 0.0
      %5305 = vmatpush1.xpose.msra.mxu0 0.0
      %5306 = vmatprep.subr.mxu0 0.0
      %5307 = vmatpush1.xpose.msra.mxu0 0.0
      %5308 = vmatprep.subr.mxu0 0.0
      %5309 = vmatpush1.xpose.msra.mxu0 0.0
      %5310 = vmatprep.subr.mxu0 0.0
      %5311 = vmatpush1.xpose.msra.mxu0 0.0
      %5312 = vmatprep.subr.mxu0 0.0
      %5313 = vmatpush1.xpose.msra.mxu0 0.0
      %5314 = vmatprep.subr.mxu0 0.0
      %5315 = vmatpush1.xpose.msra.mxu0 0.0
      %5316 = vmatprep.subr.mxu0 0.0
      %5317 = vmatpush1.xpose.msra.mxu0 0.0
      %5318 = vmatprep.subr.mxu0 0.0
      %5319 = vmatpush1.xpose.msra.mxu0 0.0
      %5320 = vmatprep.subr.mxu0 0.0
      %5321 = vmatpush1.xpose.msra.mxu0 0.0
      %5322 = vmatprep.subr.mxu0 0.0
      %5323 = vmatpush1.xpose.msra.mxu0 0.0
      %5324 = vmatprep.subr.mxu0 0.0
      %5325 = vmatpush1.xpose.msra.mxu0 0.0
      %5326 = vmatprep.subr.mxu0 0.0
      %5327 = vmatpush1.xpose.msra.mxu0 0.0
      %5328 = vmatprep.subr.mxu0 0.0
      %5329 = vmatpush1.xpose.msra.mxu0 0.0
      %5330 = vmatprep.subr.mxu0 0.0
      %5331 = vmatpush1.xpose.msra.mxu0 0.0
      %5332 = vmatprep.subr.mxu0 0.0
      %5333 = vmatpush1.xpose.msra.mxu0 0.0
      %5334 = vmatprep.subr.mxu0 0.0
      %5335 = vmatpush1.xpose.msra.mxu0 0.0
      %5336 = vmatprep.subr.mxu0 0.0
      %5337 = vmatpush1.xpose.msra.mxu0 0.0
      %5338 = vmatprep.subr.mxu0 0.0
      %5339 = vmatpush1.xpose.msra.mxu0 0.0
      %5340 = vmatprep.subr.mxu0 0.0
      %5341 = vmatpush1.xpose.msra.mxu0 0.0
      %5342 = vmatprep.subr.mxu0 0.0
      %5343 = vmatpush1.xpose.msra.mxu0 0.0
      %5344 = vmatprep.subr.mxu0 0.0
      %5345 = vmatpush1.xpose.msra.mxu0 0.0
      %5346 = vmatprep.subr.mxu0 0.0
      %5347 = vmatpush1.xpose.msra.mxu0 0.0
      %5348 = vmatprep.subr.mxu0 0.0
      %5349 = vmatpush1.xpose.msra.mxu0 0.0
      %5350 = vmatprep.subr.mxu0 0.0
      %5351 = vmatpush1.xpose.msra.mxu0 0.0
      %5352 = vmatprep.subr.mxu0 0.0
      %5353 = vmatpush1.xpose.msra.mxu0 0.0
      %5354 = vmatprep.mubr.f32.mxu0 0.0
      %5355 = vmatmul.mubr.f32.gmra.mrb[0].mxu0 %v5282
      %v5356 = vpop.f32.mrb[0].mxu0
      %v5357 = vadd.f32 0.0, %v5356
      %v5358 = vpop.f32.mrb[0].mxu0
      %5359 = vdwg.mxu0
      %v5361 = vsel %vm461, %v459, 0
      %v5364 = vsel %vm461, %v393, 0
      %v5367 = vsel %vm461, %v394, 0
      %5369 = vmatprep.subr.mxu0 0.0
      %5370 = vmatpush1.xpose.msra.mxu0 %v5364
      %5371 = vmatprep.subr.mxu0 0.0
      %5372 = vmatpush1.xpose.msra.mxu0 %v5367
      %5373 = vmatprep.subr.mxu0 0.0
      %5374 = vmatpush1.xpose.msra.mxu0 0.0
      %5375 = vmatprep.subr.mxu0 0.0
      %5376 = vmatpush1.xpose.msra.mxu0 0.0
      %5377 = vmatprep.subr.mxu0 0.0
      %5378 = vmatpush1.xpose.msra.mxu0 0.0
      %5379 = vmatprep.subr.mxu0 0.0
      %5380 = vmatpush1.xpose.msra.mxu0 0.0
      %5381 = vmatprep.subr.mxu0 0.0
      %5382 = vmatpush1.xpose.msra.mxu0 0.0
      %5383 = vmatprep.subr.mxu0 0.0
      %5384 = vmatpush1.xpose.msra.mxu0 0.0
      %5385 = vmatprep.subr.mxu0 0.0
      %5386 = vmatpush1.xpose.msra.mxu0 0.0
      %5387 = vmatprep.subr.mxu0 0.0
      %5388 = vmatpush1.xpose.msra.mxu0 0.0
      %5389 = vmatprep.subr.mxu0 0.0
      %5390 = vmatpush1.xpose.msra.mxu0 0.0
      %5391 = vmatprep.subr.mxu0 0.0
      %5392 = vmatpush1.xpose.msra.mxu0 0.0
      %5393 = vmatprep.subr.mxu0 0.0
      %5394 = vmatpush1.xpose.msra.mxu0 0.0
      %5395 = vmatprep.subr.mxu0 0.0
      %5396 = vmatpush1.xpose.msra.mxu0 0.0
      %5397 = vmatprep.subr.mxu0 0.0
      %5398 = vmatpush1.xpose.msra.mxu0 0.0
      %5399 = vmatprep.subr.mxu0 0.0
      %5400 = vmatpush1.xpose.msra.mxu0 0.0
      %5401 = vmatprep.subr.mxu0 0.0
      %5402 = vmatpush1.xpose.msra.mxu0 0.0
      %5403 = vmatprep.subr.mxu0 0.0
      %5404 = vmatpush1.xpose.msra.mxu0 0.0
      %5405 = vmatprep.subr.mxu0 0.0
      %5406 = vmatpush1.xpose.msra.mxu0 0.0
      %5407 = vmatprep.subr.mxu0 0.0
      %5408 = vmatpush1.xpose.msra.mxu0 0.0
      %5409 = vmatprep.subr.mxu0 0.0
      %5410 = vmatpush1.xpose.msra.mxu0 0.0
      %5411 = vmatprep.subr.mxu0 0.0
      %5412 = vmatpush1.xpose.msra.mxu0 0.0
      %5413 = vmatprep.subr.mxu0 0.0
      %5414 = vmatpush1.xpose.msra.mxu0 0.0
      %5415 = vmatprep.subr.mxu0 0.0
      %5416 = vmatpush1.xpose.msra.mxu0 0.0
      %5417 = vmatprep.subr.mxu0 0.0
      %5418 = vmatpush1.xpose.msra.mxu0 0.0
      %5419 = vmatprep.subr.mxu0 0.0
      %5420 = vmatpush1.xpose.msra.mxu0 0.0
      %5421 = vmatprep.subr.mxu0 0.0
      %5422 = vmatpush1.xpose.msra.mxu0 0.0
      %5423 = vmatprep.subr.mxu0 0.0
      %5424 = vmatpush1.xpose.msra.mxu0 0.0
      %5425 = vmatprep.subr.mxu0 0.0
      %5426 = vmatpush1.xpose.msra.mxu0 0.0
      %5427 = vmatprep.subr.mxu0 0.0
      %5428 = vmatpush1.xpose.msra.mxu0 0.0
      %5429 = vmatprep.subr.mxu0 0.0
      %5430 = vmatpush1.xpose.msra.mxu0 0.0
      %5431 = vmatprep.subr.mxu0 0.0
      %5432 = vmatpush1.xpose.msra.mxu0 0.0
      %5433 = vmatprep.mubr.f32.mxu0 0.0
      %5434 = vmatmul.mubr.f32.gmra.mrb[0].mxu0 %v5361
      %v5435 = vpop.f32.mrb[0].mxu0
      %v5436 = vadd.f32 0.0, %v5435
      %v5437 = vpop.f32.mrb[0].mxu0
      %5438 = vdwg.mxu0
      %v5440 = vsel %vm461, %v460, 0
      %v5443 = vsel %vm461, %v395, 0
      %v5446 = vsel %vm461, %v396, 0
      %5448 = vmatprep.subr.mxu0 0.0
      %5449 = vmatpush1.xpose.msra.mxu0 %v5443
      %5450 = vmatprep.subr.mxu0 0.0
      %5451 = vmatpush1.xpose.msra.mxu0 %v5446
      %5452 = vmatprep.subr.mxu0 0.0
      %5453 = vmatpush1.xpose.msra.mxu0 0.0
      %5454 = vmatprep.subr.mxu0 0.0
      %5455 = vmatpush1.xpose.msra.mxu0 0.0
      %5456 = vmatprep.subr.mxu0 0.0
      %5457 = vmatpush1.xpose.msra.mxu0 0.0
      %5458 = vmatprep.subr.mxu0 0.0
      %5459 = vmatpush1.xpose.msra.mxu0 0.0
      %5460 = vmatprep.subr.mxu0 0.0
      %5461 = vmatpush1.xpose.msra.mxu0 0.0
      %5462 = vmatprep.subr.mxu0 0.0
      %5463 = vmatpush1.xpose.msra.mxu0 0.0
      %5464 = vmatprep.subr.mxu0 0.0
      %5465 = vmatpush1.xpose.msra.mxu0 0.0
      %5466 = vmatprep.subr.mxu0 0.0
      %5467 = vmatpush1.xpose.msra.mxu0 0.0
      %5468 = vmatprep.subr.mxu0 0.0
      %5469 = vmatpush1.xpose.msra.mxu0 0.0
      %5470 = vmatprep.subr.mxu0 0.0
      %5471 = vmatpush1.xpose.msra.mxu0 0.0
      %5472 = vmatprep.subr.mxu0 0.0
      %5473 = vmatpush1.xpose.msra.mxu0 0.0
      %5474 = vmatprep.subr.mxu0 0.0
      %5475 = vmatpush1.xpose.msra.mxu0 0.0
      %5476 = vmatprep.subr.mxu0 0.0
      %5477 = vmatpush1.xpose.msra.mxu0 0.0
      %5478 = vmatprep.subr.mxu0 0.0
      %5479 = vmatpush1.xpose.msra.mxu0 0.0
      %5480 = vmatprep.subr.mxu0 0.0
      %5481 = vmatpush1.xpose.msra.mxu0 0.0
      %5482 = vmatprep.subr.mxu0 0.0
      %5483 = vmatpush1.xpose.msra.mxu0 0.0
      %5484 = vmatprep.subr.mxu0 0.0
      %5485 = vmatpush1.xpose.msra.mxu0 0.0
      %5486 = vmatprep.subr.mxu0 0.0
      %5487 = vmatpush1.xpose.msra.mxu0 0.0
      %5488 = vmatprep.subr.mxu0 0.0
      %5489 = vmatpush1.xpose.msra.mxu0 0.0
      %5490 = vmatprep.subr.mxu0 0.0
      %5491 = vmatpush1.xpose.msra.mxu0 0.0
      %5492 = vmatprep.subr.mxu0 0.0
      %5493 = vmatpush1.xpose.msra.mxu0 0.0
      %5494 = vmatprep.subr.mxu0 0.0
      %5495 = vmatpush1.xpose.msra.mxu0 0.0
      %5496 = vmatprep.subr.mxu0 0.0
      %5497 = vmatpush1.xpose.msra.mxu0 0.0
      %5498 = vmatprep.subr.mxu0 0.0
      %5499 = vmatpush1.xpose.msra.mxu0 0.0
      %5500 = vmatprep.subr.mxu0 0.0
      %5501 = vmatpush1.xpose.msra.mxu0 0.0
      %5502 = vmatprep.subr.mxu0 0.0
      %5503 = vmatpush1.xpose.msra.mxu0 0.0
      %5504 = vmatprep.subr.mxu0 0.0
      %5505 = vmatpush1.xpose.msra.mxu0 0.0
      %5506 = vmatprep.subr.mxu0 0.0
      %5507 = vmatpush1.xpose.msra.mxu0 0.0
      %5508 = vmatprep.subr.mxu0 0.0
      %5509 = vmatpush1.xpose.msra.mxu0 0.0
      %5510 = vmatprep.subr.mxu0 0.0
      %5511 = vmatpush1.xpose.msra.mxu0 0.0
      %5512 = vmatprep.mubr.f32.mxu0 0.0
      %5513 = vmatmul.mubr.f32.gmra.mrb[0].mxu0 %v5440
      %v5514 = vpop.f32.mrb[0].mxu0
      %v5515 = vadd.f32 0.0, %v5514
      %v5516 = vpop.f32.mrb[0].mxu0
      %5517 = vdwg.mxu0
      %vm5518 = vcmask 122880
      %v5519 = vsel %vm5518, %v538, -inf
      %5520 = vmax.xlane.f32.xlu0 %v5519
      %v5521 = vpop.xlane.xlu0 %5520
      %v5522 = vsel %vm5518, %v617, -inf
      %5523 = vmax.xlane.f32.xlu0 %v5522
      %v5524 = vpop.xlane.xlu0 %5523
      %v5525 = vsel %vm5518, %v696, -inf
      %5526 = vmax.xlane.f32.xlu0 %v5525
      %v5527 = vpop.xlane.xlu0 %5526
      %v5528 = vsel %vm5518, %v775, -inf
      %5529 = vmax.xlane.f32.xlu0 %v5528
      %v5530 = vpop.xlane.xlu0 %5529
      %v5531 = vsel %vm5518, %v854, -inf
      %5532 = vmax.xlane.f32.xlu0 %v5531
      %v5533 = vpop.xlane.xlu0 %5532
      %v5534 = vsel %vm5518, %v933, -inf
      %5535 = vmax.xlane.f32.xlu0 %v5534
      %v5536 = vpop.xlane.xlu0 %5535
      %v5537 = vsel %vm5518, %v1012, -inf
      %5538 = vmax.xlane.f32.xlu0 %v5537
      %v5539 = vpop.xlane.xlu0 %5538
      %v5540 = vsel %vm5518, %v1091, -inf
      %5541 = vmax.xlane.f32.xlu0 %v5540
      %v5542 = vpop.xlane.xlu0 %5541
      %v5543 = vsel %vm5518, %v1170, -inf
      %5544 = vmax.xlane.f32.xlu0 %v5543
      %v5545 = vpop.xlane.xlu0 %5544
      %v5546 = vsel %vm5518, %v1249, -inf
      %5547 = vmax.xlane.f32.xlu0 %v5546
      %v5548 = vpop.xlane.xlu0 %5547
      %v5549 = vsel %vm5518, %v1328, -inf
      %5550 = vmax.xlane.f32.xlu0 %v5549
      %v5551 = vpop.xlane.xlu0 %5550
      %v5552 = vsel %vm5518, %v1407, -inf
      %5553 = vmax.xlane.f32.xlu0 %v5552
      %v5554 = vpop.xlane.xlu0 %5553
      %v5555 = vsel %vm5518, %v1486, -inf
      %5556 = vmax.xlane.f32.xlu0 %v5555
      %v5557 = vpop.xlane.xlu0 %5556
      %v5558 = vsel %vm5518, %v1565, -inf
      %5559 = vmax.xlane.f32.xlu0 %v5558
      %v5560 = vpop.xlane.xlu0 %5559
      %v5561 = vsel %vm5518, %v1644, -inf
      %5562 = vmax.xlane.f32.xlu0 %v5561
      %v5563 = vpop.xlane.xlu0 %5562
      %v5564 = vsel %vm5518, %v1723, -inf
      %5565 = vmax.xlane.f32.xlu0 %v5564
      %v5566 = vpop.xlane.xlu0 %5565
      %v5567 = vsel %vm5518, %v1802, -inf
      %5568 = vmax.xlane.f32.xlu0 %v5567
      %v5569 = vpop.xlane.xlu0 %5568
      %v5570 = vsel %vm5518, %v1881, -inf
      %5571 = vmax.xlane.f32.xlu0 %v5570
      %v5572 = vpop.xlane.xlu0 %5571
      %v5573 = vsel %vm5518, %v1960, -inf
      %5574 = vmax.xlane.f32.xlu0 %v5573
      %v5575 = vpop.xlane.xlu0 %5574
      %v5576 = vsel %vm5518, %v2039, -inf
      %5577 = vmax.xlane.f32.xlu0 %v5576
      %v5578 = vpop.xlane.xlu0 %5577
      %v5579 = vsel %vm5518, %v2118, -inf
      %5580 = vmax.xlane.f32.xlu0 %v5579
      %v5581 = vpop.xlane.xlu0 %5580
      %v5582 = vsel %vm5518, %v2197, -inf
      %5583 = vmax.xlane.f32.xlu0 %v5582
      %v5584 = vpop.xlane.xlu0 %5583
      %v5585 = vsel %vm5518, %v2276, -inf
      %5586 = vmax.xlane.f32.xlu0 %v5585
      %v5587 = vpop.xlane.xlu0 %5586
      %v5588 = vsel %vm5518, %v2355, -inf
      %5589 = vmax.xlane.f32.xlu0 %v5588
      %v5590 = vpop.xlane.xlu0 %5589
      %v5591 = vsel %vm5518, %v2434, -inf
      %5592 = vmax.xlane.f32.xlu0 %v5591
      %v5593 = vpop.xlane.xlu0 %5592
      %v5594 = vsel %vm5518, %v2513, -inf
      %5595 = vmax.xlane.f32.xlu0 %v5594
      %v5596 = vpop.xlane.xlu0 %5595
      %v5597 = vsel %vm5518, %v2592, -inf
      %5598 = vmax.xlane.f32.xlu0 %v5597
      %v5599 = vpop.xlane.xlu0 %5598
      %v5600 = vsel %vm5518, %v2671, -inf
      %5601 = vmax.xlane.f32.xlu0 %v5600
      %v5602 = vpop.xlane.xlu0 %5601
      %v5603 = vsel %vm5518, %v2750, -inf
      %5604 = vmax.xlane.f32.xlu0 %v5603
      %v5605 = vpop.xlane.xlu0 %5604
      %v5606 = vsel %vm5518, %v2829, -inf
      %5607 = vmax.xlane.f32.xlu0 %v5606
      %v5608 = vpop.xlane.xlu0 %5607
      %v5609 = vsel %vm5518, %v2908, -inf
      %5610 = vmax.xlane.f32.xlu0 %v5609
      %v5611 = vpop.xlane.xlu0 %5610
      %v5612 = vsel %vm5518, %v2987, -inf
      %5613 = vmax.xlane.f32.xlu0 %v5612
      %v5614 = vpop.xlane.xlu0 %5613
      %v5615 = vsel %vm5518, %v3066, -inf
      %5616 = vmax.xlane.f32.xlu0 %v5615
      %v5617 = vpop.xlane.xlu0 %5616
      %v5618 = vsel %vm5518, %v3145, -inf
      %5619 = vmax.xlane.f32.xlu0 %v5618
      %v5620 = vpop.xlane.xlu0 %5619
      %v5621 = vsel %vm5518, %v3224, -inf
      %5622 = vmax.xlane.f32.xlu0 %v5621
      %v5623 = vpop.xlane.xlu0 %5622
      %v5624 = vsel %vm5518, %v3303, -inf
      %5625 = vmax.xlane.f32.xlu0 %v5624
      %v5626 = vpop.xlane.xlu0 %5625
      %v5627 = vsel %vm5518, %v3382, -inf
      %5628 = vmax.xlane.f32.xlu0 %v5627
      %v5629 = vpop.xlane.xlu0 %5628
      %v5630 = vsel %vm5518, %v3461, -inf
      %5631 = vmax.xlane.f32.xlu0 %v5630
      %v5632 = vpop.xlane.xlu0 %5631
      %v5633 = vsel %vm5518, %v3540, -inf
      %5634 = vmax.xlane.f32.xlu0 %v5633
      %v5635 = vpop.xlane.xlu0 %5634
      %v5636 = vsel %vm5518, %v3619, -inf
      %5637 = vmax.xlane.f32.xlu0 %v5636
      %v5638 = vpop.xlane.xlu0 %5637
      %v5639 = vsel %vm5518, %v3698, -inf
      %5640 = vmax.xlane.f32.xlu0 %v5639
      %v5641 = vpop.xlane.xlu0 %5640
      %v5642 = vsel %vm5518, %v3777, -inf
      %5643 = vmax.xlane.f32.xlu0 %v5642
      %v5644 = vpop.xlane.xlu0 %5643
      %v5645 = vsel %vm5518, %v3856, -inf
      %5646 = vmax.xlane.f32.xlu0 %v5645
      %v5647 = vpop.xlane.xlu0 %5646
      %v5648 = vsel %vm5518, %v3935, -inf
      %5649 = vmax.xlane.f32.xlu0 %v5648
      %v5650 = vpop.xlane.xlu0 %5649
      %v5651 = vsel %vm5518, %v4014, -inf
      %5652 = vmax.xlane.f32.xlu0 %v5651
      %v5653 = vpop.xlane.xlu0 %5652
      %v5654 = vsel %vm5518, %v4093, -inf
      %5655 = vmax.xlane.f32.xlu0 %v5654
      %v5656 = vpop.xlane.xlu0 %5655
      %v5657 = vsel %vm5518, %v4172, -inf
      %5658 = vmax.xlane.f32.xlu0 %v5657
      %v5659 = vpop.xlane.xlu0 %5658
      %v5660 = vsel %vm5518, %v4251, -inf
      %5661 = vmax.xlane.f32.xlu0 %v5660
      %v5662 = vpop.xlane.xlu0 %5661
      %v5663 = vsel %vm5518, %v4330, -inf
      %5664 = vmax.xlane.f32.xlu0 %v5663
      %v5665 = vpop.xlane.xlu0 %5664
      %v5666 = vsel %vm5518, %v4409, -inf
      %5667 = vmax.xlane.f32.xlu0 %v5666
      %v5668 = vpop.xlane.xlu0 %5667
      %v5669 = vsel %vm5518, %v4488, -inf
      %5670 = vmax.xlane.f32.xlu0 %v5669
      %v5671 = vpop.xlane.xlu0 %5670
      %v5672 = vsel %vm5518, %v4567, -inf
      %5673 = vmax.xlane.f32.xlu0 %v5672
      %v5674 = vpop.xlane.xlu0 %5673
      %v5675 = vsel %vm5518, %v4646, -inf
      %5676 = vmax.xlane.f32.xlu0 %v5675
      %v5677 = vpop.xlane.xlu0 %5676
      %v5678 = vsel %vm5518, %v4725, -inf
      %5679 = vmax.xlane.f32.xlu0 %v5678
      %v5680 = vpop.xlane.xlu0 %5679
      %v5681 = vsel %vm5518, %v4804, -inf
      %5682 = vmax.xlane.f32.xlu0 %v5681
      %v5683 = vpop.xlane.xlu0 %5682
      %v5684 = vsel %vm5518, %v4883, -inf
      %5685 = vmax.xlane.f32.xlu0 %v5684
      %v5686 = vpop.xlane.xlu0 %5685
      %v5687 = vsel %vm5518, %v4962, -inf
      %5688 = vmax.xlane.f32.xlu0 %v5687
      %v5689 = vpop.xlane.xlu0 %5688
      %v5690 = vsel %vm5518, %v5041, -inf
      %5691 = vmax.xlane.f32.xlu0 %v5690
      %v5692 = vpop.xlane.xlu0 %5691
      %v5693 = vsel %vm5518, %v5120, -inf
      %5694 = vmax.xlane.f32.xlu0 %v5693
      %v5695 = vpop.xlane.xlu0 %5694
      %v5696 = vsel %vm5518, %v5199, -inf
      %5697 = vmax.xlane.f32.xlu0 %v5696
      %v5698 = vpop.xlane.xlu0 %5697
      %v5699 = vsel %vm5518, %v5278, -inf
      %5700 = vmax.xlane.f32.xlu0 %v5699
      %v5701 = vpop.xlane.xlu0 %5700
      %v5702 = vsel %vm5518, %v5357, -inf
      %5703 = vmax.xlane.f32.xlu0 %v5702
      %v5704 = vpop.xlane.xlu0 %5703
      %v5705 = vsel %vm5518, %v5436, -inf
      %5706 = vmax.xlane.f32.xlu0 %v5705
      %v5707 = vpop.xlane.xlu0 %5706
      %v5708 = vsel %vm5518, %v5515, -inf
      %5709 = vmax.xlane.f32.xlu0 %v5708
      %v5710 = vpop.xlane.xlu0 %5709
      %v5711 = vsub.f32 %v538, %v5521
      %v5712 = vsub.f32 %v617, %v5524
      %v5713 = vsub.f32 %v696, %v5527
      %v5714 = vsub.f32 %v775, %v5530
      %v5715 = vsub.f32 %v854, %v5533
      %v5716 = vsub.f32 %v933, %v5536
      %v5717 = vsub.f32 %v1012, %v5539
      %v5718 = vsub.f32 %v1091, %v5542
      %v5719 = vsub.f32 %v1170, %v5545
      %v5720 = vsub.f32 %v1249, %v5548
      %v5721 = vsub.f32 %v1328, %v5551
      %v5722 = vsub.f32 %v1407, %v5554
      %v5723 = vsub.f32 %v1486, %v5557
      %v5724 = vsub.f32 %v1565, %v5560
      %v5725 = vsub.f32 %v1644, %v5563
      %v5726 = vsub.f32 %v1723, %v5566
      %v5727 = vsub.f32 %v1802, %v5569
      %v5728 = vsub.f32 %v1881, %v5572
      %v5729 = vsub.f32 %v1960, %v5575
      %v5730 = vsub.f32 %v2039, %v5578
      %v5731 = vsub.f32 %v2118, %v5581
      %v5732 = vsub.f32 %v2197, %v5584
      %v5733 = vsub.f32 %v2276, %v5587
      %v5734 = vsub.f32 %v2355, %v5590
      %v5735 = vsub.f32 %v2434, %v5593
      %v5736 = vsub.f32 %v2513, %v5596
      %v5737 = vsub.f32 %v2592, %v5599
      %v5738 = vsub.f32 %v2671, %v5602
      %v5739 = vsub.f32 %v2750, %v5605
      %v5740 = vsub.f32 %v2829, %v5608
      %v5741 = vsub.f32 %v2908, %v5611
      %v5742 = vsub.f32 %v2987, %v5614
      %v5743 = vsub.f32 %v3066, %v5617
      %v5744 = vsub.f32 %v3145, %v5620
      %v5745 = vsub.f32 %v3224, %v5623
      %v5746 = vsub.f32 %v3303, %v5626
      %v5747 = vsub.f32 %v3382, %v5629
      %v5748 = vsub.f32 %v3461, %v5632
      %v5749 = vsub.f32 %v3540, %v5635
      %v5750 = vsub.f32 %v3619, %v5638
      %v5751 = vsub.f32 %v3698, %v5641
      %v5752 = vsub.f32 %v3777, %v5644
      %v5753 = vsub.f32 %v3856, %v5647
      %v5754 = vsub.f32 %v3935, %v5650
      %v5755 = vsub.f32 %v4014, %v5653
      %v5756 = vsub.f32 %v4093, %v5656
      %v5757 = vsub.f32 %v4172, %v5659
      %v5758 = vsub.f32 %v4251, %v5662
      %v5759 = vsub.f32 %v4330, %v5665
      %v5760 = vsub.f32 %v4409, %v5668
      %v5761 = vsub.f32 %v4488, %v5671
      %v5762 = vsub.f32 %v4567, %v5674
      %v5763 = vsub.f32 %v4646, %v5677
      %v5764 = vsub.f32 %v4725, %v5680
      %v5765 = vsub.f32 %v4804, %v5683
      %v5766 = vsub.f32 %v4883, %v5686
      %v5767 = vsub.f32 %v4962, %v5689
      %v5768 = vsub.f32 %v5041, %v5692
      %v5769 = vsub.f32 %v5120, %v5695
      %v5770 = vsub.f32 %v5199, %v5698
      %v5771 = vsub.f32 %v5278, %v5701
      %v5772 = vsub.f32 %v5357, %v5704
      %v5773 = vsub.f32 %v5436, %v5707
      %v5774 = vsub.f32 %v5515, %v5710
      %v5775 = vmul.f32 %v5711, 1.442695
      %v5776 = vpow.pop %v5775
      %v5777 = vmul.f32 %v5712, 1.442695
      %v5778 = vpow.pop %v5777
      %v5779 = vmul.f32 %v5713, 1.442695
      %v5780 = vpow.pop %v5779
      %v5781 = vmul.f32 %v5714, 1.442695
      %v5782 = vpow.pop %v5781
      %v5783 = vmul.f32 %v5715, 1.442695
      %v5784 = vpow.pop %v5783
      %v5785 = vmul.f32 %v5716, 1.442695
      %v5786 = vpow.pop %v5785
      %v5787 = vmul.f32 %v5717, 1.442695
      %v5788 = vpow.pop %v5787
      %v5789 = vmul.f32 %v5718, 1.442695
      %v5790 = vpow.pop %v5789
      %v5791 = vmul.f32 %v5719, 1.442695
      %v5792 = vpow.pop %v5791
      %v5793 = vmul.f32 %v5720, 1.442695
      %v5794 = vpow.pop %v5793
      %v5795 = vmul.f32 %v5721, 1.442695
      %v5796 = vpow.pop %v5795
      %v5797 = vmul.f32 %v5722, 1.442695
      %v5798 = vpow.pop %v5797
      %v5799 = vmul.f32 %v5723, 1.442695
      %v5800 = vpow.pop %v5799
      %v5801 = vmul.f32 %v5724, 1.442695
      %v5802 = vpow.pop %v5801
      %v5803 = vmul.f32 %v5725, 1.442695
      %v5804 = vpow.pop %v5803
      %v5805 = vmul.f32 %v5726, 1.442695
      %v5806 = vpow.pop %v5805
      %v5807 = vmul.f32 %v5727, 1.442695
      %v5808 = vpow.pop %v5807
      %v5809 = vmul.f32 %v5728, 1.442695
      %v5810 = vpow.pop %v5809
      %v5811 = vmul.f32 %v5729, 1.442695
      %v5812 = vpow.pop %v5811
      %v5813 = vmul.f32 %v5730, 1.442695
      %v5814 = vpow.pop %v5813
      %v5815 = vmul.f32 %v5731, 1.442695
      %v5816 = vpow.pop %v5815
      %v5817 = vmul.f32 %v5732, 1.442695
      %v5818 = vpow.pop %v5817
      %v5819 = vmul.f32 %v5733, 1.442695
      %v5820 = vpow.pop %v5819
      %v5821 = vmul.f32 %v5734, 1.442695
      %v5822 = vpow.pop %v5821
      %v5823 = vmul.f32 %v5735, 1.442695
      %v5824 = vpow.pop %v5823
      %v5825 = vmul.f32 %v5736, 1.442695
      %v5826 = vpow.pop %v5825
      %v5827 = vmul.f32 %v5737, 1.442695
      %v5828 = vpow.pop %v5827
      %v5829 = vmul.f32 %v5738, 1.442695
      %v5830 = vpow.pop %v5829
      %v5831 = vmul.f32 %v5739, 1.442695
      %v5832 = vpow.pop %v5831
      %v5833 = vmul.f32 %v5740, 1.442695
      %v5834 = vpow.pop %v5833
      %v5835 = vmul.f32 %v5741, 1.442695
      %v5836 = vpow.pop %v5835
      %v5837 = vmul.f32 %v5742, 1.442695
      %v5838 = vpow.pop %v5837
      %v5839 = vmul.f32 %v5743, 1.442695
      %v5840 = vpow.pop %v5839
      %v5841 = vmul.f32 %v5744, 1.442695
      %v5842 = vpow.pop %v5841
      %v5843 = vmul.f32 %v5745, 1.442695
      %v5844 = vpow.pop %v5843
      %v5845 = vmul.f32 %v5746, 1.442695
      %v5846 = vpow.pop %v5845
      %v5847 = vmul.f32 %v5747, 1.442695
      %v5848 = vpow.pop %v5847
      %v5849 = vmul.f32 %v5748, 1.442695
      %v5850 = vpow.pop %v5849
      %v5851 = vmul.f32 %v5749, 1.442695
      %v5852 = vpow.pop %v5851
      %v5853 = vmul.f32 %v5750, 1.442695
      %v5854 = vpow.pop %v5853
      %v5855 = vmul.f32 %v5751, 1.442695
      %v5856 = vpow.pop %v5855
      %v5857 = vmul.f32 %v5752, 1.442695
      %v5858 = vpow.pop %v5857
      %v5859 = vmul.f32 %v5753, 1.442695
      %v5860 = vpow.pop %v5859
      %v5861 = vmul.f32 %v5754, 1.442695
      %v5862 = vpow.pop %v5861
      %v5863 = vmul.f32 %v5755, 1.442695
      %v5864 = vpow.pop %v5863
      %v5865 = vmul.f32 %v5756, 1.442695
      %v5866 = vpow.pop %v5865
      %v5867 = vmul.f32 %v5757, 1.442695
      %v5868 = vpow.pop %v5867
      %v5869 = vmul.f32 %v5758, 1.442695
      %v5870 = vpow.pop %v5869
      %v5871 = vmul.f32 %v5759, 1.442695
      %v5872 = vpow.pop %v5871
      %v5873 = vmul.f32 %v5760, 1.442695
      %v5874 = vpow.pop %v5873
      %v5875 = vmul.f32 %v5761, 1.442695
      %v5876 = vpow.pop %v5875
      %v5877 = vmul.f32 %v5762, 1.442695
      %v5878 = vpow.pop %v5877
      %v5879 = vmul.f32 %v5763, 1.442695
      %v5880 = vpow.pop %v5879
      %v5881 = vmul.f32 %v5764, 1.442695
      %v5882 = vpow.pop %v5881
      %v5883 = vmul.f32 %v5765, 1.442695
      %v5884 = vpow.pop %v5883
      %v5885 = vmul.f32 %v5766, 1.442695
      %v5886 = vpow.pop %v5885
      %v5887 = vmul.f32 %v5767, 1.442695
      %v5888 = vpow.pop %v5887
      %v5889 = vmul.f32 %v5768, 1.442695
      %v5890 = vpow.pop %v5889
      %v5891 = vmul.f32 %v5769, 1.442695
      %v5892 = vpow.pop %v5891
      %v5893 = vmul.f32 %v5770, 1.442695
      %v5894 = vpow.pop %v5893
      %v5895 = vmul.f32 %v5771, 1.442695
      %v5896 = vpow.pop %v5895
      %v5897 = vmul.f32 %v5772, 1.442695
      %v5898 = vpow.pop %v5897
      %v5899 = vmul.f32 %v5773, 1.442695
      %v5900 = vpow.pop %v5899
      %v5901 = vmul.f32 %v5774, 1.442695
      %v5902 = vpow.pop %v5901
      %v5903 = vsel %vm5518, %v5776, 0.0
      %5904 = vadd.xlane.f32.xlu0 %v5903
      %v5905 = vpop.xlane.xlu0 %5904
      %v5906 = vsel %vm5518, %v5778, 0.0
      %5907 = vadd.xlane.f32.xlu0 %v5906
      %v5908 = vpop.xlane.xlu0 %5907
      %v5909 = vsel %vm5518, %v5780, 0.0
      %5910 = vadd.xlane.f32.xlu0 %v5909
      %v5911 = vpop.xlane.xlu0 %5910
      %v5912 = vsel %vm5518, %v5782, 0.0
      %5913 = vadd.xlane.f32.xlu0 %v5912
      %v5914 = vpop.xlane.xlu0 %5913
      %v5915 = vsel %vm5518, %v5784, 0.0
      %5916 = vadd.xlane.f32.xlu0 %v5915
      %v5917 = vpop.xlane.xlu0 %5916
      %v5918 = vsel %vm5518, %v5786, 0.0
      %5919 = vadd.xlane.f32.xlu0 %v5918
      %v5920 = vpop.xlane.xlu0 %5919
      %v5921 = vsel %vm5518, %v5788, 0.0
      %5922 = vadd.xlane.f32.xlu0 %v5921
      %v5923 = vpop.xlane.xlu0 %5922
      %v5924 = vsel %vm5518, %v5790, 0.0
      %5925 = vadd.xlane.f32.xlu0 %v5924
      %v5926 = vpop.xlane.xlu0 %5925
      %v5927 = vsel %vm5518, %v5792, 0.0
      %5928 = vadd.xlane.f32.xlu0 %v5927
      %v5929 = vpop.xlane.xlu0 %5928
      %v5930 = vsel %vm5518, %v5794, 0.0
      %5931 = vadd.xlane.f32.xlu0 %v5930
      %v5932 = vpop.xlane.xlu0 %5931
      %v5933 = vsel %vm5518, %v5796, 0.0
      %5934 = vadd.xlane.f32.xlu0 %v5933
      %v5935 = vpop.xlane.xlu0 %5934
      %v5936 = vsel %vm5518, %v5798, 0.0
      %5937 = vadd.xlane.f32.xlu0 %v5936
      %v5938 = vpop.xlane.xlu0 %5937
      %v5939 = vsel %vm5518, %v5800, 0.0
      %5940 = vadd.xlane.f32.xlu0 %v5939
      %v5941 = vpop.xlane.xlu0 %5940
      %v5942 = vsel %vm5518, %v5802, 0.0
      %5943 = vadd.xlane.f32.xlu0 %v5942
      %v5944 = vpop.xlane.xlu0 %5943
      %v5945 = vsel %vm5518, %v5804, 0.0
      %5946 = vadd.xlane.f32.xlu0 %v5945
      %v5947 = vpop.xlane.xlu0 %5946
      %v5948 = vsel %vm5518, %v5806, 0.0
      %5949 = vadd.xlane.f32.xlu0 %v5948
      %v5950 = vpop.xlane.xlu0 %5949
      %v5951 = vsel %vm5518, %v5808, 0.0
      %5952 = vadd.xlane.f32.xlu0 %v5951
      %v5953 = vpop.xlane.xlu0 %5952
      %v5954 = vsel %vm5518, %v5810, 0.0
      %5955 = vadd.xlane.f32.xlu0 %v5954
      %v5956 = vpop.xlane.xlu0 %5955
      %v5957 = vsel %vm5518, %v5812, 0.0
      %5958 = vadd.xlane.f32.xlu0 %v5957
      %v5959 = vpop.xlane.xlu0 %5958
      %v5960 = vsel %vm5518, %v5814, 0.0
      %5961 = vadd.xlane.f32.xlu0 %v5960
      %v5962 = vpop.xlane.xlu0 %5961
      %v5963 = vsel %vm5518, %v5816, 0.0
      %5964 = vadd.xlane.f32.xlu0 %v5963
      %v5965 = vpop.xlane.xlu0 %5964
      %v5966 = vsel %vm5518, %v5818, 0.0
      %5967 = vadd.xlane.f32.xlu0 %v5966
      %v5968 = vpop.xlane.xlu0 %5967
      %v5969 = vsel %vm5518, %v5820, 0.0
      %5970 = vadd.xlane.f32.xlu0 %v5969
      %v5971 = vpop.xlane.xlu0 %5970
      %v5972 = vsel %vm5518, %v5822, 0.0
      %5973 = vadd.xlane.f32.xlu0 %v5972
      %v5974 = vpop.xlane.xlu0 %5973
      %v5975 = vsel %vm5518, %v5824, 0.0
      %5976 = vadd.xlane.f32.xlu0 %v5975
      %v5977 = vpop.xlane.xlu0 %5976
      %v5978 = vsel %vm5518, %v5826, 0.0
      %5979 = vadd.xlane.f32.xlu0 %v5978
      %v5980 = vpop.xlane.xlu0 %5979
      %v5981 = vsel %vm5518, %v5828, 0.0
      %5982 = vadd.xlane.f32.xlu0 %v5981
      %v5983 = vpop.xlane.xlu0 %5982
      %v5984 = vsel %vm5518, %v5830, 0.0
      %5985 = vadd.xlane.f32.xlu0 %v5984
      %v5986 = vpop.xlane.xlu0 %5985
      %v5987 = vsel %vm5518, %v5832, 0.0
      %5988 = vadd.xlane.f32.xlu0 %v5987
      %v5989 = vpop.xlane.xlu0 %5988
      %v5990 = vsel %vm5518, %v5834, 0.0
      %5991 = vadd.xlane.f32.xlu0 %v5990
      %v5992 = vpop.xlane.xlu0 %5991
      %v5993 = vsel %vm5518, %v5836, 0.0
      %5994 = vadd.xlane.f32.xlu0 %v5993
      %v5995 = vpop.xlane.xlu0 %5994
      %v5996 = vsel %vm5518, %v5838, 0.0
      %5997 = vadd.xlane.f32.xlu0 %v5996
      %v5998 = vpop.xlane.xlu0 %5997
      %v5999 = vsel %vm5518, %v5840, 0.0
      %6000 = vadd.xlane.f32.xlu0 %v5999
      %v6001 = vpop.xlane.xlu0 %6000
      %v6002 = vsel %vm5518, %v5842, 0.0
      %6003 = vadd.xlane.f32.xlu0 %v6002
      %v6004 = vpop.xlane.xlu0 %6003
      %v6005 = vsel %vm5518, %v5844, 0.0
      %6006 = vadd.xlane.f32.xlu0 %v6005
      %v6007 = vpop.xlane.xlu0 %6006
      %v6008 = vsel %vm5518, %v5846, 0.0
      %6009 = vadd.xlane.f32.xlu0 %v6008
      %v6010 = vpop.xlane.xlu0 %6009
      %v6011 = vsel %vm5518, %v5848, 0.0
      %6012 = vadd.xlane.f32.xlu0 %v6011
      %v6013 = vpop.xlane.xlu0 %6012
      %v6014 = vsel %vm5518, %v5850, 0.0
      %6015 = vadd.xlane.f32.xlu0 %v6014
      %v6016 = vpop.xlane.xlu0 %6015
      %v6017 = vsel %vm5518, %v5852, 0.0
      %6018 = vadd.xlane.f32.xlu0 %v6017
      %v6019 = vpop.xlane.xlu0 %6018
      %v6020 = vsel %vm5518, %v5854, 0.0
      %6021 = vadd.xlane.f32.xlu0 %v6020
      %v6022 = vpop.xlane.xlu0 %6021
      %v6023 = vsel %vm5518, %v5856, 0.0
      %6024 = vadd.xlane.f32.xlu0 %v6023
      %v6025 = vpop.xlane.xlu0 %6024
      %v6026 = vsel %vm5518, %v5858, 0.0
      %6027 = vadd.xlane.f32.xlu0 %v6026
      %v6028 = vpop.xlane.xlu0 %6027
      %v6029 = vsel %vm5518, %v5860, 0.0
      %6030 = vadd.xlane.f32.xlu0 %v6029
      %v6031 = vpop.xlane.xlu0 %6030
      %v6032 = vsel %vm5518, %v5862, 0.0
      %6033 = vadd.xlane.f32.xlu0 %v6032
      %v6034 = vpop.xlane.xlu0 %6033
      %v6035 = vsel %vm5518, %v5864, 0.0
      %6036 = vadd.xlane.f32.xlu0 %v6035
      %v6037 = vpop.xlane.xlu0 %6036
      %v6038 = vsel %vm5518, %v5866, 0.0
      %6039 = vadd.xlane.f32.xlu0 %v6038
      %v6040 = vpop.xlane.xlu0 %6039
      %v6041 = vsel %vm5518, %v5868, 0.0
      %6042 = vadd.xlane.f32.xlu0 %v6041
      %v6043 = vpop.xlane.xlu0 %6042
      %v6044 = vsel %vm5518, %v5870, 0.0
      %6045 = vadd.xlane.f32.xlu0 %v6044
      %v6046 = vpop.xlane.xlu0 %6045
      %v6047 = vsel %vm5518, %v5872, 0.0
      %6048 = vadd.xlane.f32.xlu0 %v6047
      %v6049 = vpop.xlane.xlu0 %6048
      %v6050 = vsel %vm5518, %v5874, 0.0
      %6051 = vadd.xlane.f32.xlu0 %v6050
      %v6052 = vpop.xlane.xlu0 %6051
      %v6053 = vsel %vm5518, %v5876, 0.0
      %6054 = vadd.xlane.f32.xlu0 %v6053
      %v6055 = vpop.xlane.xlu0 %6054
      %v6056 = vsel %vm5518, %v5878, 0.0
      %6057 = vadd.xlane.f32.xlu0 %v6056
      %v6058 = vpop.xlane.xlu0 %6057
      %v6059 = vsel %vm5518, %v5880, 0.0
      %6060 = vadd.xlane.f32.xlu0 %v6059
      %v6061 = vpop.xlane.xlu0 %6060
      %v6062 = vsel %vm5518, %v5882, 0.0
      %6063 = vadd.xlane.f32.xlu0 %v6062
      %v6064 = vpop.xlane.xlu0 %6063
      %v6065 = vsel %vm5518, %v5884, 0.0
      %6066 = vadd.xlane.f32.xlu0 %v6065
      %v6067 = vpop.xlane.xlu0 %6066
      %v6068 = vsel %vm5518, %v5886, 0.0
      %6069 = vadd.xlane.f32.xlu0 %v6068
      %v6070 = vpop.xlane.xlu0 %6069
      %v6071 = vsel %vm5518, %v5888, 0.0
      %6072 = vadd.xlane.f32.xlu0 %v6071
      %v6073 = vpop.xlane.xlu0 %6072
      %v6074 = vsel %vm5518, %v5890, 0.0
      %6075 = vadd.xlane.f32.xlu0 %v6074
      %v6076 = vpop.xlane.xlu0 %6075
      %v6077 = vsel %vm5518, %v5892, 0.0
      %6078 = vadd.xlane.f32.xlu0 %v6077
      %v6079 = vpop.xlane.xlu0 %6078
      %v6080 = vsel %vm5518, %v5894, 0.0
      %6081 = vadd.xlane.f32.xlu0 %v6080
      %v6082 = vpop.xlane.xlu0 %6081
      %v6083 = vsel %vm5518, %v5896, 0.0
      %6084 = vadd.xlane.f32.xlu0 %v6083
      %v6085 = vpop.xlane.xlu0 %6084
      %v6086 = vsel %vm5518, %v5898, 0.0
      %6087 = vadd.xlane.f32.xlu0 %v6086
      %v6088 = vpop.xlane.xlu0 %6087
      %v6089 = vsel %vm5518, %v5900, 0.0
      %6090 = vadd.xlane.f32.xlu0 %v6089
      %v6091 = vpop.xlane.xlu0 %6090
      %v6092 = vsel %vm5518, %v5902, 0.0
      %6093 = vadd.xlane.f32.xlu0 %v6092
      %v6094 = vpop.xlane.xlu0 %6093
      %v6095 = vld [vmem:[%s249] sm:$0x1]
      %v6096 = vld [vmem:[%s249 + $0x1] sm:$0x1]
      %v6097 = vld [vmem:[%s249 + $0x2] sm:$0x1]
      %v6098 = vld [vmem:[%s249 + $0x3] sm:$0x1]
      %v6099 = vld [vmem:[%s249 + $0x4] sm:$0x1]
      %v6100 = vld [vmem:[%s249 + $0x5] sm:$0x1]
      %v6101 = vld [vmem:[%s249 + $0x6] sm:$0x1]
      %v6102 = vld [vmem:[%s249 + $0x7] sm:$0x1]
      %v6103 = vld [vmem:[%s249 + $0x8] sm:$0x1]
      %v6104 = vld [vmem:[%s249 + $0x9] sm:$0x1]
      %v6105 = vld [vmem:[%s249 + $0xa] sm:$0x1]
      %v6106 = vld [vmem:[%s249 + $0xb] sm:$0x1]
      %v6107 = vld [vmem:[%s249 + $0xc] sm:$0x1]
      %v6108 = vld [vmem:[%s249 + $0xd] sm:$0x1]
      %v6109 = vld [vmem:[%s249 + $0xe] sm:$0x1]
      %v6110 = vld [vmem:[%s249 + $0xf] sm:$0x1]
      %v6111 = vld [vmem:[%s249 + $0x10] sm:$0x1]
      %v6112 = vld [vmem:[%s249 + $0x11] sm:$0x1]
      %v6113 = vld [vmem:[%s249 + $0x12] sm:$0x1]
      %v6114 = vld [vmem:[%s249 + $0x13] sm:$0x1]
      %v6115 = vld [vmem:[%s249 + $0x14] sm:$0x1]
      %v6116 = vld [vmem:[%s249 + $0x15] sm:$0x1]
      %v6117 = vld [vmem:[%s249 + $0x16] sm:$0x1]
      %v6118 = vld [vmem:[%s249 + $0x17] sm:$0x1]
      %v6119 = vld [vmem:[%s249 + $0x18] sm:$0x1]
      %v6120 = vld [vmem:[%s249 + $0x19] sm:$0x1]
      %v6121 = vld [vmem:[%s249 + $0x1a] sm:$0x1]
      %v6122 = vld [vmem:[%s249 + $0x1b] sm:$0x1]
      %v6123 = vld [vmem:[%s249 + $0x1c] sm:$0x1]
      %v6124 = vld [vmem:[%s249 + $0x1d] sm:$0x1]
      %v6125 = vld [vmem:[%s249 + $0x1e] sm:$0x1]
      %v6126 = vld [vmem:[%s249 + $0x1f] sm:$0x1]
      %v6127 = vld [vmem:[%s249 + $0x20] sm:$0x1]
      %v6128 = vld [vmem:[%s249 + $0x21] sm:$0x1]
      %v6129 = vld [vmem:[%s249 + $0x22] sm:$0x1]
      %v6130 = vld [vmem:[%s249 + $0x23] sm:$0x1]
      %v6131 = vld [vmem:[%s249 + $0x24] sm:$0x1]
      %v6132 = vld [vmem:[%s249 + $0x25] sm:$0x1]
      %v6133 = vld [vmem:[%s249 + $0x26] sm:$0x1]
      %v6134 = vld [vmem:[%s249 + $0x27] sm:$0x1]
      %v6135 = vld [vmem:[%s249 + $0x28] sm:$0x1]
      %v6136 = vld [vmem:[%s249 + $0x29] sm:$0x1]
      %v6137 = vld [vmem:[%s249 + $0x2a] sm:$0x1]
      %v6138 = vld [vmem:[%s249 + $0x2b] sm:$0x1]
      %v6139 = vld [vmem:[%s249 + $0x2c] sm:$0x1]
      %v6140 = vld [vmem:[%s249 + $0x2d] sm:$0x1]
      %v6141 = vld [vmem:[%s249 + $0x2e] sm:$0x1]
      %v6142 = vld [vmem:[%s249 + $0x2f] sm:$0x1]
      %v6143 = vld [vmem:[%s249 + $0x30] sm:$0x1]
      %v6144 = vld [vmem:[%s249 + $0x31] sm:$0x1]
      %v6145 = vld [vmem:[%s249 + $0x32] sm:$0x1]
      %v6146 = vld [vmem:[%s249 + $0x33] sm:$0x1]
      %v6147 = vld [vmem:[%s249 + $0x34] sm:$0x1]
      %v6148 = vld [vmem:[%s249 + $0x35] sm:$0x1]
      %v6149 = vld [vmem:[%s249 + $0x36] sm:$0x1]
      %v6150 = vld [vmem:[%s249 + $0x37] sm:$0x1]
      %v6151 = vld [vmem:[%s249 + $0x38] sm:$0x1]
      %v6152 = vld [vmem:[%s249 + $0x39] sm:$0x1]
      %v6153 = vld [vmem:[%s249 + $0x3a] sm:$0x1]
      %v6154 = vld [vmem:[%s249 + $0x3b] sm:$0x1]
      %v6155 = vld [vmem:[%s249 + $0x3c] sm:$0x1]
      %v6156 = vld [vmem:[%s249 + $0x3d] sm:$0x1]
      %v6157 = vld [vmem:[%s249 + $0x3e] sm:$0x1]
      %v6158 = vld [vmem:[%s249 + $0x3f] sm:$0x1]
      %v6159 = vlaneseq
      %v6160 = vand.u32 %v6159, 127
      %v6161 = vcvt.s32.f32 %v6160
      %6163 = vset.pattern.permute.xlu0 0
      %6164 = vperm.xlu0 %6163, %v6095
      %v6165 = vpop.permute.xlu0 %6164
      %v6167 = vlaneseq
      %v6168 = vshrl.u32 %v6167, 7
      %v6169 = vsub.s32 0, %v6168
      %v6170 = vrot.slane %v6165, %v6169
      %6172 = vset.pattern.permute.xlu0 0
      %6173 = vperm.xlu0 %6172, %v6096
      %v6174 = vpop.permute.xlu0 %6173
      %v6176 = vlaneseq
      %v6177 = vshrl.u32 %v6176, 7
      %v6178 = vsub.s32 0, %v6177
      %v6179 = vrot.slane %v6174, %v6178
      %6181 = vset.pattern.permute.xlu0 0
      %6182 = vperm.xlu0 %6181, %v6097
      %v6183 = vpop.permute.xlu0 %6182
      %v6185 = vlaneseq
      %v6186 = vshrl.u32 %v6185, 7
      %v6187 = vsub.s32 0, %v6186
      %v6188 = vrot.slane %v6183, %v6187
      %6190 = vset.pattern.permute.xlu0 0
      %6191 = vperm.xlu0 %6190, %v6098
      %v6192 = vpop.permute.xlu0 %6191
      %v6194 = vlaneseq
      %v6195 = vshrl.u32 %v6194, 7
      %v6196 = vsub.s32 0, %v6195
      %v6197 = vrot.slane %v6192, %v6196
      %6199 = vset.pattern.permute.xlu0 0
      %6200 = vperm.xlu0 %6199, %v6099
      %v6201 = vpop.permute.xlu0 %6200
      %v6203 = vlaneseq
      %v6204 = vshrl.u32 %v6203, 7
      %v6205 = vsub.s32 0, %v6204
      %v6206 = vrot.slane %v6201, %v6205
      %6208 = vset.pattern.permute.xlu0 0
      %6209 = vperm.xlu0 %6208, %v6100
      %v6210 = vpop.permute.xlu0 %6209
      %v6212 = vlaneseq
      %v6213 = vshrl.u32 %v6212, 7
      %v6214 = vsub.s32 0, %v6213
      %v6215 = vrot.slane %v6210, %v6214
      %6217 = vset.pattern.permute.xlu0 0
      %6218 = vperm.xlu0 %6217, %v6101
      %v6219 = vpop.permute.xlu0 %6218
      %v6221 = vlaneseq
      %v6222 = vshrl.u32 %v6221, 7
      %v6223 = vsub.s32 0, %v6222
      %v6224 = vrot.slane %v6219, %v6223
      %6226 = vset.pattern.permute.xlu0 0
      %6227 = vperm.xlu0 %6226, %v6102
      %v6228 = vpop.permute.xlu0 %6227
      %v6230 = vlaneseq
      %v6231 = vshrl.u32 %v6230, 7
      %v6232 = vsub.s32 0, %v6231
      %v6233 = vrot.slane %v6228, %v6232
      %6235 = vset.pattern.permute.xlu0 0
      %6236 = vperm.xlu0 %6235, %v6103
      %v6237 = vpop.permute.xlu0 %6236
      %v6239 = vlaneseq
      %v6240 = vshrl.u32 %v6239, 7
      %v6241 = vsub.s32 0, %v6240
      %v6242 = vrot.slane %v6237, %v6241
      %6244 = vset.pattern.permute.xlu0 0
      %6245 = vperm.xlu0 %6244, %v6104
      %v6246 = vpop.permute.xlu0 %6245
      %v6248 = vlaneseq
      %v6249 = vshrl.u32 %v6248, 7
      %v6250 = vsub.s32 0, %v6249
      %v6251 = vrot.slane %v6246, %v6250
      %6253 = vset.pattern.permute.xlu0 0
      %6254 = vperm.xlu0 %6253, %v6105
      %v6255 = vpop.permute.xlu0 %6254
      %v6257 = vlaneseq
      %v6258 = vshrl.u32 %v6257, 7
      %v6259 = vsub.s32 0, %v6258
      %v6260 = vrot.slane %v6255, %v6259
      %6262 = vset.pattern.permute.xlu0 0
      %6263 = vperm.xlu0 %6262, %v6106
      %v6264 = vpop.permute.xlu0 %6263
      %v6266 = vlaneseq
      %v6267 = vshrl.u32 %v6266, 7
      %v6268 = vsub.s32 0, %v6267
      %v6269 = vrot.slane %v6264, %v6268
      %6271 = vset.pattern.permute.xlu0 0
      %6272 = vperm.xlu0 %6271, %v6107
      %v6273 = vpop.permute.xlu0 %6272
      %v6275 = vlaneseq
      %v6276 = vshrl.u32 %v6275, 7
      %v6277 = vsub.s32 0, %v6276
      %v6278 = vrot.slane %v6273, %v6277
      %6280 = vset.pattern.permute.xlu0 0
      %6281 = vperm.xlu0 %6280, %v6108
      %v6282 = vpop.permute.xlu0 %6281
      %v6284 = vlaneseq
      %v6285 = vshrl.u32 %v6284, 7
      %v6286 = vsub.s32 0, %v6285
      %v6287 = vrot.slane %v6282, %v6286
      %6289 = vset.pattern.permute.xlu0 0
      %6290 = vperm.xlu0 %6289, %v6109
      %v6291 = vpop.permute.xlu0 %6290
      %v6293 = vlaneseq
      %v6294 = vshrl.u32 %v6293, 7
      %v6295 = vsub.s32 0, %v6294
      %v6296 = vrot.slane %v6291, %v6295
      %6298 = vset.pattern.permute.xlu0 0
      %6299 = vperm.xlu0 %6298, %v6110
      %v6300 = vpop.permute.xlu0 %6299
      %v6302 = vlaneseq
      %v6303 = vshrl.u32 %v6302, 7
      %v6304 = vsub.s32 0, %v6303
      %v6305 = vrot.slane %v6300, %v6304
      %6307 = vset.pattern.permute.xlu0 0
      %6308 = vperm.xlu0 %6307, %v6111
      %v6309 = vpop.permute.xlu0 %6308
      %v6311 = vlaneseq
      %v6312 = vshrl.u32 %v6311, 7
      %v6313 = vsub.s32 0, %v6312
      %v6314 = vrot.slane %v6309, %v6313
      %6316 = vset.pattern.permute.xlu0 0
      %6317 = vperm.xlu0 %6316, %v6112
      %v6318 = vpop.permute.xlu0 %6317
      %v6320 = vlaneseq
      %v6321 = vshrl.u32 %v6320, 7
      %v6322 = vsub.s32 0, %v6321
      %v6323 = vrot.slane %v6318, %v6322
      %6325 = vset.pattern.permute.xlu0 0
      %6326 = vperm.xlu0 %6325, %v6113
      %v6327 = vpop.permute.xlu0 %6326
      %v6329 = vlaneseq
      %v6330 = vshrl.u32 %v6329, 7
      %v6331 = vsub.s32 0, %v6330
      %v6332 = vrot.slane %v6327, %v6331
      %6334 = vset.pattern.permute.xlu0 0
      %6335 = vperm.xlu0 %6334, %v6114
      %v6336 = vpop.permute.xlu0 %6335
      %v6338 = vlaneseq
      %v6339 = vshrl.u32 %v6338, 7
      %v6340 = vsub.s32 0, %v6339
      %v6341 = vrot.slane %v6336, %v6340
      %6343 = vset.pattern.permute.xlu0 0
      %6344 = vperm.xlu0 %6343, %v6115
      %v6345 = vpop.permute.xlu0 %6344
      %v6347 = vlaneseq
      %v6348 = vshrl.u32 %v6347, 7
      %v6349 = vsub.s32 0, %v6348
      %v6350 = vrot.slane %v6345, %v6349
      %6352 = vset.pattern.permute.xlu0 0
      %6353 = vperm.xlu0 %6352, %v6116
      %v6354 = vpop.permute.xlu0 %6353
      %v6356 = vlaneseq
      %v6357 = vshrl.u32 %v6356, 7
      %v6358 = vsub.s32 0, %v6357
      %v6359 = vrot.slane %v6354, %v6358
      %6361 = vset.pattern.permute.xlu0 0
      %6362 = vperm.xlu0 %6361, %v6117
      %v6363 = vpop.permute.xlu0 %6362
      %v6365 = vlaneseq
      %v6366 = vshrl.u32 %v6365, 7
      %v6367 = vsub.s32 0, %v6366
      %v6368 = vrot.slane %v6363, %v6367
      %6370 = vset.pattern.permute.xlu0 0
      %6371 = vperm.xlu0 %6370, %v6118
      %v6372 = vpop.permute.xlu0 %6371
      %v6374 = vlaneseq
      %v6375 = vshrl.u32 %v6374, 7
      %v6376 = vsub.s32 0, %v6375
      %v6377 = vrot.slane %v6372, %v6376
      %6379 = vset.pattern.permute.xlu0 0
      %6380 = vperm.xlu0 %6379, %v6119
      %v6381 = vpop.permute.xlu0 %6380
      %v6383 = vlaneseq
      %v6384 = vshrl.u32 %v6383, 7
      %v6385 = vsub.s32 0, %v6384
      %v6386 = vrot.slane %v6381, %v6385
      %6388 = vset.pattern.permute.xlu0 0
      %6389 = vperm.xlu0 %6388, %v6120
      %v6390 = vpop.permute.xlu0 %6389
      %v6392 = vlaneseq
      %v6393 = vshrl.u32 %v6392, 7
      %v6394 = vsub.s32 0, %v6393
      %v6395 = vrot.slane %v6390, %v6394
      %6397 = vset.pattern.permute.xlu0 0
      %6398 = vperm.xlu0 %6397, %v6121
      %v6399 = vpop.permute.xlu0 %6398
      %v6401 = vlaneseq
      %v6402 = vshrl.u32 %v6401, 7
      %v6403 = vsub.s32 0, %v6402
      %v6404 = vrot.slane %v6399, %v6403
      %6406 = vset.pattern.permute.xlu0 0
      %6407 = vperm.xlu0 %6406, %v6122
      %v6408 = vpop.permute.xlu0 %6407
      %v6410 = vlaneseq
      %v6411 = vshrl.u32 %v6410, 7
      %v6412 = vsub.s32 0, %v6411
      %v6413 = vrot.slane %v6408, %v6412
      %6415 = vset.pattern.permute.xlu0 0
      %6416 = vperm.xlu0 %6415, %v6123
      %v6417 = vpop.permute.xlu0 %6416
      %v6419 = vlaneseq
      %v6420 = vshrl.u32 %v6419, 7
      %v6421 = vsub.s32 0, %v6420
      %v6422 = vrot.slane %v6417, %v6421
      %6424 = vset.pattern.permute.xlu0 0
      %6425 = vperm.xlu0 %6424, %v6124
      %v6426 = vpop.permute.xlu0 %6425
      %v6428 = vlaneseq
      %v6429 = vshrl.u32 %v6428, 7
      %v6430 = vsub.s32 0, %v6429
      %v6431 = vrot.slane %v6426, %v6430
      %6433 = vset.pattern.permute.xlu0 0
      %6434 = vperm.xlu0 %6433, %v6125
      %v6435 = vpop.permute.xlu0 %6434
      %v6437 = vlaneseq
      %v6438 = vshrl.u32 %v6437, 7
      %v6439 = vsub.s32 0, %v6438
      %v6440 = vrot.slane %v6435, %v6439
      %6442 = vset.pattern.permute.xlu0 0
      %6443 = vperm.xlu0 %6442, %v6126
      %v6444 = vpop.permute.xlu0 %6443
      %v6446 = vlaneseq
      %v6447 = vshrl.u32 %v6446, 7
      %v6448 = vsub.s32 0, %v6447
      %v6449 = vrot.slane %v6444, %v6448
      %6451 = vset.pattern.permute.xlu0 0
      %6452 = vperm.xlu0 %6451, %v6127
      %v6453 = vpop.permute.xlu0 %6452
      %v6455 = vlaneseq
      %v6456 = vshrl.u32 %v6455, 7
      %v6457 = vsub.s32 0, %v6456
      %v6458 = vrot.slane %v6453, %v6457
      %6460 = vset.pattern.permute.xlu0 0
      %6461 = vperm.xlu0 %6460, %v6128
      %v6462 = vpop.permute.xlu0 %6461
      %v6464 = vlaneseq
      %v6465 = vshrl.u32 %v6464, 7
      %v6466 = vsub.s32 0, %v6465
      %v6467 = vrot.slane %v6462, %v6466
      %6469 = vset.pattern.permute.xlu0 0
      %6470 = vperm.xlu0 %6469, %v6129
      %v6471 = vpop.permute.xlu0 %6470
      %v6473 = vlaneseq
      %v6474 = vshrl.u32 %v6473, 7
      %v6475 = vsub.s32 0, %v6474
      %v6476 = vrot.slane %v6471, %v6475
      %6478 = vset.pattern.permute.xlu0 0
      %6479 = vperm.xlu0 %6478, %v6130
      %v6480 = vpop.permute.xlu0 %6479
      %v6482 = vlaneseq
      %v6483 = vshrl.u32 %v6482, 7
      %v6484 = vsub.s32 0, %v6483
      %v6485 = vrot.slane %v6480, %v6484
      %6487 = vset.pattern.permute.xlu0 0
      %6488 = vperm.xlu0 %6487, %v6131
      %v6489 = vpop.permute.xlu0 %6488
      %v6491 = vlaneseq
      %v6492 = vshrl.u32 %v6491, 7
      %v6493 = vsub.s32 0, %v6492
      %v6494 = vrot.slane %v6489, %v6493
      %6496 = vset.pattern.permute.xlu0 0
      %6497 = vperm.xlu0 %6496, %v6132
      %v6498 = vpop.permute.xlu0 %6497
      %v6500 = vlaneseq
      %v6501 = vshrl.u32 %v6500, 7
      %v6502 = vsub.s32 0, %v6501
      %v6503 = vrot.slane %v6498, %v6502
      %6505 = vset.pattern.permute.xlu0 0
      %6506 = vperm.xlu0 %6505, %v6133
      %v6507 = vpop.permute.xlu0 %6506
      %v6509 = vlaneseq
      %v6510 = vshrl.u32 %v6509, 7
      %v6511 = vsub.s32 0, %v6510
      %v6512 = vrot.slane %v6507, %v6511
      %6514 = vset.pattern.permute.xlu0 0
      %6515 = vperm.xlu0 %6514, %v6134
      %v6516 = vpop.permute.xlu0 %6515
      %v6518 = vlaneseq
      %v6519 = vshrl.u32 %v6518, 7
      %v6520 = vsub.s32 0, %v6519
      %v6521 = vrot.slane %v6516, %v6520
      %6523 = vset.pattern.permute.xlu0 0
      %6524 = vperm.xlu0 %6523, %v6135
      %v6525 = vpop.permute.xlu0 %6524
      %v6527 = vlaneseq
      %v6528 = vshrl.u32 %v6527, 7
      %v6529 = vsub.s32 0, %v6528
      %v6530 = vrot.slane %v6525, %v6529
      %6532 = vset.pattern.permute.xlu0 0
      %6533 = vperm.xlu0 %6532, %v6136
      %v6534 = vpop.permute.xlu0 %6533
      %v6536 = vlaneseq
      %v6537 = vshrl.u32 %v6536, 7
      %v6538 = vsub.s32 0, %v6537
      %v6539 = vrot.slane %v6534, %v6538
      %6541 = vset.pattern.permute.xlu0 0
      %6542 = vperm.xlu0 %6541, %v6137
      %v6543 = vpop.permute.xlu0 %6542
      %v6545 = vlaneseq
      %v6546 = vshrl.u32 %v6545, 7
      %v6547 = vsub.s32 0, %v6546
      %v6548 = vrot.slane %v6543, %v6547
      %6550 = vset.pattern.permute.xlu0 0
      %6551 = vperm.xlu0 %6550, %v6138
      %v6552 = vpop.permute.xlu0 %6551
      %v6554 = vlaneseq
      %v6555 = vshrl.u32 %v6554, 7
      %v6556 = vsub.s32 0, %v6555
      %v6557 = vrot.slane %v6552, %v6556
      %6559 = vset.pattern.permute.xlu0 0
      %6560 = vperm.xlu0 %6559, %v6139
      %v6561 = vpop.permute.xlu0 %6560
      %v6563 = vlaneseq
      %v6564 = vshrl.u32 %v6563, 7
      %v6565 = vsub.s32 0, %v6564
      %v6566 = vrot.slane %v6561, %v6565
      %6568 = vset.pattern.permute.xlu0 0
      %6569 = vperm.xlu0 %6568, %v6140
      %v6570 = vpop.permute.xlu0 %6569
      %v6572 = vlaneseq
      %v6573 = vshrl.u32 %v6572, 7
      %v6574 = vsub.s32 0, %v6573
      %v6575 = vrot.slane %v6570, %v6574
      %6577 = vset.pattern.permute.xlu0 0
      %6578 = vperm.xlu0 %6577, %v6141
      %v6579 = vpop.permute.xlu0 %6578
      %v6581 = vlaneseq
      %v6582 = vshrl.u32 %v6581, 7
      %v6583 = vsub.s32 0, %v6582
      %v6584 = vrot.slane %v6579, %v6583
      %6586 = vset.pattern.permute.xlu0 0
      %6587 = vperm.xlu0 %6586, %v6142
      %v6588 = vpop.permute.xlu0 %6587
      %v6590 = vlaneseq
      %v6591 = vshrl.u32 %v6590, 7
      %v6592 = vsub.s32 0, %v6591
      %v6593 = vrot.slane %v6588, %v6592
      %6595 = vset.pattern.permute.xlu0 0
      %6596 = vperm.xlu0 %6595, %v6143
      %v6597 = vpop.permute.xlu0 %6596
      %v6599 = vlaneseq
      %v6600 = vshrl.u32 %v6599, 7
      %v6601 = vsub.s32 0, %v6600
      %v6602 = vrot.slane %v6597, %v6601
      %6604 = vset.pattern.permute.xlu0 0
      %6605 = vperm.xlu0 %6604, %v6144
      %v6606 = vpop.permute.xlu0 %6605
      %v6608 = vlaneseq
      %v6609 = vshrl.u32 %v6608, 7
      %v6610 = vsub.s32 0, %v6609
      %v6611 = vrot.slane %v6606, %v6610
      %6613 = vset.pattern.permute.xlu0 0
      %6614 = vperm.xlu0 %6613, %v6145
      %v6615 = vpop.permute.xlu0 %6614
      %v6617 = vlaneseq
      %v6618 = vshrl.u32 %v6617, 7
      %v6619 = vsub.s32 0, %v6618
      %v6620 = vrot.slane %v6615, %v6619
      %6622 = vset.pattern.permute.xlu0 0
      %6623 = vperm.xlu0 %6622, %v6146
      %v6624 = vpop.permute.xlu0 %6623
      %v6626 = vlaneseq
      %v6627 = vshrl.u32 %v6626, 7
      %v6628 = vsub.s32 0, %v6627
      %v6629 = vrot.slane %v6624, %v6628
      %6631 = vset.pattern.permute.xlu0 0
      %6632 = vperm.xlu0 %6631, %v6147
      %v6633 = vpop.permute.xlu0 %6632
      %v6635 = vlaneseq
      %v6636 = vshrl.u32 %v6635, 7
      %v6637 = vsub.s32 0, %v6636
      %v6638 = vrot.slane %v6633, %v6637
      %6640 = vset.pattern.permute.xlu0 0
      %6641 = vperm.xlu0 %6640, %v6148
      %v6642 = vpop.permute.xlu0 %6641
      %v6644 = vlaneseq
      %v6645 = vshrl.u32 %v6644, 7
      %v6646 = vsub.s32 0, %v6645
      %v6647 = vrot.slane %v6642, %v6646
      %6649 = vset.pattern.permute.xlu0 0
      %6650 = vperm.xlu0 %6649, %v6149
      %v6651 = vpop.permute.xlu0 %6650
      %v6653 = vlaneseq
      %v6654 = vshrl.u32 %v6653, 7
      %v6655 = vsub.s32 0, %v6654
      %v6656 = vrot.slane %v6651, %v6655
      %6658 = vset.pattern.permute.xlu0 0
      %6659 = vperm.xlu0 %6658, %v6150
      %v6660 = vpop.permute.xlu0 %6659
      %v6662 = vlaneseq
      %v6663 = vshrl.u32 %v6662, 7
      %v6664 = vsub.s32 0, %v6663
      %v6665 = vrot.slane %v6660, %v6664
      %6667 = vset.pattern.permute.xlu0 0
      %6668 = vperm.xlu0 %6667, %v6151
      %v6669 = vpop.permute.xlu0 %6668
      %v6671 = vlaneseq
      %v6672 = vshrl.u32 %v6671, 7
      %v6673 = vsub.s32 0, %v6672
      %v6674 = vrot.slane %v6669, %v6673
      %6676 = vset.pattern.permute.xlu0 0
      %6677 = vperm.xlu0 %6676, %v6152
      %v6678 = vpop.permute.xlu0 %6677
      %v6680 = vlaneseq
      %v6681 = vshrl.u32 %v6680, 7
      %v6682 = vsub.s32 0, %v6681
      %v6683 = vrot.slane %v6678, %v6682
      %6685 = vset.pattern.permute.xlu0 0
      %6686 = vperm.xlu0 %6685, %v6153
      %v6687 = vpop.permute.xlu0 %6686
      %v6689 = vlaneseq
      %v6690 = vshrl.u32 %v6689, 7
      %v6691 = vsub.s32 0, %v6690
      %v6692 = vrot.slane %v6687, %v6691
      %6694 = vset.pattern.permute.xlu0 0
      %6695 = vperm.xlu0 %6694, %v6154
      %v6696 = vpop.permute.xlu0 %6695
      %v6698 = vlaneseq
      %v6699 = vshrl.u32 %v6698, 7
      %v6700 = vsub.s32 0, %v6699
      %v6701 = vrot.slane %v6696, %v6700
      %6703 = vset.pattern.permute.xlu0 0
      %6704 = vperm.xlu0 %6703, %v6155
      %v6705 = vpop.permute.xlu0 %6704
      %v6707 = vlaneseq
      %v6708 = vshrl.u32 %v6707, 7
      %v6709 = vsub.s32 0, %v6708
      %v6710 = vrot.slane %v6705, %v6709
      %6712 = vset.pattern.permute.xlu0 0
      %6713 = vperm.xlu0 %6712, %v6156
      %v6714 = vpop.permute.xlu0 %6713
      %v6716 = vlaneseq
      %v6717 = vshrl.u32 %v6716, 7
      %v6718 = vsub.s32 0, %v6717
      %v6719 = vrot.slane %v6714, %v6718
      %6721 = vset.pattern.permute.xlu0 0
      %6722 = vperm.xlu0 %6721, %v6157
      %v6723 = vpop.permute.xlu0 %6722
      %v6725 = vlaneseq
      %v6726 = vshrl.u32 %v6725, 7
      %v6727 = vsub.s32 0, %v6726
      %v6728 = vrot.slane %v6723, %v6727
      %6730 = vset.pattern.permute.xlu0 0
      %6731 = vperm.xlu0 %6730, %v6158
      %v6732 = vpop.permute.xlu0 %6731
      %v6734 = vlaneseq
      %v6735 = vshrl.u32 %v6734, 7
      %v6736 = vsub.s32 0, %v6735
      %v6737 = vrot.slane %v6732, %v6736
      %v6738 = vsub.f32 %v6161, %v6170
      %v6739 = vsub.f32 %v6161, %v6179
      %v6740 = vsub.f32 %v6161, %v6188
      %v6741 = vsub.f32 %v6161, %v6197
      %v6742 = vsub.f32 %v6161, %v6206
      %v6743 = vsub.f32 %v6161, %v6215
      %v6744 = vsub.f32 %v6161, %v6224
      %v6745 = vsub.f32 %v6161, %v6233
      %v6746 = vsub.f32 %v6161, %v6242
      %v6747 = vsub.f32 %v6161, %v6251
      %v6748 = vsub.f32 %v6161, %v6260
      %v6749 = vsub.f32 %v6161, %v6269
      %v6750 = vsub.f32 %v6161, %v6278
      %v6751 = vsub.f32 %v6161, %v6287
      %v6752 = vsub.f32 %v6161, %v6296
      %v6753 = vsub.f32 %v6161, %v6305
      %v6754 = vsub.f32 %v6161, %v6314
      %v6755 = vsub.f32 %v6161, %v6323
      %v6756 = vsub.f32 %v6161, %v6332
      %v6757 = vsub.f32 %v6161, %v6341
      %v6758 = vsub.f32 %v6161, %v6350
      %v6759 = vsub.f32 %v6161, %v6359
      %v6760 = vsub.f32 %v6161, %v6368
      %v6761 = vsub.f32 %v6161, %v6377
      %v6762 = vsub.f32 %v6161, %v6386
      %v6763 = vsub.f32 %v6161, %v6395
      %v6764 = vsub.f32 %v6161, %v6404
      %v6765 = vsub.f32 %v6161, %v6413
      %v6766 = vsub.f32 %v6161, %v6422
      %v6767 = vsub.f32 %v6161, %v6431
      %v6768 = vsub.f32 %v6161, %v6440
      %v6769 = vsub.f32 %v6161, %v6449
      %v6770 = vsub.f32 %v6161, %v6458
      %v6771 = vsub.f32 %v6161, %v6467
      %v6772 = vsub.f32 %v6161, %v6476
      %v6773 = vsub.f32 %v6161, %v6485
      %v6774 = vsub.f32 %v6161, %v6494
      %v6775 = vsub.f32 %v6161, %v6503
      %v6776 = vsub.f32 %v6161, %v6512
      %v6777 = vsub.f32 %v6161, %v6521
      %v6778 = vsub.f32 %v6161, %v6530
      %v6779 = vsub.f32 %v6161, %v6539
      %v6780 = vsub.f32 %v6161, %v6548
      %v6781 = vsub.f32 %v6161, %v6557
      %v6782 = vsub.f32 %v6161, %v6566
      %v6783 = vsub.f32 %v6161, %v6575
      %v6784 = vsub.f32 %v6161, %v6584
      %v6785 = vsub.f32 %v6161, %v6593
      %v6786 = vsub.f32 %v6161, %v6602
      %v6787 = vsub.f32 %v6161, %v6611
      %v6788 = vsub.f32 %v6161, %v6620
      %v6789 = vsub.f32 %v6161, %v6629
      %v6790 = vsub.f32 %v6161, %v6638
      %v6791 = vsub.f32 %v6161, %v6647
      %v6792 = vsub.f32 %v6161, %v6656
      %v6793 = vsub.f32 %v6161, %v6665
      %v6794 = vsub.f32 %v6161, %v6674
      %v6795 = vsub.f32 %v6161, %v6683
      %v6796 = vsub.f32 %v6161, %v6692
      %v6797 = vsub.f32 %v6161, %v6701
      %v6798 = vsub.f32 %v6161, %v6710
      %v6799 = vsub.f32 %v6161, %v6719
      %v6800 = vsub.f32 %v6161, %v6728
      %v6801 = vsub.f32 %v6161, %v6737
      %v6802 = vmul.f32 %v6738, %v6738
      %v6803 = vmul.f32 %v6739, %v6739
      %v6804 = vmul.f32 %v6740, %v6740
      %v6805 = vmul.f32 %v6741, %v6741
      %v6806 = vmul.f32 %v6742, %v6742
      %v6807 = vmul.f32 %v6743, %v6743
      %v6808 = vmul.f32 %v6744, %v6744
      %v6809 = vmul.f32 %v6745, %v6745
      %v6810 = vmul.f32 %v6746, %v6746
      %v6811 = vmul.f32 %v6747, %v6747
      %v6812 = vmul.f32 %v6748, %v6748
      %v6813 = vmul.f32 %v6749, %v6749
      %v6814 = vmul.f32 %v6750, %v6750
      %v6815 = vmul.f32 %v6751, %v6751
      %v6816 = vmul.f32 %v6752, %v6752
      %v6817 = vmul.f32 %v6753, %v6753
      %v6818 = vmul.f32 %v6754, %v6754
      %v6819 = vmul.f32 %v6755, %v6755
      %v6820 = vmul.f32 %v6756, %v6756
      %v6821 = vmul.f32 %v6757, %v6757
      %v6822 = vmul.f32 %v6758, %v6758
      %v6823 = vmul.f32 %v6759, %v6759
      %v6824 = vmul.f32 %v6760, %v6760
      %v6825 = vmul.f32 %v6761, %v6761
      %v6826 = vmul.f32 %v6762, %v6762
      %v6827 = vmul.f32 %v6763, %v6763
      %v6828 = vmul.f32 %v6764, %v6764
      %v6829 = vmul.f32 %v6765, %v6765
      %v6830 = vmul.f32 %v6766, %v6766
      %v6831 = vmul.f32 %v6767, %v6767
      %v6832 = vmul.f32 %v6768, %v6768
      %v6833 = vmul.f32 %v6769, %v6769
      %v6834 = vmul.f32 %v6770, %v6770
      %v6835 = vmul.f32 %v6771, %v6771
      %v6836 = vmul.f32 %v6772, %v6772
      %v6837 = vmul.f32 %v6773, %v6773
      %v6838 = vmul.f32 %v6774, %v6774
      %v6839 = vmul.f32 %v6775, %v6775
      %v6840 = vmul.f32 %v6776, %v6776
      %v6841 = vmul.f32 %v6777, %v6777
      %v6842 = vmul.f32 %v6778, %v6778
      %v6843 = vmul.f32 %v6779, %v6779
      %v6844 = vmul.f32 %v6780, %v6780
      %v6845 = vmul.f32 %v6781, %v6781
      %v6846 = vmul.f32 %v6782, %v6782
      %v6847 = vmul.f32 %v6783, %v6783
      %v6848 = vmul.f32 %v6784, %v6784
      %v6849 = vmul.f32 %v6785, %v6785
      %v6850 = vmul.f32 %v6786, %v6786
      %v6851 = vmul.f32 %v6787, %v6787
      %v6852 = vmul.f32 %v6788, %v6788
      %v6853 = vmul.f32 %v6789, %v6789
      %v6854 = vmul.f32 %v6790, %v6790
      %v6855 = vmul.f32 %v6791, %v6791
      %v6856 = vmul.f32 %v6792, %v6792
      %v6857 = vmul.f32 %v6793, %v6793
      %v6858 = vmul.f32 %v6794, %v6794
      %v6859 = vmul.f32 %v6795, %v6795
      %v6860 = vmul.f32 %v6796, %v6796
      %v6861 = vmul.f32 %v6797, %v6797
      %v6862 = vmul.f32 %v6798, %v6798
      %v6863 = vmul.f32 %v6799, %v6799
      %v6864 = vmul.f32 %v6800, %v6800
      %v6865 = vmul.f32 %v6801, %v6801
      %v6866 = vmul.f32 %v6802, -0.5
      %v6867 = vmul.f32 %v6803, -0.5
      %v6868 = vmul.f32 %v6804, -0.5
      %v6869 = vmul.f32 %v6805, -0.5
      %v6870 = vmul.f32 %v6806, -0.5
      %v6871 = vmul.f32 %v6807, -0.5
      %v6872 = vmul.f32 %v6808, -0.5
      %v6873 = vmul.f32 %v6809, -0.5
      %v6874 = vmul.f32 %v6810, -0.5
      %v6875 = vmul.f32 %v6811, -0.5
      %v6876 = vmul.f32 %v6812, -0.5
      %v6877 = vmul.f32 %v6813, -0.5
      %v6878 = vmul.f32 %v6814, -0.5
      %v6879 = vmul.f32 %v6815, -0.5
      %v6880 = vmul.f32 %v6816, -0.5
      %v6881 = vmul.f32 %v6817, -0.5
      %v6882 = vmul.f32 %v6818, -0.5
      %v6883 = vmul.f32 %v6819, -0.5
      %v6884 = vmul.f32 %v6820, -0.5
      %v6885 = vmul.f32 %v6821, -0.5
      %v6886 = vmul.f32 %v6822, -0.5
      %v6887 = vmul.f32 %v6823, -0.5
      %v6888 = vmul.f32 %v6824, -0.5
      %v6889 = vmul.f32 %v6825, -0.5
      %v6890 = vmul.f32 %v6826, -0.5
      %v6891 = vmul.f32 %v6827, -0.5
      %v6892 = vmul.f32 %v6828, -0.5
      %v6893 = vmul.f32 %v6829, -0.5
      %v6894 = vmul.f32 %v6830, -0.5
      %v6895 = vmul.f32 %v6831, -0.5
      %v6896 = vmul.f32 %v6832, -0.5
      %v6897 = vmul.f32 %v6833, -0.5
      %v6898 = vmul.f32 %v6834, -0.5
      %v6899 = vmul.f32 %v6835, -0.5
      %v6900 = vmul.f32 %v6836, -0.5
      %v6901 = vmul.f32 %v6837, -0.5
      %v6902 = vmul.f32 %v6838, -0.5
      %v6903 = vmul.f32 %v6839, -0.5
      %v6904 = vmul.f32 %v6840, -0.5
      %v6905 = vmul.f32 %v6841, -0.5
      %v6906 = vmul.f32 %v6842, -0.5
      %v6907 = vmul.f32 %v6843, -0.5
      %v6908 = vmul.f32 %v6844, -0.5
      %v6909 = vmul.f32 %v6845, -0.5
      %v6910 = vmul.f32 %v6846, -0.5
      %v6911 = vmul.f32 %v6847, -0.5
      %v6912 = vmul.f32 %v6848, -0.5
      %v6913 = vmul.f32 %v6849, -0.5
      %v6914 = vmul.f32 %v6850, -0.5
      %v6915 = vmul.f32 %v6851, -0.5
      %v6916 = vmul.f32 %v6852, -0.5
      %v6917 = vmul.f32 %v6853, -0.5
      %v6918 = vmul.f32 %v6854, -0.5
      %v6919 = vmul.f32 %v6855, -0.5
      %v6920 = vmul.f32 %v6856, -0.5
      %v6921 = vmul.f32 %v6857, -0.5
      %v6922 = vmul.f32 %v6858, -0.5
      %v6923 = vmul.f32 %v6859, -0.5
      %v6924 = vmul.f32 %v6860, -0.5
      %v6925 = vmul.f32 %v6861, -0.5
      %v6926 = vmul.f32 %v6862, -0.5
      %v6927 = vmul.f32 %v6863, -0.5
      %v6928 = vmul.f32 %v6864, -0.5
      %v6929 = vmul.f32 %v6865, -0.5
      %v6930 = vmul.f32 %v6866, 1.442695
      %v6931 = vpow.pop %v6930
      %v6932 = vmul.f32 %v6867, 1.442695
      %v6933 = vpow.pop %v6932
      %v6934 = vmul.f32 %v6868, 1.442695
      %v6935 = vpow.pop %v6934
      %v6936 = vmul.f32 %v6869, 1.442695
      %v6937 = vpow.pop %v6936
      %v6938 = vmul.f32 %v6870, 1.442695
      %v6939 = vpow.pop %v6938
      %v6940 = vmul.f32 %v6871, 1.442695
      %v6941 = vpow.pop %v6940
      %v6942 = vmul.f32 %v6872, 1.442695
      %v6943 = vpow.pop %v6942
      %v6944 = vmul.f32 %v6873, 1.442695
      %v6945 = vpow.pop %v6944
      %v6946 = vmul.f32 %v6874, 1.442695
      %v6947 = vpow.pop %v6946
      %v6948 = vmul.f32 %v6875, 1.442695
      %v6949 = vpow.pop %v6948
      %v6950 = vmul.f32 %v6876, 1.442695
      %v6951 = vpow.pop %v6950
      %v6952 = vmul.f32 %v6877, 1.442695
      %v6953 = vpow.pop %v6952
      %v6954 = vmul.f32 %v6878, 1.442695
      %v6955 = vpow.pop %v6954
      %v6956 = vmul.f32 %v6879, 1.442695
      %v6957 = vpow.pop %v6956
      %v6958 = vmul.f32 %v6880, 1.442695
      %v6959 = vpow.pop %v6958
      %v6960 = vmul.f32 %v6881, 1.442695
      %v6961 = vpow.pop %v6960
      %v6962 = vmul.f32 %v6882, 1.442695
      %v6963 = vpow.pop %v6962
      %v6964 = vmul.f32 %v6883, 1.442695
      %v6965 = vpow.pop %v6964
      %v6966 = vmul.f32 %v6884, 1.442695
      %v6967 = vpow.pop %v6966
      %v6968 = vmul.f32 %v6885, 1.442695
      %v6969 = vpow.pop %v6968
      %v6970 = vmul.f32 %v6886, 1.442695
      %v6971 = vpow.pop %v6970
      %v6972 = vmul.f32 %v6887, 1.442695
      %v6973 = vpow.pop %v6972
      %v6974 = vmul.f32 %v6888, 1.442695
      %v6975 = vpow.pop %v6974
      %v6976 = vmul.f32 %v6889, 1.442695
      %v6977 = vpow.pop %v6976
      %v6978 = vmul.f32 %v6890, 1.442695
      %v6979 = vpow.pop %v6978
      %v6980 = vmul.f32 %v6891, 1.442695
      %v6981 = vpow.pop %v6980
      %v6982 = vmul.f32 %v6892, 1.442695
      %v6983 = vpow.pop %v6982
      %v6984 = vmul.f32 %v6893, 1.442695
      %v6985 = vpow.pop %v6984
      %v6986 = vmul.f32 %v6894, 1.442695
      %v6987 = vpow.pop %v6986
      %v6988 = vmul.f32 %v6895, 1.442695
      %v6989 = vpow.pop %v6988
      %v6990 = vmul.f32 %v6896, 1.442695
      %v6991 = vpow.pop %v6990
      %v6992 = vmul.f32 %v6897, 1.442695
      %v6993 = vpow.pop %v6992
      %v6994 = vmul.f32 %v6898, 1.442695
      %v6995 = vpow.pop %v6994
      %v6996 = vmul.f32 %v6899, 1.442695
      %v6997 = vpow.pop %v6996
      %v6998 = vmul.f32 %v6900, 1.442695
      %v6999 = vpow.pop %v6998
      %v7000 = vmul.f32 %v6901, 1.442695
      %v7001 = vpow.pop %v7000
      %v7002 = vmul.f32 %v6902, 1.442695
      %v7003 = vpow.pop %v7002
      %v7004 = vmul.f32 %v6903, 1.442695
      %v7005 = vpow.pop %v7004
      %v7006 = vmul.f32 %v6904, 1.442695
      %v7007 = vpow.pop %v7006
      %v7008 = vmul.f32 %v6905, 1.442695
      %v7009 = vpow.pop %v7008
      %v7010 = vmul.f32 %v6906, 1.442695
      %v7011 = vpow.pop %v7010
      %v7012 = vmul.f32 %v6907, 1.442695
      %v7013 = vpow.pop %v7012
      %v7014 = vmul.f32 %v6908, 1.442695
      %v7015 = vpow.pop %v7014
      %v7016 = vmul.f32 %v6909, 1.442695
      %v7017 = vpow.pop %v7016
      %v7018 = vmul.f32 %v6910, 1.442695
      %v7019 = vpow.pop %v7018
      %v7020 = vmul.f32 %v6911, 1.442695
      %v7021 = vpow.pop %v7020
      %v7022 = vmul.f32 %v6912, 1.442695
      %v7023 = vpow.pop %v7022
      %v7024 = vmul.f32 %v6913, 1.442695
      %v7025 = vpow.pop %v7024
      %v7026 = vmul.f32 %v6914, 1.442695
      %v7027 = vpow.pop %v7026
      %v7028 = vmul.f32 %v6915, 1.442695
      %v7029 = vpow.pop %v7028
      %v7030 = vmul.f32 %v6916, 1.442695
      %v7031 = vpow.pop %v7030
      %v7032 = vmul.f32 %v6917, 1.442695
      %v7033 = vpow.pop %v7032
      %v7034 = vmul.f32 %v6918, 1.442695
      %v7035 = vpow.pop %v7034
      %v7036 = vmul.f32 %v6919, 1.442695
      %v7037 = vpow.pop %v7036
      %v7038 = vmul.f32 %v6920, 1.442695
      %v7039 = vpow.pop %v7038
      %v7040 = vmul.f32 %v6921, 1.442695
      %v7041 = vpow.pop %v7040
      %v7042 = vmul.f32 %v6922, 1.442695
      %v7043 = vpow.pop %v7042
      %v7044 = vmul.f32 %v6923, 1.442695
      %v7045 = vpow.pop %v7044
      %v7046 = vmul.f32 %v6924, 1.442695
      %v7047 = vpow.pop %v7046
      %v7048 = vmul.f32 %v6925, 1.442695
      %v7049 = vpow.pop %v7048
      %v7050 = vmul.f32 %v6926, 1.442695
      %v7051 = vpow.pop %v7050
      %v7052 = vmul.f32 %v6927, 1.442695
      %v7053 = vpow.pop %v7052
      %v7054 = vmul.f32 %v6928, 1.442695
      %v7055 = vpow.pop %v7054
      %v7056 = vmul.f32 %v6929, 1.442695
      %v7057 = vpow.pop %v7056
      %v7058 = vmul.f32 %v5776, %v6931
      %v7059 = vmul.f32 %v5778, %v6933
      %v7060 = vmul.f32 %v5780, %v6935
      %v7061 = vmul.f32 %v5782, %v6937
      %v7062 = vmul.f32 %v5784, %v6939
      %v7063 = vmul.f32 %v5786, %v6941
      %v7064 = vmul.f32 %v5788, %v6943
      %v7065 = vmul.f32 %v5790, %v6945
      %v7066 = vmul.f32 %v5792, %v6947
      %v7067 = vmul.f32 %v5794, %v6949
      %v7068 = vmul.f32 %v5796, %v6951
      %v7069 = vmul.f32 %v5798, %v6953
      %v7070 = vmul.f32 %v5800, %v6955
      %v7071 = vmul.f32 %v5802, %v6957
      %v7072 = vmul.f32 %v5804, %v6959
      %v7073 = vmul.f32 %v5806, %v6961
      %v7074 = vmul.f32 %v5808, %v6963
      %v7075 = vmul.f32 %v5810, %v6965
      %v7076 = vmul.f32 %v5812, %v6967
      %v7077 = vmul.f32 %v5814, %v6969
      %v7078 = vmul.f32 %v5816, %v6971
      %v7079 = vmul.f32 %v5818, %v6973
      %v7080 = vmul.f32 %v5820, %v6975
      %v7081 = vmul.f32 %v5822, %v6977
      %v7082 = vmul.f32 %v5824, %v6979
      %v7083 = vmul.f32 %v5826, %v6981
      %v7084 = vmul.f32 %v5828, %v6983
      %v7085 = vmul.f32 %v5830, %v6985
      %v7086 = vmul.f32 %v5832, %v6987
      %v7087 = vmul.f32 %v5834, %v6989
      %v7088 = vmul.f32 %v5836, %v6991
      %v7089 = vmul.f32 %v5838, %v6993
      %v7090 = vmul.f32 %v5840, %v6995
      %v7091 = vmul.f32 %v5842, %v6997
      %v7092 = vmul.f32 %v5844, %v6999
      %v7093 = vmul.f32 %v5846, %v7001
      %v7094 = vmul.f32 %v5848, %v7003
      %v7095 = vmul.f32 %v5850, %v7005
      %v7096 = vmul.f32 %v5852, %v7007
      %v7097 = vmul.f32 %v5854, %v7009
      %v7098 = vmul.f32 %v5856, %v7011
      %v7099 = vmul.f32 %v5858, %v7013
      %v7100 = vmul.f32 %v5860, %v7015
      %v7101 = vmul.f32 %v5862, %v7017
      %v7102 = vmul.f32 %v5864, %v7019
      %v7103 = vmul.f32 %v5866, %v7021
      %v7104 = vmul.f32 %v5868, %v7023
      %v7105 = vmul.f32 %v5870, %v7025
      %v7106 = vmul.f32 %v5872, %v7027
      %v7107 = vmul.f32 %v5874, %v7029
      %v7108 = vmul.f32 %v5876, %v7031
      %v7109 = vmul.f32 %v5878, %v7033
      %v7110 = vmul.f32 %v5880, %v7035
      %v7111 = vmul.f32 %v5882, %v7037
      %v7112 = vmul.f32 %v5884, %v7039
      %v7113 = vmul.f32 %v5886, %v7041
      %v7114 = vmul.f32 %v5888, %v7043
      %v7115 = vmul.f32 %v5890, %v7045
      %v7116 = vmul.f32 %v5892, %v7047
      %v7117 = vmul.f32 %v5894, %v7049
      %v7118 = vmul.f32 %v5896, %v7051
      %v7119 = vmul.f32 %v5898, %v7053
      %v7120 = vmul.f32 %v5900, %v7055
      %v7121 = vmul.f32 %v5902, %v7057
      %v7122 = vrcp.pop %v5905
      %v7123 = vrcp.pop %v5908
      %v7124 = vrcp.pop %v5911
      %v7125 = vrcp.pop %v5914
      %v7126 = vrcp.pop %v5917
      %v7127 = vrcp.pop %v5920
      %v7128 = vrcp.pop %v5923
      %v7129 = vrcp.pop %v5926
      %v7130 = vrcp.pop %v5929
      %v7131 = vrcp.pop %v5932
      %v7132 = vrcp.pop %v5935
      %v7133 = vrcp.pop %v5938
      %v7134 = vrcp.pop %v5941
      %v7135 = vrcp.pop %v5944
      %v7136 = vrcp.pop %v5947
      %v7137 = vrcp.pop %v5950
      %v7138 = vrcp.pop %v5953
      %v7139 = vrcp.pop %v5956
      %v7140 = vrcp.pop %v5959
      %v7141 = vrcp.pop %v5962
      %v7142 = vrcp.pop %v5965
      %v7143 = vrcp.pop %v5968
      %v7144 = vrcp.pop %v5971
      %v7145 = vrcp.pop %v5974
      %v7146 = vrcp.pop %v5977
      %v7147 = vrcp.pop %v5980
      %v7148 = vrcp.pop %v5983
      %v7149 = vrcp.pop %v5986
      %v7150 = vrcp.pop %v5989
      %v7151 = vrcp.pop %v5992
      %v7152 = vrcp.pop %v5995
      %v7153 = vrcp.pop %v5998
      %v7154 = vrcp.pop %v6001
      %v7155 = vrcp.pop %v6004
      %v7156 = vrcp.pop %v6007
      %v7157 = vrcp.pop %v6010
      %v7158 = vrcp.pop %v6013
      %v7159 = vrcp.pop %v6016
      %v7160 = vrcp.pop %v6019
      %v7161 = vrcp.pop %v6022
      %v7162 = vrcp.pop %v6025
      %v7163 = vrcp.pop %v6028
      %v7164 = vrcp.pop %v6031
      %v7165 = vrcp.pop %v6034
      %v7166 = vrcp.pop %v6037
      %v7167 = vrcp.pop %v6040
      %v7168 = vrcp.pop %v6043
      %v7169 = vrcp.pop %v6046
      %v7170 = vrcp.pop %v6049
      %v7171 = vrcp.pop %v6052
      %v7172 = vrcp.pop %v6055
      %v7173 = vrcp.pop %v6058
      %v7174 = vrcp.pop %v6061
      %v7175 = vrcp.pop %v6064
      %v7176 = vrcp.pop %v6067
      %v7177 = vrcp.pop %v6070
      %v7178 = vrcp.pop %v6073
      %v7179 = vrcp.pop %v6076
      %v7180 = vrcp.pop %v6079
      %v7181 = vrcp.pop %v6082
      %v7182 = vrcp.pop %v6085
      %v7183 = vrcp.pop %v6088
      %v7184 = vrcp.pop %v6091
      %v7185 = vrcp.pop %v6094
      %v7186 = vmul.f32 %v7058, %v7122
      %v7187 = vmul.f32 %v7059, %v7123
      %v7188 = vmul.f32 %v7060, %v7124
      %v7189 = vmul.f32 %v7061, %v7125
      %v7190 = vmul.f32 %v7062, %v7126
      %v7191 = vmul.f32 %v7063, %v7127
      %v7192 = vmul.f32 %v7064, %v7128
      %v7193 = vmul.f32 %v7065, %v7129
      %v7194 = vmul.f32 %v7066, %v7130
      %v7195 = vmul.f32 %v7067, %v7131
      %v7196 = vmul.f32 %v7068, %v7132
      %v7197 = vmul.f32 %v7069, %v7133
      %v7198 = vmul.f32 %v7070, %v7134
      %v7199 = vmul.f32 %v7071, %v7135
      %v7200 = vmul.f32 %v7072, %v7136
      %v7201 = vmul.f32 %v7073, %v7137
      %v7202 = vmul.f32 %v7074, %v7138
      %v7203 = vmul.f32 %v7075, %v7139
      %v7204 = vmul.f32 %v7076, %v7140
      %v7205 = vmul.f32 %v7077, %v7141
      %v7206 = vmul.f32 %v7078, %v7142
      %v7207 = vmul.f32 %v7079, %v7143
      %v7208 = vmul.f32 %v7080, %v7144
      %v7209 = vmul.f32 %v7081, %v7145
      %v7210 = vmul.f32 %v7082, %v7146
      %v7211 = vmul.f32 %v7083, %v7147
      %v7212 = vmul.f32 %v7084, %v7148
      %v7213 = vmul.f32 %v7085, %v7149
      %v7214 = vmul.f32 %v7086, %v7150
      %v7215 = vmul.f32 %v7087, %v7151
      %v7216 = vmul.f32 %v7088, %v7152
      %v7217 = vmul.f32 %v7089, %v7153
      %v7218 = vmul.f32 %v7090, %v7154
      %v7219 = vmul.f32 %v7091, %v7155
      %v7220 = vmul.f32 %v7092, %v7156
      %v7221 = vmul.f32 %v7093, %v7157
      %v7222 = vmul.f32 %v7094, %v7158
      %v7223 = vmul.f32 %v7095, %v7159
      %v7224 = vmul.f32 %v7096, %v7160
      %v7225 = vmul.f32 %v7097, %v7161
      %v7226 = vmul.f32 %v7098, %v7162
      %v7227 = vmul.f32 %v7099, %v7163
      %v7228 = vmul.f32 %v7100, %v7164
      %v7229 = vmul.f32 %v7101, %v7165
      %v7230 = vmul.f32 %v7102, %v7166
      %v7231 = vmul.f32 %v7103, %v7167
      %v7232 = vmul.f32 %v7104, %v7168
      %v7233 = vmul.f32 %v7105, %v7169
      %v7234 = vmul.f32 %v7106, %v7170
      %v7235 = vmul.f32 %v7107, %v7171
      %v7236 = vmul.f32 %v7108, %v7172
      %v7237 = vmul.f32 %v7109, %v7173
      %v7238 = vmul.f32 %v7110, %v7174
      %v7239 = vmul.f32 %v7111, %v7175
      %v7240 = vmul.f32 %v7112, %v7176
      %v7241 = vmul.f32 %v7113, %v7177
      %v7242 = vmul.f32 %v7114, %v7178
      %v7243 = vmul.f32 %v7115, %v7179
      %v7244 = vmul.f32 %v7116, %v7180
      %v7245 = vmul.f32 %v7117, %v7181
      %v7246 = vmul.f32 %v7118, %v7182
      %v7247 = vmul.f32 %v7119, %v7183
      %v7248 = vmul.f32 %v7120, %v7184
      %v7249 = vmul.f32 %v7121, %v7185
      %vm7250 = vcmask 130048
      %v7252 = vsel %vm7250, %v7186, 0
      %7254 = vmatprep.subr.mxu0 0.0
      %7255 = vmatpush1.msra.mxu0 %v269
      %7256 = vmatprep.subr.mxu0 0.0
      %7257 = vmatpush1.msra.mxu0 %v270
      %7258 = vmatprep.subr.mxu0 0.0
      %7259 = vmatpush1.msra.mxu0 0.0
      %7260 = vmatprep.subr.mxu0 0.0
      %7261 = vmatpush1.msra.mxu0 0.0
      %7262 = vmatprep.subr.mxu0 0.0
      %7263 = vmatpush1.msra.mxu0 0.0
      %7264 = vmatprep.subr.mxu0 0.0
      %7265 = vmatpush1.msra.mxu0 0.0
      %7266 = vmatprep.subr.mxu0 0.0
      %7267 = vmatpush1.msra.mxu0 0.0
      %7268 = vmatprep.subr.mxu0 0.0
      %7269 = vmatpush1.msra.mxu0 0.0
      %7270 = vmatprep.subr.mxu0 0.0
      %7271 = vmatpush1.msra.mxu0 0.0
      %7272 = vmatprep.subr.mxu0 0.0
      %7273 = vmatpush1.msra.mxu0 0.0
      %7274 = vmatprep.subr.mxu0 0.0
      %7275 = vmatpush1.msra.mxu0 0.0
      %7276 = vmatprep.subr.mxu0 0.0
      %7277 = vmatpush1.msra.mxu0 0.0
      %7278 = vmatprep.subr.mxu0 0.0
      %7279 = vmatpush1.msra.mxu0 0.0
      %7280 = vmatprep.subr.mxu0 0.0
      %7281 = vmatpush1.msra.mxu0 0.0
      %7282 = vmatprep.subr.mxu0 0.0
      %7283 = vmatpush1.msra.mxu0 0.0
      %7284 = vmatprep.subr.mxu0 0.0
      %7285 = vmatpush1.msra.mxu0 0.0
      %7286 = vmatprep.subr.mxu0 0.0
      %7287 = vmatpush1.msra.mxu0 0.0
      %7288 = vmatprep.subr.mxu0 0.0
      %7289 = vmatpush1.msra.mxu0 0.0
      %7290 = vmatprep.subr.mxu0 0.0
      %7291 = vmatpush1.msra.mxu0 0.0
      %7292 = vmatprep.subr.mxu0 0.0
      %7293 = vmatpush1.msra.mxu0 0.0
      %7294 = vmatprep.subr.mxu0 0.0
      %7295 = vmatpush1.msra.mxu0 0.0
      %7296 = vmatprep.subr.mxu0 0.0
      %7297 = vmatpush1.msra.mxu0 0.0
      %7298 = vmatprep.subr.mxu0 0.0
      %7299 = vmatpush1.msra.mxu0 0.0
      %7300 = vmatprep.subr.mxu0 0.0
      %7301 = vmatpush1.msra.mxu0 0.0
      %7302 = vmatprep.subr.mxu0 0.0
      %7303 = vmatpush1.msra.mxu0 0.0
      %7304 = vmatprep.subr.mxu0 0.0
      %7305 = vmatpush1.msra.mxu0 0.0
      %7306 = vmatprep.subr.mxu0 0.0
      %7307 = vmatpush1.msra.mxu0 0.0
      %7308 = vmatprep.subr.mxu0 0.0
      %7309 = vmatpush1.msra.mxu0 0.0
      %7310 = vmatprep.subr.mxu0 0.0
      %7311 = vmatpush1.msra.mxu0 0.0
      %7312 = vmatprep.subr.mxu0 0.0
      %7313 = vmatpush1.msra.mxu0 0.0
      %7314 = vmatprep.subr.mxu0 0.0
      %7315 = vmatpush1.msra.mxu0 0.0
      %7316 = vmatprep.subr.mxu0 0.0
      %7317 = vmatpush1.msra.mxu0 0.0
      %7318 = vmatprep.mubr.f32.mxu0 0.0
      %7319 = vmatmul.mubr.f32.gmra.mrb[0].mxu0 %v7252
      %v7320 = vpop.f32.mrb[0].mxu0
      %v7321 = vadd.f32 0.0, %v7320
      %v7322 = vpop.f32.mrb[0].mxu0
      %7323 = vdwg.mxu0
      %v7325 = vsel %vm7250, %v7187, 0
      %7327 = vmatprep.subr.mxu0 0.0
      %7328 = vmatpush1.msra.mxu0 %v271
      %7329 = vmatprep.subr.mxu0 0.0
      %7330 = vmatpush1.msra.mxu0 %v272
      %7331 = vmatprep.subr.mxu0 0.0
      %7332 = vmatpush1.msra.mxu0 0.0
      %7333 = vmatprep.subr.mxu0 0.0
      %7334 = vmatpush1.msra.mxu0 0.0
      %7335 = vmatprep.subr.mxu0 0.0
      %7336 = vmatpush1.msra.mxu0 0.0
      %7337 = vmatprep.subr.mxu0 0.0
      %7338 = vmatpush1.msra.mxu0 0.0
      %7339 = vmatprep.subr.mxu0 0.0
      %7340 = vmatpush1.msra.mxu0 0.0
      %7341 = vmatprep.subr.mxu0 0.0
      %7342 = vmatpush1.msra.mxu0 0.0
      %7343 = vmatprep.subr.mxu0 0.0
      %7344 = vmatpush1.msra.mxu0 0.0
      %7345 = vmatprep.subr.mxu0 0.0
      %7346 = vmatpush1.msra.mxu0 0.0
      %7347 = vmatprep.subr.mxu0 0.0
      %7348 = vmatpush1.msra.mxu0 0.0
      %7349 = vmatprep.subr.mxu0 0.0
      %7350 = vmatpush1.msra.mxu0 0.0
      %7351 = vmatprep.subr.mxu0 0.0
      %7352 = vmatpush1.msra.mxu0 0.0
      %7353 = vmatprep.subr.mxu0 0.0
      %7354 = vmatpush1.msra.mxu0 0.0
      %7355 = vmatprep.subr.mxu0 0.0
      %7356 = vmatpush1.msra.mxu0 0.0
      %7357 = vmatprep.subr.mxu0 0.0
      %7358 = vmatpush1.msra.mxu0 0.0
      %7359 = vmatprep.subr.mxu0 0.0
      %7360 = vmatpush1.msra.mxu0 0.0
      %7361 = vmatprep.subr.mxu0 0.0
      %7362 = vmatpush1.msra.mxu0 0.0
      %7363 = vmatprep.subr.mxu0 0.0
      %7364 = vmatpush1.msra.mxu0 0.0
      %7365 = vmatprep.subr.mxu0 0.0
      %7366 = vmatpush1.msra.mxu0 0.0
      %7367 = vmatprep.subr.mxu0 0.0
      %7368 = vmatpush1.msra.mxu0 0.0
      %7369 = vmatprep.subr.mxu0 0.0
      %7370 = vmatpush1.msra.mxu0 0.0
      %7371 = vmatprep.subr.mxu0 0.0
      %7372 = vmatpush1.msra.mxu0 0.0
      %7373 = vmatprep.subr.mxu0 0.0
      %7374 = vmatpush1.msra.mxu0 0.0
      %7375 = vmatprep.subr.mxu0 0.0
      %7376 = vmatpush1.msra.mxu0 0.0
      %7377 = vmatprep.subr.mxu0 0.0
      %7378 = vmatpush1.msra.mxu0 0.0
      %7379 = vmatprep.subr.mxu0 0.0
      %7380 = vmatpush1.msra.mxu0 0.0
      %7381 = vmatprep.subr.mxu0 0.0
      %7382 = vmatpush1.msra.mxu0 0.0
      %7383 = vmatprep.subr.mxu0 0.0
      %7384 = vmatpush1.msra.mxu0 0.0
      %7385 = vmatprep.subr.mxu0 0.0
      %7386 = vmatpush1.msra.mxu0 0.0
      %7387 = vmatprep.subr.mxu0 0.0
      %7388 = vmatpush1.msra.mxu0 0.0
      %7389 = vmatprep.subr.mxu0 0.0
      %7390 = vmatpush1.msra.mxu0 0.0
      %7391 = vmatprep.mubr.f32.mxu0 0.0
      %7392 = vmatmul.mubr.f32.gmra.mrb[0].mxu0 %v7325
      %v7393 = vpop.f32.mrb[0].mxu0
      %v7394 = vadd.f32 0.0, %v7393
      %v7395 = vpop.f32.mrb[0].mxu0
      %7396 = vdwg.mxu0
      %v7398 = vsel %vm7250, %v7188, 0
      %7400 = vmatprep.subr.mxu0 0.0
      %7401 = vmatpush1.msra.mxu0 %v273
      %7402 = vmatprep.subr.mxu0 0.0
      %7403 = vmatpush1.msra.mxu0 %v274
      %7404 = vmatprep.subr.mxu0 0.0
      %7405 = vmatpush1.msra.mxu0 0.0
      %7406 = vmatprep.subr.mxu0 0.0
      %7407 = vmatpush1.msra.mxu0 0.0
      %7408 = vmatprep.subr.mxu0 0.0
      %7409 = vmatpush1.msra.mxu0 0.0
      %7410 = vmatprep.subr.mxu0 0.0
      %7411 = vmatpush1.msra.mxu0 0.0
      %7412 = vmatprep.subr.mxu0 0.0
      %7413 = vmatpush1.msra.mxu0 0.0
      %7414 = vmatprep.subr.mxu0 0.0
      %7415 = vmatpush1.msra.mxu0 0.0
      %7416 = vmatprep.subr.mxu0 0.0
      %7417 = vmatpush1.msra.mxu0 0.0
      %7418 = vmatprep.subr.mxu0 0.0
      %7419 = vmatpush1.msra.mxu0 0.0
      %7420 = vmatprep.subr.mxu0 0.0
      %7421 = vmatpush1.msra.mxu0 0.0
      %7422 = vmatprep.subr.mxu0 0.0
      %7423 = vmatpush1.msra.mxu0 0.0
      %7424 = vmatprep.subr.mxu0 0.0
      %7425 = vmatpush1.msra.mxu0 0.0
      %7426 = vmatprep.subr.mxu0 0.0
      %7427 = vmatpush1.msra.mxu0 0.0
      %7428 = vmatprep.subr.mxu0 0.0
      %7429 = vmatpush1.msra.mxu0 0.0
      %7430 = vmatprep.subr.mxu0 0.0
      %7431 = vmatpush1.msra.mxu0 0.0
      %7432 = vmatprep.subr.mxu0 0.0
      %7433 = vmatpush1.msra.mxu0 0.0
      %7434 = vmatprep.subr.mxu0 0.0
      %7435 = vmatpush1.msra.mxu0 0.0
      %7436 = vmatprep.subr.mxu0 0.0
      %7437 = vmatpush1.msra.mxu0 0.0
      %7438 = vmatprep.subr.mxu0 0.0
      %7439 = vmatpush1.msra.mxu0 0.0
      %7440 = vmatprep.subr.mxu0 0.0
      %7441 = vmatpush1.msra.mxu0 0.0
      %7442 = vmatprep.subr.mxu0 0.0
      %7443 = vmatpush1.msra.mxu0 0.0
      %7444 = vmatprep.subr.mxu0 0.0
      %7445 = vmatpush1.msra.mxu0 0.0
      %7446 = vmatprep.subr.mxu0 0.0
      %7447 = vmatpush1.msra.mxu0 0.0
      %7448 = vmatprep.subr.mxu0 0.0
      %7449 = vmatpush1.msra.mxu0 0.0
      %7450 = vmatprep.subr.mxu0 0.0
      %7451 = vmatpush1.msra.mxu0 0.0
      %7452 = vmatprep.subr.mxu0 0.0
      %7453 = vmatpush1.msra.mxu0 0.0
      %7454 = vmatprep.subr.mxu0 0.0
      %7455 = vmatpush1.msra.mxu0 0.0
      %7456 = vmatprep.subr.mxu0 0.0
      %7457 = vmatpush1.msra.mxu0 0.0
      %7458 = vmatprep.subr.mxu0 0.0
      %7459 = vmatpush1.msra.mxu0 0.0
      %7460 = vmatprep.subr.mxu0 0.0
      %7461 = vmatpush1.msra.mxu0 0.0
      %7462 = vmatprep.subr.mxu0 0.0
      %7463 = vmatpush1.msra.mxu0 0.0
      %7464 = vmatprep.mubr.f32.mxu0 0.0
      %7465 = vmatmul.mubr.f32.gmra.mrb[0].mxu0 %v7398
      %v7466 = vpop.f32.mrb[0].mxu0
      %v7467 = vadd.f32 0.0, %v7466
      %v7468 = vpop.f32.mrb[0].mxu0
      %7469 = vdwg.mxu0
      %v7471 = vsel %vm7250, %v7189, 0
      %7473 = vmatprep.subr.mxu0 0.0
      %7474 = vmatpush1.msra.mxu0 %v275
      %7475 = vmatprep.subr.mxu0 0.0
      %7476 = vmatpush1.msra.mxu0 %v276
      %7477 = vmatprep.subr.mxu0 0.0
      %7478 = vmatpush1.msra.mxu0 0.0
      %7479 = vmatprep.subr.mxu0 0.0
      %7480 = vmatpush1.msra.mxu0 0.0
      %7481 = vmatprep.subr.mxu0 0.0
      %7482 = vmatpush1.msra.mxu0 0.0
      %7483 = vmatprep.subr.mxu0 0.0
      %7484 = vmatpush1.msra.mxu0 0.0
      %7485 = vmatprep.subr.mxu0 0.0
      %7486 = vmatpush1.msra.mxu0 0.0
      %7487 = vmatprep.subr.mxu0 0.0
      %7488 = vmatpush1.msra.mxu0 0.0
      %7489 = vmatprep.subr.mxu0 0.0
      %7490 = vmatpush1.msra.mxu0 0.0
      %7491 = vmatprep.subr.mxu0 0.0
      %7492 = vmatpush1.msra.mxu0 0.0
      %7493 = vmatprep.subr.mxu0 0.0
      %7494 = vmatpush1.msra.mxu0 0.0
      %7495 = vmatprep.subr.mxu0 0.0
      %7496 = vmatpush1.msra.mxu0 0.0
      %7497 = vmatprep.subr.mxu0 0.0
      %7498 = vmatpush1.msra.mxu0 0.0
      %7499 = vmatprep.subr.mxu0 0.0
      %7500 = vmatpush1.msra.mxu0 0.0
      %7501 = vmatprep.subr.mxu0 0.0
      %7502 = vmatpush1.msra.mxu0 0.0
      %7503 = vmatprep.subr.mxu0 0.0
      %7504 = vmatpush1.msra.mxu0 0.0
      %7505 = vmatprep.subr.mxu0 0.0
      %7506 = vmatpush1.msra.mxu0 0.0
      %7507 = vmatprep.subr.mxu0 0.0
      %7508 = vmatpush1.msra.mxu0 0.0
      %7509 = vmatprep.subr.mxu0 0.0
      %7510 = vmatpush1.msra.mxu0 0.0
      %7511 = vmatprep.subr.mxu0 0.0
      %7512 = vmatpush1.msra.mxu0 0.0
      %7513 = vmatprep.subr.mxu0 0.0
      %7514 = vmatpush1.msra.mxu0 0.0
      %7515 = vmatprep.subr.mxu0 0.0
      %7516 = vmatpush1.msra.mxu0 0.0
      %7517 = vmatprep.subr.mxu0 0.0
      %7518 = vmatpush1.msra.mxu0 0.0
      %7519 = vmatprep.subr.mxu0 0.0
      %7520 = vmatpush1.msra.mxu0 0.0
      %7521 = vmatprep.subr.mxu0 0.0
      %7522 = vmatpush1.msra.mxu0 0.0
      %7523 = vmatprep.subr.mxu0 0.0
      %7524 = vmatpush1.msra.mxu0 0.0
      %7525 = vmatprep.subr.mxu0 0.0
      %7526 = vmatpush1.msra.mxu0 0.0
      %7527 = vmatprep.subr.mxu0 0.0
      %7528 = vmatpush1.msra.mxu0 0.0
      %7529 = vmatprep.subr.mxu0 0.0
      %7530 = vmatpush1.msra.mxu0 0.0
      %7531 = vmatprep.subr.mxu0 0.0
      %7532 = vmatpush1.msra.mxu0 0.0
      %7533 = vmatprep.subr.mxu0 0.0
      %7534 = vmatpush1.msra.mxu0 0.0
      %7535 = vmatprep.subr.mxu0 0.0
      %7536 = vmatpush1.msra.mxu0 0.0
      %7537 = vmatprep.mubr.f32.mxu0 0.0
      %7538 = vmatmul.mubr.f32.gmra.mrb[0].mxu0 %v7471
      %v7539 = vpop.f32.mrb[0].mxu0
      %v7540 = vadd.f32 0.0, %v7539
      %v7541 = vpop.f32.mrb[0].mxu0
      %7542 = vdwg.mxu0
      %v7544 = vsel %vm7250, %v7190, 0
      %7546 = vmatprep.subr.mxu0 0.0
      %7547 = vmatpush1.msra.mxu0 %v277
      %7548 = vmatprep.subr.mxu0 0.0
      %7549 = vmatpush1.msra.mxu0 %v278
      %7550 = vmatprep.subr.mxu0 0.0
      %7551 = vmatpush1.msra.mxu0 0.0
      %7552 = vmatprep.subr.mxu0 0.0
      %7553 = vmatpush1.msra.mxu0 0.0
      %7554 = vmatprep.subr.mxu0 0.0
      %7555 = vmatpush1.msra.mxu0 0.0
      %7556 = vmatprep.subr.mxu0 0.0
      %7557 = vmatpush1.msra.mxu0 0.0
      %7558 = vmatprep.subr.mxu0 0.0
      %7559 = vmatpush1.msra.mxu0 0.0
      %7560 = vmatprep.subr.mxu0 0.0
      %7561 = vmatpush1.msra.mxu0 0.0
      %7562 = vmatprep.subr.mxu0 0.0
      %7563 = vmatpush1.msra.mxu0 0.0
      %7564 = vmatprep.subr.mxu0 0.0
      %7565 = vmatpush1.msra.mxu0 0.0
      %7566 = vmatprep.subr.mxu0 0.0
      %7567 = vmatpush1.msra.mxu0 0.0
      %7568 = vmatprep.subr.mxu0 0.0
      %7569 = vmatpush1.msra.mxu0 0.0
      %7570 = vmatprep.subr.mxu0 0.0
      %7571 = vmatpush1.msra.mxu0 0.0
      %7572 = vmatprep.subr.mxu0 0.0
      %7573 = vmatpush1.msra.mxu0 0.0
      %7574 = vmatprep.subr.mxu0 0.0
      %7575 = vmatpush1.msra.mxu0 0.0
      %7576 = vmatprep.subr.mxu0 0.0
      %7577 = vmatpush1.msra.mxu0 0.0
      %7578 = vmatprep.subr.mxu0 0.0
      %7579 = vmatpush1.msra.mxu0 0.0
      %7580 = vmatprep.subr.mxu0 0.0
      %7581 = vmatpush1.msra.mxu0 0.0
      %7582 = vmatprep.subr.mxu0 0.0
      %7583 = vmatpush1.msra.mxu0 0.0
      %7584 = vmatprep.subr.mxu0 0.0
      %7585 = vmatpush1.msra.mxu0 0.0
      %7586 = vmatprep.subr.mxu0 0.0
      %7587 = vmatpush1.msra.mxu0 0.0
      %7588 = vmatprep.subr.mxu0 0.0
      %7589 = vmatpush1.msra.mxu0 0.0
      %7590 = vmatprep.subr.mxu0 0.0
      %7591 = vmatpush1.msra.mxu0 0.0
      %7592 = vmatprep.subr.mxu0 0.0
      %7593 = vmatpush1.msra.mxu0 0.0
      %7594 = vmatprep.subr.mxu0 0.0
      %7595 = vmatpush1.msra.mxu0 0.0
      %7596 = vmatprep.subr.mxu0 0.0
      %7597 = vmatpush1.msra.mxu0 0.0
      %7598 = vmatprep.subr.mxu0 0.0
      %7599 = vmatpush1.msra.mxu0 0.0
      %7600 = vmatprep.subr.mxu0 0.0
      %7601 = vmatpush1.msra.mxu0 0.0
      %7602 = vmatprep.subr.mxu0 0.0
      %7603 = vmatpush1.msra.mxu0 0.0
      %7604 = vmatprep.subr.mxu0 0.0
      %7605 = vmatpush1.msra.mxu0 0.0
      %7606 = vmatprep.subr.mxu0 0.0
      %7607 = vmatpush1.msra.mxu0 0.0
      %7608 = vmatprep.subr.mxu0 0.0
      %7609 = vmatpush1.msra.mxu0 0.0
      %7610 = vmatprep.mubr.f32.mxu0 0.0
      %7611 = vmatmul.mubr.f32.gmra.mrb[0].mxu0 %v7544
      %v7612 = vpop.f32.mrb[0].mxu0
      %v7613 = vadd.f32 0.0, %v7612
      %v7614 = vpop.f32.mrb[0].mxu0
      %7615 = vdwg.mxu0
      %v7617 = vsel %vm7250, %v7191, 0
      %7619 = vmatprep.subr.mxu0 0.0
      %7620 = vmatpush1.msra.mxu0 %v279
      %7621 = vmatprep.subr.mxu0 0.0
      %7622 = vmatpush1.msra.mxu0 %v280
      %7623 = vmatprep.subr.mxu0 0.0
      %7624 = vmatpush1.msra.mxu0 0.0
      %7625 = vmatprep.subr.mxu0 0.0
      %7626 = vmatpush1.msra.mxu0 0.0
      %7627 = vmatprep.subr.mxu0 0.0
      %7628 = vmatpush1.msra.mxu0 0.0
      %7629 = vmatprep.subr.mxu0 0.0
      %7630 = vmatpush1.msra.mxu0 0.0
      %7631 = vmatprep.subr.mxu0 0.0
      %7632 = vmatpush1.msra.mxu0 0.0
      %7633 = vmatprep.subr.mxu0 0.0
      %7634 = vmatpush1.msra.mxu0 0.0
      %7635 = vmatprep.subr.mxu0 0.0
      %7636 = vmatpush1.msra.mxu0 0.0
      %7637 = vmatprep.subr.mxu0 0.0
      %7638 = vmatpush1.msra.mxu0 0.0
      %7639 = vmatprep.subr.mxu0 0.0
      %7640 = vmatpush1.msra.mxu0 0.0
      %7641 = vmatprep.subr.mxu0 0.0
      %7642 = vmatpush1.msra.mxu0 0.0
      %7643 = vmatprep.subr.mxu0 0.0
      %7644 = vmatpush1.msra.mxu0 0.0
      %7645 = vmatprep.subr.mxu0 0.0
      %7646 = vmatpush1.msra.mxu0 0.0
      %7647 = vmatprep.subr.mxu0 0.0
      %7648 = vmatpush1.msra.mxu0 0.0
      %7649 = vmatprep.subr.mxu0 0.0
      %7650 = vmatpush1.msra.mxu0 0.0
      %7651 = vmatprep.subr.mxu0 0.0
      %7652 = vmatpush1.msra.mxu0 0.0
      %7653 = vmatprep.subr.mxu0 0.0
      %7654 = vmatpush1.msra.mxu0 0.0
      %7655 = vmatprep.subr.mxu0 0.0
      %7656 = vmatpush1.msra.mxu0 0.0
      %7657 = vmatprep.subr.mxu0 0.0
      %7658 = vmatpush1.msra.mxu0 0.0
      %7659 = vmatprep.subr.mxu0 0.0
      %7660 = vmatpush1.msra.mxu0 0.0
      %7661 = vmatprep.subr.mxu0 0.0
      %7662 = vmatpush1.msra.mxu0 0.0
      %7663 = vmatprep.subr.mxu0 0.0
      %7664 = vmatpush1.msra.mxu0 0.0
      %7665 = vmatprep.subr.mxu0 0.0
      %7666 = vmatpush1.msra.mxu0 0.0
      %7667 = vmatprep.subr.mxu0 0.0
      %7668 = vmatpush1.msra.mxu0 0.0
      %7669 = vmatprep.subr.mxu0 0.0
      %7670 = vmatpush1.msra.mxu0 0.0
      %7671 = vmatprep.subr.mxu0 0.0
      %7672 = vmatpush1.msra.mxu0 0.0
      %7673 = vmatprep.subr.mxu0 0.0
      %7674 = vmatpush1.msra.mxu0 0.0
      %7675 = vmatprep.subr.mxu0 0.0
      %7676 = vmatpush1.msra.mxu0 0.0
      %7677 = vmatprep.subr.mxu0 0.0
      %7678 = vmatpush1.msra.mxu0 0.0
      %7679 = vmatprep.subr.mxu0 0.0
      %7680 = vmatpush1.msra.mxu0 0.0
      %7681 = vmatprep.subr.mxu0 0.0
      %7682 = vmatpush1.msra.mxu0 0.0
      %7683 = vmatprep.mubr.f32.mxu0 0.0
      %7684 = vmatmul.mubr.f32.gmra.mrb[0].mxu0 %v7617
      %v7685 = vpop.f32.mrb[0].mxu0
      %v7686 = vadd.f32 0.0, %v7685
      %v7687 = vpop.f32.mrb[0].mxu0
      %7688 = vdwg.mxu0
      %v7690 = vsel %vm7250, %v7192, 0
      %7692 = vmatprep.subr.mxu0 0.0
      %7693 = vmatpush1.msra.mxu0 %v281
      %7694 = vmatprep.subr.mxu0 0.0
      %7695 = vmatpush1.msra.mxu0 %v282
      %7696 = vmatprep.subr.mxu0 0.0
      %7697 = vmatpush1.msra.mxu0 0.0
      %7698 = vmatprep.subr.mxu0 0.0
      %7699 = vmatpush1.msra.mxu0 0.0
      %7700 = vmatprep.subr.mxu0 0.0
      %7701 = vmatpush1.msra.mxu0 0.0
      %7702 = vmatprep.subr.mxu0 0.0
      %7703 = vmatpush1.msra.mxu0 0.0
      %7704 = vmatprep.subr.mxu0 0.0
      %7705 = vmatpush1.msra.mxu0 0.0
      %7706 = vmatprep.subr.mxu0 0.0
      %7707 = vmatpush1.msra.mxu0 0.0
      %7708 = vmatprep.subr.mxu0 0.0
      %7709 = vmatpush1.msra.mxu0 0.0
      %7710 = vmatprep.subr.mxu0 0.0
      %7711 = vmatpush1.msra.mxu0 0.0
      %7712 = vmatprep.subr.mxu0 0.0
      %7713 = vmatpush1.msra.mxu0 0.0
      %7714 = vmatprep.subr.mxu0 0.0
      %7715 = vmatpush1.msra.mxu0 0.0
      %7716 = vmatprep.subr.mxu0 0.0
      %7717 = vmatpush1.msra.mxu0 0.0
      %7718 = vmatprep.subr.mxu0 0.0
      %7719 = vmatpush1.msra.mxu0 0.0
      %7720 = vmatprep.subr.mxu0 0.0
      %7721 = vmatpush1.msra.mxu0 0.0
      %7722 = vmatprep.subr.mxu0 0.0
      %7723 = vmatpush1.msra.mxu0 0.0
      %7724 = vmatprep.subr.mxu0 0.0
      %7725 = vmatpush1.msra.mxu0 0.0
      %7726 = vmatprep.subr.mxu0 0.0
      %7727 = vmatpush1.msra.mxu0 0.0
      %7728 = vmatprep.subr.mxu0 0.0
      %7729 = vmatpush1.msra.mxu0 0.0
      %7730 = vmatprep.subr.mxu0 0.0
      %7731 = vmatpush1.msra.mxu0 0.0
      %7732 = vmatprep.subr.mxu0 0.0
      %7733 = vmatpush1.msra.mxu0 0.0
      %7734 = vmatprep.subr.mxu0 0.0
      %7735 = vmatpush1.msra.mxu0 0.0
      %7736 = vmatprep.subr.mxu0 0.0
      %7737 = vmatpush1.msra.mxu0 0.0
      %7738 = vmatprep.subr.mxu0 0.0
      %7739 = vmatpush1.msra.mxu0 0.0
      %7740 = vmatprep.subr.mxu0 0.0
      %7741 = vmatpush1.msra.mxu0 0.0
      %7742 = vmatprep.subr.mxu0 0.0
      %7743 = vmatpush1.msra.mxu0 0.0
      %7744 = vmatprep.subr.mxu0 0.0
      %7745 = vmatpush1.msra.mxu0 0.0
      %7746 = vmatprep.subr.mxu0 0.0
      %7747 = vmatpush1.msra.mxu0 0.0
      %7748 = vmatprep.subr.mxu0 0.0
      %7749 = vmatpush1.msra.mxu0 0.0
      %7750 = vmatprep.subr.mxu0 0.0
      %7751 = vmatpush1.msra.mxu0 0.0
      %7752 = vmatprep.subr.mxu0 0.0
      %7753 = vmatpush1.msra.mxu0 0.0
      %7754 = vmatprep.subr.mxu0 0.0
      %7755 = vmatpush1.msra.mxu0 0.0
      %7756 = vmatprep.mubr.f32.mxu0 0.0
      %7757 = vmatmul.mubr.f32.gmra.mrb[0].mxu0 %v7690
      %v7758 = vpop.f32.mrb[0].mxu0
      %v7759 = vadd.f32 0.0, %v7758
      %v7760 = vpop.f32.mrb[0].mxu0
      %7761 = vdwg.mxu0
      %v7763 = vsel %vm7250, %v7193, 0
      %7765 = vmatprep.subr.mxu0 0.0
      %7766 = vmatpush1.msra.mxu0 %v283
      %7767 = vmatprep.subr.mxu0 0.0
      %7768 = vmatpush1.msra.mxu0 %v284
      %7769 = vmatprep.subr.mxu0 0.0
      %7770 = vmatpush1.msra.mxu0 0.0
      %7771 = vmatprep.subr.mxu0 0.0
      %7772 = vmatpush1.msra.mxu0 0.0
      %7773 = vmatprep.subr.mxu0 0.0
      %7774 = vmatpush1.msra.mxu0 0.0
      %7775 = vmatprep.subr.mxu0 0.0
      %7776 = vmatpush1.msra.mxu0 0.0
      %7777 = vmatprep.subr.mxu0 0.0
      %7778 = vmatpush1.msra.mxu0 0.0
      %7779 = vmatprep.subr.mxu0 0.0
      %7780 = vmatpush1.msra.mxu0 0.0
      %7781 = vmatprep.subr.mxu0 0.0
      %7782 = vmatpush1.msra.mxu0 0.0
      %7783 = vmatprep.subr.mxu0 0.0
      %7784 = vmatpush1.msra.mxu0 0.0
      %7785 = vmatprep.subr.mxu0 0.0
      %7786 = vmatpush1.msra.mxu0 0.0
      %7787 = vmatprep.subr.mxu0 0.0
      %7788 = vmatpush1.msra.mxu0 0.0
      %7789 = vmatprep.subr.mxu0 0.0
      %7790 = vmatpush1.msra.mxu0 0.0
      %7791 = vmatprep.subr.mxu0 0.0
      %7792 = vmatpush1.msra.mxu0 0.0
      %7793 = vmatprep.subr.mxu0 0.0
      %7794 = vmatpush1.msra.mxu0 0.0
      %7795 = vmatprep.subr.mxu0 0.0
      %7796 = vmatpush1.msra.mxu0 0.0
      %7797 = vmatprep.subr.mxu0 0.0
      %7798 = vmatpush1.msra.mxu0 0.0
      %7799 = vmatprep.subr.mxu0 0.0
      %7800 = vmatpush1.msra.mxu0 0.0
      %7801 = vmatprep.subr.mxu0 0.0
      %7802 = vmatpush1.msra.mxu0 0.0
      %7803 = vmatprep.subr.mxu0 0.0
      %7804 = vmatpush1.msra.mxu0 0.0
      %7805 = vmatprep.subr.mxu0 0.0
      %7806 = vmatpush1.msra.mxu0 0.0
      %7807 = vmatprep.subr.mxu0 0.0
      %7808 = vmatpush1.msra.mxu0 0.0
      %7809 = vmatprep.subr.mxu0 0.0
      %7810 = vmatpush1.msra.mxu0 0.0
      %7811 = vmatprep.subr.mxu0 0.0
      %7812 = vmatpush1.msra.mxu0 0.0
      %7813 = vmatprep.subr.mxu0 0.0
      %7814 = vmatpush1.msra.mxu0 0.0
      %7815 = vmatprep.subr.mxu0 0.0
      %7816 = vmatpush1.msra.mxu0 0.0
      %7817 = vmatprep.subr.mxu0 0.0
      %7818 = vmatpush1.msra.mxu0 0.0
      %7819 = vmatprep.subr.mxu0 0.0
      %7820 = vmatpush1.msra.mxu0 0.0
      %7821 = vmatprep.subr.mxu0 0.0
      %7822 = vmatpush1.msra.mxu0 0.0
      %7823 = vmatprep.subr.mxu0 0.0
      %7824 = vmatpush1.msra.mxu0 0.0
      %7825 = vmatprep.subr.mxu0 0.0
      %7826 = vmatpush1.msra.mxu0 0.0
      %7827 = vmatprep.subr.mxu0 0.0
      %7828 = vmatpush1.msra.mxu0 0.0
      %7829 = vmatprep.mubr.f32.mxu0 0.0
      %7830 = vmatmul.mubr.f32.gmra.mrb[0].mxu0 %v7763
      %v7831 = vpop.f32.mrb[0].mxu0
      %v7832 = vadd.f32 0.0, %v7831
      %v7833 = vpop.f32.mrb[0].mxu0
      %7834 = vdwg.mxu0
      %v7836 = vsel %vm7250, %v7194, 0
      %7838 = vmatprep.subr.mxu0 0.0
      %7839 = vmatpush1.msra.mxu0 %v285
      %7840 = vmatprep.subr.mxu0 0.0
      %7841 = vmatpush1.msra.mxu0 %v286
      %7842 = vmatprep.subr.mxu0 0.0
      %7843 = vmatpush1.msra.mxu0 0.0
      %7844 = vmatprep.subr.mxu0 0.0
      %7845 = vmatpush1.msra.mxu0 0.0
      %7846 = vmatprep.subr.mxu0 0.0
      %7847 = vmatpush1.msra.mxu0 0.0
      %7848 = vmatprep.subr.mxu0 0.0
      %7849 = vmatpush1.msra.mxu0 0.0
      %7850 = vmatprep.subr.mxu0 0.0
      %7851 = vmatpush1.msra.mxu0 0.0
      %7852 = vmatprep.subr.mxu0 0.0
      %7853 = vmatpush1.msra.mxu0 0.0
      %7854 = vmatprep.subr.mxu0 0.0
      %7855 = vmatpush1.msra.mxu0 0.0
      %7856 = vmatprep.subr.mxu0 0.0
      %7857 = vmatpush1.msra.mxu0 0.0
      %7858 = vmatprep.subr.mxu0 0.0
      %7859 = vmatpush1.msra.mxu0 0.0
      %7860 = vmatprep.subr.mxu0 0.0
      %7861 = vmatpush1.msra.mxu0 0.0
      %7862 = vmatprep.subr.mxu0 0.0
      %7863 = vmatpush1.msra.mxu0 0.0
      %7864 = vmatprep.subr.mxu0 0.0
      %7865 = vmatpush1.msra.mxu0 0.0
      %7866 = vmatprep.subr.mxu0 0.0
      %7867 = vmatpush1.msra.mxu0 0.0
      %7868 = vmatprep.subr.mxu0 0.0
      %7869 = vmatpush1.msra.mxu0 0.0
      %7870 = vmatprep.subr.mxu0 0.0
      %7871 = vmatpush1.msra.mxu0 0.0
      %7872 = vmatprep.subr.mxu0 0.0
      %7873 = vmatpush1.msra.mxu0 0.0
      %7874 = vmatprep.subr.mxu0 0.0
      %7875 = vmatpush1.msra.mxu0 0.0
      %7876 = vmatprep.subr.mxu0 0.0
      %7877 = vmatpush1.msra.mxu0 0.0
      %7878 = vmatprep.subr.mxu0 0.0
      %7879 = vmatpush1.msra.mxu0 0.0
      %7880 = vmatprep.subr.mxu0 0.0
      %7881 = vmatpush1.msra.mxu0 0.0
      %7882 = vmatprep.subr.mxu0 0.0
      %7883 = vmatpush1.msra.mxu0 0.0
      %7884 = vmatprep.subr.mxu0 0.0
      %7885 = vmatpush1.msra.mxu0 0.0
      %7886 = vmatprep.subr.mxu0 0.0
      %7887 = vmatpush1.msra.mxu0 0.0
      %7888 = vmatprep.subr.mxu0 0.0
      %7889 = vmatpush1.msra.mxu0 0.0
      %7890 = vmatprep.subr.mxu0 0.0
      %7891 = vmatpush1.msra.mxu0 0.0
      %7892 = vmatprep.subr.mxu0 0.0
      %7893 = vmatpush1.msra.mxu0 0.0
      %7894 = vmatprep.subr.mxu0 0.0
      %7895 = vmatpush1.msra.mxu0 0.0
      %7896 = vmatprep.subr.mxu0 0.0
      %7897 = vmatpush1.msra.mxu0 0.0
      %7898 = vmatprep.subr.mxu0 0.0
      %7899 = vmatpush1.msra.mxu0 0.0
      %7900 = vmatprep.subr.mxu0 0.0
      %7901 = vmatpush1.msra.mxu0 0.0
      %7902 = vmatprep.mubr.f32.mxu0 0.0
      %7903 = vmatmul.mubr.f32.gmra.mrb[0].mxu0 %v7836
      %v7904 = vpop.f32.mrb[0].mxu0
      %v7905 = vadd.f32 0.0, %v7904
      %v7906 = vpop.f32.mrb[0].mxu0
      %7907 = vdwg.mxu0
      %v7909 = vsel %vm7250, %v7195, 0
      %7911 = vmatprep.subr.mxu0 0.0
      %7912 = vmatpush1.msra.mxu0 %v287
      %7913 = vmatprep.subr.mxu0 0.0
      %7914 = vmatpush1.msra.mxu0 %v288
      %7915 = vmatprep.subr.mxu0 0.0
      %7916 = vmatpush1.msra.mxu0 0.0
      %7917 = vmatprep.subr.mxu0 0.0
      %7918 = vmatpush1.msra.mxu0 0.0
      %7919 = vmatprep.subr.mxu0 0.0
      %7920 = vmatpush1.msra.mxu0 0.0
      %7921 = vmatprep.subr.mxu0 0.0
      %7922 = vmatpush1.msra.mxu0 0.0
      %7923 = vmatprep.subr.mxu0 0.0
      %7924 = vmatpush1.msra.mxu0 0.0
      %7925 = vmatprep.subr.mxu0 0.0
      %7926 = vmatpush1.msra.mxu0 0.0
      %7927 = vmatprep.subr.mxu0 0.0
      %7928 = vmatpush1.msra.mxu0 0.0
      %7929 = vmatprep.subr.mxu0 0.0
      %7930 = vmatpush1.msra.mxu0 0.0
      %7931 = vmatprep.subr.mxu0 0.0
      %7932 = vmatpush1.msra.mxu0 0.0
      %7933 = vmatprep.subr.mxu0 0.0
      %7934 = vmatpush1.msra.mxu0 0.0
      %7935 = vmatprep.subr.mxu0 0.0
      %7936 = vmatpush1.msra.mxu0 0.0
      %7937 = vmatprep.subr.mxu0 0.0
      %7938 = vmatpush1.msra.mxu0 0.0
      %7939 = vmatprep.subr.mxu0 0.0
      %7940 = vmatpush1.msra.mxu0 0.0
      %7941 = vmatprep.subr.mxu0 0.0
      %7942 = vmatpush1.msra.mxu0 0.0
      %7943 = vmatprep.subr.mxu0 0.0
      %7944 = vmatpush1.msra.mxu0 0.0
      %7945 = vmatprep.subr.mxu0 0.0
      %7946 = vmatpush1.msra.mxu0 0.0
      %7947 = vmatprep.subr.mxu0 0.0
      %7948 = vmatpush1.msra.mxu0 0.0
      %7949 = vmatprep.subr.mxu0 0.0
      %7950 = vmatpush1.msra.mxu0 0.0
      %7951 = vmatprep.subr.mxu0 0.0
      %7952 = vmatpush1.msra.mxu0 0.0
      %7953 = vmatprep.subr.mxu0 0.0
      %7954 = vmatpush1.msra.mxu0 0.0
      %7955 = vmatprep.subr.mxu0 0.0
      %7956 = vmatpush1.msra.mxu0 0.0
      %7957 = vmatprep.subr.mxu0 0.0
      %7958 = vmatpush1.msra.mxu0 0.0
      %7959 = vmatprep.subr.mxu0 0.0
      %7960 = vmatpush1.msra.mxu0 0.0
      %7961 = vmatprep.subr.mxu0 0.0
      %7962 = vmatpush1.msra.mxu0 0.0
      %7963 = vmatprep.subr.mxu0 0.0
      %7964 = vmatpush1.msra.mxu0 0.0
      %7965 = vmatprep.subr.mxu0 0.0
      %7966 = vmatpush1.msra.mxu0 0.0
      %7967 = vmatprep.subr.mxu0 0.0
      %7968 = vmatpush1.msra.mxu0 0.0
      %7969 = vmatprep.subr.mxu0 0.0
      %7970 = vmatpush1.msra.mxu0 0.0
      %7971 = vmatprep.subr.mxu0 0.0
      %7972 = vmatpush1.msra.mxu0 0.0
      %7973 = vmatprep.subr.mxu0 0.0
      %7974 = vmatpush1.msra.mxu0 0.0
      %7975 = vmatprep.mubr.f32.mxu0 0.0
      %7976 = vmatmul.mubr.f32.gmra.mrb[0].mxu0 %v7909
      %v7977 = vpop.f32.mrb[0].mxu0
      %v7978 = vadd.f32 0.0, %v7977
      %v7979 = vpop.f32.mrb[0].mxu0
      %7980 = vdwg.mxu0
      %v7982 = vsel %vm7250, %v7196, 0
      %7984 = vmatprep.subr.mxu0 0.0
      %7985 = vmatpush1.msra.mxu0 %v289
      %7986 = vmatprep.subr.mxu0 0.0
      %7987 = vmatpush1.msra.mxu0 %v290
      %7988 = vmatprep.subr.mxu0 0.0
      %7989 = vmatpush1.msra.mxu0 0.0
      %7990 = vmatprep.subr.mxu0 0.0
      %7991 = vmatpush1.msra.mxu0 0.0
      %7992 = vmatprep.subr.mxu0 0.0
      %7993 = vmatpush1.msra.mxu0 0.0
      %7994 = vmatprep.subr.mxu0 0.0
      %7995 = vmatpush1.msra.mxu0 0.0
      %7996 = vmatprep.subr.mxu0 0.0
      %7997 = vmatpush1.msra.mxu0 0.0
      %7998 = vmatprep.subr.mxu0 0.0
      %7999 = vmatpush1.msra.mxu0 0.0
      %8000 = vmatprep.subr.mxu0 0.0
      %8001 = vmatpush1.msra.mxu0 0.0
      %8002 = vmatprep.subr.mxu0 0.0
      %8003 = vmatpush1.msra.mxu0 0.0
      %8004 = vmatprep.subr.mxu0 0.0
      %8005 = vmatpush1.msra.mxu0 0.0
      %8006 = vmatprep.subr.mxu0 0.0
      %8007 = vmatpush1.msra.mxu0 0.0
      %8008 = vmatprep.subr.mxu0 0.0
      %8009 = vmatpush1.msra.mxu0 0.0
      %8010 = vmatprep.subr.mxu0 0.0
      %8011 = vmatpush1.msra.mxu0 0.0
      %8012 = vmatprep.subr.mxu0 0.0
      %8013 = vmatpush1.msra.mxu0 0.0
      %8014 = vmatprep.subr.mxu0 0.0
      %8015 = vmatpush1.msra.mxu0 0.0
      %8016 = vmatprep.subr.mxu0 0.0
      %8017 = vmatpush1.msra.mxu0 0.0
      %8018 = vmatprep.subr.mxu0 0.0
      %8019 = vmatpush1.msra.mxu0 0.0
      %8020 = vmatprep.subr.mxu0 0.0
      %8021 = vmatpush1.msra.mxu0 0.0
      %8022 = vmatprep.subr.mxu0 0.0
      %8023 = vmatpush1.msra.mxu0 0.0
      %8024 = vmatprep.subr.mxu0 0.0
      %8025 = vmatpush1.msra.mxu0 0.0
      %8026 = vmatprep.subr.mxu0 0.0
      %8027 = vmatpush1.msra.mxu0 0.0
      %8028 = vmatprep.subr.mxu0 0.0
      %8029 = vmatpush1.msra.mxu0 0.0
      %8030 = vmatprep.subr.mxu0 0.0
      %8031 = vmatpush1.msra.mxu0 0.0
      %8032 = vmatprep.subr.mxu0 0.0
      %8033 = vmatpush1.msra.mxu0 0.0
      %8034 = vmatprep.subr.mxu0 0.0
      %8035 = vmatpush1.msra.mxu0 0.0
      %8036 = vmatprep.subr.mxu0 0.0
      %8037 = vmatpush1.msra.mxu0 0.0
      %8038 = vmatprep.subr.mxu0 0.0
      %8039 = vmatpush1.msra.mxu0 0.0
      %8040 = vmatprep.subr.mxu0 0.0
      %8041 = vmatpush1.msra.mxu0 0.0
      %8042 = vmatprep.subr.mxu0 0.0
      %8043 = vmatpush1.msra.mxu0 0.0
      %8044 = vmatprep.subr.mxu0 0.0
      %8045 = vmatpush1.msra.mxu0 0.0
      %8046 = vmatprep.subr.mxu0 0.0
      %8047 = vmatpush1.msra.mxu0 0.0
      %8048 = vmatprep.mubr.f32.mxu0 0.0
      %8049 = vmatmul.mubr.f32.gmra.mrb[0].mxu0 %v7982
      %v8050 = vpop.f32.mrb[0].mxu0
      %v8051 = vadd.f32 0.0, %v8050
      %v8052 = vpop.f32.mrb[0].mxu0
      %8053 = vdwg.mxu0
      %v8055 = vsel %vm7250, %v7197, 0
      %8057 = vmatprep.subr.mxu0 0.0
      %8058 = vmatpush1.msra.mxu0 %v291
      %8059 = vmatprep.subr.mxu0 0.0
      %8060 = vmatpush1.msra.mxu0 %v292
      %8061 = vmatprep.subr.mxu0 0.0
      %8062 = vmatpush1.msra.mxu0 0.0
      %8063 = vmatprep.subr.mxu0 0.0
      %8064 = vmatpush1.msra.mxu0 0.0
      %8065 = vmatprep.subr.mxu0 0.0
      %8066 = vmatpush1.msra.mxu0 0.0
      %8067 = vmatprep.subr.mxu0 0.0
      %8068 = vmatpush1.msra.mxu0 0.0
      %8069 = vmatprep.subr.mxu0 0.0
      %8070 = vmatpush1.msra.mxu0 0.0
      %8071 = vmatprep.subr.mxu0 0.0
      %8072 = vmatpush1.msra.mxu0 0.0
      %8073 = vmatprep.subr.mxu0 0.0
      %8074 = vmatpush1.msra.mxu0 0.0
      %8075 = vmatprep.subr.mxu0 0.0
      %8076 = vmatpush1.msra.mxu0 0.0
      %8077 = vmatprep.subr.mxu0 0.0
      %8078 = vmatpush1.msra.mxu0 0.0
      %8079 = vmatprep.subr.mxu0 0.0
      %8080 = vmatpush1.msra.mxu0 0.0
      %8081 = vmatprep.subr.mxu0 0.0
      %8082 = vmatpush1.msra.mxu0 0.0
      %8083 = vmatprep.subr.mxu0 0.0
      %8084 = vmatpush1.msra.mxu0 0.0
      %8085 = vmatprep.subr.mxu0 0.0
      %8086 = vmatpush1.msra.mxu0 0.0
      %8087 = vmatprep.subr.mxu0 0.0
      %8088 = vmatpush1.msra.mxu0 0.0
      %8089 = vmatprep.subr.mxu0 0.0
      %8090 = vmatpush1.msra.mxu0 0.0
      %8091 = vmatprep.subr.mxu0 0.0
      %8092 = vmatpush1.msra.mxu0 0.0
      %8093 = vmatprep.subr.mxu0 0.0
      %8094 = vmatpush1.msra.mxu0 0.0
      %8095 = vmatprep.subr.mxu0 0.0
      %8096 = vmatpush1.msra.mxu0 0.0
      %8097 = vmatprep.subr.mxu0 0.0
      %8098 = vmatpush1.msra.mxu0 0.0
      %8099 = vmatprep.subr.mxu0 0.0
      %8100 = vmatpush1.msra.mxu0 0.0
      %8101 = vmatprep.subr.mxu0 0.0
      %8102 = vmatpush1.msra.mxu0 0.0
      %8103 = vmatprep.subr.mxu0 0.0
      %8104 = vmatpush1.msra.mxu0 0.0
      %8105 = vmatprep.subr.mxu0 0.0
      %8106 = vmatpush1.msra.mxu0 0.0
      %8107 = vmatprep.subr.mxu0 0.0
      %8108 = vmatpush1.msra.mxu0 0.0
      %8109 = vmatprep.subr.mxu0 0.0
      %8110 = vmatpush1.msra.mxu0 0.0
      %8111 = vmatprep.subr.mxu0 0.0
      %8112 = vmatpush1.msra.mxu0 0.0
      %8113 = vmatprep.subr.mxu0 0.0
      %8114 = vmatpush1.msra.mxu0 0.0
      %8115 = vmatprep.subr.mxu0 0.0
      %8116 = vmatpush1.msra.mxu0 0.0
      %8117 = vmatprep.subr.mxu0 0.0
      %8118 = vmatpush1.msra.mxu0 0.0
      %8119 = vmatprep.subr.mxu0 0.0
      %8120 = vmatpush1.msra.mxu0 0.0
      %8121 = vmatprep.mubr.f32.mxu0 0.0
      %8122 = vmatmul.mubr.f32.gmra.mrb[0].mxu0 %v8055
      %v8123 = vpop.f32.mrb[0].mxu0
      %v8124 = vadd.f32 0.0, %v8123
      %v8125 = vpop.f32.mrb[0].mxu0
      %8126 = vdwg.mxu0
      %v8128 = vsel %vm7250, %v7198, 0
      %8130 = vmatprep.subr.mxu0 0.0
      %8131 = vmatpush1.msra.mxu0 %v293
      %8132 = vmatprep.subr.mxu0 0.0
      %8133 = vmatpush1.msra.mxu0 %v294
      %8134 = vmatprep.subr.mxu0 0.0
      %8135 = vmatpush1.msra.mxu0 0.0
      %8136 = vmatprep.subr.mxu0 0.0
      %8137 = vmatpush1.msra.mxu0 0.0
      %8138 = vmatprep.subr.mxu0 0.0
      %8139 = vmatpush1.msra.mxu0 0.0
      %8140 = vmatprep.subr.mxu0 0.0
      %8141 = vmatpush1.msra.mxu0 0.0
      %8142 = vmatprep.subr.mxu0 0.0
      %8143 = vmatpush1.msra.mxu0 0.0
      %8144 = vmatprep.subr.mxu0 0.0
      %8145 = vmatpush1.msra.mxu0 0.0
      %8146 = vmatprep.subr.mxu0 0.0
      %8147 = vmatpush1.msra.mxu0 0.0
      %8148 = vmatprep.subr.mxu0 0.0
      %8149 = vmatpush1.msra.mxu0 0.0
      %8150 = vmatprep.subr.mxu0 0.0
      %8151 = vmatpush1.msra.mxu0 0.0
      %8152 = vmatprep.subr.mxu0 0.0
      %8153 = vmatpush1.msra.mxu0 0.0
      %8154 = vmatprep.subr.mxu0 0.0
      %8155 = vmatpush1.msra.mxu0 0.0
      %8156 = vmatprep.subr.mxu0 0.0
      %8157 = vmatpush1.msra.mxu0 0.0
      %8158 = vmatprep.subr.mxu0 0.0
      %8159 = vmatpush1.msra.mxu0 0.0
      %8160 = vmatprep.subr.mxu0 0.0
      %8161 = vmatpush1.msra.mxu0 0.0
      %8162 = vmatprep.subr.mxu0 0.0
      %8163 = vmatpush1.msra.mxu0 0.0
      %8164 = vmatprep.subr.mxu0 0.0
      %8165 = vmatpush1.msra.mxu0 0.0
      %8166 = vmatprep.subr.mxu0 0.0
      %8167 = vmatpush1.msra.mxu0 0.0
      %8168 = vmatprep.subr.mxu0 0.0
      %8169 = vmatpush1.msra.mxu0 0.0
      %8170 = vmatprep.subr.mxu0 0.0
      %8171 = vmatpush1.msra.mxu0 0.0
      %8172 = vmatprep.subr.mxu0 0.0
      %8173 = vmatpush1.msra.mxu0 0.0
      %8174 = vmatprep.subr.mxu0 0.0
      %8175 = vmatpush1.msra.mxu0 0.0
      %8176 = vmatprep.subr.mxu0 0.0
      %8177 = vmatpush1.msra.mxu0 0.0
      %8178 = vmatprep.subr.mxu0 0.0
      %8179 = vmatpush1.msra.mxu0 0.0
      %8180 = vmatprep.subr.mxu0 0.0
      %8181 = vmatpush1.msra.mxu0 0.0
      %8182 = vmatprep.subr.mxu0 0.0
      %8183 = vmatpush1.msra.mxu0 0.0
      %8184 = vmatprep.subr.mxu0 0.0
      %8185 = vmatpush1.msra.mxu0 0.0
      %8186 = vmatprep.subr.mxu0 0.0
      %8187 = vmatpush1.msra.mxu0 0.0
      %8188 = vmatprep.subr.mxu0 0.0
      %8189 = vmatpush1.msra.mxu0 0.0
      %8190 = vmatprep.subr.mxu0 0.0
      %8191 = vmatpush1.msra.mxu0 0.0
      %8192 = vmatprep.subr.mxu0 0.0
      %8193 = vmatpush1.msra.mxu0 0.0
      %8194 = vmatprep.mubr.f32.mxu0 0.0
      %8195 = vmatmul.mubr.f32.gmra.mrb[0].mxu0 %v8128
      %v8196 = vpop.f32.mrb[0].mxu0
      %v8197 = vadd.f32 0.0, %v8196
      %v8198 = vpop.f32.mrb[0].mxu0
      %8199 = vdwg.mxu0
      %v8201 = vsel %vm7250, %v7199, 0
      %8203 = vmatprep.subr.mxu0 0.0
      %8204 = vmatpush1.msra.mxu0 %v295
      %8205 = vmatprep.subr.mxu0 0.0
      %8206 = vmatpush1.msra.mxu0 %v296
      %8207 = vmatprep.subr.mxu0 0.0
      %8208 = vmatpush1.msra.mxu0 0.0
      %8209 = vmatprep.subr.mxu0 0.0
      %8210 = vmatpush1.msra.mxu0 0.0
      %8211 = vmatprep.subr.mxu0 0.0
      %8212 = vmatpush1.msra.mxu0 0.0
      %8213 = vmatprep.subr.mxu0 0.0
      %8214 = vmatpush1.msra.mxu0 0.0
      %8215 = vmatprep.subr.mxu0 0.0
      %8216 = vmatpush1.msra.mxu0 0.0
      %8217 = vmatprep.subr.mxu0 0.0
      %8218 = vmatpush1.msra.mxu0 0.0
      %8219 = vmatprep.subr.mxu0 0.0
      %8220 = vmatpush1.msra.mxu0 0.0
      %8221 = vmatprep.subr.mxu0 0.0
      %8222 = vmatpush1.msra.mxu0 0.0
      %8223 = vmatprep.subr.mxu0 0.0
      %8224 = vmatpush1.msra.mxu0 0.0
      %8225 = vmatprep.subr.mxu0 0.0
      %8226 = vmatpush1.msra.mxu0 0.0
      %8227 = vmatprep.subr.mxu0 0.0
      %8228 = vmatpush1.msra.mxu0 0.0
      %8229 = vmatprep.subr.mxu0 0.0
      %8230 = vmatpush1.msra.mxu0 0.0
      %8231 = vmatprep.subr.mxu0 0.0
      %8232 = vmatpush1.msra.mxu0 0.0
      %8233 = vmatprep.subr.mxu0 0.0
      %8234 = vmatpush1.msra.mxu0 0.0
      %8235 = vmatprep.subr.mxu0 0.0
      %8236 = vmatpush1.msra.mxu0 0.0
      %8237 = vmatprep.subr.mxu0 0.0
      %8238 = vmatpush1.msra.mxu0 0.0
      %8239 = vmatprep.subr.mxu0 0.0
      %8240 = vmatpush1.msra.mxu0 0.0
      %8241 = vmatprep.subr.mxu0 0.0
      %8242 = vmatpush1.msra.mxu0 0.0
      %8243 = vmatprep.subr.mxu0 0.0
      %8244 = vmatpush1.msra.mxu0 0.0
      %8245 = vmatprep.subr.mxu0 0.0
      %8246 = vmatpush1.msra.mxu0 0.0
      %8247 = vmatprep.subr.mxu0 0.0
      %8248 = vmatpush1.msra.mxu0 0.0
      %8249 = vmatprep.subr.mxu0 0.0
      %8250 = vmatpush1.msra.mxu0 0.0
      %8251 = vmatprep.subr.mxu0 0.0
      %8252 = vmatpush1.msra.mxu0 0.0
      %8253 = vmatprep.subr.mxu0 0.0
      %8254 = vmatpush1.msra.mxu0 0.0
      %8255 = vmatprep.subr.mxu0 0.0
      %8256 = vmatpush1.msra.mxu0 0.0
      %8257 = vmatprep.subr.mxu0 0.0
      %8258 = vmatpush1.msra.mxu0 0.0
      %8259 = vmatprep.subr.mxu0 0.0
      %8260 = vmatpush1.msra.mxu0 0.0
      %8261 = vmatprep.subr.mxu0 0.0
      %8262 = vmatpush1.msra.mxu0 0.0
      %8263 = vmatprep.subr.mxu0 0.0
      %8264 = vmatpush1.msra.mxu0 0.0
      %8265 = vmatprep.subr.mxu0 0.0
      %8266 = vmatpush1.msra.mxu0 0.0
      %8267 = vmatprep.mubr.f32.mxu0 0.0
      %8268 = vmatmul.mubr.f32.gmra.mrb[0].mxu0 %v8201
      %v8269 = vpop.f32.mrb[0].mxu0
      %v8270 = vadd.f32 0.0, %v8269
      %v8271 = vpop.f32.mrb[0].mxu0
      %8272 = vdwg.mxu0
      %v8274 = vsel %vm7250, %v7200, 0
      %8276 = vmatprep.subr.mxu0 0.0
      %8277 = vmatpush1.msra.mxu0 %v297
      %8278 = vmatprep.subr.mxu0 0.0
      %8279 = vmatpush1.msra.mxu0 %v298
      %8280 = vmatprep.subr.mxu0 0.0
      %8281 = vmatpush1.msra.mxu0 0.0
      %8282 = vmatprep.subr.mxu0 0.0
      %8283 = vmatpush1.msra.mxu0 0.0
      %8284 = vmatprep.subr.mxu0 0.0
      %8285 = vmatpush1.msra.mxu0 0.0
      %8286 = vmatprep.subr.mxu0 0.0
      %8287 = vmatpush1.msra.mxu0 0.0
      %8288 = vmatprep.subr.mxu0 0.0
      %8289 = vmatpush1.msra.mxu0 0.0
      %8290 = vmatprep.subr.mxu0 0.0
      %8291 = vmatpush1.msra.mxu0 0.0
      %8292 = vmatprep.subr.mxu0 0.0
      %8293 = vmatpush1.msra.mxu0 0.0
      %8294 = vmatprep.subr.mxu0 0.0
      %8295 = vmatpush1.msra.mxu0 0.0
      %8296 = vmatprep.subr.mxu0 0.0
      %8297 = vmatpush1.msra.mxu0 0.0
      %8298 = vmatprep.subr.mxu0 0.0
      %8299 = vmatpush1.msra.mxu0 0.0
      %8300 = vmatprep.subr.mxu0 0.0
      %8301 = vmatpush1.msra.mxu0 0.0
      %8302 = vmatprep.subr.mxu0 0.0
      %8303 = vmatpush1.msra.mxu0 0.0
      %8304 = vmatprep.subr.mxu0 0.0
      %8305 = vmatpush1.msra.mxu0 0.0
      %8306 = vmatprep.subr.mxu0 0.0
      %8307 = vmatpush1.msra.mxu0 0.0
      %8308 = vmatprep.subr.mxu0 0.0
      %8309 = vmatpush1.msra.mxu0 0.0
      %8310 = vmatprep.subr.mxu0 0.0
      %8311 = vmatpush1.msra.mxu0 0.0
      %8312 = vmatprep.subr.mxu0 0.0
      %8313 = vmatpush1.msra.mxu0 0.0
      %8314 = vmatprep.subr.mxu0 0.0
      %8315 = vmatpush1.msra.mxu0 0.0
      %8316 = vmatprep.subr.mxu0 0.0
      %8317 = vmatpush1.msra.mxu0 0.0
      %8318 = vmatprep.subr.mxu0 0.0
      %8319 = vmatpush1.msra.mxu0 0.0
      %8320 = vmatprep.subr.mxu0 0.0
      %8321 = vmatpush1.msra.mxu0 0.0
      %8322 = vmatprep.subr.mxu0 0.0
      %8323 = vmatpush1.msra.mxu0 0.0
      %8324 = vmatprep.subr.mxu0 0.0
      %8325 = vmatpush1.msra.mxu0 0.0
      %8326 = vmatprep.subr.mxu0 0.0
      %8327 = vmatpush1.msra.mxu0 0.0
      %8328 = vmatprep.subr.mxu0 0.0
      %8329 = vmatpush1.msra.mxu0 0.0
      %8330 = vmatprep.subr.mxu0 0.0
      %8331 = vmatpush1.msra.mxu0 0.0
      %8332 = vmatprep.subr.mxu0 0.0
      %8333 = vmatpush1.msra.mxu0 0.0
      %8334 = vmatprep.subr.mxu0 0.0
      %8335 = vmatpush1.msra.mxu0 0.0
      %8336 = vmatprep.subr.mxu0 0.0
      %8337 = vmatpush1.msra.mxu0 0.0
      %8338 = vmatprep.subr.mxu0 0.0
      %8339 = vmatpush1.msra.mxu0 0.0
      %8340 = vmatprep.mubr.f32.mxu0 0.0
      %8341 = vmatmul.mubr.f32.gmra.mrb[0].mxu0 %v8274
      %v8342 = vpop.f32.mrb[0].mxu0
      %v8343 = vadd.f32 0.0, %v8342
      %v8344 = vpop.f32.mrb[0].mxu0
      %8345 = vdwg.mxu0
      %v8347 = vsel %vm7250, %v7201, 0
      %8349 = vmatprep.subr.mxu0 0.0
      %8350 = vmatpush1.msra.mxu0 %v299
      %8351 = vmatprep.subr.mxu0 0.0
      %8352 = vmatpush1.msra.mxu0 %v300
      %8353 = vmatprep.subr.mxu0 0.0
      %8354 = vmatpush1.msra.mxu0 0.0
      %8355 = vmatprep.subr.mxu0 0.0
      %8356 = vmatpush1.msra.mxu0 0.0
      %8357 = vmatprep.subr.mxu0 0.0
      %8358 = vmatpush1.msra.mxu0 0.0
      %8359 = vmatprep.subr.mxu0 0.0
      %8360 = vmatpush1.msra.mxu0 0.0
      %8361 = vmatprep.subr.mxu0 0.0
      %8362 = vmatpush1.msra.mxu0 0.0
      %8363 = vmatprep.subr.mxu0 0.0
      %8364 = vmatpush1.msra.mxu0 0.0
      %8365 = vmatprep.subr.mxu0 0.0
      %8366 = vmatpush1.msra.mxu0 0.0
      %8367 = vmatprep.subr.mxu0 0.0
      %8368 = vmatpush1.msra.mxu0 0.0
      %8369 = vmatprep.subr.mxu0 0.0
      %8370 = vmatpush1.msra.mxu0 0.0
      %8371 = vmatprep.subr.mxu0 0.0
      %8372 = vmatpush1.msra.mxu0 0.0
      %8373 = vmatprep.subr.mxu0 0.0
      %8374 = vmatpush1.msra.mxu0 0.0
      %8375 = vmatprep.subr.mxu0 0.0
      %8376 = vmatpush1.msra.mxu0 0.0
      %8377 = vmatprep.subr.mxu0 0.0
      %8378 = vmatpush1.msra.mxu0 0.0
      %8379 = vmatprep.subr.mxu0 0.0
      %8380 = vmatpush1.msra.mxu0 0.0
      %8381 = vmatprep.subr.mxu0 0.0
      %8382 = vmatpush1.msra.mxu0 0.0
      %8383 = vmatprep.subr.mxu0 0.0
      %8384 = vmatpush1.msra.mxu0 0.0
      %8385 = vmatprep.subr.mxu0 0.0
      %8386 = vmatpush1.msra.mxu0 0.0
      %8387 = vmatprep.subr.mxu0 0.0
      %8388 = vmatpush1.msra.mxu0 0.0
      %8389 = vmatprep.subr.mxu0 0.0
      %8390 = vmatpush1.msra.mxu0 0.0
      %8391 = vmatprep.subr.mxu0 0.0
      %8392 = vmatpush1.msra.mxu0 0.0
      %8393 = vmatprep.subr.mxu0 0.0
      %8394 = vmatpush1.msra.mxu0 0.0
      %8395 = vmatprep.subr.mxu0 0.0
      %8396 = vmatpush1.msra.mxu0 0.0
      %8397 = vmatprep.subr.mxu0 0.0
      %8398 = vmatpush1.msra.mxu0 0.0
      %8399 = vmatprep.subr.mxu0 0.0
      %8400 = vmatpush1.msra.mxu0 0.0
      %8401 = vmatprep.subr.mxu0 0.0
      %8402 = vmatpush1.msra.mxu0 0.0
      %8403 = vmatprep.subr.mxu0 0.0
      %8404 = vmatpush1.msra.mxu0 0.0
      %8405 = vmatprep.subr.mxu0 0.0
      %8406 = vmatpush1.msra.mxu0 0.0
      %8407 = vmatprep.subr.mxu0 0.0
      %8408 = vmatpush1.msra.mxu0 0.0
      %8409 = vmatprep.subr.mxu0 0.0
      %8410 = vmatpush1.msra.mxu0 0.0
      %8411 = vmatprep.subr.mxu0 0.0
      %8412 = vmatpush1.msra.mxu0 0.0
      %8413 = vmatprep.mubr.f32.mxu0 0.0
      %8414 = vmatmul.mubr.f32.gmra.mrb[0].mxu0 %v8347
      %v8415 = vpop.f32.mrb[0].mxu0
      %v8416 = vadd.f32 0.0, %v8415
      %v8417 = vpop.f32.mrb[0].mxu0
      %8418 = vdwg.mxu0
      %v8420 = vsel %vm7250, %v7202, 0
      %8422 = vmatprep.subr.mxu0 0.0
      %8423 = vmatpush1.msra.mxu0 %v301
      %8424 = vmatprep.subr.mxu0 0.0
      %8425 = vmatpush1.msra.mxu0 %v302
      %8426 = vmatprep.subr.mxu0 0.0
      %8427 = vmatpush1.msra.mxu0 0.0
      %8428 = vmatprep.subr.mxu0 0.0
      %8429 = vmatpush1.msra.mxu0 0.0
      %8430 = vmatprep.subr.mxu0 0.0
      %8431 = vmatpush1.msra.mxu0 0.0
      %8432 = vmatprep.subr.mxu0 0.0
      %8433 = vmatpush1.msra.mxu0 0.0
      %8434 = vmatprep.subr.mxu0 0.0
      %8435 = vmatpush1.msra.mxu0 0.0
      %8436 = vmatprep.subr.mxu0 0.0
      %8437 = vmatpush1.msra.mxu0 0.0
      %8438 = vmatprep.subr.mxu0 0.0
      %8439 = vmatpush1.msra.mxu0 0.0
      %8440 = vmatprep.subr.mxu0 0.0
      %8441 = vmatpush1.msra.mxu0 0.0
      %8442 = vmatprep.subr.mxu0 0.0
      %8443 = vmatpush1.msra.mxu0 0.0
      %8444 = vmatprep.subr.mxu0 0.0
      %8445 = vmatpush1.msra.mxu0 0.0
      %8446 = vmatprep.subr.mxu0 0.0
      %8447 = vmatpush1.msra.mxu0 0.0
      %8448 = vmatprep.subr.mxu0 0.0
      %8449 = vmatpush1.msra.mxu0 0.0
      %8450 = vmatprep.subr.mxu0 0.0
      %8451 = vmatpush1.msra.mxu0 0.0
      %8452 = vmatprep.subr.mxu0 0.0
      %8453 = vmatpush1.msra.mxu0 0.0
      %8454 = vmatprep.subr.mxu0 0.0
      %8455 = vmatpush1.msra.mxu0 0.0
      %8456 = vmatprep.subr.mxu0 0.0
      %8457 = vmatpush1.msra.mxu0 0.0
      %8458 = vmatprep.subr.mxu0 0.0
      %8459 = vmatpush1.msra.mxu0 0.0
      %8460 = vmatprep.subr.mxu0 0.0
      %8461 = vmatpush1.msra.mxu0 0.0
      %8462 = vmatprep.subr.mxu0 0.0
      %8463 = vmatpush1.msra.mxu0 0.0
      %8464 = vmatprep.subr.mxu0 0.0
      %8465 = vmatpush1.msra.mxu0 0.0
      %8466 = vmatprep.subr.mxu0 0.0
      %8467 = vmatpush1.msra.mxu0 0.0
      %8468 = vmatprep.subr.mxu0 0.0
      %8469 = vmatpush1.msra.mxu0 0.0
      %8470 = vmatprep.subr.mxu0 0.0
      %8471 = vmatpush1.msra.mxu0 0.0
      %8472 = vmatprep.subr.mxu0 0.0
      %8473 = vmatpush1.msra.mxu0 0.0
      %8474 = vmatprep.subr.mxu0 0.0
      %8475 = vmatpush1.msra.mxu0 0.0
      %8476 = vmatprep.subr.mxu0 0.0
      %8477 = vmatpush1.msra.mxu0 0.0
      %8478 = vmatprep.subr.mxu0 0.0
      %8479 = vmatpush1.msra.mxu0 0.0
      %8480 = vmatprep.subr.mxu0 0.0
      %8481 = vmatpush1.msra.mxu0 0.0
      %8482 = vmatprep.subr.mxu0 0.0
      %8483 = vmatpush1.msra.mxu0 0.0
      %8484 = vmatprep.subr.mxu0 0.0
      %8485 = vmatpush1.msra.mxu0 0.0
      %8486 = vmatprep.mubr.f32.mxu0 0.0
      %8487 = vmatmul.mubr.f32.gmra.mrb[0].mxu0 %v8420
      %v8488 = vpop.f32.mrb[0].mxu0
      %v8489 = vadd.f32 0.0, %v8488
      %v8490 = vpop.f32.mrb[0].mxu0
      %8491 = vdwg.mxu0
      %v8493 = vsel %vm7250, %v7203, 0
      %8495 = vmatprep.subr.mxu0 0.0
      %8496 = vmatpush1.msra.mxu0 %v303
      %8497 = vmatprep.subr.mxu0 0.0
      %8498 = vmatpush1.msra.mxu0 %v304
      %8499 = vmatprep.subr.mxu0 0.0
      %8500 = vmatpush1.msra.mxu0 0.0
      %8501 = vmatprep.subr.mxu0 0.0
      %8502 = vmatpush1.msra.mxu0 0.0
      %8503 = vmatprep.subr.mxu0 0.0
      %8504 = vmatpush1.msra.mxu0 0.0
      %8505 = vmatprep.subr.mxu0 0.0
      %8506 = vmatpush1.msra.mxu0 0.0
      %8507 = vmatprep.subr.mxu0 0.0
      %8508 = vmatpush1.msra.mxu0 0.0
      %8509 = vmatprep.subr.mxu0 0.0
      %8510 = vmatpush1.msra.mxu0 0.0
      %8511 = vmatprep.subr.mxu0 0.0
      %8512 = vmatpush1.msra.mxu0 0.0
      %8513 = vmatprep.subr.mxu0 0.0
      %8514 = vmatpush1.msra.mxu0 0.0
      %8515 = vmatprep.subr.mxu0 0.0
      %8516 = vmatpush1.msra.mxu0 0.0
      %8517 = vmatprep.subr.mxu0 0.0
      %8518 = vmatpush1.msra.mxu0 0.0
      %8519 = vmatprep.subr.mxu0 0.0
      %8520 = vmatpush1.msra.mxu0 0.0
      %8521 = vmatprep.subr.mxu0 0.0
      %8522 = vmatpush1.msra.mxu0 0.0
      %8523 = vmatprep.subr.mxu0 0.0
      %8524 = vmatpush1.msra.mxu0 0.0
      %8525 = vmatprep.subr.mxu0 0.0
      %8526 = vmatpush1.msra.mxu0 0.0
      %8527 = vmatprep.subr.mxu0 0.0
      %8528 = vmatpush1.msra.mxu0 0.0
      %8529 = vmatprep.subr.mxu0 0.0
      %8530 = vmatpush1.msra.mxu0 0.0
      %8531 = vmatprep.subr.mxu0 0.0
      %8532 = vmatpush1.msra.mxu0 0.0
      %8533 = vmatprep.subr.mxu0 0.0
      %8534 = vmatpush1.msra.mxu0 0.0
      %8535 = vmatprep.subr.mxu0 0.0
      %8536 = vmatpush1.msra.mxu0 0.0
      %8537 = vmatprep.subr.mxu0 0.0
      %8538 = vmatpush1.msra.mxu0 0.0
      %8539 = vmatprep.subr.mxu0 0.0
      %8540 = vmatpush1.msra.mxu0 0.0
      %8541 = vmatprep.subr.mxu0 0.0
      %8542 = vmatpush1.msra.mxu0 0.0
      %8543 = vmatprep.subr.mxu0 0.0
      %8544 = vmatpush1.msra.mxu0 0.0
      %8545 = vmatprep.subr.mxu0 0.0
      %8546 = vmatpush1.msra.mxu0 0.0
      %8547 = vmatprep.subr.mxu0 0.0
      %8548 = vmatpush1.msra.mxu0 0.0
      %8549 = vmatprep.subr.mxu0 0.0
      %8550 = vmatpush1.msra.mxu0 0.0
      %8551 = vmatprep.subr.mxu0 0.0
      %8552 = vmatpush1.msra.mxu0 0.0
      %8553 = vmatprep.subr.mxu0 0.0
      %8554 = vmatpush1.msra.mxu0 0.0
      %8555 = vmatprep.subr.mxu0 0.0
      %8556 = vmatpush1.msra.mxu0 0.0
      %8557 = vmatprep.subr.mxu0 0.0
      %8558 = vmatpush1.msra.mxu0 0.0
      %8559 = vmatprep.mubr.f32.mxu0 0.0
      %8560 = vmatmul.mubr.f32.gmra.mrb[0].mxu0 %v8493
      %v8561 = vpop.f32.mrb[0].mxu0
      %v8562 = vadd.f32 0.0, %v8561
      %v8563 = vpop.f32.mrb[0].mxu0
      %8564 = vdwg.mxu0
      %v8566 = vsel %vm7250, %v7204, 0
      %8568 = vmatprep.subr.mxu0 0.0
      %8569 = vmatpush1.msra.mxu0 %v305
      %8570 = vmatprep.subr.mxu0 0.0
      %8571 = vmatpush1.msra.mxu0 %v306
      %8572 = vmatprep.subr.mxu0 0.0
      %8573 = vmatpush1.msra.mxu0 0.0
      %8574 = vmatprep.subr.mxu0 0.0
      %8575 = vmatpush1.msra.mxu0 0.0
      %8576 = vmatprep.subr.mxu0 0.0
      %8577 = vmatpush1.msra.mxu0 0.0
      %8578 = vmatprep.subr.mxu0 0.0
      %8579 = vmatpush1.msra.mxu0 0.0
      %8580 = vmatprep.subr.mxu0 0.0
      %8581 = vmatpush1.msra.mxu0 0.0
      %8582 = vmatprep.subr.mxu0 0.0
      %8583 = vmatpush1.msra.mxu0 0.0
      %8584 = vmatprep.subr.mxu0 0.0
      %8585 = vmatpush1.msra.mxu0 0.0
      %8586 = vmatprep.subr.mxu0 0.0
      %8587 = vmatpush1.msra.mxu0 0.0
      %8588 = vmatprep.subr.mxu0 0.0
      %8589 = vmatpush1.msra.mxu0 0.0
      %8590 = vmatprep.subr.mxu0 0.0
      %8591 = vmatpush1.msra.mxu0 0.0
      %8592 = vmatprep.subr.mxu0 0.0
      %8593 = vmatpush1.msra.mxu0 0.0
      %8594 = vmatprep.subr.mxu0 0.0
      %8595 = vmatpush1.msra.mxu0 0.0
      %8596 = vmatprep.subr.mxu0 0.0
      %8597 = vmatpush1.msra.mxu0 0.0
      %8598 = vmatprep.subr.mxu0 0.0
      %8599 = vmatpush1.msra.mxu0 0.0
      %8600 = vmatprep.subr.mxu0 0.0
      %8601 = vmatpush1.msra.mxu0 0.0
      %8602 = vmatprep.subr.mxu0 0.0
      %8603 = vmatpush1.msra.mxu0 0.0
      %8604 = vmatprep.subr.mxu0 0.0
      %8605 = vmatpush1.msra.mxu0 0.0
      %8606 = vmatprep.subr.mxu0 0.0
      %8607 = vmatpush1.msra.mxu0 0.0
      %8608 = vmatprep.subr.mxu0 0.0
      %8609 = vmatpush1.msra.mxu0 0.0
      %8610 = vmatprep.subr.mxu0 0.0
      %8611 = vmatpush1.msra.mxu0 0.0
      %8612 = vmatprep.subr.mxu0 0.0
      %8613 = vmatpush1.msra.mxu0 0.0
      %8614 = vmatprep.subr.mxu0 0.0
      %8615 = vmatpush1.msra.mxu0 0.0
      %8616 = vmatprep.subr.mxu0 0.0
      %8617 = vmatpush1.msra.mxu0 0.0
      %8618 = vmatprep.subr.mxu0 0.0
      %8619 = vmatpush1.msra.mxu0 0.0
      %8620 = vmatprep.subr.mxu0 0.0
      %8621 = vmatpush1.msra.mxu0 0.0
      %8622 = vmatprep.subr.mxu0 0.0
      %8623 = vmatpush1.msra.mxu0 0.0
      %8624 = vmatprep.subr.mxu0 0.0
      %8625 = vmatpush1.msra.mxu0 0.0
      %8626 = vmatprep.subr.mxu0 0.0
      %8627 = vmatpush1.msra.mxu0 0.0
      %8628 = vmatprep.subr.mxu0 0.0
      %8629 = vmatpush1.msra.mxu0 0.0
      %8630 = vmatprep.subr.mxu0 0.0
      %8631 = vmatpush1.msra.mxu0 0.0
      %8632 = vmatprep.mubr.f32.mxu0 0.0
      %8633 = vmatmul.mubr.f32.gmra.mrb[0].mxu0 %v8566
      %v8634 = vpop.f32.mrb[0].mxu0
      %v8635 = vadd.f32 0.0, %v8634
      %v8636 = vpop.f32.mrb[0].mxu0
      %8637 = vdwg.mxu0
      %v8639 = vsel %vm7250, %v7205, 0
      %8641 = vmatprep.subr.mxu0 0.0
      %8642 = vmatpush1.msra.mxu0 %v307
      %8643 = vmatprep.subr.mxu0 0.0
      %8644 = vmatpush1.msra.mxu0 %v308
      %8645 = vmatprep.subr.mxu0 0.0
      %8646 = vmatpush1.msra.mxu0 0.0
      %8647 = vmatprep.subr.mxu0 0.0
      %8648 = vmatpush1.msra.mxu0 0.0
      %8649 = vmatprep.subr.mxu0 0.0
      %8650 = vmatpush1.msra.mxu0 0.0
      %8651 = vmatprep.subr.mxu0 0.0
      %8652 = vmatpush1.msra.mxu0 0.0
      %8653 = vmatprep.subr.mxu0 0.0
      %8654 = vmatpush1.msra.mxu0 0.0
      %8655 = vmatprep.subr.mxu0 0.0
      %8656 = vmatpush1.msra.mxu0 0.0
      %8657 = vmatprep.subr.mxu0 0.0
      %8658 = vmatpush1.msra.mxu0 0.0
      %8659 = vmatprep.subr.mxu0 0.0
      %8660 = vmatpush1.msra.mxu0 0.0
      %8661 = vmatprep.subr.mxu0 0.0
      %8662 = vmatpush1.msra.mxu0 0.0
      %8663 = vmatprep.subr.mxu0 0.0
      %8664 = vmatpush1.msra.mxu0 0.0
      %8665 = vmatprep.subr.mxu0 0.0
      %8666 = vmatpush1.msra.mxu0 0.0
      %8667 = vmatprep.subr.mxu0 0.0
      %8668 = vmatpush1.msra.mxu0 0.0
      %8669 = vmatprep.subr.mxu0 0.0
      %8670 = vmatpush1.msra.mxu0 0.0
      %8671 = vmatprep.subr.mxu0 0.0
      %8672 = vmatpush1.msra.mxu0 0.0
      %8673 = vmatprep.subr.mxu0 0.0
      %8674 = vmatpush1.msra.mxu0 0.0
      %8675 = vmatprep.subr.mxu0 0.0
      %8676 = vmatpush1.msra.mxu0 0.0
      %8677 = vmatprep.subr.mxu0 0.0
      %8678 = vmatpush1.msra.mxu0 0.0
      %8679 = vmatprep.subr.mxu0 0.0
      %8680 = vmatpush1.msra.mxu0 0.0
      %8681 = vmatprep.subr.mxu0 0.0
      %8682 = vmatpush1.msra.mxu0 0.0
      %8683 = vmatprep.subr.mxu0 0.0
      %8684 = vmatpush1.msra.mxu0 0.0
      %8685 = vmatprep.subr.mxu0 0.0
      %8686 = vmatpush1.msra.mxu0 0.0
      %8687 = vmatprep.subr.mxu0 0.0
      %8688 = vmatpush1.msra.mxu0 0.0
      %8689 = vmatprep.subr.mxu0 0.0
      %8690 = vmatpush1.msra.mxu0 0.0
      %8691 = vmatprep.subr.mxu0 0.0
      %8692 = vmatpush1.msra.mxu0 0.0
      %8693 = vmatprep.subr.mxu0 0.0
      %8694 = vmatpush1.msra.mxu0 0.0
      %8695 = vmatprep.subr.mxu0 0.0
      %8696 = vmatpush1.msra.mxu0 0.0
      %8697 = vmatprep.subr.mxu0 0.0
      %8698 = vmatpush1.msra.mxu0 0.0
      %8699 = vmatprep.subr.mxu0 0.0
      %8700 = vmatpush1.msra.mxu0 0.0
      %8701 = vmatprep.subr.mxu0 0.0
      %8702 = vmatpush1.msra.mxu0 0.0
      %8703 = vmatprep.subr.mxu0 0.0
      %8704 = vmatpush1.msra.mxu0 0.0
      %8705 = vmatprep.mubr.f32.mxu0 0.0
      %8706 = vmatmul.mubr.f32.gmra.mrb[0].mxu0 %v8639
      %v8707 = vpop.f32.mrb[0].mxu0
      %v8708 = vadd.f32 0.0, %v8707
      %v8709 = vpop.f32.mrb[0].mxu0
      %8710 = vdwg.mxu0
      %v8712 = vsel %vm7250, %v7206, 0
      %8714 = vmatprep.subr.mxu0 0.0
      %8715 = vmatpush1.msra.mxu0 %v309
      %8716 = vmatprep.subr.mxu0 0.0
      %8717 = vmatpush1.msra.mxu0 %v310
      %8718 = vmatprep.subr.mxu0 0.0
      %8719 = vmatpush1.msra.mxu0 0.0
      %8720 = vmatprep.subr.mxu0 0.0
      %8721 = vmatpush1.msra.mxu0 0.0
      %8722 = vmatprep.subr.mxu0 0.0
      %8723 = vmatpush1.msra.mxu0 0.0
      %8724 = vmatprep.subr.mxu0 0.0
      %8725 = vmatpush1.msra.mxu0 0.0
      %8726 = vmatprep.subr.mxu0 0.0
      %8727 = vmatpush1.msra.mxu0 0.0
      %8728 = vmatprep.subr.mxu0 0.0
      %8729 = vmatpush1.msra.mxu0 0.0
      %8730 = vmatprep.subr.mxu0 0.0
      %8731 = vmatpush1.msra.mxu0 0.0
      %8732 = vmatprep.subr.mxu0 0.0
      %8733 = vmatpush1.msra.mxu0 0.0
      %8734 = vmatprep.subr.mxu0 0.0
      %8735 = vmatpush1.msra.mxu0 0.0
      %8736 = vmatprep.subr.mxu0 0.0
      %8737 = vmatpush1.msra.mxu0 0.0
      %8738 = vmatprep.subr.mxu0 0.0
      %8739 = vmatpush1.msra.mxu0 0.0
      %8740 = vmatprep.subr.mxu0 0.0
      %8741 = vmatpush1.msra.mxu0 0.0
      %8742 = vmatprep.subr.mxu0 0.0
      %8743 = vmatpush1.msra.mxu0 0.0
      %8744 = vmatprep.subr.mxu0 0.0
      %8745 = vmatpush1.msra.mxu0 0.0
      %8746 = vmatprep.subr.mxu0 0.0
      %8747 = vmatpush1.msra.mxu0 0.0
      %8748 = vmatprep.subr.mxu0 0.0
      %8749 = vmatpush1.msra.mxu0 0.0
      %8750 = vmatprep.subr.mxu0 0.0
      %8751 = vmatpush1.msra.mxu0 0.0
      %8752 = vmatprep.subr.mxu0 0.0
      %8753 = vmatpush1.msra.mxu0 0.0
      %8754 = vmatprep.subr.mxu0 0.0
      %8755 = vmatpush1.msra.mxu0 0.0
      %8756 = vmatprep.subr.mxu0 0.0
      %8757 = vmatpush1.msra.mxu0 0.0
      %8758 = vmatprep.subr.mxu0 0.0
      %8759 = vmatpush1.msra.mxu0 0.0
      %8760 = vmatprep.subr.mxu0 0.0
      %8761 = vmatpush1.msra.mxu0 0.0
      %8762 = vmatprep.subr.mxu0 0.0
      %8763 = vmatpush1.msra.mxu0 0.0
      %8764 = vmatprep.subr.mxu0 0.0
      %8765 = vmatpush1.msra.mxu0 0.0
      %8766 = vmatprep.subr.mxu0 0.0
      %8767 = vmatpush1.msra.mxu0 0.0
      %8768 = vmatprep.subr.mxu0 0.0
      %8769 = vmatpush1.msra.mxu0 0.0
      %8770 = vmatprep.subr.mxu0 0.0
      %8771 = vmatpush1.msra.mxu0 0.0
      %8772 = vmatprep.subr.mxu0 0.0
      %8773 = vmatpush1.msra.mxu0 0.0
      %8774 = vmatprep.subr.mxu0 0.0
      %8775 = vmatpush1.msra.mxu0 0.0
      %8776 = vmatprep.subr.mxu0 0.0
      %8777 = vmatpush1.msra.mxu0 0.0
      %8778 = vmatprep.mubr.f32.mxu0 0.0
      %8779 = vmatmul.mubr.f32.gmra.mrb[0].mxu0 %v8712
      %v8780 = vpop.f32.mrb[0].mxu0
      %v8781 = vadd.f32 0.0, %v8780
      %v8782 = vpop.f32.mrb[0].mxu0
      %8783 = vdwg.mxu0
      %v8785 = vsel %vm7250, %v7207, 0
      %8787 = vmatprep.subr.mxu0 0.0
      %8788 = vmatpush1.msra.mxu0 %v311
      %8789 = vmatprep.subr.mxu0 0.0
      %8790 = vmatpush1.msra.mxu0 %v312
      %8791 = vmatprep.subr.mxu0 0.0
      %8792 = vmatpush1.msra.mxu0 0.0
      %8793 = vmatprep.subr.mxu0 0.0
      %8794 = vmatpush1.msra.mxu0 0.0
      %8795 = vmatprep.subr.mxu0 0.0
      %8796 = vmatpush1.msra.mxu0 0.0
      %8797 = vmatprep.subr.mxu0 0.0
      %8798 = vmatpush1.msra.mxu0 0.0
      %8799 = vmatprep.subr.mxu0 0.0
      %8800 = vmatpush1.msra.mxu0 0.0
      %8801 = vmatprep.subr.mxu0 0.0
      %8802 = vmatpush1.msra.mxu0 0.0
      %8803 = vmatprep.subr.mxu0 0.0
      %8804 = vmatpush1.msra.mxu0 0.0
      %8805 = vmatprep.subr.mxu0 0.0
      %8806 = vmatpush1.msra.mxu0 0.0
      %8807 = vmatprep.subr.mxu0 0.0
      %8808 = vmatpush1.msra.mxu0 0.0
      %8809 = vmatprep.subr.mxu0 0.0
      %8810 = vmatpush1.msra.mxu0 0.0
      %8811 = vmatprep.subr.mxu0 0.0
      %8812 = vmatpush1.msra.mxu0 0.0
      %8813 = vmatprep.subr.mxu0 0.0
      %8814 = vmatpush1.msra.mxu0 0.0
      %8815 = vmatprep.subr.mxu0 0.0
      %8816 = vmatpush1.msra.mxu0 0.0
      %8817 = vmatprep.subr.mxu0 0.0
      %8818 = vmatpush1.msra.mxu0 0.0
      %8819 = vmatprep.subr.mxu0 0.0
      %8820 = vmatpush1.msra.mxu0 0.0
      %8821 = vmatprep.subr.mxu0 0.0
      %8822 = vmatpush1.msra.mxu0 0.0
      %8823 = vmatprep.subr.mxu0 0.0
      %8824 = vmatpush1.msra.mxu0 0.0
      %8825 = vmatprep.subr.mxu0 0.0
      %8826 = vmatpush1.msra.mxu0 0.0
      %8827 = vmatprep.subr.mxu0 0.0
      %8828 = vmatpush1.msra.mxu0 0.0
      %8829 = vmatprep.subr.mxu0 0.0
      %8830 = vmatpush1.msra.mxu0 0.0
      %8831 = vmatprep.subr.mxu0 0.0
      %8832 = vmatpush1.msra.mxu0 0.0
      %8833 = vmatprep.subr.mxu0 0.0
      %8834 = vmatpush1.msra.mxu0 0.0
      %8835 = vmatprep.subr.mxu0 0.0
      %8836 = vmatpush1.msra.mxu0 0.0
      %8837 = vmatprep.subr.mxu0 0.0
      %8838 = vmatpush1.msra.mxu0 0.0
      %8839 = vmatprep.subr.mxu0 0.0
      %8840 = vmatpush1.msra.mxu0 0.0
      %8841 = vmatprep.subr.mxu0 0.0
      %8842 = vmatpush1.msra.mxu0 0.0
      %8843 = vmatprep.subr.mxu0 0.0
      %8844 = vmatpush1.msra.mxu0 0.0
      %8845 = vmatprep.subr.mxu0 0.0
      %8846 = vmatpush1.msra.mxu0 0.0
      %8847 = vmatprep.subr.mxu0 0.0
      %8848 = vmatpush1.msra.mxu0 0.0
      %8849 = vmatprep.subr.mxu0 0.0
      %8850 = vmatpush1.msra.mxu0 0.0
      %8851 = vmatprep.mubr.f32.mxu0 0.0
      %8852 = vmatmul.mubr.f32.gmra.mrb[0].mxu0 %v8785
      %v8853 = vpop.f32.mrb[0].mxu0
      %v8854 = vadd.f32 0.0, %v8853
      %v8855 = vpop.f32.mrb[0].mxu0
      %8856 = vdwg.mxu0
      %v8858 = vsel %vm7250, %v7208, 0
      %8860 = vmatprep.subr.mxu0 0.0
      %8861 = vmatpush1.msra.mxu0 %v313
      %8862 = vmatprep.subr.mxu0 0.0
      %8863 = vmatpush1.msra.mxu0 %v314
      %8864 = vmatprep.subr.mxu0 0.0
      %8865 = vmatpush1.msra.mxu0 0.0
      %8866 = vmatprep.subr.mxu0 0.0
      %8867 = vmatpush1.msra.mxu0 0.0
      %8868 = vmatprep.subr.mxu0 0.0
      %8869 = vmatpush1.msra.mxu0 0.0
      %8870 = vmatprep.subr.mxu0 0.0
      %8871 = vmatpush1.msra.mxu0 0.0
      %8872 = vmatprep.subr.mxu0 0.0
      %8873 = vmatpush1.msra.mxu0 0.0
      %8874 = vmatprep.subr.mxu0 0.0
      %8875 = vmatpush1.msra.mxu0 0.0
      %8876 = vmatprep.subr.mxu0 0.0
      %8877 = vmatpush1.msra.mxu0 0.0
      %8878 = vmatprep.subr.mxu0 0.0
      %8879 = vmatpush1.msra.mxu0 0.0
      %8880 = vmatprep.subr.mxu0 0.0
      %8881 = vmatpush1.msra.mxu0 0.0
      %8882 = vmatprep.subr.mxu0 0.0
      %8883 = vmatpush1.msra.mxu0 0.0
      %8884 = vmatprep.subr.mxu0 0.0
      %8885 = vmatpush1.msra.mxu0 0.0
      %8886 = vmatprep.subr.mxu0 0.0
      %8887 = vmatpush1.msra.mxu0 0.0
      %8888 = vmatprep.subr.mxu0 0.0
      %8889 = vmatpush1.msra.mxu0 0.0
      %8890 = vmatprep.subr.mxu0 0.0
      %8891 = vmatpush1.msra.mxu0 0.0
      %8892 = vmatprep.subr.mxu0 0.0
      %8893 = vmatpush1.msra.mxu0 0.0
      %8894 = vmatprep.subr.mxu0 0.0
      %8895 = vmatpush1.msra.mxu0 0.0
      %8896 = vmatprep.subr.mxu0 0.0
      %8897 = vmatpush1.msra.mxu0 0.0
      %8898 = vmatprep.subr.mxu0 0.0
      %8899 = vmatpush1.msra.mxu0 0.0
      %8900 = vmatprep.subr.mxu0 0.0
      %8901 = vmatpush1.msra.mxu0 0.0
      %8902 = vmatprep.subr.mxu0 0.0
      %8903 = vmatpush1.msra.mxu0 0.0
      %8904 = vmatprep.subr.mxu0 0.0
      %8905 = vmatpush1.msra.mxu0 0.0
      %8906 = vmatprep.subr.mxu0 0.0
      %8907 = vmatpush1.msra.mxu0 0.0
      %8908 = vmatprep.subr.mxu0 0.0
      %8909 = vmatpush1.msra.mxu0 0.0
      %8910 = vmatprep.subr.mxu0 0.0
      %8911 = vmatpush1.msra.mxu0 0.0
      %8912 = vmatprep.subr.mxu0 0.0
      %8913 = vmatpush1.msra.mxu0 0.0
      %8914 = vmatprep.subr.mxu0 0.0
      %8915 = vmatpush1.msra.mxu0 0.0
      %8916 = vmatprep.subr.mxu0 0.0
      %8917 = vmatpush1.msra.mxu0 0.0
      %8918 = vmatprep.subr.mxu0 0.0
      %8919 = vmatpush1.msra.mxu0 0.0
      %8920 = vmatprep.subr.mxu0 0.0
      %8921 = vmatpush1.msra.mxu0 0.0
      %8922 = vmatprep.subr.mxu0 0.0
      %8923 = vmatpush1.msra.mxu0 0.0
      %8924 = vmatprep.mubr.f32.mxu0 0.0
      %8925 = vmatmul.mubr.f32.gmra.mrb[0].mxu0 %v8858
      %v8926 = vpop.f32.mrb[0].mxu0
      %v8927 = vadd.f32 0.0, %v8926
      %v8928 = vpop.f32.mrb[0].mxu0
      %8929 = vdwg.mxu0
      %v8931 = vsel %vm7250, %v7209, 0
      %8933 = vmatprep.subr.mxu0 0.0
      %8934 = vmatpush1.msra.mxu0 %v315
      %8935 = vmatprep.subr.mxu0 0.0
      %8936 = vmatpush1.msra.mxu0 %v316
      %8937 = vmatprep.subr.mxu0 0.0
      %8938 = vmatpush1.msra.mxu0 0.0
      %8939 = vmatprep.subr.mxu0 0.0
      %8940 = vmatpush1.msra.mxu0 0.0
      %8941 = vmatprep.subr.mxu0 0.0
      %8942 = vmatpush1.msra.mxu0 0.0
      %8943 = vmatprep.subr.mxu0 0.0
      %8944 = vmatpush1.msra.mxu0 0.0
      %8945 = vmatprep.subr.mxu0 0.0
      %8946 = vmatpush1.msra.mxu0 0.0
      %8947 = vmatprep.subr.mxu0 0.0
      %8948 = vmatpush1.msra.mxu0 0.0
      %8949 = vmatprep.subr.mxu0 0.0
      %8950 = vmatpush1.msra.mxu0 0.0
      %8951 = vmatprep.subr.mxu0 0.0
      %8952 = vmatpush1.msra.mxu0 0.0
      %8953 = vmatprep.subr.mxu0 0.0
      %8954 = vmatpush1.msra.mxu0 0.0
      %8955 = vmatprep.subr.mxu0 0.0
      %8956 = vmatpush1.msra.mxu0 0.0
      %8957 = vmatprep.subr.mxu0 0.0
      %8958 = vmatpush1.msra.mxu0 0.0
      %8959 = vmatprep.subr.mxu0 0.0
      %8960 = vmatpush1.msra.mxu0 0.0
      %8961 = vmatprep.subr.mxu0 0.0
      %8962 = vmatpush1.msra.mxu0 0.0
      %8963 = vmatprep.subr.mxu0 0.0
      %8964 = vmatpush1.msra.mxu0 0.0
      %8965 = vmatprep.subr.mxu0 0.0
      %8966 = vmatpush1.msra.mxu0 0.0
      %8967 = vmatprep.subr.mxu0 0.0
      %8968 = vmatpush1.msra.mxu0 0.0
      %8969 = vmatprep.subr.mxu0 0.0
      %8970 = vmatpush1.msra.mxu0 0.0
      %8971 = vmatprep.subr.mxu0 0.0
      %8972 = vmatpush1.msra.mxu0 0.0
      %8973 = vmatprep.subr.mxu0 0.0
      %8974 = vmatpush1.msra.mxu0 0.0
      %8975 = vmatprep.subr.mxu0 0.0
      %8976 = vmatpush1.msra.mxu0 0.0
      %8977 = vmatprep.subr.mxu0 0.0
      %8978 = vmatpush1.msra.mxu0 0.0
      %8979 = vmatprep.subr.mxu0 0.0
      %8980 = vmatpush1.msra.mxu0 0.0
      %8981 = vmatprep.subr.mxu0 0.0
      %8982 = vmatpush1.msra.mxu0 0.0
      %8983 = vmatprep.subr.mxu0 0.0
      %8984 = vmatpush1.msra.mxu0 0.0
      %8985 = vmatprep.subr.mxu0 0.0
      %8986 = vmatpush1.msra.mxu0 0.0
      %8987 = vmatprep.subr.mxu0 0.0
      %8988 = vmatpush1.msra.mxu0 0.0
      %8989 = vmatprep.subr.mxu0 0.0
      %8990 = vmatpush1.msra.mxu0 0.0
      %8991 = vmatprep.subr.mxu0 0.0
      %8992 = vmatpush1.msra.mxu0 0.0
      %8993 = vmatprep.subr.mxu0 0.0
      %8994 = vmatpush1.msra.mxu0 0.0
      %8995 = vmatprep.subr.mxu0 0.0
      %8996 = vmatpush1.msra.mxu0 0.0
      %8997 = vmatprep.mubr.f32.mxu0 0.0
      %8998 = vmatmul.mubr.f32.gmra.mrb[0].mxu0 %v8931
      %v8999 = vpop.f32.mrb[0].mxu0
      %v9000 = vadd.f32 0.0, %v8999
      %v9001 = vpop.f32.mrb[0].mxu0
      %9002 = vdwg.mxu0
      %v9004 = vsel %vm7250, %v7210, 0
      %9006 = vmatprep.subr.mxu0 0.0
      %9007 = vmatpush1.msra.mxu0 %v317
      %9008 = vmatprep.subr.mxu0 0.0
      %9009 = vmatpush1.msra.mxu0 %v318
      %9010 = vmatprep.subr.mxu0 0.0
      %9011 = vmatpush1.msra.mxu0 0.0
      %9012 = vmatprep.subr.mxu0 0.0
      %9013 = vmatpush1.msra.mxu0 0.0
      %9014 = vmatprep.subr.mxu0 0.0
      %9015 = vmatpush1.msra.mxu0 0.0
      %9016 = vmatprep.subr.mxu0 0.0
      %9017 = vmatpush1.msra.mxu0 0.0
      %9018 = vmatprep.subr.mxu0 0.0
      %9019 = vmatpush1.msra.mxu0 0.0
      %9020 = vmatprep.subr.mxu0 0.0
      %9021 = vmatpush1.msra.mxu0 0.0
      %9022 = vmatprep.subr.mxu0 0.0
      %9023 = vmatpush1.msra.mxu0 0.0
      %9024 = vmatprep.subr.mxu0 0.0
      %9025 = vmatpush1.msra.mxu0 0.0
      %9026 = vmatprep.subr.mxu0 0.0
      %9027 = vmatpush1.msra.mxu0 0.0
      %9028 = vmatprep.subr.mxu0 0.0
      %9029 = vmatpush1.msra.mxu0 0.0
      %9030 = vmatprep.subr.mxu0 0.0
      %9031 = vmatpush1.msra.mxu0 0.0
      %9032 = vmatprep.subr.mxu0 0.0
      %9033 = vmatpush1.msra.mxu0 0.0
      %9034 = vmatprep.subr.mxu0 0.0
      %9035 = vmatpush1.msra.mxu0 0.0
      %9036 = vmatprep.subr.mxu0 0.0
      %9037 = vmatpush1.msra.mxu0 0.0
      %9038 = vmatprep.subr.mxu0 0.0
      %9039 = vmatpush1.msra.mxu0 0.0
      %9040 = vmatprep.subr.mxu0 0.0
      %9041 = vmatpush1.msra.mxu0 0.0
      %9042 = vmatprep.subr.mxu0 0.0
      %9043 = vmatpush1.msra.mxu0 0.0
      %9044 = vmatprep.subr.mxu0 0.0
      %9045 = vmatpush1.msra.mxu0 0.0
      %9046 = vmatprep.subr.mxu0 0.0
      %9047 = vmatpush1.msra.mxu0 0.0
      %9048 = vmatprep.subr.mxu0 0.0
      %9049 = vmatpush1.msra.mxu0 0.0
      %9050 = vmatprep.subr.mxu0 0.0
      %9051 = vmatpush1.msra.mxu0 0.0
      %9052 = vmatprep.subr.mxu0 0.0
      %9053 = vmatpush1.msra.mxu0 0.0
      %9054 = vmatprep.subr.mxu0 0.0
      %9055 = vmatpush1.msra.mxu0 0.0
      %9056 = vmatprep.subr.mxu0 0.0
      %9057 = vmatpush1.msra.mxu0 0.0
      %9058 = vmatprep.subr.mxu0 0.0
      %9059 = vmatpush1.msra.mxu0 0.0
      %9060 = vmatprep.subr.mxu0 0.0
      %9061 = vmatpush1.msra.mxu0 0.0
      %9062 = vmatprep.subr.mxu0 0.0
      %9063 = vmatpush1.msra.mxu0 0.0
      %9064 = vmatprep.subr.mxu0 0.0
      %9065 = vmatpush1.msra.mxu0 0.0
      %9066 = vmatprep.subr.mxu0 0.0
      %9067 = vmatpush1.msra.mxu0 0.0
      %9068 = vmatprep.subr.mxu0 0.0
      %9069 = vmatpush1.msra.mxu0 0.0
      %9070 = vmatprep.mubr.f32.mxu0 0.0
      %9071 = vmatmul.mubr.f32.gmra.mrb[0].mxu0 %v9004
      %v9072 = vpop.f32.mrb[0].mxu0
      %v9073 = vadd.f32 0.0, %v9072
      %v9074 = vpop.f32.mrb[0].mxu0
      %9075 = vdwg.mxu0
      %v9077 = vsel %vm7250, %v7211, 0
      %9079 = vmatprep.subr.mxu0 0.0
      %9080 = vmatpush1.msra.mxu0 %v319
      %9081 = vmatprep.subr.mxu0 0.0
      %9082 = vmatpush1.msra.mxu0 %v320
      %9083 = vmatprep.subr.mxu0 0.0
      %9084 = vmatpush1.msra.mxu0 0.0
      %9085 = vmatprep.subr.mxu0 0.0
      %9086 = vmatpush1.msra.mxu0 0.0
      %9087 = vmatprep.subr.mxu0 0.0
      %9088 = vmatpush1.msra.mxu0 0.0
      %9089 = vmatprep.subr.mxu0 0.0
      %9090 = vmatpush1.msra.mxu0 0.0
      %9091 = vmatprep.subr.mxu0 0.0
      %9092 = vmatpush1.msra.mxu0 0.0
      %9093 = vmatprep.subr.mxu0 0.0
      %9094 = vmatpush1.msra.mxu0 0.0
      %9095 = vmatprep.subr.mxu0 0.0
      %9096 = vmatpush1.msra.mxu0 0.0
      %9097 = vmatprep.subr.mxu0 0.0
      %9098 = vmatpush1.msra.mxu0 0.0
      %9099 = vmatprep.subr.mxu0 0.0
      %9100 = vmatpush1.msra.mxu0 0.0
      %9101 = vmatprep.subr.mxu0 0.0
      %9102 = vmatpush1.msra.mxu0 0.0
      %9103 = vmatprep.subr.mxu0 0.0
      %9104 = vmatpush1.msra.mxu0 0.0
      %9105 = vmatprep.subr.mxu0 0.0
      %9106 = vmatpush1.msra.mxu0 0.0
      %9107 = vmatprep.subr.mxu0 0.0
      %9108 = vmatpush1.msra.mxu0 0.0
      %9109 = vmatprep.subr.mxu0 0.0
      %9110 = vmatpush1.msra.mxu0 0.0
      %9111 = vmatprep.subr.mxu0 0.0
      %9112 = vmatpush1.msra.mxu0 0.0
      %9113 = vmatprep.subr.mxu0 0.0
      %9114 = vmatpush1.msra.mxu0 0.0
      %9115 = vmatprep.subr.mxu0 0.0
      %9116 = vmatpush1.msra.mxu0 0.0
      %9117 = vmatprep.subr.mxu0 0.0
      %9118 = vmatpush1.msra.mxu0 0.0
      %9119 = vmatprep.subr.mxu0 0.0
      %9120 = vmatpush1.msra.mxu0 0.0
      %9121 = vmatprep.subr.mxu0 0.0
      %9122 = vmatpush1.msra.mxu0 0.0
      %9123 = vmatprep.subr.mxu0 0.0
      %9124 = vmatpush1.msra.mxu0 0.0
      %9125 = vmatprep.subr.mxu0 0.0
      %9126 = vmatpush1.msra.mxu0 0.0
      %9127 = vmatprep.subr.mxu0 0.0
      %9128 = vmatpush1.msra.mxu0 0.0
      %9129 = vmatprep.subr.mxu0 0.0
      %9130 = vmatpush1.msra.mxu0 0.0
      %9131 = vmatprep.subr.mxu0 0.0
      %9132 = vmatpush1.msra.mxu0 0.0
      %9133 = vmatprep.subr.mxu0 0.0
      %9134 = vmatpush1.msra.mxu0 0.0
      %9135 = vmatprep.subr.mxu0 0.0
      %9136 = vmatpush1.msra.mxu0 0.0
      %9137 = vmatprep.subr.mxu0 0.0
      %9138 = vmatpush1.msra.mxu0 0.0
      %9139 = vmatprep.subr.mxu0 0.0
      %9140 = vmatpush1.msra.mxu0 0.0
      %9141 = vmatprep.subr.mxu0 0.0
      %9142 = vmatpush1.msra.mxu0 0.0
      %9143 = vmatprep.mubr.f32.mxu0 0.0
      %9144 = vmatmul.mubr.f32.gmra.mrb[0].mxu0 %v9077
      %v9145 = vpop.f32.mrb[0].mxu0
      %v9146 = vadd.f32 0.0, %v9145
      %v9147 = vpop.f32.mrb[0].mxu0
      %9148 = vdwg.mxu0
      %v9150 = vsel %vm7250, %v7212, 0
      %9152 = vmatprep.subr.mxu0 0.0
      %9153 = vmatpush1.msra.mxu0 %v321
      %9154 = vmatprep.subr.mxu0 0.0
      %9155 = vmatpush1.msra.mxu0 %v322
      %9156 = vmatprep.subr.mxu0 0.0
      %9157 = vmatpush1.msra.mxu0 0.0
      %9158 = vmatprep.subr.mxu0 0.0
      %9159 = vmatpush1.msra.mxu0 0.0
      %9160 = vmatprep.subr.mxu0 0.0
      %9161 = vmatpush1.msra.mxu0 0.0
      %9162 = vmatprep.subr.mxu0 0.0
      %9163 = vmatpush1.msra.mxu0 0.0
      %9164 = vmatprep.subr.mxu0 0.0
      %9165 = vmatpush1.msra.mxu0 0.0
      %9166 = vmatprep.subr.mxu0 0.0
      %9167 = vmatpush1.msra.mxu0 0.0
      %9168 = vmatprep.subr.mxu0 0.0
      %9169 = vmatpush1.msra.mxu0 0.0
      %9170 = vmatprep.subr.mxu0 0.0
      %9171 = vmatpush1.msra.mxu0 0.0
      %9172 = vmatprep.subr.mxu0 0.0
      %9173 = vmatpush1.msra.mxu0 0.0
      %9174 = vmatprep.subr.mxu0 0.0
      %9175 = vmatpush1.msra.mxu0 0.0
      %9176 = vmatprep.subr.mxu0 0.0
      %9177 = vmatpush1.msra.mxu0 0.0
      %9178 = vmatprep.subr.mxu0 0.0
      %9179 = vmatpush1.msra.mxu0 0.0
      %9180 = vmatprep.subr.mxu0 0.0
      %9181 = vmatpush1.msra.mxu0 0.0
      %9182 = vmatprep.subr.mxu0 0.0
      %9183 = vmatpush1.msra.mxu0 0.0
      %9184 = vmatprep.subr.mxu0 0.0
      %9185 = vmatpush1.msra.mxu0 0.0
      %9186 = vmatprep.subr.mxu0 0.0
      %9187 = vmatpush1.msra.mxu0 0.0
      %9188 = vmatprep.subr.mxu0 0.0
      %9189 = vmatpush1.msra.mxu0 0.0
      %9190 = vmatprep.subr.mxu0 0.0
      %9191 = vmatpush1.msra.mxu0 0.0
      %9192 = vmatprep.subr.mxu0 0.0
      %9193 = vmatpush1.msra.mxu0 0.0
      %9194 = vmatprep.subr.mxu0 0.0
      %9195 = vmatpush1.msra.mxu0 0.0
      %9196 = vmatprep.subr.mxu0 0.0
      %9197 = vmatpush1.msra.mxu0 0.0
      %9198 = vmatprep.subr.mxu0 0.0
      %9199 = vmatpush1.msra.mxu0 0.0
      %9200 = vmatprep.subr.mxu0 0.0
      %9201 = vmatpush1.msra.mxu0 0.0
      %9202 = vmatprep.subr.mxu0 0.0
      %9203 = vmatpush1.msra.mxu0 0.0
      %9204 = vmatprep.subr.mxu0 0.0
      %9205 = vmatpush1.msra.mxu0 0.0
      %9206 = vmatprep.subr.mxu0 0.0
      %9207 = vmatpush1.msra.mxu0 0.0
      %9208 = vmatprep.subr.mxu0 0.0
      %9209 = vmatpush1.msra.mxu0 0.0
      %9210 = vmatprep.subr.mxu0 0.0
      %9211 = vmatpush1.msra.mxu0 0.0
      %9212 = vmatprep.subr.mxu0 0.0
      %9213 = vmatpush1.msra.mxu0 0.0
      %9214 = vmatprep.subr.mxu0 0.0
      %9215 = vmatpush1.msra.mxu0 0.0
      %9216 = vmatprep.mubr.f32.mxu0 0.0
      %9217 = vmatmul.mubr.f32.gmra.mrb[0].mxu0 %v9150
      %v9218 = vpop.f32.mrb[0].mxu0
      %v9219 = vadd.f32 0.0, %v9218
      %v9220 = vpop.f32.mrb[0].mxu0
      %9221 = vdwg.mxu0
      %v9223 = vsel %vm7250, %v7213, 0
      %9225 = vmatprep.subr.mxu0 0.0
      %9226 = vmatpush1.msra.mxu0 %v323
      %9227 = vmatprep.subr.mxu0 0.0
      %9228 = vmatpush1.msra.mxu0 %v324
      %9229 = vmatprep.subr.mxu0 0.0
      %9230 = vmatpush1.msra.mxu0 0.0
      %9231 = vmatprep.subr.mxu0 0.0
      %9232 = vmatpush1.msra.mxu0 0.0
      %9233 = vmatprep.subr.mxu0 0.0
      %9234 = vmatpush1.msra.mxu0 0.0
      %9235 = vmatprep.subr.mxu0 0.0
      %9236 = vmatpush1.msra.mxu0 0.0
      %9237 = vmatprep.subr.mxu0 0.0
      %9238 = vmatpush1.msra.mxu0 0.0
      %9239 = vmatprep.subr.mxu0 0.0
      %9240 = vmatpush1.msra.mxu0 0.0
      %9241 = vmatprep.subr.mxu0 0.0
      %9242 = vmatpush1.msra.mxu0 0.0
      %9243 = vmatprep.subr.mxu0 0.0
      %9244 = vmatpush1.msra.mxu0 0.0
      %9245 = vmatprep.subr.mxu0 0.0
      %9246 = vmatpush1.msra.mxu0 0.0
      %9247 = vmatprep.subr.mxu0 0.0
      %9248 = vmatpush1.msra.mxu0 0.0
      %9249 = vmatprep.subr.mxu0 0.0
      %9250 = vmatpush1.msra.mxu0 0.0
      %9251 = vmatprep.subr.mxu0 0.0
      %9252 = vmatpush1.msra.mxu0 0.0
      %9253 = vmatprep.subr.mxu0 0.0
      %9254 = vmatpush1.msra.mxu0 0.0
      %9255 = vmatprep.subr.mxu0 0.0
      %9256 = vmatpush1.msra.mxu0 0.0
      %9257 = vmatprep.subr.mxu0 0.0
      %9258 = vmatpush1.msra.mxu0 0.0
      %9259 = vmatprep.subr.mxu0 0.0
      %9260 = vmatpush1.msra.mxu0 0.0
      %9261 = vmatprep.subr.mxu0 0.0
      %9262 = vmatpush1.msra.mxu0 0.0
      %9263 = vmatprep.subr.mxu0 0.0
      %9264 = vmatpush1.msra.mxu0 0.0
      %9265 = vmatprep.subr.mxu0 0.0
      %9266 = vmatpush1.msra.mxu0 0.0
      %9267 = vmatprep.subr.mxu0 0.0
      %9268 = vmatpush1.msra.mxu0 0.0
      %9269 = vmatprep.subr.mxu0 0.0
      %9270 = vmatpush1.msra.mxu0 0.0
      %9271 = vmatprep.subr.mxu0 0.0
      %9272 = vmatpush1.msra.mxu0 0.0
      %9273 = vmatprep.subr.mxu0 0.0
      %9274 = vmatpush1.msra.mxu0 0.0
      %9275 = vmatprep.subr.mxu0 0.0
      %9276 = vmatpush1.msra.mxu0 0.0
      %9277 = vmatprep.subr.mxu0 0.0
      %9278 = vmatpush1.msra.mxu0 0.0
      %9279 = vmatprep.subr.mxu0 0.0
      %9280 = vmatpush1.msra.mxu0 0.0
      %9281 = vmatprep.subr.mxu0 0.0
      %9282 = vmatpush1.msra.mxu0 0.0
      %9283 = vmatprep.subr.mxu0 0.0
      %9284 = vmatpush1.msra.mxu0 0.0
      %9285 = vmatprep.subr.mxu0 0.0
      %9286 = vmatpush1.msra.mxu0 0.0
      %9287 = vmatprep.subr.mxu0 0.0
      %9288 = vmatpush1.msra.mxu0 0.0
      %9289 = vmatprep.mubr.f32.mxu0 0.0
      %9290 = vmatmul.mubr.f32.gmra.mrb[0].mxu0 %v9223
      %v9291 = vpop.f32.mrb[0].mxu0
      %v9292 = vadd.f32 0.0, %v9291
      %v9293 = vpop.f32.mrb[0].mxu0
      %9294 = vdwg.mxu0
      %v9296 = vsel %vm7250, %v7214, 0
      %9298 = vmatprep.subr.mxu0 0.0
      %9299 = vmatpush1.msra.mxu0 %v325
      %9300 = vmatprep.subr.mxu0 0.0
      %9301 = vmatpush1.msra.mxu0 %v326
      %9302 = vmatprep.subr.mxu0 0.0
      %9303 = vmatpush1.msra.mxu0 0.0
      %9304 = vmatprep.subr.mxu0 0.0
      %9305 = vmatpush1.msra.mxu0 0.0
      %9306 = vmatprep.subr.mxu0 0.0
      %9307 = vmatpush1.msra.mxu0 0.0
      %9308 = vmatprep.subr.mxu0 0.0
      %9309 = vmatpush1.msra.mxu0 0.0
      %9310 = vmatprep.subr.mxu0 0.0
      %9311 = vmatpush1.msra.mxu0 0.0
      %9312 = vmatprep.subr.mxu0 0.0
      %9313 = vmatpush1.msra.mxu0 0.0
      %9314 = vmatprep.subr.mxu0 0.0
      %9315 = vmatpush1.msra.mxu0 0.0
      %9316 = vmatprep.subr.mxu0 0.0
      %9317 = vmatpush1.msra.mxu0 0.0
      %9318 = vmatprep.subr.mxu0 0.0
      %9319 = vmatpush1.msra.mxu0 0.0
      %9320 = vmatprep.subr.mxu0 0.0
      %9321 = vmatpush1.msra.mxu0 0.0
      %9322 = vmatprep.subr.mxu0 0.0
      %9323 = vmatpush1.msra.mxu0 0.0
      %9324 = vmatprep.subr.mxu0 0.0
      %9325 = vmatpush1.msra.mxu0 0.0
      %9326 = vmatprep.subr.mxu0 0.0
      %9327 = vmatpush1.msra.mxu0 0.0
      %9328 = vmatprep.subr.mxu0 0.0
      %9329 = vmatpush1.msra.mxu0 0.0
      %9330 = vmatprep.subr.mxu0 0.0
      %9331 = vmatpush1.msra.mxu0 0.0
      %9332 = vmatprep.subr.mxu0 0.0
      %9333 = vmatpush1.msra.mxu0 0.0
      %9334 = vmatprep.subr.mxu0 0.0
      %9335 = vmatpush1.msra.mxu0 0.0
      %9336 = vmatprep.subr.mxu0 0.0
      %9337 = vmatpush1.msra.mxu0 0.0
      %9338 = vmatprep.subr.mxu0 0.0
      %9339 = vmatpush1.msra.mxu0 0.0
      %9340 = vmatprep.subr.mxu0 0.0
      %9341 = vmatpush1.msra.mxu0 0.0
      %9342 = vmatprep.subr.mxu0 0.0
      %9343 = vmatpush1.msra.mxu0 0.0
      %9344 = vmatprep.subr.mxu0 0.0
      %9345 = vmatpush1.msra.mxu0 0.0
      %9346 = vmatprep.subr.mxu0 0.0
      %9347 = vmatpush1.msra.mxu0 0.0
      %9348 = vmatprep.subr.mxu0 0.0
      %9349 = vmatpush1.msra.mxu0 0.0
      %9350 = vmatprep.subr.mxu0 0.0
      %9351 = vmatpush1.msra.mxu0 0.0
      %9352 = vmatprep.subr.mxu0 0.0
      %9353 = vmatpush1.msra.mxu0 0.0
      %9354 = vmatprep.subr.mxu0 0.0
      %9355 = vmatpush1.msra.mxu0 0.0
      %9356 = vmatprep.subr.mxu0 0.0
      %9357 = vmatpush1.msra.mxu0 0.0
      %9358 = vmatprep.subr.mxu0 0.0
      %9359 = vmatpush1.msra.mxu0 0.0
      %9360 = vmatprep.subr.mxu0 0.0
      %9361 = vmatpush1.msra.mxu0 0.0
      %9362 = vmatprep.mubr.f32.mxu0 0.0
      %9363 = vmatmul.mubr.f32.gmra.mrb[0].mxu0 %v9296
      %v9364 = vpop.f32.mrb[0].mxu0
      %v9365 = vadd.f32 0.0, %v9364
      %v9366 = vpop.f32.mrb[0].mxu0
      %9367 = vdwg.mxu0
      %v9369 = vsel %vm7250, %v7215, 0
      %9371 = vmatprep.subr.mxu0 0.0
      %9372 = vmatpush1.msra.mxu0 %v327
      %9373 = vmatprep.subr.mxu0 0.0
      %9374 = vmatpush1.msra.mxu0 %v328
      %9375 = vmatprep.subr.mxu0 0.0
      %9376 = vmatpush1.msra.mxu0 0.0
      %9377 = vmatprep.subr.mxu0 0.0
      %9378 = vmatpush1.msra.mxu0 0.0
      %9379 = vmatprep.subr.mxu0 0.0
      %9380 = vmatpush1.msra.mxu0 0.0
      %9381 = vmatprep.subr.mxu0 0.0
      %9382 = vmatpush1.msra.mxu0 0.0
      %9383 = vmatprep.subr.mxu0 0.0
      %9384 = vmatpush1.msra.mxu0 0.0
      %9385 = vmatprep.subr.mxu0 0.0
      %9386 = vmatpush1.msra.mxu0 0.0
      %9387 = vmatprep.subr.mxu0 0.0
      %9388 = vmatpush1.msra.mxu0 0.0
      %9389 = vmatprep.subr.mxu0 0.0
      %9390 = vmatpush1.msra.mxu0 0.0
      %9391 = vmatprep.subr.mxu0 0.0
      %9392 = vmatpush1.msra.mxu0 0.0
      %9393 = vmatprep.subr.mxu0 0.0
      %9394 = vmatpush1.msra.mxu0 0.0
      %9395 = vmatprep.subr.mxu0 0.0
      %9396 = vmatpush1.msra.mxu0 0.0
      %9397 = vmatprep.subr.mxu0 0.0
      %9398 = vmatpush1.msra.mxu0 0.0
      %9399 = vmatprep.subr.mxu0 0.0
      %9400 = vmatpush1.msra.mxu0 0.0
      %9401 = vmatprep.subr.mxu0 0.0
      %9402 = vmatpush1.msra.mxu0 0.0
      %9403 = vmatprep.subr.mxu0 0.0
      %9404 = vmatpush1.msra.mxu0 0.0
      %9405 = vmatprep.subr.mxu0 0.0
      %9406 = vmatpush1.msra.mxu0 0.0
      %9407 = vmatprep.subr.mxu0 0.0
      %9408 = vmatpush1.msra.mxu0 0.0
      %9409 = vmatprep.subr.mxu0 0.0
      %9410 = vmatpush1.msra.mxu0 0.0
      %9411 = vmatprep.subr.mxu0 0.0
      %9412 = vmatpush1.msra.mxu0 0.0
      %9413 = vmatprep.subr.mxu0 0.0
      %9414 = vmatpush1.msra.mxu0 0.0
      %9415 = vmatprep.subr.mxu0 0.0
      %9416 = vmatpush1.msra.mxu0 0.0
      %9417 = vmatprep.subr.mxu0 0.0
      %9418 = vmatpush1.msra.mxu0 0.0
      %9419 = vmatprep.subr.mxu0 0.0
      %9420 = vmatpush1.msra.mxu0 0.0
      %9421 = vmatprep.subr.mxu0 0.0
      %9422 = vmatpush1.msra.mxu0 0.0
      %9423 = vmatprep.subr.mxu0 0.0
      %9424 = vmatpush1.msra.mxu0 0.0
      %9425 = vmatprep.subr.mxu0 0.0
      %9426 = vmatpush1.msra.mxu0 0.0
      %9427 = vmatprep.subr.mxu0 0.0
      %9428 = vmatpush1.msra.mxu0 0.0
      %9429 = vmatprep.subr.mxu0 0.0
      %9430 = vmatpush1.msra.mxu0 0.0
      %9431 = vmatprep.subr.mxu0 0.0
      %9432 = vmatpush1.msra.mxu0 0.0
      %9433 = vmatprep.subr.mxu0 0.0
      %9434 = vmatpush1.msra.mxu0 0.0
      %9435 = vmatprep.mubr.f32.mxu0 0.0
      %9436 = vmatmul.mubr.f32.gmra.mrb[0].mxu0 %v9369
      %v9437 = vpop.f32.mrb[0].mxu0
      %v9438 = vadd.f32 0.0, %v9437
      %v9439 = vpop.f32.mrb[0].mxu0
      %9440 = vdwg.mxu0
      %v9442 = vsel %vm7250, %v7216, 0
      %9444 = vmatprep.subr.mxu0 0.0
      %9445 = vmatpush1.msra.mxu0 %v329
      %9446 = vmatprep.subr.mxu0 0.0
      %9447 = vmatpush1.msra.mxu0 %v330
      %9448 = vmatprep.subr.mxu0 0.0
      %9449 = vmatpush1.msra.mxu0 0.0
      %9450 = vmatprep.subr.mxu0 0.0
      %9451 = vmatpush1.msra.mxu0 0.0
      %9452 = vmatprep.subr.mxu0 0.0
      %9453 = vmatpush1.msra.mxu0 0.0
      %9454 = vmatprep.subr.mxu0 0.0
      %9455 = vmatpush1.msra.mxu0 0.0
      %9456 = vmatprep.subr.mxu0 0.0
      %9457 = vmatpush1.msra.mxu0 0.0
      %9458 = vmatprep.subr.mxu0 0.0
      %9459 = vmatpush1.msra.mxu0 0.0
      %9460 = vmatprep.subr.mxu0 0.0
      %9461 = vmatpush1.msra.mxu0 0.0
      %9462 = vmatprep.subr.mxu0 0.0
      %9463 = vmatpush1.msra.mxu0 0.0
      %9464 = vmatprep.subr.mxu0 0.0
      %9465 = vmatpush1.msra.mxu0 0.0
      %9466 = vmatprep.subr.mxu0 0.0
      %9467 = vmatpush1.msra.mxu0 0.0
      %9468 = vmatprep.subr.mxu0 0.0
      %9469 = vmatpush1.msra.mxu0 0.0
      %9470 = vmatprep.subr.mxu0 0.0
      %9471 = vmatpush1.msra.mxu0 0.0
      %9472 = vmatprep.subr.mxu0 0.0
      %9473 = vmatpush1.msra.mxu0 0.0
      %9474 = vmatprep.subr.mxu0 0.0
      %9475 = vmatpush1.msra.mxu0 0.0
      %9476 = vmatprep.subr.mxu0 0.0
      %9477 = vmatpush1.msra.mxu0 0.0
      %9478 = vmatprep.subr.mxu0 0.0
      %9479 = vmatpush1.msra.mxu0 0.0
      %9480 = vmatprep.subr.mxu0 0.0
      %9481 = vmatpush1.msra.mxu0 0.0
      %9482 = vmatprep.subr.mxu0 0.0
      %9483 = vmatpush1.msra.mxu0 0.0
      %9484 = vmatprep.subr.mxu0 0.0
      %9485 = vmatpush1.msra.mxu0 0.0
      %9486 = vmatprep.subr.mxu0 0.0
      %9487 = vmatpush1.msra.mxu0 0.0
      %9488 = vmatprep.subr.mxu0 0.0
      %9489 = vmatpush1.msra.mxu0 0.0
      %9490 = vmatprep.subr.mxu0 0.0
      %9491 = vmatpush1.msra.mxu0 0.0
      %9492 = vmatprep.subr.mxu0 0.0
      %9493 = vmatpush1.msra.mxu0 0.0
      %9494 = vmatprep.subr.mxu0 0.0
      %9495 = vmatpush1.msra.mxu0 0.0
      %9496 = vmatprep.subr.mxu0 0.0
      %9497 = vmatpush1.msra.mxu0 0.0
      %9498 = vmatprep.subr.mxu0 0.0
      %9499 = vmatpush1.msra.mxu0 0.0
      %9500 = vmatprep.subr.mxu0 0.0
      %9501 = vmatpush1.msra.mxu0 0.0
      %9502 = vmatprep.subr.mxu0 0.0
      %9503 = vmatpush1.msra.mxu0 0.0
      %9504 = vmatprep.subr.mxu0 0.0
      %9505 = vmatpush1.msra.mxu0 0.0
      %9506 = vmatprep.subr.mxu0 0.0
      %9507 = vmatpush1.msra.mxu0 0.0
      %9508 = vmatprep.mubr.f32.mxu0 0.0
      %9509 = vmatmul.mubr.f32.gmra.mrb[0].mxu0 %v9442
      %v9510 = vpop.f32.mrb[0].mxu0
      %v9511 = vadd.f32 0.0, %v9510
      %v9512 = vpop.f32.mrb[0].mxu0
      %9513 = vdwg.mxu0
      %v9515 = vsel %vm7250, %v7217, 0
      %9517 = vmatprep.subr.mxu0 0.0
      %9518 = vmatpush1.msra.mxu0 %v331
      %9519 = vmatprep.subr.mxu0 0.0
      %9520 = vmatpush1.msra.mxu0 %v332
      %9521 = vmatprep.subr.mxu0 0.0
      %9522 = vmatpush1.msra.mxu0 0.0
      %9523 = vmatprep.subr.mxu0 0.0
      %9524 = vmatpush1.msra.mxu0 0.0
      %9525 = vmatprep.subr.mxu0 0.0
      %9526 = vmatpush1.msra.mxu0 0.0
      %9527 = vmatprep.subr.mxu0 0.0
      %9528 = vmatpush1.msra.mxu0 0.0
      %9529 = vmatprep.subr.mxu0 0.0
      %9530 = vmatpush1.msra.mxu0 0.0
      %9531 = vmatprep.subr.mxu0 0.0
      %9532 = vmatpush1.msra.mxu0 0.0
      %9533 = vmatprep.subr.mxu0 0.0
      %9534 = vmatpush1.msra.mxu0 0.0
      %9535 = vmatprep.subr.mxu0 0.0
      %9536 = vmatpush1.msra.mxu0 0.0
      %9537 = vmatprep.subr.mxu0 0.0
      %9538 = vmatpush1.msra.mxu0 0.0
      %9539 = vmatprep.subr.mxu0 0.0
      %9540 = vmatpush1.msra.mxu0 0.0
      %9541 = vmatprep.subr.mxu0 0.0
      %9542 = vmatpush1.msra.mxu0 0.0
      %9543 = vmatprep.subr.mxu0 0.0
      %9544 = vmatpush1.msra.mxu0 0.0
      %9545 = vmatprep.subr.mxu0 0.0
      %9546 = vmatpush1.msra.mxu0 0.0
      %9547 = vmatprep.subr.mxu0 0.0
      %9548 = vmatpush1.msra.mxu0 0.0
      %9549 = vmatprep.subr.mxu0 0.0
      %9550 = vmatpush1.msra.mxu0 0.0
      %9551 = vmatprep.subr.mxu0 0.0
      %9552 = vmatpush1.msra.mxu0 0.0
      %9553 = vmatprep.subr.mxu0 0.0
      %9554 = vmatpush1.msra.mxu0 0.0
      %9555 = vmatprep.subr.mxu0 0.0
      %9556 = vmatpush1.msra.mxu0 0.0
      %9557 = vmatprep.subr.mxu0 0.0
      %9558 = vmatpush1.msra.mxu0 0.0
      %9559 = vmatprep.subr.mxu0 0.0
      %9560 = vmatpush1.msra.mxu0 0.0
      %9561 = vmatprep.subr.mxu0 0.0
      %9562 = vmatpush1.msra.mxu0 0.0
      %9563 = vmatprep.subr.mxu0 0.0
      %9564 = vmatpush1.msra.mxu0 0.0
      %9565 = vmatprep.subr.mxu0 0.0
      %9566 = vmatpush1.msra.mxu0 0.0
      %9567 = vmatprep.subr.mxu0 0.0
      %9568 = vmatpush1.msra.mxu0 0.0
      %9569 = vmatprep.subr.mxu0 0.0
      %9570 = vmatpush1.msra.mxu0 0.0
      %9571 = vmatprep.subr.mxu0 0.0
      %9572 = vmatpush1.msra.mxu0 0.0
      %9573 = vmatprep.subr.mxu0 0.0
      %9574 = vmatpush1.msra.mxu0 0.0
      %9575 = vmatprep.subr.mxu0 0.0
      %9576 = vmatpush1.msra.mxu0 0.0
      %9577 = vmatprep.subr.mxu0 0.0
      %9578 = vmatpush1.msra.mxu0 0.0
      %9579 = vmatprep.subr.mxu0 0.0
      %9580 = vmatpush1.msra.mxu0 0.0
      %9581 = vmatprep.mubr.f32.mxu0 0.0
      %9582 = vmatmul.mubr.f32.gmra.mrb[0].mxu0 %v9515
      %v9583 = vpop.f32.mrb[0].mxu0
      %v9584 = vadd.f32 0.0, %v9583
      %v9585 = vpop.f32.mrb[0].mxu0
      %9586 = vdwg.mxu0
      %v9588 = vsel %vm7250, %v7218, 0
      %9590 = vmatprep.subr.mxu0 0.0
      %9591 = vmatpush1.msra.mxu0 %v333
      %9592 = vmatprep.subr.mxu0 0.0
      %9593 = vmatpush1.msra.mxu0 %v334
      %9594 = vmatprep.subr.mxu0 0.0
      %9595 = vmatpush1.msra.mxu0 0.0
      %9596 = vmatprep.subr.mxu0 0.0
      %9597 = vmatpush1.msra.mxu0 0.0
      %9598 = vmatprep.subr.mxu0 0.0
      %9599 = vmatpush1.msra.mxu0 0.0
      %9600 = vmatprep.subr.mxu0 0.0
      %9601 = vmatpush1.msra.mxu0 0.0
      %9602 = vmatprep.subr.mxu0 0.0
      %9603 = vmatpush1.msra.mxu0 0.0
      %9604 = vmatprep.subr.mxu0 0.0
      %9605 = vmatpush1.msra.mxu0 0.0
      %9606 = vmatprep.subr.mxu0 0.0
      %9607 = vmatpush1.msra.mxu0 0.0
      %9608 = vmatprep.subr.mxu0 0.0
      %9609 = vmatpush1.msra.mxu0 0.0
      %9610 = vmatprep.subr.mxu0 0.0
      %9611 = vmatpush1.msra.mxu0 0.0
      %9612 = vmatprep.subr.mxu0 0.0
      %9613 = vmatpush1.msra.mxu0 0.0
      %9614 = vmatprep.subr.mxu0 0.0
      %9615 = vmatpush1.msra.mxu0 0.0
      %9616 = vmatprep.subr.mxu0 0.0
      %9617 = vmatpush1.msra.mxu0 0.0
      %9618 = vmatprep.subr.mxu0 0.0
      %9619 = vmatpush1.msra.mxu0 0.0
      %9620 = vmatprep.subr.mxu0 0.0
      %9621 = vmatpush1.msra.mxu0 0.0
      %9622 = vmatprep.subr.mxu0 0.0
      %9623 = vmatpush1.msra.mxu0 0.0
      %9624 = vmatprep.subr.mxu0 0.0
      %9625 = vmatpush1.msra.mxu0 0.0
      %9626 = vmatprep.subr.mxu0 0.0
      %9627 = vmatpush1.msra.mxu0 0.0
      %9628 = vmatprep.subr.mxu0 0.0
      %9629 = vmatpush1.msra.mxu0 0.0
      %9630 = vmatprep.subr.mxu0 0.0
      %9631 = vmatpush1.msra.mxu0 0.0
      %9632 = vmatprep.subr.mxu0 0.0
      %9633 = vmatpush1.msra.mxu0 0.0
      %9634 = vmatprep.subr.mxu0 0.0
      %9635 = vmatpush1.msra.mxu0 0.0
      %9636 = vmatprep.subr.mxu0 0.0
      %9637 = vmatpush1.msra.mxu0 0.0
      %9638 = vmatprep.subr.mxu0 0.0
      %9639 = vmatpush1.msra.mxu0 0.0
      %9640 = vmatprep.subr.mxu0 0.0
      %9641 = vmatpush1.msra.mxu0 0.0
      %9642 = vmatprep.subr.mxu0 0.0
      %9643 = vmatpush1.msra.mxu0 0.0
      %9644 = vmatprep.subr.mxu0 0.0
      %9645 = vmatpush1.msra.mxu0 0.0
      %9646 = vmatprep.subr.mxu0 0.0
      %9647 = vmatpush1.msra.mxu0 0.0
      %9648 = vmatprep.subr.mxu0 0.0
      %9649 = vmatpush1.msra.mxu0 0.0
      %9650 = vmatprep.subr.mxu0 0.0
      %9651 = vmatpush1.msra.mxu0 0.0
      %9652 = vmatprep.subr.mxu0 0.0
      %9653 = vmatpush1.msra.mxu0 0.0
      %9654 = vmatprep.mubr.f32.mxu0 0.0
      %9655 = vmatmul.mubr.f32.gmra.mrb[0].mxu0 %v9588
      %v9656 = vpop.f32.mrb[0].mxu0
      %v9657 = vadd.f32 0.0, %v9656
      %v9658 = vpop.f32.mrb[0].mxu0
      %9659 = vdwg.mxu0
      %v9661 = vsel %vm7250, %v7219, 0
      %9663 = vmatprep.subr.mxu0 0.0
      %9664 = vmatpush1.msra.mxu0 %v335
      %9665 = vmatprep.subr.mxu0 0.0
      %9666 = vmatpush1.msra.mxu0 %v336
      %9667 = vmatprep.subr.mxu0 0.0
      %9668 = vmatpush1.msra.mxu0 0.0
      %9669 = vmatprep.subr.mxu0 0.0
      %9670 = vmatpush1.msra.mxu0 0.0
      %9671 = vmatprep.subr.mxu0 0.0
      %9672 = vmatpush1.msra.mxu0 0.0
      %9673 = vmatprep.subr.mxu0 0.0
      %9674 = vmatpush1.msra.mxu0 0.0
      %9675 = vmatprep.subr.mxu0 0.0
      %9676 = vmatpush1.msra.mxu0 0.0
      %9677 = vmatprep.subr.mxu0 0.0
      %9678 = vmatpush1.msra.mxu0 0.0
      %9679 = vmatprep.subr.mxu0 0.0
      %9680 = vmatpush1.msra.mxu0 0.0
      %9681 = vmatprep.subr.mxu0 0.0
      %9682 = vmatpush1.msra.mxu0 0.0
      %9683 = vmatprep.subr.mxu0 0.0
      %9684 = vmatpush1.msra.mxu0 0.0
      %9685 = vmatprep.subr.mxu0 0.0
      %9686 = vmatpush1.msra.mxu0 0.0
      %9687 = vmatprep.subr.mxu0 0.0
      %9688 = vmatpush1.msra.mxu0 0.0
      %9689 = vmatprep.subr.mxu0 0.0
      %9690 = vmatpush1.msra.mxu0 0.0
      %9691 = vmatprep.subr.mxu0 0.0
      %9692 = vmatpush1.msra.mxu0 0.0
      %9693 = vmatprep.subr.mxu0 0.0
      %9694 = vmatpush1.msra.mxu0 0.0
      %9695 = vmatprep.subr.mxu0 0.0
      %9696 = vmatpush1.msra.mxu0 0.0
      %9697 = vmatprep.subr.mxu0 0.0
      %9698 = vmatpush1.msra.mxu0 0.0
      %9699 = vmatprep.subr.mxu0 0.0
      %9700 = vmatpush1.msra.mxu0 0.0
      %9701 = vmatprep.subr.mxu0 0.0
      %9702 = vmatpush1.msra.mxu0 0.0
      %9703 = vmatprep.subr.mxu0 0.0
      %9704 = vmatpush1.msra.mxu0 0.0
      %9705 = vmatprep.subr.mxu0 0.0
      %9706 = vmatpush1.msra.mxu0 0.0
      %9707 = vmatprep.subr.mxu0 0.0
      %9708 = vmatpush1.msra.mxu0 0.0
      %9709 = vmatprep.subr.mxu0 0.0
      %9710 = vmatpush1.msra.mxu0 0.0
      %9711 = vmatprep.subr.mxu0 0.0
      %9712 = vmatpush1.msra.mxu0 0.0
      %9713 = vmatprep.subr.mxu0 0.0
      %9714 = vmatpush1.msra.mxu0 0.0
      %9715 = vmatprep.subr.mxu0 0.0
      %9716 = vmatpush1.msra.mxu0 0.0
      %9717 = vmatprep.subr.mxu0 0.0
      %9718 = vmatpush1.msra.mxu0 0.0
      %9719 = vmatprep.subr.mxu0 0.0
      %9720 = vmatpush1.msra.mxu0 0.0
      %9721 = vmatprep.subr.mxu0 0.0
      %9722 = vmatpush1.msra.mxu0 0.0
      %9723 = vmatprep.subr.mxu0 0.0
      %9724 = vmatpush1.msra.mxu0 0.0
      %9725 = vmatprep.subr.mxu0 0.0
      %9726 = vmatpush1.msra.mxu0 0.0
      %9727 = vmatprep.mubr.f32.mxu0 0.0
      %9728 = vmatmul.mubr.f32.gmra.mrb[0].mxu0 %v9661
      %v9729 = vpop.f32.mrb[0].mxu0
      %v9730 = vadd.f32 0.0, %v9729
      %v9731 = vpop.f32.mrb[0].mxu0
      %9732 = vdwg.mxu0
      %v9734 = vsel %vm7250, %v7220, 0
      %9736 = vmatprep.subr.mxu0 0.0
      %9737 = vmatpush1.msra.mxu0 %v337
      %9738 = vmatprep.subr.mxu0 0.0
      %9739 = vmatpush1.msra.mxu0 %v338
      %9740 = vmatprep.subr.mxu0 0.0
      %9741 = vmatpush1.msra.mxu0 0.0
      %9742 = vmatprep.subr.mxu0 0.0
      %9743 = vmatpush1.msra.mxu0 0.0
      %9744 = vmatprep.subr.mxu0 0.0
      %9745 = vmatpush1.msra.mxu0 0.0
      %9746 = vmatprep.subr.mxu0 0.0
      %9747 = vmatpush1.msra.mxu0 0.0
      %9748 = vmatprep.subr.mxu0 0.0
      %9749 = vmatpush1.msra.mxu0 0.0
      %9750 = vmatprep.subr.mxu0 0.0
      %9751 = vmatpush1.msra.mxu0 0.0
      %9752 = vmatprep.subr.mxu0 0.0
      %9753 = vmatpush1.msra.mxu0 0.0
      %9754 = vmatprep.subr.mxu0 0.0
      %9755 = vmatpush1.msra.mxu0 0.0
      %9756 = vmatprep.subr.mxu0 0.0
      %9757 = vmatpush1.msra.mxu0 0.0
      %9758 = vmatprep.subr.mxu0 0.0
      %9759 = vmatpush1.msra.mxu0 0.0
      %9760 = vmatprep.subr.mxu0 0.0
      %9761 = vmatpush1.msra.mxu0 0.0
      %9762 = vmatprep.subr.mxu0 0.0
      %9763 = vmatpush1.msra.mxu0 0.0
      %9764 = vmatprep.subr.mxu0 0.0
      %9765 = vmatpush1.msra.mxu0 0.0
      %9766 = vmatprep.subr.mxu0 0.0
      %9767 = vmatpush1.msra.mxu0 0.0
      %9768 = vmatprep.subr.mxu0 0.0
      %9769 = vmatpush1.msra.mxu0 0.0
      %9770 = vmatprep.subr.mxu0 0.0
      %9771 = vmatpush1.msra.mxu0 0.0
      %9772 = vmatprep.subr.mxu0 0.0
      %9773 = vmatpush1.msra.mxu0 0.0
      %9774 = vmatprep.subr.mxu0 0.0
      %9775 = vmatpush1.msra.mxu0 0.0
      %9776 = vmatprep.subr.mxu0 0.0
      %9777 = vmatpush1.msra.mxu0 0.0
      %9778 = vmatprep.subr.mxu0 0.0
      %9779 = vmatpush1.msra.mxu0 0.0
      %9780 = vmatprep.subr.mxu0 0.0
      %9781 = vmatpush1.msra.mxu0 0.0
      %9782 = vmatprep.subr.mxu0 0.0
      %9783 = vmatpush1.msra.mxu0 0.0
      %9784 = vmatprep.subr.mxu0 0.0
      %9785 = vmatpush1.msra.mxu0 0.0
      %9786 = vmatprep.subr.mxu0 0.0
      %9787 = vmatpush1.msra.mxu0 0.0
      %9788 = vmatprep.subr.mxu0 0.0
      %9789 = vmatpush1.msra.mxu0 0.0
      %9790 = vmatprep.subr.mxu0 0.0
      %9791 = vmatpush1.msra.mxu0 0.0
      %9792 = vmatprep.subr.mxu0 0.0
      %9793 = vmatpush1.msra.mxu0 0.0
      %9794 = vmatprep.subr.mxu0 0.0
      %9795 = vmatpush1.msra.mxu0 0.0
      %9796 = vmatprep.subr.mxu0 0.0
      %9797 = vmatpush1.msra.mxu0 0.0
      %9798 = vmatprep.subr.mxu0 0.0
      %9799 = vmatpush1.msra.mxu0 0.0
      %9800 = vmatprep.mubr.f32.mxu0 0.0
      %9801 = vmatmul.mubr.f32.gmra.mrb[0].mxu0 %v9734
      %v9802 = vpop.f32.mrb[0].mxu0
      %v9803 = vadd.f32 0.0, %v9802
      %v9804 = vpop.f32.mrb[0].mxu0
      %9805 = vdwg.mxu0
      %v9807 = vsel %vm7250, %v7221, 0
      %9809 = vmatprep.subr.mxu0 0.0
      %9810 = vmatpush1.msra.mxu0 %v339
      %9811 = vmatprep.subr.mxu0 0.0
      %9812 = vmatpush1.msra.mxu0 %v340
      %9813 = vmatprep.subr.mxu0 0.0
      %9814 = vmatpush1.msra.mxu0 0.0
      %9815 = vmatprep.subr.mxu0 0.0
      %9816 = vmatpush1.msra.mxu0 0.0
      %9817 = vmatprep.subr.mxu0 0.0
      %9818 = vmatpush1.msra.mxu0 0.0
      %9819 = vmatprep.subr.mxu0 0.0
      %9820 = vmatpush1.msra.mxu0 0.0
      %9821 = vmatprep.subr.mxu0 0.0
      %9822 = vmatpush1.msra.mxu0 0.0
      %9823 = vmatprep.subr.mxu0 0.0
      %9824 = vmatpush1.msra.mxu0 0.0
      %9825 = vmatprep.subr.mxu0 0.0
      %9826 = vmatpush1.msra.mxu0 0.0
      %9827 = vmatprep.subr.mxu0 0.0
      %9828 = vmatpush1.msra.mxu0 0.0
      %9829 = vmatprep.subr.mxu0 0.0
      %9830 = vmatpush1.msra.mxu0 0.0
      %9831 = vmatprep.subr.mxu0 0.0
      %9832 = vmatpush1.msra.mxu0 0.0
      %9833 = vmatprep.subr.mxu0 0.0
      %9834 = vmatpush1.msra.mxu0 0.0
      %9835 = vmatprep.subr.mxu0 0.0
      %9836 = vmatpush1.msra.mxu0 0.0
      %9837 = vmatprep.subr.mxu0 0.0
      %9838 = vmatpush1.msra.mxu0 0.0
      %9839 = vmatprep.subr.mxu0 0.0
      %9840 = vmatpush1.msra.mxu0 0.0
      %9841 = vmatprep.subr.mxu0 0.0
      %9842 = vmatpush1.msra.mxu0 0.0
      %9843 = vmatprep.subr.mxu0 0.0
      %9844 = vmatpush1.msra.mxu0 0.0
      %9845 = vmatprep.subr.mxu0 0.0
      %9846 = vmatpush1.msra.mxu0 0.0
      %9847 = vmatprep.subr.mxu0 0.0
      %9848 = vmatpush1.msra.mxu0 0.0
      %9849 = vmatprep.subr.mxu0 0.0
      %9850 = vmatpush1.msra.mxu0 0.0
      %9851 = vmatprep.subr.mxu0 0.0
      %9852 = vmatpush1.msra.mxu0 0.0
      %9853 = vmatprep.subr.mxu0 0.0
      %9854 = vmatpush1.msra.mxu0 0.0
      %9855 = vmatprep.subr.mxu0 0.0
      %9856 = vmatpush1.msra.mxu0 0.0
      %9857 = vmatprep.subr.mxu0 0.0
      %9858 = vmatpush1.msra.mxu0 0.0
      %9859 = vmatprep.subr.mxu0 0.0
      %9860 = vmatpush1.msra.mxu0 0.0
      %9861 = vmatprep.subr.mxu0 0.0
      %9862 = vmatpush1.msra.mxu0 0.0
      %9863 = vmatprep.subr.mxu0 0.0
      %9864 = vmatpush1.msra.mxu0 0.0
      %9865 = vmatprep.subr.mxu0 0.0
      %9866 = vmatpush1.msra.mxu0 0.0
      %9867 = vmatprep.subr.mxu0 0.0
      %9868 = vmatpush1.msra.mxu0 0.0
      %9869 = vmatprep.subr.mxu0 0.0
      %9870 = vmatpush1.msra.mxu0 0.0
      %9871 = vmatprep.subr.mxu0 0.0
      %9872 = vmatpush1.msra.mxu0 0.0
      %9873 = vmatprep.mubr.f32.mxu0 0.0
      %9874 = vmatmul.mubr.f32.gmra.mrb[0].mxu0 %v9807
      %v9875 = vpop.f32.mrb[0].mxu0
      %v9876 = vadd.f32 0.0, %v9875
      %v9877 = vpop.f32.mrb[0].mxu0
      %9878 = vdwg.mxu0
      %v9880 = vsel %vm7250, %v7222, 0
      %9882 = vmatprep.subr.mxu0 0.0
      %9883 = vmatpush1.msra.mxu0 %v341
      %9884 = vmatprep.subr.mxu0 0.0
      %9885 = vmatpush1.msra.mxu0 %v342
      %9886 = vmatprep.subr.mxu0 0.0
      %9887 = vmatpush1.msra.mxu0 0.0
      %9888 = vmatprep.subr.mxu0 0.0
      %9889 = vmatpush1.msra.mxu0 0.0
      %9890 = vmatprep.subr.mxu0 0.0
      %9891 = vmatpush1.msra.mxu0 0.0
      %9892 = vmatprep.subr.mxu0 0.0
      %9893 = vmatpush1.msra.mxu0 0.0
      %9894 = vmatprep.subr.mxu0 0.0
      %9895 = vmatpush1.msra.mxu0 0.0
      %9896 = vmatprep.subr.mxu0 0.0
      %9897 = vmatpush1.msra.mxu0 0.0
      %9898 = vmatprep.subr.mxu0 0.0
      %9899 = vmatpush1.msra.mxu0 0.0
      %9900 = vmatprep.subr.mxu0 0.0
      %9901 = vmatpush1.msra.mxu0 0.0
      %9902 = vmatprep.subr.mxu0 0.0
      %9903 = vmatpush1.msra.mxu0 0.0
      %9904 = vmatprep.subr.mxu0 0.0
      %9905 = vmatpush1.msra.mxu0 0.0
      %9906 = vmatprep.subr.mxu0 0.0
      %9907 = vmatpush1.msra.mxu0 0.0
      %9908 = vmatprep.subr.mxu0 0.0
      %9909 = vmatpush1.msra.mxu0 0.0
      %9910 = vmatprep.subr.mxu0 0.0
      %9911 = vmatpush1.msra.mxu0 0.0
      %9912 = vmatprep.subr.mxu0 0.0
      %9913 = vmatpush1.msra.mxu0 0.0
      %9914 = vmatprep.subr.mxu0 0.0
      %9915 = vmatpush1.msra.mxu0 0.0
      %9916 = vmatprep.subr.mxu0 0.0
      %9917 = vmatpush1.msra.mxu0 0.0
      %9918 = vmatprep.subr.mxu0 0.0
      %9919 = vmatpush1.msra.mxu0 0.0
      %9920 = vmatprep.subr.mxu0 0.0
      %9921 = vmatpush1.msra.mxu0 0.0
      %9922 = vmatprep.subr.mxu0 0.0
      %9923 = vmatpush1.msra.mxu0 0.0
      %9924 = vmatprep.subr.mxu0 0.0
      %9925 = vmatpush1.msra.mxu0 0.0
      %9926 = vmatprep.subr.mxu0 0.0
      %9927 = vmatpush1.msra.mxu0 0.0
      %9928 = vmatprep.subr.mxu0 0.0
      %9929 = vmatpush1.msra.mxu0 0.0
      %9930 = vmatprep.subr.mxu0 0.0
      %9931 = vmatpush1.msra.mxu0 0.0
      %9932 = vmatprep.subr.mxu0 0.0
      %9933 = vmatpush1.msra.mxu0 0.0
      %9934 = vmatprep.subr.mxu0 0.0
      %9935 = vmatpush1.msra.mxu0 0.0
      %9936 = vmatprep.subr.mxu0 0.0
      %9937 = vmatpush1.msra.mxu0 0.0
      %9938 = vmatprep.subr.mxu0 0.0
      %9939 = vmatpush1.msra.mxu0 0.0
      %9940 = vmatprep.subr.mxu0 0.0
      %9941 = vmatpush1.msra.mxu0 0.0
      %9942 = vmatprep.subr.mxu0 0.0
      %9943 = vmatpush1.msra.mxu0 0.0
      %9944 = vmatprep.subr.mxu0 0.0
      %9945 = vmatpush1.msra.mxu0 0.0
      %9946 = vmatprep.mubr.f32.mxu0 0.0
      %9947 = vmatmul.mubr.f32.gmra.mrb[0].mxu0 %v9880
      %v9948 = vpop.f32.mrb[0].mxu0
      %v9949 = vadd.f32 0.0, %v9948
      %v9950 = vpop.f32.mrb[0].mxu0
      %9951 = vdwg.mxu0
      %v9953 = vsel %vm7250, %v7223, 0
      %9955 = vmatprep.subr.mxu0 0.0
      %9956 = vmatpush1.msra.mxu0 %v343
      %9957 = vmatprep.subr.mxu0 0.0
      %9958 = vmatpush1.msra.mxu0 %v344
      %9959 = vmatprep.subr.mxu0 0.0
      %9960 = vmatpush1.msra.mxu0 0.0
      %9961 = vmatprep.subr.mxu0 0.0
      %9962 = vmatpush1.msra.mxu0 0.0
      %9963 = vmatprep.subr.mxu0 0.0
      %9964 = vmatpush1.msra.mxu0 0.0
      %9965 = vmatprep.subr.mxu0 0.0
      %9966 = vmatpush1.msra.mxu0 0.0
      %9967 = vmatprep.subr.mxu0 0.0
      %9968 = vmatpush1.msra.mxu0 0.0
      %9969 = vmatprep.subr.mxu0 0.0
      %9970 = vmatpush1.msra.mxu0 0.0
      %9971 = vmatprep.subr.mxu0 0.0
      %9972 = vmatpush1.msra.mxu0 0.0
      %9973 = vmatprep.subr.mxu0 0.0
      %9974 = vmatpush1.msra.mxu0 0.0
      %9975 = vmatprep.subr.mxu0 0.0
      %9976 = vmatpush1.msra.mxu0 0.0
      %9977 = vmatprep.subr.mxu0 0.0
      %9978 = vmatpush1.msra.mxu0 0.0
      %9979 = vmatprep.subr.mxu0 0.0
      %9980 = vmatpush1.msra.mxu0 0.0
      %9981 = vmatprep.subr.mxu0 0.0
      %9982 = vmatpush1.msra.mxu0 0.0
      %9983 = vmatprep.subr.mxu0 0.0
      %9984 = vmatpush1.msra.mxu0 0.0
      %9985 = vmatprep.subr.mxu0 0.0
      %9986 = vmatpush1.msra.mxu0 0.0
      %9987 = vmatprep.subr.mxu0 0.0
      %9988 = vmatpush1.msra.mxu0 0.0
      %9989 = vmatprep.subr.mxu0 0.0
      %9990 = vmatpush1.msra.mxu0 0.0
      %9991 = vmatprep.subr.mxu0 0.0
      %9992 = vmatpush1.msra.mxu0 0.0
      %9993 = vmatprep.subr.mxu0 0.0
      %9994 = vmatpush1.msra.mxu0 0.0
      %9995 = vmatprep.subr.mxu0 0.0
      %9996 = vmatpush1.msra.mxu0 0.0
      %9997 = vmatprep.subr.mxu0 0.0
      %9998 = vmatpush1.msra.mxu0 0.0
      %9999 = vmatprep.subr.mxu0 0.0
      %10000 = vmatpush1.msra.mxu0 0.0
      %10001 = vmatprep.subr.mxu0 0.0
      %10002 = vmatpush1.msra.mxu0 0.0
      %10003 = vmatprep.subr.mxu0 0.0
      %10004 = vmatpush1.msra.mxu0 0.0
      %10005 = vmatprep.subr.mxu0 0.0
      %10006 = vmatpush1.msra.mxu0 0.0
      %10007 = vmatprep.subr.mxu0 0.0
      %10008 = vmatpush1.msra.mxu0 0.0
      %10009 = vmatprep.subr.mxu0 0.0
      %10010 = vmatpush1.msra.mxu0 0.0
      %10011 = vmatprep.subr.mxu0 0.0
      %10012 = vmatpush1.msra.mxu0 0.0
      %10013 = vmatprep.subr.mxu0 0.0
      %10014 = vmatpush1.msra.mxu0 0.0
      %10015 = vmatprep.subr.mxu0 0.0
      %10016 = vmatpush1.msra.mxu0 0.0
      %10017 = vmatprep.subr.mxu0 0.0
      %10018 = vmatpush1.msra.mxu0 0.0
      %10019 = vmatprep.mubr.f32.mxu0 0.0
      %10020 = vmatmul.mubr.f32.gmra.mrb[0].mxu0 %v9953
      %v10021 = vpop.f32.mrb[0].mxu0
      %v10022 = vadd.f32 0.0, %v10021
      %v10023 = vpop.f32.mrb[0].mxu0
      %10024 = vdwg.mxu0
      %v10026 = vsel %vm7250, %v7224, 0
      %10028 = vmatprep.subr.mxu0 0.0
      %10029 = vmatpush1.msra.mxu0 %v345
      %10030 = vmatprep.subr.mxu0 0.0
      %10031 = vmatpush1.msra.mxu0 %v346
      %10032 = vmatprep.subr.mxu0 0.0
      %10033 = vmatpush1.msra.mxu0 0.0
      %10034 = vmatprep.subr.mxu0 0.0
      %10035 = vmatpush1.msra.mxu0 0.0
      %10036 = vmatprep.subr.mxu0 0.0
      %10037 = vmatpush1.msra.mxu0 0.0
      %10038 = vmatprep.subr.mxu0 0.0
      %10039 = vmatpush1.msra.mxu0 0.0
      %10040 = vmatprep.subr.mxu0 0.0
      %10041 = vmatpush1.msra.mxu0 0.0
      %10042 = vmatprep.subr.mxu0 0.0
      %10043 = vmatpush1.msra.mxu0 0.0
      %10044 = vmatprep.subr.mxu0 0.0
      %10045 = vmatpush1.msra.mxu0 0.0
      %10046 = vmatprep.subr.mxu0 0.0
      %10047 = vmatpush1.msra.mxu0 0.0
      %10048 = vmatprep.subr.mxu0 0.0
      %10049 = vmatpush1.msra.mxu0 0.0
      %10050 = vmatprep.subr.mxu0 0.0
      %10051 = vmatpush1.msra.mxu0 0.0
      %10052 = vmatprep.subr.mxu0 0.0
      %10053 = vmatpush1.msra.mxu0 0.0
      %10054 = vmatprep.subr.mxu0 0.0
      %10055 = vmatpush1.msra.mxu0 0.0
      %10056 = vmatprep.subr.mxu0 0.0
      %10057 = vmatpush1.msra.mxu0 0.0
      %10058 = vmatprep.subr.mxu0 0.0
      %10059 = vmatpush1.msra.mxu0 0.0
      %10060 = vmatprep.subr.mxu0 0.0
      %10061 = vmatpush1.msra.mxu0 0.0
      %10062 = vmatprep.subr.mxu0 0.0
      %10063 = vmatpush1.msra.mxu0 0.0
      %10064 = vmatprep.subr.mxu0 0.0
      %10065 = vmatpush1.msra.mxu0 0.0
      %10066 = vmatprep.subr.mxu0 0.0
      %10067 = vmatpush1.msra.mxu0 0.0
      %10068 = vmatprep.subr.mxu0 0.0
      %10069 = vmatpush1.msra.mxu0 0.0
      %10070 = vmatprep.subr.mxu0 0.0
      %10071 = vmatpush1.msra.mxu0 0.0
      %10072 = vmatprep.subr.mxu0 0.0
      %10073 = vmatpush1.msra.mxu0 0.0
      %10074 = vmatprep.subr.mxu0 0.0
      %10075 = vmatpush1.msra.mxu0 0.0
      %10076 = vmatprep.subr.mxu0 0.0
      %10077 = vmatpush1.msra.mxu0 0.0
      %10078 = vmatprep.subr.mxu0 0.0
      %10079 = vmatpush1.msra.mxu0 0.0
      %10080 = vmatprep.subr.mxu0 0.0
      %10081 = vmatpush1.msra.mxu0 0.0
      %10082 = vmatprep.subr.mxu0 0.0
      %10083 = vmatpush1.msra.mxu0 0.0
      %10084 = vmatprep.subr.mxu0 0.0
      %10085 = vmatpush1.msra.mxu0 0.0
      %10086 = vmatprep.subr.mxu0 0.0
      %10087 = vmatpush1.msra.mxu0 0.0
      %10088 = vmatprep.subr.mxu0 0.0
      %10089 = vmatpush1.msra.mxu0 0.0
      %10090 = vmatprep.subr.mxu0 0.0
      %10091 = vmatpush1.msra.mxu0 0.0
      %10092 = vmatprep.mubr.f32.mxu0 0.0
      %10093 = vmatmul.mubr.f32.gmra.mrb[0].mxu0 %v10026
      %v10094 = vpop.f32.mrb[0].mxu0
      %v10095 = vadd.f32 0.0, %v10094
      %v10096 = vpop.f32.mrb[0].mxu0
      %10097 = vdwg.mxu0
      %v10099 = vsel %vm7250, %v7225, 0
      %10101 = vmatprep.subr.mxu0 0.0
      %10102 = vmatpush1.msra.mxu0 %v347
      %10103 = vmatprep.subr.mxu0 0.0
      %10104 = vmatpush1.msra.mxu0 %v348
      %10105 = vmatprep.subr.mxu0 0.0
      %10106 = vmatpush1.msra.mxu0 0.0
      %10107 = vmatprep.subr.mxu0 0.0
      %10108 = vmatpush1.msra.mxu0 0.0
      %10109 = vmatprep.subr.mxu0 0.0
      %10110 = vmatpush1.msra.mxu0 0.0
      %10111 = vmatprep.subr.mxu0 0.0
      %10112 = vmatpush1.msra.mxu0 0.0
      %10113 = vmatprep.subr.mxu0 0.0
      %10114 = vmatpush1.msra.mxu0 0.0
      %10115 = vmatprep.subr.mxu0 0.0
      %10116 = vmatpush1.msra.mxu0 0.0
      %10117 = vmatprep.subr.mxu0 0.0
      %10118 = vmatpush1.msra.mxu0 0.0
      %10119 = vmatprep.subr.mxu0 0.0
      %10120 = vmatpush1.msra.mxu0 0.0
      %10121 = vmatprep.subr.mxu0 0.0
      %10122 = vmatpush1.msra.mxu0 0.0
      %10123 = vmatprep.subr.mxu0 0.0
      %10124 = vmatpush1.msra.mxu0 0.0
      %10125 = vmatprep.subr.mxu0 0.0
      %10126 = vmatpush1.msra.mxu0 0.0
      %10127 = vmatprep.subr.mxu0 0.0
      %10128 = vmatpush1.msra.mxu0 0.0
      %10129 = vmatprep.subr.mxu0 0.0
      %10130 = vmatpush1.msra.mxu0 0.0
      %10131 = vmatprep.subr.mxu0 0.0
      %10132 = vmatpush1.msra.mxu0 0.0
      %10133 = vmatprep.subr.mxu0 0.0
      %10134 = vmatpush1.msra.mxu0 0.0
      %10135 = vmatprep.subr.mxu0 0.0
      %10136 = vmatpush1.msra.mxu0 0.0
      %10137 = vmatprep.subr.mxu0 0.0
      %10138 = vmatpush1.msra.mxu0 0.0
      %10139 = vmatprep.subr.mxu0 0.0
      %10140 = vmatpush1.msra.mxu0 0.0
      %10141 = vmatprep.subr.mxu0 0.0
      %10142 = vmatpush1.msra.mxu0 0.0
      %10143 = vmatprep.subr.mxu0 0.0
      %10144 = vmatpush1.msra.mxu0 0.0
      %10145 = vmatprep.subr.mxu0 0.0
      %10146 = vmatpush1.msra.mxu0 0.0
      %10147 = vmatprep.subr.mxu0 0.0
      %10148 = vmatpush1.msra.mxu0 0.0
      %10149 = vmatprep.subr.mxu0 0.0
      %10150 = vmatpush1.msra.mxu0 0.0
      %10151 = vmatprep.subr.mxu0 0.0
      %10152 = vmatpush1.msra.mxu0 0.0
      %10153 = vmatprep.subr.mxu0 0.0
      %10154 = vmatpush1.msra.mxu0 0.0
      %10155 = vmatprep.subr.mxu0 0.0
      %10156 = vmatpush1.msra.mxu0 0.0
      %10157 = vmatprep.subr.mxu0 0.0
      %10158 = vmatpush1.msra.mxu0 0.0
      %10159 = vmatprep.subr.mxu0 0.0
      %10160 = vmatpush1.msra.mxu0 0.0
      %10161 = vmatprep.subr.mxu0 0.0
      %10162 = vmatpush1.msra.mxu0 0.0
      %10163 = vmatprep.subr.mxu0 0.0
      %10164 = vmatpush1.msra.mxu0 0.0
      %10165 = vmatprep.mubr.f32.mxu0 0.0
      %10166 = vmatmul.mubr.f32.gmra.mrb[0].mxu0 %v10099
      %v10167 = vpop.f32.mrb[0].mxu0
      %v10168 = vadd.f32 0.0, %v10167
      %v10169 = vpop.f32.mrb[0].mxu0
      %10170 = vdwg.mxu0
      %v10172 = vsel %vm7250, %v7226, 0
      %10174 = vmatprep.subr.mxu0 0.0
      %10175 = vmatpush1.msra.mxu0 %v349
      %10176 = vmatprep.subr.mxu0 0.0
      %10177 = vmatpush1.msra.mxu0 %v350
      %10178 = vmatprep.subr.mxu0 0.0
      %10179 = vmatpush1.msra.mxu0 0.0
      %10180 = vmatprep.subr.mxu0 0.0
      %10181 = vmatpush1.msra.mxu0 0.0
      %10182 = vmatprep.subr.mxu0 0.0
      %10183 = vmatpush1.msra.mxu0 0.0
      %10184 = vmatprep.subr.mxu0 0.0
      %10185 = vmatpush1.msra.mxu0 0.0
      %10186 = vmatprep.subr.mxu0 0.0
      %10187 = vmatpush1.msra.mxu0 0.0
      %10188 = vmatprep.subr.mxu0 0.0
      %10189 = vmatpush1.msra.mxu0 0.0
      %10190 = vmatprep.subr.mxu0 0.0
      %10191 = vmatpush1.msra.mxu0 0.0
      %10192 = vmatprep.subr.mxu0 0.0
      %10193 = vmatpush1.msra.mxu0 0.0
      %10194 = vmatprep.subr.mxu0 0.0
      %10195 = vmatpush1.msra.mxu0 0.0
      %10196 = vmatprep.subr.mxu0 0.0
      %10197 = vmatpush1.msra.mxu0 0.0
      %10198 = vmatprep.subr.mxu0 0.0
      %10199 = vmatpush1.msra.mxu0 0.0
      %10200 = vmatprep.subr.mxu0 0.0
      %10201 = vmatpush1.msra.mxu0 0.0
      %10202 = vmatprep.subr.mxu0 0.0
      %10203 = vmatpush1.msra.mxu0 0.0
      %10204 = vmatprep.subr.mxu0 0.0
      %10205 = vmatpush1.msra.mxu0 0.0
      %10206 = vmatprep.subr.mxu0 0.0
      %10207 = vmatpush1.msra.mxu0 0.0
      %10208 = vmatprep.subr.mxu0 0.0
      %10209 = vmatpush1.msra.mxu0 0.0
      %10210 = vmatprep.subr.mxu0 0.0
      %10211 = vmatpush1.msra.mxu0 0.0
      %10212 = vmatprep.subr.mxu0 0.0
      %10213 = vmatpush1.msra.mxu0 0.0
      %10214 = vmatprep.subr.mxu0 0.0
      %10215 = vmatpush1.msra.mxu0 0.0
      %10216 = vmatprep.subr.mxu0 0.0
      %10217 = vmatpush1.msra.mxu0 0.0
      %10218 = vmatprep.subr.mxu0 0.0
      %10219 = vmatpush1.msra.mxu0 0.0
      %10220 = vmatprep.subr.mxu0 0.0
      %10221 = vmatpush1.msra.mxu0 0.0
      %10222 = vmatprep.subr.mxu0 0.0
      %10223 = vmatpush1.msra.mxu0 0.0
      %10224 = vmatprep.subr.mxu0 0.0
      %10225 = vmatpush1.msra.mxu0 0.0
      %10226 = vmatprep.subr.mxu0 0.0
      %10227 = vmatpush1.msra.mxu0 0.0
      %10228 = vmatprep.subr.mxu0 0.0
      %10229 = vmatpush1.msra.mxu0 0.0
      %10230 = vmatprep.subr.mxu0 0.0
      %10231 = vmatpush1.msra.mxu0 0.0
      %10232 = vmatprep.subr.mxu0 0.0
      %10233 = vmatpush1.msra.mxu0 0.0
      %10234 = vmatprep.subr.mxu0 0.0
      %10235 = vmatpush1.msra.mxu0 0.0
      %10236 = vmatprep.subr.mxu0 0.0
      %10237 = vmatpush1.msra.mxu0 0.0
      %10238 = vmatprep.mubr.f32.mxu0 0.0
      %10239 = vmatmul.mubr.f32.gmra.mrb[0].mxu0 %v10172
      %v10240 = vpop.f32.mrb[0].mxu0
      %v10241 = vadd.f32 0.0, %v10240
      %v10242 = vpop.f32.mrb[0].mxu0
      %10243 = vdwg.mxu0
      %v10245 = vsel %vm7250, %v7227, 0
      %10247 = vmatprep.subr.mxu0 0.0
      %10248 = vmatpush1.msra.mxu0 %v351
      %10249 = vmatprep.subr.mxu0 0.0
      %10250 = vmatpush1.msra.mxu0 %v352
      %10251 = vmatprep.subr.mxu0 0.0
      %10252 = vmatpush1.msra.mxu0 0.0
      %10253 = vmatprep.subr.mxu0 0.0
      %10254 = vmatpush1.msra.mxu0 0.0
      %10255 = vmatprep.subr.mxu0 0.0
      %10256 = vmatpush1.msra.mxu0 0.0
      %10257 = vmatprep.subr.mxu0 0.0
      %10258 = vmatpush1.msra.mxu0 0.0
      %10259 = vmatprep.subr.mxu0 0.0
      %10260 = vmatpush1.msra.mxu0 0.0
      %10261 = vmatprep.subr.mxu0 0.0
      %10262 = vmatpush1.msra.mxu0 0.0
      %10263 = vmatprep.subr.mxu0 0.0
      %10264 = vmatpush1.msra.mxu0 0.0
      %10265 = vmatprep.subr.mxu0 0.0
      %10266 = vmatpush1.msra.mxu0 0.0
      %10267 = vmatprep.subr.mxu0 0.0
      %10268 = vmatpush1.msra.mxu0 0.0
      %10269 = vmatprep.subr.mxu0 0.0
      %10270 = vmatpush1.msra.mxu0 0.0
      %10271 = vmatprep.subr.mxu0 0.0
      %10272 = vmatpush1.msra.mxu0 0.0
      %10273 = vmatprep.subr.mxu0 0.0
      %10274 = vmatpush1.msra.mxu0 0.0
      %10275 = vmatprep.subr.mxu0 0.0
      %10276 = vmatpush1.msra.mxu0 0.0
      %10277 = vmatprep.subr.mxu0 0.0
      %10278 = vmatpush1.msra.mxu0 0.0
      %10279 = vmatprep.subr.mxu0 0.0
      %10280 = vmatpush1.msra.mxu0 0.0
      %10281 = vmatprep.subr.mxu0 0.0
      %10282 = vmatpush1.msra.mxu0 0.0
      %10283 = vmatprep.subr.mxu0 0.0
      %10284 = vmatpush1.msra.mxu0 0.0
      %10285 = vmatprep.subr.mxu0 0.0
      %10286 = vmatpush1.msra.mxu0 0.0
      %10287 = vmatprep.subr.mxu0 0.0
      %10288 = vmatpush1.msra.mxu0 0.0
      %10289 = vmatprep.subr.mxu0 0.0
      %10290 = vmatpush1.msra.mxu0 0.0
      %10291 = vmatprep.subr.mxu0 0.0
      %10292 = vmatpush1.msra.mxu0 0.0
      %10293 = vmatprep.subr.mxu0 0.0
      %10294 = vmatpush1.msra.mxu0 0.0
      %10295 = vmatprep.subr.mxu0 0.0
      %10296 = vmatpush1.msra.mxu0 0.0
      %10297 = vmatprep.subr.mxu0 0.0
      %10298 = vmatpush1.msra.mxu0 0.0
      %10299 = vmatprep.subr.mxu0 0.0
      %10300 = vmatpush1.msra.mxu0 0.0
      %10301 = vmatprep.subr.mxu0 0.0
      %10302 = vmatpush1.msra.mxu0 0.0
      %10303 = vmatprep.subr.mxu0 0.0
      %10304 = vmatpush1.msra.mxu0 0.0
      %10305 = vmatprep.subr.mxu0 0.0
      %10306 = vmatpush1.msra.mxu0 0.0
      %10307 = vmatprep.subr.mxu0 0.0
      %10308 = vmatpush1.msra.mxu0 0.0
      %10309 = vmatprep.subr.mxu0 0.0
      %10310 = vmatpush1.msra.mxu0 0.0
      %10311 = vmatprep.mubr.f32.mxu0 0.0
      %10312 = vmatmul.mubr.f32.gmra.mrb[0].mxu0 %v10245
      %v10313 = vpop.f32.mrb[0].mxu0
      %v10314 = vadd.f32 0.0, %v10313
      %v10315 = vpop.f32.mrb[0].mxu0
      %10316 = vdwg.mxu0
      %v10318 = vsel %vm7250, %v7228, 0
      %10320 = vmatprep.subr.mxu0 0.0
      %10321 = vmatpush1.msra.mxu0 %v353
      %10322 = vmatprep.subr.mxu0 0.0
      %10323 = vmatpush1.msra.mxu0 %v354
      %10324 = vmatprep.subr.mxu0 0.0
      %10325 = vmatpush1.msra.mxu0 0.0
      %10326 = vmatprep.subr.mxu0 0.0
      %10327 = vmatpush1.msra.mxu0 0.0
      %10328 = vmatprep.subr.mxu0 0.0
      %10329 = vmatpush1.msra.mxu0 0.0
      %10330 = vmatprep.subr.mxu0 0.0
      %10331 = vmatpush1.msra.mxu0 0.0
      %10332 = vmatprep.subr.mxu0 0.0
      %10333 = vmatpush1.msra.mxu0 0.0
      %10334 = vmatprep.subr.mxu0 0.0
      %10335 = vmatpush1.msra.mxu0 0.0
      %10336 = vmatprep.subr.mxu0 0.0
      %10337 = vmatpush1.msra.mxu0 0.0
      %10338 = vmatprep.subr.mxu0 0.0
      %10339 = vmatpush1.msra.mxu0 0.0
      %10340 = vmatprep.subr.mxu0 0.0
      %10341 = vmatpush1.msra.mxu0 0.0
      %10342 = vmatprep.subr.mxu0 0.0
      %10343 = vmatpush1.msra.mxu0 0.0
      %10344 = vmatprep.subr.mxu0 0.0
      %10345 = vmatpush1.msra.mxu0 0.0
      %10346 = vmatprep.subr.mxu0 0.0
      %10347 = vmatpush1.msra.mxu0 0.0
      %10348 = vmatprep.subr.mxu0 0.0
      %10349 = vmatpush1.msra.mxu0 0.0
      %10350 = vmatprep.subr.mxu0 0.0
      %10351 = vmatpush1.msra.mxu0 0.0
      %10352 = vmatprep.subr.mxu0 0.0
      %10353 = vmatpush1.msra.mxu0 0.0
      %10354 = vmatprep.subr.mxu0 0.0
      %10355 = vmatpush1.msra.mxu0 0.0
      %10356 = vmatprep.subr.mxu0 0.0
      %10357 = vmatpush1.msra.mxu0 0.0
      %10358 = vmatprep.subr.mxu0 0.0
      %10359 = vmatpush1.msra.mxu0 0.0
      %10360 = vmatprep.subr.mxu0 0.0
      %10361 = vmatpush1.msra.mxu0 0.0
      %10362 = vmatprep.subr.mxu0 0.0
      %10363 = vmatpush1.msra.mxu0 0.0
      %10364 = vmatprep.subr.mxu0 0.0
      %10365 = vmatpush1.msra.mxu0 0.0
      %10366 = vmatprep.subr.mxu0 0.0
      %10367 = vmatpush1.msra.mxu0 0.0
      %10368 = vmatprep.subr.mxu0 0.0
      %10369 = vmatpush1.msra.mxu0 0.0
      %10370 = vmatprep.subr.mxu0 0.0
      %10371 = vmatpush1.msra.mxu0 0.0
      %10372 = vmatprep.subr.mxu0 0.0
      %10373 = vmatpush1.msra.mxu0 0.0
      %10374 = vmatprep.subr.mxu0 0.0
      %10375 = vmatpush1.msra.mxu0 0.0
      %10376 = vmatprep.subr.mxu0 0.0
      %10377 = vmatpush1.msra.mxu0 0.0
      %10378 = vmatprep.subr.mxu0 0.0
      %10379 = vmatpush1.msra.mxu0 0.0
      %10380 = vmatprep.subr.mxu0 0.0
      %10381 = vmatpush1.msra.mxu0 0.0
      %10382 = vmatprep.subr.mxu0 0.0
      %10383 = vmatpush1.msra.mxu0 0.0
      %10384 = vmatprep.mubr.f32.mxu0 0.0
      %10385 = vmatmul.mubr.f32.gmra.mrb[0].mxu0 %v10318
      %v10386 = vpop.f32.mrb[0].mxu0
      %v10387 = vadd.f32 0.0, %v10386
      %v10388 = vpop.f32.mrb[0].mxu0
      %10389 = vdwg.mxu0
      %v10391 = vsel %vm7250, %v7229, 0
      %10393 = vmatprep.subr.mxu0 0.0
      %10394 = vmatpush1.msra.mxu0 %v355
      %10395 = vmatprep.subr.mxu0 0.0
      %10396 = vmatpush1.msra.mxu0 %v356
      %10397 = vmatprep.subr.mxu0 0.0
      %10398 = vmatpush1.msra.mxu0 0.0
      %10399 = vmatprep.subr.mxu0 0.0
      %10400 = vmatpush1.msra.mxu0 0.0
      %10401 = vmatprep.subr.mxu0 0.0
      %10402 = vmatpush1.msra.mxu0 0.0
      %10403 = vmatprep.subr.mxu0 0.0
      %10404 = vmatpush1.msra.mxu0 0.0
      %10405 = vmatprep.subr.mxu0 0.0
      %10406 = vmatpush1.msra.mxu0 0.0
      %10407 = vmatprep.subr.mxu0 0.0
      %10408 = vmatpush1.msra.mxu0 0.0
      %10409 = vmatprep.subr.mxu0 0.0
      %10410 = vmatpush1.msra.mxu0 0.0
      %10411 = vmatprep.subr.mxu0 0.0
      %10412 = vmatpush1.msra.mxu0 0.0
      %10413 = vmatprep.subr.mxu0 0.0
      %10414 = vmatpush1.msra.mxu0 0.0
      %10415 = vmatprep.subr.mxu0 0.0
      %10416 = vmatpush1.msra.mxu0 0.0
      %10417 = vmatprep.subr.mxu0 0.0
      %10418 = vmatpush1.msra.mxu0 0.0
      %10419 = vmatprep.subr.mxu0 0.0
      %10420 = vmatpush1.msra.mxu0 0.0
      %10421 = vmatprep.subr.mxu0 0.0
      %10422 = vmatpush1.msra.mxu0 0.0
      %10423 = vmatprep.subr.mxu0 0.0
      %10424 = vmatpush1.msra.mxu0 0.0
      %10425 = vmatprep.subr.mxu0 0.0
      %10426 = vmatpush1.msra.mxu0 0.0
      %10427 = vmatprep.subr.mxu0 0.0
      %10428 = vmatpush1.msra.mxu0 0.0
      %10429 = vmatprep.subr.mxu0 0.0
      %10430 = vmatpush1.msra.mxu0 0.0
      %10431 = vmatprep.subr.mxu0 0.0
      %10432 = vmatpush1.msra.mxu0 0.0
      %10433 = vmatprep.subr.mxu0 0.0
      %10434 = vmatpush1.msra.mxu0 0.0
      %10435 = vmatprep.subr.mxu0 0.0
      %10436 = vmatpush1.msra.mxu0 0.0
      %10437 = vmatprep.subr.mxu0 0.0
      %10438 = vmatpush1.msra.mxu0 0.0
      %10439 = vmatprep.subr.mxu0 0.0
      %10440 = vmatpush1.msra.mxu0 0.0
      %10441 = vmatprep.subr.mxu0 0.0
      %10442 = vmatpush1.msra.mxu0 0.0
      %10443 = vmatprep.subr.mxu0 0.0
      %10444 = vmatpush1.msra.mxu0 0.0
      %10445 = vmatprep.subr.mxu0 0.0
      %10446 = vmatpush1.msra.mxu0 0.0
      %10447 = vmatprep.subr.mxu0 0.0
      %10448 = vmatpush1.msra.mxu0 0.0
      %10449 = vmatprep.subr.mxu0 0.0
      %10450 = vmatpush1.msra.mxu0 0.0
      %10451 = vmatprep.subr.mxu0 0.0
      %10452 = vmatpush1.msra.mxu0 0.0
      %10453 = vmatprep.subr.mxu0 0.0
      %10454 = vmatpush1.msra.mxu0 0.0
      %10455 = vmatprep.subr.mxu0 0.0
      %10456 = vmatpush1.msra.mxu0 0.0
      %10457 = vmatprep.mubr.f32.mxu0 0.0
      %10458 = vmatmul.mubr.f32.gmra.mrb[0].mxu0 %v10391
      %v10459 = vpop.f32.mrb[0].mxu0
      %v10460 = vadd.f32 0.0, %v10459
      %v10461 = vpop.f32.mrb[0].mxu0
      %10462 = vdwg.mxu0
      %v10464 = vsel %vm7250, %v7230, 0
      %10466 = vmatprep.subr.mxu0 0.0
      %10467 = vmatpush1.msra.mxu0 %v357
      %10468 = vmatprep.subr.mxu0 0.0
      %10469 = vmatpush1.msra.mxu0 %v358
      %10470 = vmatprep.subr.mxu0 0.0
      %10471 = vmatpush1.msra.mxu0 0.0
      %10472 = vmatprep.subr.mxu0 0.0
      %10473 = vmatpush1.msra.mxu0 0.0
      %10474 = vmatprep.subr.mxu0 0.0
      %10475 = vmatpush1.msra.mxu0 0.0
      %10476 = vmatprep.subr.mxu0 0.0
      %10477 = vmatpush1.msra.mxu0 0.0
      %10478 = vmatprep.subr.mxu0 0.0
      %10479 = vmatpush1.msra.mxu0 0.0
      %10480 = vmatprep.subr.mxu0 0.0
      %10481 = vmatpush1.msra.mxu0 0.0
      %10482 = vmatprep.subr.mxu0 0.0
      %10483 = vmatpush1.msra.mxu0 0.0
      %10484 = vmatprep.subr.mxu0 0.0
      %10485 = vmatpush1.msra.mxu0 0.0
      %10486 = vmatprep.subr.mxu0 0.0
      %10487 = vmatpush1.msra.mxu0 0.0
      %10488 = vmatprep.subr.mxu0 0.0
      %10489 = vmatpush1.msra.mxu0 0.0
      %10490 = vmatprep.subr.mxu0 0.0
      %10491 = vmatpush1.msra.mxu0 0.0
      %10492 = vmatprep.subr.mxu0 0.0
      %10493 = vmatpush1.msra.mxu0 0.0
      %10494 = vmatprep.subr.mxu0 0.0
      %10495 = vmatpush1.msra.mxu0 0.0
      %10496 = vmatprep.subr.mxu0 0.0
      %10497 = vmatpush1.msra.mxu0 0.0
      %10498 = vmatprep.subr.mxu0 0.0
      %10499 = vmatpush1.msra.mxu0 0.0
      %10500 = vmatprep.subr.mxu0 0.0
      %10501 = vmatpush1.msra.mxu0 0.0
      %10502 = vmatprep.subr.mxu0 0.0
      %10503 = vmatpush1.msra.mxu0 0.0
      %10504 = vmatprep.subr.mxu0 0.0
      %10505 = vmatpush1.msra.mxu0 0.0
      %10506 = vmatprep.subr.mxu0 0.0
      %10507 = vmatpush1.msra.mxu0 0.0
      %10508 = vmatprep.subr.mxu0 0.0
      %10509 = vmatpush1.msra.mxu0 0.0
      %10510 = vmatprep.subr.mxu0 0.0
      %10511 = vmatpush1.msra.mxu0 0.0
      %10512 = vmatprep.subr.mxu0 0.0
      %10513 = vmatpush1.msra.mxu0 0.0
      %10514 = vmatprep.subr.mxu0 0.0
      %10515 = vmatpush1.msra.mxu0 0.0
      %10516 = vmatprep.subr.mxu0 0.0
      %10517 = vmatpush1.msra.mxu0 0.0
      %10518 = vmatprep.subr.mxu0 0.0
      %10519 = vmatpush1.msra.mxu0 0.0
      %10520 = vmatprep.subr.mxu0 0.0
      %10521 = vmatpush1.msra.mxu0 0.0
      %10522 = vmatprep.subr.mxu0 0.0
      %10523 = vmatpush1.msra.mxu0 0.0
      %10524 = vmatprep.subr.mxu0 0.0
      %10525 = vmatpush1.msra.mxu0 0.0
      %10526 = vmatprep.subr.mxu0 0.0
      %10527 = vmatpush1.msra.mxu0 0.0
      %10528 = vmatprep.subr.mxu0 0.0
      %10529 = vmatpush1.msra.mxu0 0.0
      %10530 = vmatprep.mubr.f32.mxu0 0.0
      %10531 = vmatmul.mubr.f32.gmra.mrb[0].mxu0 %v10464
      %v10532 = vpop.f32.mrb[0].mxu0
      %v10533 = vadd.f32 0.0, %v10532
      %v10534 = vpop.f32.mrb[0].mxu0
      %10535 = vdwg.mxu0
      %v10537 = vsel %vm7250, %v7231, 0
      %10539 = vmatprep.subr.mxu0 0.0
      %10540 = vmatpush1.msra.mxu0 %v359
      %10541 = vmatprep.subr.mxu0 0.0
      %10542 = vmatpush1.msra.mxu0 %v360
      %10543 = vmatprep.subr.mxu0 0.0
      %10544 = vmatpush1.msra.mxu0 0.0
      %10545 = vmatprep.subr.mxu0 0.0
      %10546 = vmatpush1.msra.mxu0 0.0
      %10547 = vmatprep.subr.mxu0 0.0
      %10548 = vmatpush1.msra.mxu0 0.0
      %10549 = vmatprep.subr.mxu0 0.0
      %10550 = vmatpush1.msra.mxu0 0.0
      %10551 = vmatprep.subr.mxu0 0.0
      %10552 = vmatpush1.msra.mxu0 0.0
      %10553 = vmatprep.subr.mxu0 0.0
      %10554 = vmatpush1.msra.mxu0 0.0
      %10555 = vmatprep.subr.mxu0 0.0
      %10556 = vmatpush1.msra.mxu0 0.0
      %10557 = vmatprep.subr.mxu0 0.0
      %10558 = vmatpush1.msra.mxu0 0.0
      %10559 = vmatprep.subr.mxu0 0.0
      %10560 = vmatpush1.msra.mxu0 0.0
      %10561 = vmatprep.subr.mxu0 0.0
      %10562 = vmatpush1.msra.mxu0 0.0
      %10563 = vmatprep.subr.mxu0 0.0
      %10564 = vmatpush1.msra.mxu0 0.0
      %10565 = vmatprep.subr.mxu0 0.0
      %10566 = vmatpush1.msra.mxu0 0.0
      %10567 = vmatprep.subr.mxu0 0.0
      %10568 = vmatpush1.msra.mxu0 0.0
      %10569 = vmatprep.subr.mxu0 0.0
      %10570 = vmatpush1.msra.mxu0 0.0
      %10571 = vmatprep.subr.mxu0 0.0
      %10572 = vmatpush1.msra.mxu0 0.0
      %10573 = vmatprep.subr.mxu0 0.0
      %10574 = vmatpush1.msra.mxu0 0.0
      %10575 = vmatprep.subr.mxu0 0.0
      %10576 = vmatpush1.msra.mxu0 0.0
      %10577 = vmatprep.subr.mxu0 0.0
      %10578 = vmatpush1.msra.mxu0 0.0
      %10579 = vmatprep.subr.mxu0 0.0
      %10580 = vmatpush1.msra.mxu0 0.0
      %10581 = vmatprep.subr.mxu0 0.0
      %10582 = vmatpush1.msra.mxu0 0.0
      %10583 = vmatprep.subr.mxu0 0.0
      %10584 = vmatpush1.msra.mxu0 0.0
      %10585 = vmatprep.subr.mxu0 0.0
      %10586 = vmatpush1.msra.mxu0 0.0
      %10587 = vmatprep.subr.mxu0 0.0
      %10588 = vmatpush1.msra.mxu0 0.0
      %10589 = vmatprep.subr.mxu0 0.0
      %10590 = vmatpush1.msra.mxu0 0.0
      %10591 = vmatprep.subr.mxu0 0.0
      %10592 = vmatpush1.msra.mxu0 0.0
      %10593 = vmatprep.subr.mxu0 0.0
      %10594 = vmatpush1.msra.mxu0 0.0
      %10595 = vmatprep.subr.mxu0 0.0
      %10596 = vmatpush1.msra.mxu0 0.0
      %10597 = vmatprep.subr.mxu0 0.0
      %10598 = vmatpush1.msra.mxu0 0.0
      %10599 = vmatprep.subr.mxu0 0.0
      %10600 = vmatpush1.msra.mxu0 0.0
      %10601 = vmatprep.subr.mxu0 0.0
      %10602 = vmatpush1.msra.mxu0 0.0
      %10603 = vmatprep.mubr.f32.mxu0 0.0
      %10604 = vmatmul.mubr.f32.gmra.mrb[0].mxu0 %v10537
      %v10605 = vpop.f32.mrb[0].mxu0
      %v10606 = vadd.f32 0.0, %v10605
      %v10607 = vpop.f32.mrb[0].mxu0
      %10608 = vdwg.mxu0
      %v10610 = vsel %vm7250, %v7232, 0
      %10612 = vmatprep.subr.mxu0 0.0
      %10613 = vmatpush1.msra.mxu0 %v361
      %10614 = vmatprep.subr.mxu0 0.0
      %10615 = vmatpush1.msra.mxu0 %v362
      %10616 = vmatprep.subr.mxu0 0.0
      %10617 = vmatpush1.msra.mxu0 0.0
      %10618 = vmatprep.subr.mxu0 0.0
      %10619 = vmatpush1.msra.mxu0 0.0
      %10620 = vmatprep.subr.mxu0 0.0
      %10621 = vmatpush1.msra.mxu0 0.0
      %10622 = vmatprep.subr.mxu0 0.0
      %10623 = vmatpush1.msra.mxu0 0.0
      %10624 = vmatprep.subr.mxu0 0.0
      %10625 = vmatpush1.msra.mxu0 0.0
      %10626 = vmatprep.subr.mxu0 0.0
      %10627 = vmatpush1.msra.mxu0 0.0
      %10628 = vmatprep.subr.mxu0 0.0
      %10629 = vmatpush1.msra.mxu0 0.0
      %10630 = vmatprep.subr.mxu0 0.0
      %10631 = vmatpush1.msra.mxu0 0.0
      %10632 = vmatprep.subr.mxu0 0.0
      %10633 = vmatpush1.msra.mxu0 0.0
      %10634 = vmatprep.subr.mxu0 0.0
      %10635 = vmatpush1.msra.mxu0 0.0
      %10636 = vmatprep.subr.mxu0 0.0
      %10637 = vmatpush1.msra.mxu0 0.0
      %10638 = vmatprep.subr.mxu0 0.0
      %10639 = vmatpush1.msra.mxu0 0.0
      %10640 = vmatprep.subr.mxu0 0.0
      %10641 = vmatpush1.msra.mxu0 0.0
      %10642 = vmatprep.subr.mxu0 0.0
      %10643 = vmatpush1.msra.mxu0 0.0
      %10644 = vmatprep.subr.mxu0 0.0
      %10645 = vmatpush1.msra.mxu0 0.0
      %10646 = vmatprep.subr.mxu0 0.0
      %10647 = vmatpush1.msra.mxu0 0.0
      %10648 = vmatprep.subr.mxu0 0.0
      %10649 = vmatpush1.msra.mxu0 0.0
      %10650 = vmatprep.subr.mxu0 0.0
      %10651 = vmatpush1.msra.mxu0 0.0
      %10652 = vmatprep.subr.mxu0 0.0
      %10653 = vmatpush1.msra.mxu0 0.0
      %10654 = vmatprep.subr.mxu0 0.0
      %10655 = vmatpush1.msra.mxu0 0.0
      %10656 = vmatprep.subr.mxu0 0.0
      %10657 = vmatpush1.msra.mxu0 0.0
      %10658 = vmatprep.subr.mxu0 0.0
      %10659 = vmatpush1.msra.mxu0 0.0
      %10660 = vmatprep.subr.mxu0 0.0
      %10661 = vmatpush1.msra.mxu0 0.0
      %10662 = vmatprep.subr.mxu0 0.0
      %10663 = vmatpush1.msra.mxu0 0.0
      %10664 = vmatprep.subr.mxu0 0.0
      %10665 = vmatpush1.msra.mxu0 0.0
      %10666 = vmatprep.subr.mxu0 0.0
      %10667 = vmatpush1.msra.mxu0 0.0
      %10668 = vmatprep.subr.mxu0 0.0
      %10669 = vmatpush1.msra.mxu0 0.0
      %10670 = vmatprep.subr.mxu0 0.0
      %10671 = vmatpush1.msra.mxu0 0.0
      %10672 = vmatprep.subr.mxu0 0.0
      %10673 = vmatpush1.msra.mxu0 0.0
      %10674 = vmatprep.subr.mxu0 0.0
      %10675 = vmatpush1.msra.mxu0 0.0
      %10676 = vmatprep.mubr.f32.mxu0 0.0
      %10677 = vmatmul.mubr.f32.gmra.mrb[0].mxu0 %v10610
      %v10678 = vpop.f32.mrb[0].mxu0
      %v10679 = vadd.f32 0.0, %v10678
      %v10680 = vpop.f32.mrb[0].mxu0
      %10681 = vdwg.mxu0
      %v10683 = vsel %vm7250, %v7233, 0
      %10685 = vmatprep.subr.mxu0 0.0
      %10686 = vmatpush1.msra.mxu0 %v363
      %10687 = vmatprep.subr.mxu0 0.0
      %10688 = vmatpush1.msra.mxu0 %v364
      %10689 = vmatprep.subr.mxu0 0.0
      %10690 = vmatpush1.msra.mxu0 0.0
      %10691 = vmatprep.subr.mxu0 0.0
      %10692 = vmatpush1.msra.mxu0 0.0
      %10693 = vmatprep.subr.mxu0 0.0
      %10694 = vmatpush1.msra.mxu0 0.0
      %10695 = vmatprep.subr.mxu0 0.0
      %10696 = vmatpush1.msra.mxu0 0.0
      %10697 = vmatprep.subr.mxu0 0.0
      %10698 = vmatpush1.msra.mxu0 0.0
      %10699 = vmatprep.subr.mxu0 0.0
      %10700 = vmatpush1.msra.mxu0 0.0
      %10701 = vmatprep.subr.mxu0 0.0
      %10702 = vmatpush1.msra.mxu0 0.0
      %10703 = vmatprep.subr.mxu0 0.0
      %10704 = vmatpush1.msra.mxu0 0.0
      %10705 = vmatprep.subr.mxu0 0.0
      %10706 = vmatpush1.msra.mxu0 0.0
      %10707 = vmatprep.subr.mxu0 0.0
      %10708 = vmatpush1.msra.mxu0 0.0
      %10709 = vmatprep.subr.mxu0 0.0
      %10710 = vmatpush1.msra.mxu0 0.0
      %10711 = vmatprep.subr.mxu0 0.0
      %10712 = vmatpush1.msra.mxu0 0.0
      %10713 = vmatprep.subr.mxu0 0.0
      %10714 = vmatpush1.msra.mxu0 0.0
      %10715 = vmatprep.subr.mxu0 0.0
      %10716 = vmatpush1.msra.mxu0 0.0
      %10717 = vmatprep.subr.mxu0 0.0
      %10718 = vmatpush1.msra.mxu0 0.0
      %10719 = vmatprep.subr.mxu0 0.0
      %10720 = vmatpush1.msra.mxu0 0.0
      %10721 = vmatprep.subr.mxu0 0.0
      %10722 = vmatpush1.msra.mxu0 0.0
      %10723 = vmatprep.subr.mxu0 0.0
      %10724 = vmatpush1.msra.mxu0 0.0
      %10725 = vmatprep.subr.mxu0 0.0
      %10726 = vmatpush1.msra.mxu0 0.0
      %10727 = vmatprep.subr.mxu0 0.0
      %10728 = vmatpush1.msra.mxu0 0.0
      %10729 = vmatprep.subr.mxu0 0.0
      %10730 = vmatpush1.msra.mxu0 0.0
      %10731 = vmatprep.subr.mxu0 0.0
      %10732 = vmatpush1.msra.mxu0 0.0
      %10733 = vmatprep.subr.mxu0 0.0
      %10734 = vmatpush1.msra.mxu0 0.0
      %10735 = vmatprep.subr.mxu0 0.0
      %10736 = vmatpush1.msra.mxu0 0.0
      %10737 = vmatprep.subr.mxu0 0.0
      %10738 = vmatpush1.msra.mxu0 0.0
      %10739 = vmatprep.subr.mxu0 0.0
      %10740 = vmatpush1.msra.mxu0 0.0
      %10741 = vmatprep.subr.mxu0 0.0
      %10742 = vmatpush1.msra.mxu0 0.0
      %10743 = vmatprep.subr.mxu0 0.0
      %10744 = vmatpush1.msra.mxu0 0.0
      %10745 = vmatprep.subr.mxu0 0.0
      %10746 = vmatpush1.msra.mxu0 0.0
      %10747 = vmatprep.subr.mxu0 0.0
      %10748 = vmatpush1.msra.mxu0 0.0
      %10749 = vmatprep.mubr.f32.mxu0 0.0
      %10750 = vmatmul.mubr.f32.gmra.mrb[0].mxu0 %v10683
      %v10751 = vpop.f32.mrb[0].mxu0
      %v10752 = vadd.f32 0.0, %v10751
      %v10753 = vpop.f32.mrb[0].mxu0
      %10754 = vdwg.mxu0
      %v10756 = vsel %vm7250, %v7234, 0
      %10758 = vmatprep.subr.mxu0 0.0
      %10759 = vmatpush1.msra.mxu0 %v365
      %10760 = vmatprep.subr.mxu0 0.0
      %10761 = vmatpush1.msra.mxu0 %v366
      %10762 = vmatprep.subr.mxu0 0.0
      %10763 = vmatpush1.msra.mxu0 0.0
      %10764 = vmatprep.subr.mxu0 0.0
      %10765 = vmatpush1.msra.mxu0 0.0
      %10766 = vmatprep.subr.mxu0 0.0
      %10767 = vmatpush1.msra.mxu0 0.0
      %10768 = vmatprep.subr.mxu0 0.0
      %10769 = vmatpush1.msra.mxu0 0.0
      %10770 = vmatprep.subr.mxu0 0.0
      %10771 = vmatpush1.msra.mxu0 0.0
      %10772 = vmatprep.subr.mxu0 0.0
      %10773 = vmatpush1.msra.mxu0 0.0
      %10774 = vmatprep.subr.mxu0 0.0
      %10775 = vmatpush1.msra.mxu0 0.0
      %10776 = vmatprep.subr.mxu0 0.0
      %10777 = vmatpush1.msra.mxu0 0.0
      %10778 = vmatprep.subr.mxu0 0.0
      %10779 = vmatpush1.msra.mxu0 0.0
      %10780 = vmatprep.subr.mxu0 0.0
      %10781 = vmatpush1.msra.mxu0 0.0
      %10782 = vmatprep.subr.mxu0 0.0
      %10783 = vmatpush1.msra.mxu0 0.0
      %10784 = vmatprep.subr.mxu0 0.0
      %10785 = vmatpush1.msra.mxu0 0.0
      %10786 = vmatprep.subr.mxu0 0.0
      %10787 = vmatpush1.msra.mxu0 0.0
      %10788 = vmatprep.subr.mxu0 0.0
      %10789 = vmatpush1.msra.mxu0 0.0
      %10790 = vmatprep.subr.mxu0 0.0
      %10791 = vmatpush1.msra.mxu0 0.0
      %10792 = vmatprep.subr.mxu0 0.0
      %10793 = vmatpush1.msra.mxu0 0.0
      %10794 = vmatprep.subr.mxu0 0.0
      %10795 = vmatpush1.msra.mxu0 0.0
      %10796 = vmatprep.subr.mxu0 0.0
      %10797 = vmatpush1.msra.mxu0 0.0
      %10798 = vmatprep.subr.mxu0 0.0
      %10799 = vmatpush1.msra.mxu0 0.0
      %10800 = vmatprep.subr.mxu0 0.0
      %10801 = vmatpush1.msra.mxu0 0.0
      %10802 = vmatprep.subr.mxu0 0.0
      %10803 = vmatpush1.msra.mxu0 0.0
      %10804 = vmatprep.subr.mxu0 0.0
      %10805 = vmatpush1.msra.mxu0 0.0
      %10806 = vmatprep.subr.mxu0 0.0
      %10807 = vmatpush1.msra.mxu0 0.0
      %10808 = vmatprep.subr.mxu0 0.0
      %10809 = vmatpush1.msra.mxu0 0.0
      %10810 = vmatprep.subr.mxu0 0.0
      %10811 = vmatpush1.msra.mxu0 0.0
      %10812 = vmatprep.subr.mxu0 0.0
      %10813 = vmatpush1.msra.mxu0 0.0
      %10814 = vmatprep.subr.mxu0 0.0
      %10815 = vmatpush1.msra.mxu0 0.0
      %10816 = vmatprep.subr.mxu0 0.0
      %10817 = vmatpush1.msra.mxu0 0.0
      %10818 = vmatprep.subr.mxu0 0.0
      %10819 = vmatpush1.msra.mxu0 0.0
      %10820 = vmatprep.subr.mxu0 0.0
      %10821 = vmatpush1.msra.mxu0 0.0
      %10822 = vmatprep.mubr.f32.mxu0 0.0
      %10823 = vmatmul.mubr.f32.gmra.mrb[0].mxu0 %v10756
      %v10824 = vpop.f32.mrb[0].mxu0
      %v10825 = vadd.f32 0.0, %v10824
      %v10826 = vpop.f32.mrb[0].mxu0
      %10827 = vdwg.mxu0
      %v10829 = vsel %vm7250, %v7235, 0
      %10831 = vmatprep.subr.mxu0 0.0
      %10832 = vmatpush1.msra.mxu0 %v367
      %10833 = vmatprep.subr.mxu0 0.0
      %10834 = vmatpush1.msra.mxu0 %v368
      %10835 = vmatprep.subr.mxu0 0.0
      %10836 = vmatpush1.msra.mxu0 0.0
      %10837 = vmatprep.subr.mxu0 0.0
      %10838 = vmatpush1.msra.mxu0 0.0
      %10839 = vmatprep.subr.mxu0 0.0
      %10840 = vmatpush1.msra.mxu0 0.0
      %10841 = vmatprep.subr.mxu0 0.0
      %10842 = vmatpush1.msra.mxu0 0.0
      %10843 = vmatprep.subr.mxu0 0.0
      %10844 = vmatpush1.msra.mxu0 0.0
      %10845 = vmatprep.subr.mxu0 0.0
      %10846 = vmatpush1.msra.mxu0 0.0
      %10847 = vmatprep.subr.mxu0 0.0
      %10848 = vmatpush1.msra.mxu0 0.0
      %10849 = vmatprep.subr.mxu0 0.0
      %10850 = vmatpush1.msra.mxu0 0.0
      %10851 = vmatprep.subr.mxu0 0.0
      %10852 = vmatpush1.msra.mxu0 0.0
      %10853 = vmatprep.subr.mxu0 0.0
      %10854 = vmatpush1.msra.mxu0 0.0
      %10855 = vmatprep.subr.mxu0 0.0
      %10856 = vmatpush1.msra.mxu0 0.0
      %10857 = vmatprep.subr.mxu0 0.0
      %10858 = vmatpush1.msra.mxu0 0.0
      %10859 = vmatprep.subr.mxu0 0.0
      %10860 = vmatpush1.msra.mxu0 0.0
      %10861 = vmatprep.subr.mxu0 0.0
      %10862 = vmatpush1.msra.mxu0 0.0
      %10863 = vmatprep.subr.mxu0 0.0
      %10864 = vmatpush1.msra.mxu0 0.0
      %10865 = vmatprep.subr.mxu0 0.0
      %10866 = vmatpush1.msra.mxu0 0.0
      %10867 = vmatprep.subr.mxu0 0.0
      %10868 = vmatpush1.msra.mxu0 0.0
      %10869 = vmatprep.subr.mxu0 0.0
      %10870 = vmatpush1.msra.mxu0 0.0
      %10871 = vmatprep.subr.mxu0 0.0
      %10872 = vmatpush1.msra.mxu0 0.0
      %10873 = vmatprep.subr.mxu0 0.0
      %10874 = vmatpush1.msra.mxu0 0.0
      %10875 = vmatprep.subr.mxu0 0.0
      %10876 = vmatpush1.msra.mxu0 0.0
      %10877 = vmatprep.subr.mxu0 0.0
      %10878 = vmatpush1.msra.mxu0 0.0
      %10879 = vmatprep.subr.mxu0 0.0
      %10880 = vmatpush1.msra.mxu0 0.0
      %10881 = vmatprep.subr.mxu0 0.0
      %10882 = vmatpush1.msra.mxu0 0.0
      %10883 = vmatprep.subr.mxu0 0.0
      %10884 = vmatpush1.msra.mxu0 0.0
      %10885 = vmatprep.subr.mxu0 0.0
      %10886 = vmatpush1.msra.mxu0 0.0
      %10887 = vmatprep.subr.mxu0 0.0
      %10888 = vmatpush1.msra.mxu0 0.0
      %10889 = vmatprep.subr.mxu0 0.0
      %10890 = vmatpush1.msra.mxu0 0.0
      %10891 = vmatprep.subr.mxu0 0.0
      %10892 = vmatpush1.msra.mxu0 0.0
      %10893 = vmatprep.subr.mxu0 0.0
      %10894 = vmatpush1.msra.mxu0 0.0
      %10895 = vmatprep.mubr.f32.mxu0 0.0
      %10896 = vmatmul.mubr.f32.gmra.mrb[0].mxu0 %v10829
      %v10897 = vpop.f32.mrb[0].mxu0
      %v10898 = vadd.f32 0.0, %v10897
      %v10899 = vpop.f32.mrb[0].mxu0
      %10900 = vdwg.mxu0
      %v10902 = vsel %vm7250, %v7236, 0
      %10904 = vmatprep.subr.mxu0 0.0
      %10905 = vmatpush1.msra.mxu0 %v369
      %10906 = vmatprep.subr.mxu0 0.0
      %10907 = vmatpush1.msra.mxu0 %v370
      %10908 = vmatprep.subr.mxu0 0.0
      %10909 = vmatpush1.msra.mxu0 0.0
      %10910 = vmatprep.subr.mxu0 0.0
      %10911 = vmatpush1.msra.mxu0 0.0
      %10912 = vmatprep.subr.mxu0 0.0
      %10913 = vmatpush1.msra.mxu0 0.0
      %10914 = vmatprep.subr.mxu0 0.0
      %10915 = vmatpush1.msra.mxu0 0.0
      %10916 = vmatprep.subr.mxu0 0.0
      %10917 = vmatpush1.msra.mxu0 0.0
      %10918 = vmatprep.subr.mxu0 0.0
      %10919 = vmatpush1.msra.mxu0 0.0
      %10920 = vmatprep.subr.mxu0 0.0
      %10921 = vmatpush1.msra.mxu0 0.0
      %10922 = vmatprep.subr.mxu0 0.0
      %10923 = vmatpush1.msra.mxu0 0.0
      %10924 = vmatprep.subr.mxu0 0.0
      %10925 = vmatpush1.msra.mxu0 0.0
      %10926 = vmatprep.subr.mxu0 0.0
      %10927 = vmatpush1.msra.mxu0 0.0
      %10928 = vmatprep.subr.mxu0 0.0
      %10929 = vmatpush1.msra.mxu0 0.0
      %10930 = vmatprep.subr.mxu0 0.0
      %10931 = vmatpush1.msra.mxu0 0.0
      %10932 = vmatprep.subr.mxu0 0.0
      %10933 = vmatpush1.msra.mxu0 0.0
      %10934 = vmatprep.subr.mxu0 0.0
      %10935 = vmatpush1.msra.mxu0 0.0
      %10936 = vmatprep.subr.mxu0 0.0
      %10937 = vmatpush1.msra.mxu0 0.0
      %10938 = vmatprep.subr.mxu0 0.0
      %10939 = vmatpush1.msra.mxu0 0.0
      %10940 = vmatprep.subr.mxu0 0.0
      %10941 = vmatpush1.msra.mxu0 0.0
      %10942 = vmatprep.subr.mxu0 0.0
      %10943 = vmatpush1.msra.mxu0 0.0
      %10944 = vmatprep.subr.mxu0 0.0
      %10945 = vmatpush1.msra.mxu0 0.0
      %10946 = vmatprep.subr.mxu0 0.0
      %10947 = vmatpush1.msra.mxu0 0.0
      %10948 = vmatprep.subr.mxu0 0.0
      %10949 = vmatpush1.msra.mxu0 0.0
      %10950 = vmatprep.subr.mxu0 0.0
      %10951 = vmatpush1.msra.mxu0 0.0
      %10952 = vmatprep.subr.mxu0 0.0
      %10953 = vmatpush1.msra.mxu0 0.0
      %10954 = vmatprep.subr.mxu0 0.0
      %10955 = vmatpush1.msra.mxu0 0.0
      %10956 = vmatprep.subr.mxu0 0.0
      %10957 = vmatpush1.msra.mxu0 0.0
      %10958 = vmatprep.subr.mxu0 0.0
      %10959 = vmatpush1.msra.mxu0 0.0
      %10960 = vmatprep.subr.mxu0 0.0
      %10961 = vmatpush1.msra.mxu0 0.0
      %10962 = vmatprep.subr.mxu0 0.0
      %10963 = vmatpush1.msra.mxu0 0.0
      %10964 = vmatprep.subr.mxu0 0.0
      %10965 = vmatpush1.msra.mxu0 0.0
      %10966 = vmatprep.subr.mxu0 0.0
      %10967 = vmatpush1.msra.mxu0 0.0
      %10968 = vmatprep.mubr.f32.mxu0 0.0
      %10969 = vmatmul.mubr.f32.gmra.mrb[0].mxu0 %v10902
      %v10970 = vpop.f32.mrb[0].mxu0
      %v10971 = vadd.f32 0.0, %v10970
      %v10972 = vpop.f32.mrb[0].mxu0
      %10973 = vdwg.mxu0
      %v10975 = vsel %vm7250, %v7237, 0
      %10977 = vmatprep.subr.mxu0 0.0
      %10978 = vmatpush1.msra.mxu0 %v371
      %10979 = vmatprep.subr.mxu0 0.0
      %10980 = vmatpush1.msra.mxu0 %v372
      %10981 = vmatprep.subr.mxu0 0.0
      %10982 = vmatpush1.msra.mxu0 0.0
      %10983 = vmatprep.subr.mxu0 0.0
      %10984 = vmatpush1.msra.mxu0 0.0
      %10985 = vmatprep.subr.mxu0 0.0
      %10986 = vmatpush1.msra.mxu0 0.0
      %10987 = vmatprep.subr.mxu0 0.0
      %10988 = vmatpush1.msra.mxu0 0.0
      %10989 = vmatprep.subr.mxu0 0.0
      %10990 = vmatpush1.msra.mxu0 0.0
      %10991 = vmatprep.subr.mxu0 0.0
      %10992 = vmatpush1.msra.mxu0 0.0
      %10993 = vmatprep.subr.mxu0 0.0
      %10994 = vmatpush1.msra.mxu0 0.0
      %10995 = vmatprep.subr.mxu0 0.0
      %10996 = vmatpush1.msra.mxu0 0.0
      %10997 = vmatprep.subr.mxu0 0.0
      %10998 = vmatpush1.msra.mxu0 0.0
      %10999 = vmatprep.subr.mxu0 0.0
      %11000 = vmatpush1.msra.mxu0 0.0
      %11001 = vmatprep.subr.mxu0 0.0
      %11002 = vmatpush1.msra.mxu0 0.0
      %11003 = vmatprep.subr.mxu0 0.0
      %11004 = vmatpush1.msra.mxu0 0.0
      %11005 = vmatprep.subr.mxu0 0.0
      %11006 = vmatpush1.msra.mxu0 0.0
      %11007 = vmatprep.subr.mxu0 0.0
      %11008 = vmatpush1.msra.mxu0 0.0
      %11009 = vmatprep.subr.mxu0 0.0
      %11010 = vmatpush1.msra.mxu0 0.0
      %11011 = vmatprep.subr.mxu0 0.0
      %11012 = vmatpush1.msra.mxu0 0.0
      %11013 = vmatprep.subr.mxu0 0.0
      %11014 = vmatpush1.msra.mxu0 0.0
      %11015 = vmatprep.subr.mxu0 0.0
      %11016 = vmatpush1.msra.mxu0 0.0
      %11017 = vmatprep.subr.mxu0 0.0
      %11018 = vmatpush1.msra.mxu0 0.0
      %11019 = vmatprep.subr.mxu0 0.0
      %11020 = vmatpush1.msra.mxu0 0.0
      %11021 = vmatprep.subr.mxu0 0.0
      %11022 = vmatpush1.msra.mxu0 0.0
      %11023 = vmatprep.subr.mxu0 0.0
      %11024 = vmatpush1.msra.mxu0 0.0
      %11025 = vmatprep.subr.mxu0 0.0
      %11026 = vmatpush1.msra.mxu0 0.0
      %11027 = vmatprep.subr.mxu0 0.0
      %11028 = vmatpush1.msra.mxu0 0.0
      %11029 = vmatprep.subr.mxu0 0.0
      %11030 = vmatpush1.msra.mxu0 0.0
      %11031 = vmatprep.subr.mxu0 0.0
      %11032 = vmatpush1.msra.mxu0 0.0
      %11033 = vmatprep.subr.mxu0 0.0
      %11034 = vmatpush1.msra.mxu0 0.0
      %11035 = vmatprep.subr.mxu0 0.0
      %11036 = vmatpush1.msra.mxu0 0.0
      %11037 = vmatprep.subr.mxu0 0.0
      %11038 = vmatpush1.msra.mxu0 0.0
      %11039 = vmatprep.subr.mxu0 0.0
      %11040 = vmatpush1.msra.mxu0 0.0
      %11041 = vmatprep.mubr.f32.mxu0 0.0
      %11042 = vmatmul.mubr.f32.gmra.mrb[0].mxu0 %v10975
      %v11043 = vpop.f32.mrb[0].mxu0
      %v11044 = vadd.f32 0.0, %v11043
      %v11045 = vpop.f32.mrb[0].mxu0
      %11046 = vdwg.mxu0
      %v11048 = vsel %vm7250, %v7238, 0
      %11050 = vmatprep.subr.mxu0 0.0
      %11051 = vmatpush1.msra.mxu0 %v373
      %11052 = vmatprep.subr.mxu0 0.0
      %11053 = vmatpush1.msra.mxu0 %v374
      %11054 = vmatprep.subr.mxu0 0.0
      %11055 = vmatpush1.msra.mxu0 0.0
      %11056 = vmatprep.subr.mxu0 0.0
      %11057 = vmatpush1.msra.mxu0 0.0
      %11058 = vmatprep.subr.mxu0 0.0
      %11059 = vmatpush1.msra.mxu0 0.0
      %11060 = vmatprep.subr.mxu0 0.0
      %11061 = vmatpush1.msra.mxu0 0.0
      %11062 = vmatprep.subr.mxu0 0.0
      %11063 = vmatpush1.msra.mxu0 0.0
      %11064 = vmatprep.subr.mxu0 0.0
      %11065 = vmatpush1.msra.mxu0 0.0
      %11066 = vmatprep.subr.mxu0 0.0
      %11067 = vmatpush1.msra.mxu0 0.0
      %11068 = vmatprep.subr.mxu0 0.0
      %11069 = vmatpush1.msra.mxu0 0.0
      %11070 = vmatprep.subr.mxu0 0.0
      %11071 = vmatpush1.msra.mxu0 0.0
      %11072 = vmatprep.subr.mxu0 0.0
      %11073 = vmatpush1.msra.mxu0 0.0
      %11074 = vmatprep.subr.mxu0 0.0
      %11075 = vmatpush1.msra.mxu0 0.0
      %11076 = vmatprep.subr.mxu0 0.0
      %11077 = vmatpush1.msra.mxu0 0.0
      %11078 = vmatprep.subr.mxu0 0.0
      %11079 = vmatpush1.msra.mxu0 0.0
      %11080 = vmatprep.subr.mxu0 0.0
      %11081 = vmatpush1.msra.mxu0 0.0
      %11082 = vmatprep.subr.mxu0 0.0
      %11083 = vmatpush1.msra.mxu0 0.0
      %11084 = vmatprep.subr.mxu0 0.0
      %11085 = vmatpush1.msra.mxu0 0.0
      %11086 = vmatprep.subr.mxu0 0.0
      %11087 = vmatpush1.msra.mxu0 0.0
      %11088 = vmatprep.subr.mxu0 0.0
      %11089 = vmatpush1.msra.mxu0 0.0
      %11090 = vmatprep.subr.mxu0 0.0
      %11091 = vmatpush1.msra.mxu0 0.0
      %11092 = vmatprep.subr.mxu0 0.0
      %11093 = vmatpush1.msra.mxu0 0.0
      %11094 = vmatprep.subr.mxu0 0.0
      %11095 = vmatpush1.msra.mxu0 0.0
      %11096 = vmatprep.subr.mxu0 0.0
      %11097 = vmatpush1.msra.mxu0 0.0
      %11098 = vmatprep.subr.mxu0 0.0
      %11099 = vmatpush1.msra.mxu0 0.0
      %11100 = vmatprep.subr.mxu0 0.0
      %11101 = vmatpush1.msra.mxu0 0.0
      %11102 = vmatprep.subr.mxu0 0.0
      %11103 = vmatpush1.msra.mxu0 0.0
      %11104 = vmatprep.subr.mxu0 0.0
      %11105 = vmatpush1.msra.mxu0 0.0
      %11106 = vmatprep.subr.mxu0 0.0
      %11107 = vmatpush1.msra.mxu0 0.0
      %11108 = vmatprep.subr.mxu0 0.0
      %11109 = vmatpush1.msra.mxu0 0.0
      %11110 = vmatprep.subr.mxu0 0.0
      %11111 = vmatpush1.msra.mxu0 0.0
      %11112 = vmatprep.subr.mxu0 0.0
      %11113 = vmatpush1.msra.mxu0 0.0
      %11114 = vmatprep.mubr.f32.mxu0 0.0
      %11115 = vmatmul.mubr.f32.gmra.mrb[0].mxu0 %v11048
      %v11116 = vpop.f32.mrb[0].mxu0
      %v11117 = vadd.f32 0.0, %v11116
      %v11118 = vpop.f32.mrb[0].mxu0
      %11119 = vdwg.mxu0
      %v11121 = vsel %vm7250, %v7239, 0
      %11123 = vmatprep.subr.mxu0 0.0
      %11124 = vmatpush1.msra.mxu0 %v375
      %11125 = vmatprep.subr.mxu0 0.0
      %11126 = vmatpush1.msra.mxu0 %v376
      %11127 = vmatprep.subr.mxu0 0.0
      %11128 = vmatpush1.msra.mxu0 0.0
      %11129 = vmatprep.subr.mxu0 0.0
      %11130 = vmatpush1.msra.mxu0 0.0
      %11131 = vmatprep.subr.mxu0 0.0
      %11132 = vmatpush1.msra.mxu0 0.0
      %11133 = vmatprep.subr.mxu0 0.0
      %11134 = vmatpush1.msra.mxu0 0.0
      %11135 = vmatprep.subr.mxu0 0.0
      %11136 = vmatpush1.msra.mxu0 0.0
      %11137 = vmatprep.subr.mxu0 0.0
      %11138 = vmatpush1.msra.mxu0 0.0
      %11139 = vmatprep.subr.mxu0 0.0
      %11140 = vmatpush1.msra.mxu0 0.0
      %11141 = vmatprep.subr.mxu0 0.0
      %11142 = vmatpush1.msra.mxu0 0.0
      %11143 = vmatprep.subr.mxu0 0.0
      %11144 = vmatpush1.msra.mxu0 0.0
      %11145 = vmatprep.subr.mxu0 0.0
      %11146 = vmatpush1.msra.mxu0 0.0
      %11147 = vmatprep.subr.mxu0 0.0
      %11148 = vmatpush1.msra.mxu0 0.0
      %11149 = vmatprep.subr.mxu0 0.0
      %11150 = vmatpush1.msra.mxu0 0.0
      %11151 = vmatprep.subr.mxu0 0.0
      %11152 = vmatpush1.msra.mxu0 0.0
      %11153 = vmatprep.subr.mxu0 0.0
      %11154 = vmatpush1.msra.mxu0 0.0
      %11155 = vmatprep.subr.mxu0 0.0
      %11156 = vmatpush1.msra.mxu0 0.0
      %11157 = vmatprep.subr.mxu0 0.0
      %11158 = vmatpush1.msra.mxu0 0.0
      %11159 = vmatprep.subr.mxu0 0.0
      %11160 = vmatpush1.msra.mxu0 0.0
      %11161 = vmatprep.subr.mxu0 0.0
      %11162 = vmatpush1.msra.mxu0 0.0
      %11163 = vmatprep.subr.mxu0 0.0
      %11164 = vmatpush1.msra.mxu0 0.0
      %11165 = vmatprep.subr.mxu0 0.0
      %11166 = vmatpush1.msra.mxu0 0.0
      %11167 = vmatprep.subr.mxu0 0.0
      %11168 = vmatpush1.msra.mxu0 0.0
      %11169 = vmatprep.subr.mxu0 0.0
      %11170 = vmatpush1.msra.mxu0 0.0
      %11171 = vmatprep.subr.mxu0 0.0
      %11172 = vmatpush1.msra.mxu0 0.0
      %11173 = vmatprep.subr.mxu0 0.0
      %11174 = vmatpush1.msra.mxu0 0.0
      %11175 = vmatprep.subr.mxu0 0.0
      %11176 = vmatpush1.msra.mxu0 0.0
      %11177 = vmatprep.subr.mxu0 0.0
      %11178 = vmatpush1.msra.mxu0 0.0
      %11179 = vmatprep.subr.mxu0 0.0
      %11180 = vmatpush1.msra.mxu0 0.0
      %11181 = vmatprep.subr.mxu0 0.0
      %11182 = vmatpush1.msra.mxu0 0.0
      %11183 = vmatprep.subr.mxu0 0.0
      %11184 = vmatpush1.msra.mxu0 0.0
      %11185 = vmatprep.subr.mxu0 0.0
      %11186 = vmatpush1.msra.mxu0 0.0
      %11187 = vmatprep.mubr.f32.mxu0 0.0
      %11188 = vmatmul.mubr.f32.gmra.mrb[0].mxu0 %v11121
      %v11189 = vpop.f32.mrb[0].mxu0
      %v11190 = vadd.f32 0.0, %v11189
      %v11191 = vpop.f32.mrb[0].mxu0
      %11192 = vdwg.mxu0
      %v11194 = vsel %vm7250, %v7240, 0
      %11196 = vmatprep.subr.mxu0 0.0
      %11197 = vmatpush1.msra.mxu0 %v377
      %11198 = vmatprep.subr.mxu0 0.0
      %11199 = vmatpush1.msra.mxu0 %v378
      %11200 = vmatprep.subr.mxu0 0.0
      %11201 = vmatpush1.msra.mxu0 0.0
      %11202 = vmatprep.subr.mxu0 0.0
      %11203 = vmatpush1.msra.mxu0 0.0
      %11204 = vmatprep.subr.mxu0 0.0
      %11205 = vmatpush1.msra.mxu0 0.0
      %11206 = vmatprep.subr.mxu0 0.0
      %11207 = vmatpush1.msra.mxu0 0.0
      %11208 = vmatprep.subr.mxu0 0.0
      %11209 = vmatpush1.msra.mxu0 0.0
      %11210 = vmatprep.subr.mxu0 0.0
      %11211 = vmatpush1.msra.mxu0 0.0
      %11212 = vmatprep.subr.mxu0 0.0
      %11213 = vmatpush1.msra.mxu0 0.0
      %11214 = vmatprep.subr.mxu0 0.0
      %11215 = vmatpush1.msra.mxu0 0.0
      %11216 = vmatprep.subr.mxu0 0.0
      %11217 = vmatpush1.msra.mxu0 0.0
      %11218 = vmatprep.subr.mxu0 0.0
      %11219 = vmatpush1.msra.mxu0 0.0
      %11220 = vmatprep.subr.mxu0 0.0
      %11221 = vmatpush1.msra.mxu0 0.0
      %11222 = vmatprep.subr.mxu0 0.0
      %11223 = vmatpush1.msra.mxu0 0.0
      %11224 = vmatprep.subr.mxu0 0.0
      %11225 = vmatpush1.msra.mxu0 0.0
      %11226 = vmatprep.subr.mxu0 0.0
      %11227 = vmatpush1.msra.mxu0 0.0
      %11228 = vmatprep.subr.mxu0 0.0
      %11229 = vmatpush1.msra.mxu0 0.0
      %11230 = vmatprep.subr.mxu0 0.0
      %11231 = vmatpush1.msra.mxu0 0.0
      %11232 = vmatprep.subr.mxu0 0.0
      %11233 = vmatpush1.msra.mxu0 0.0
      %11234 = vmatprep.subr.mxu0 0.0
      %11235 = vmatpush1.msra.mxu0 0.0
      %11236 = vmatprep.subr.mxu0 0.0
      %11237 = vmatpush1.msra.mxu0 0.0
      %11238 = vmatprep.subr.mxu0 0.0
      %11239 = vmatpush1.msra.mxu0 0.0
      %11240 = vmatprep.subr.mxu0 0.0
      %11241 = vmatpush1.msra.mxu0 0.0
      %11242 = vmatprep.subr.mxu0 0.0
      %11243 = vmatpush1.msra.mxu0 0.0
      %11244 = vmatprep.subr.mxu0 0.0
      %11245 = vmatpush1.msra.mxu0 0.0
      %11246 = vmatprep.subr.mxu0 0.0
      %11247 = vmatpush1.msra.mxu0 0.0
      %11248 = vmatprep.subr.mxu0 0.0
      %11249 = vmatpush1.msra.mxu0 0.0
      %11250 = vmatprep.subr.mxu0 0.0
      %11251 = vmatpush1.msra.mxu0 0.0
      %11252 = vmatprep.subr.mxu0 0.0
      %11253 = vmatpush1.msra.mxu0 0.0
      %11254 = vmatprep.subr.mxu0 0.0
      %11255 = vmatpush1.msra.mxu0 0.0
      %11256 = vmatprep.subr.mxu0 0.0
      %11257 = vmatpush1.msra.mxu0 0.0
      %11258 = vmatprep.subr.mxu0 0.0
      %11259 = vmatpush1.msra.mxu0 0.0
      %11260 = vmatprep.mubr.f32.mxu0 0.0
      %11261 = vmatmul.mubr.f32.gmra.mrb[0].mxu0 %v11194
      %v11262 = vpop.f32.mrb[0].mxu0
      %v11263 = vadd.f32 0.0, %v11262
      %v11264 = vpop.f32.mrb[0].mxu0
      %11265 = vdwg.mxu0
      %v11267 = vsel %vm7250, %v7241, 0
      %11269 = vmatprep.subr.mxu0 0.0
      %11270 = vmatpush1.msra.mxu0 %v379
      %11271 = vmatprep.subr.mxu0 0.0
      %11272 = vmatpush1.msra.mxu0 %v380
      %11273 = vmatprep.subr.mxu0 0.0
      %11274 = vmatpush1.msra.mxu0 0.0
      %11275 = vmatprep.subr.mxu0 0.0
      %11276 = vmatpush1.msra.mxu0 0.0
      %11277 = vmatprep.subr.mxu0 0.0
      %11278 = vmatpush1.msra.mxu0 0.0
      %11279 = vmatprep.subr.mxu0 0.0
      %11280 = vmatpush1.msra.mxu0 0.0
      %11281 = vmatprep.subr.mxu0 0.0
      %11282 = vmatpush1.msra.mxu0 0.0
      %11283 = vmatprep.subr.mxu0 0.0
      %11284 = vmatpush1.msra.mxu0 0.0
      %11285 = vmatprep.subr.mxu0 0.0
      %11286 = vmatpush1.msra.mxu0 0.0
      %11287 = vmatprep.subr.mxu0 0.0
      %11288 = vmatpush1.msra.mxu0 0.0
      %11289 = vmatprep.subr.mxu0 0.0
      %11290 = vmatpush1.msra.mxu0 0.0
      %11291 = vmatprep.subr.mxu0 0.0
      %11292 = vmatpush1.msra.mxu0 0.0
      %11293 = vmatprep.subr.mxu0 0.0
      %11294 = vmatpush1.msra.mxu0 0.0
      %11295 = vmatprep.subr.mxu0 0.0
      %11296 = vmatpush1.msra.mxu0 0.0
      %11297 = vmatprep.subr.mxu0 0.0
      %11298 = vmatpush1.msra.mxu0 0.0
      %11299 = vmatprep.subr.mxu0 0.0
      %11300 = vmatpush1.msra.mxu0 0.0
      %11301 = vmatprep.subr.mxu0 0.0
      %11302 = vmatpush1.msra.mxu0 0.0
      %11303 = vmatprep.subr.mxu0 0.0
      %11304 = vmatpush1.msra.mxu0 0.0
      %11305 = vmatprep.subr.mxu0 0.0
      %11306 = vmatpush1.msra.mxu0 0.0
      %11307 = vmatprep.subr.mxu0 0.0
      %11308 = vmatpush1.msra.mxu0 0.0
      %11309 = vmatprep.subr.mxu0 0.0
      %11310 = vmatpush1.msra.mxu0 0.0
      %11311 = vmatprep.subr.mxu0 0.0
      %11312 = vmatpush1.msra.mxu0 0.0
      %11313 = vmatprep.subr.mxu0 0.0
      %11314 = vmatpush1.msra.mxu0 0.0
      %11315 = vmatprep.subr.mxu0 0.0
      %11316 = vmatpush1.msra.mxu0 0.0
      %11317 = vmatprep.subr.mxu0 0.0
      %11318 = vmatpush1.msra.mxu0 0.0
      %11319 = vmatprep.subr.mxu0 0.0
      %11320 = vmatpush1.msra.mxu0 0.0
      %11321 = vmatprep.subr.mxu0 0.0
      %11322 = vmatpush1.msra.mxu0 0.0
      %11323 = vmatprep.subr.mxu0 0.0
      %11324 = vmatpush1.msra.mxu0 0.0
      %11325 = vmatprep.subr.mxu0 0.0
      %11326 = vmatpush1.msra.mxu0 0.0
      %11327 = vmatprep.subr.mxu0 0.0
      %11328 = vmatpush1.msra.mxu0 0.0
      %11329 = vmatprep.subr.mxu0 0.0
      %11330 = vmatpush1.msra.mxu0 0.0
      %11331 = vmatprep.subr.mxu0 0.0
      %11332 = vmatpush1.msra.mxu0 0.0
      %11333 = vmatprep.mubr.f32.mxu0 0.0
      %11334 = vmatmul.mubr.f32.gmra.mrb[0].mxu0 %v11267
      %v11335 = vpop.f32.mrb[0].mxu0
      %v11336 = vadd.f32 0.0, %v11335
      %v11337 = vpop.f32.mrb[0].mxu0
      %11338 = vdwg.mxu0
      %v11340 = vsel %vm7250, %v7242, 0
      %11342 = vmatprep.subr.mxu0 0.0
      %11343 = vmatpush1.msra.mxu0 %v381
      %11344 = vmatprep.subr.mxu0 0.0
      %11345 = vmatpush1.msra.mxu0 %v382
      %11346 = vmatprep.subr.mxu0 0.0
      %11347 = vmatpush1.msra.mxu0 0.0
      %11348 = vmatprep.subr.mxu0 0.0
      %11349 = vmatpush1.msra.mxu0 0.0
      %11350 = vmatprep.subr.mxu0 0.0
      %11351 = vmatpush1.msra.mxu0 0.0
      %11352 = vmatprep.subr.mxu0 0.0
      %11353 = vmatpush1.msra.mxu0 0.0
      %11354 = vmatprep.subr.mxu0 0.0
      %11355 = vmatpush1.msra.mxu0 0.0
      %11356 = vmatprep.subr.mxu0 0.0
      %11357 = vmatpush1.msra.mxu0 0.0
      %11358 = vmatprep.subr.mxu0 0.0
      %11359 = vmatpush1.msra.mxu0 0.0
      %11360 = vmatprep.subr.mxu0 0.0
      %11361 = vmatpush1.msra.mxu0 0.0
      %11362 = vmatprep.subr.mxu0 0.0
      %11363 = vmatpush1.msra.mxu0 0.0
      %11364 = vmatprep.subr.mxu0 0.0
      %11365 = vmatpush1.msra.mxu0 0.0
      %11366 = vmatprep.subr.mxu0 0.0
      %11367 = vmatpush1.msra.mxu0 0.0
      %11368 = vmatprep.subr.mxu0 0.0
      %11369 = vmatpush1.msra.mxu0 0.0
      %11370 = vmatprep.subr.mxu0 0.0
      %11371 = vmatpush1.msra.mxu0 0.0
      %11372 = vmatprep.subr.mxu0 0.0
      %11373 = vmatpush1.msra.mxu0 0.0
      %11374 = vmatprep.subr.mxu0 0.0
      %11375 = vmatpush1.msra.mxu0 0.0
      %11376 = vmatprep.subr.mxu0 0.0
      %11377 = vmatpush1.msra.mxu0 0.0
      %11378 = vmatprep.subr.mxu0 0.0
      %11379 = vmatpush1.msra.mxu0 0.0
      %11380 = vmatprep.subr.mxu0 0.0
      %11381 = vmatpush1.msra.mxu0 0.0
      %11382 = vmatprep.subr.mxu0 0.0
      %11383 = vmatpush1.msra.mxu0 0.0
      %11384 = vmatprep.subr.mxu0 0.0
      %11385 = vmatpush1.msra.mxu0 0.0
      %11386 = vmatprep.subr.mxu0 0.0
      %11387 = vmatpush1.msra.mxu0 0.0
      %11388 = vmatprep.subr.mxu0 0.0
      %11389 = vmatpush1.msra.mxu0 0.0
      %11390 = vmatprep.subr.mxu0 0.0
      %11391 = vmatpush1.msra.mxu0 0.0
      %11392 = vmatprep.subr.mxu0 0.0
      %11393 = vmatpush1.msra.mxu0 0.0
      %11394 = vmatprep.subr.mxu0 0.0
      %11395 = vmatpush1.msra.mxu0 0.0
      %11396 = vmatprep.subr.mxu0 0.0
      %11397 = vmatpush1.msra.mxu0 0.0
      %11398 = vmatprep.subr.mxu0 0.0
      %11399 = vmatpush1.msra.mxu0 0.0
      %11400 = vmatprep.subr.mxu0 0.0
      %11401 = vmatpush1.msra.mxu0 0.0
      %11402 = vmatprep.subr.mxu0 0.0
      %11403 = vmatpush1.msra.mxu0 0.0
      %11404 = vmatprep.subr.mxu0 0.0
      %11405 = vmatpush1.msra.mxu0 0.0
      %11406 = vmatprep.mubr.f32.mxu0 0.0
      %11407 = vmatmul.mubr.f32.gmra.mrb[0].mxu0 %v11340
      %v11408 = vpop.f32.mrb[0].mxu0
      %v11409 = vadd.f32 0.0, %v11408
      %v11410 = vpop.f32.mrb[0].mxu0
      %11411 = vdwg.mxu0
      %v11413 = vsel %vm7250, %v7243, 0
      %11415 = vmatprep.subr.mxu0 0.0
      %11416 = vmatpush1.msra.mxu0 %v383
      %11417 = vmatprep.subr.mxu0 0.0
      %11418 = vmatpush1.msra.mxu0 %v384
      %11419 = vmatprep.subr.mxu0 0.0
      %11420 = vmatpush1.msra.mxu0 0.0
      %11421 = vmatprep.subr.mxu0 0.0
      %11422 = vmatpush1.msra.mxu0 0.0
      %11423 = vmatprep.subr.mxu0 0.0
      %11424 = vmatpush1.msra.mxu0 0.0
      %11425 = vmatprep.subr.mxu0 0.0
      %11426 = vmatpush1.msra.mxu0 0.0
      %11427 = vmatprep.subr.mxu0 0.0
      %11428 = vmatpush1.msra.mxu0 0.0
      %11429 = vmatprep.subr.mxu0 0.0
      %11430 = vmatpush1.msra.mxu0 0.0
      %11431 = vmatprep.subr.mxu0 0.0
      %11432 = vmatpush1.msra.mxu0 0.0
      %11433 = vmatprep.subr.mxu0 0.0
      %11434 = vmatpush1.msra.mxu0 0.0
      %11435 = vmatprep.subr.mxu0 0.0
      %11436 = vmatpush1.msra.mxu0 0.0
      %11437 = vmatprep.subr.mxu0 0.0
      %11438 = vmatpush1.msra.mxu0 0.0
      %11439 = vmatprep.subr.mxu0 0.0
      %11440 = vmatpush1.msra.mxu0 0.0
      %11441 = vmatprep.subr.mxu0 0.0
      %11442 = vmatpush1.msra.mxu0 0.0
      %11443 = vmatprep.subr.mxu0 0.0
      %11444 = vmatpush1.msra.mxu0 0.0
      %11445 = vmatprep.subr.mxu0 0.0
      %11446 = vmatpush1.msra.mxu0 0.0
      %11447 = vmatprep.subr.mxu0 0.0
      %11448 = vmatpush1.msra.mxu0 0.0
      %11449 = vmatprep.subr.mxu0 0.0
      %11450 = vmatpush1.msra.mxu0 0.0
      %11451 = vmatprep.subr.mxu0 0.0
      %11452 = vmatpush1.msra.mxu0 0.0
      %11453 = vmatprep.subr.mxu0 0.0
      %11454 = vmatpush1.msra.mxu0 0.0
      %11455 = vmatprep.subr.mxu0 0.0
      %11456 = vmatpush1.msra.mxu0 0.0
      %11457 = vmatprep.subr.mxu0 0.0
      %11458 = vmatpush1.msra.mxu0 0.0
      %11459 = vmatprep.subr.mxu0 0.0
      %11460 = vmatpush1.msra.mxu0 0.0
      %11461 = vmatprep.subr.mxu0 0.0
      %11462 = vmatpush1.msra.mxu0 0.0
      %11463 = vmatprep.subr.mxu0 0.0
      %11464 = vmatpush1.msra.mxu0 0.0
      %11465 = vmatprep.subr.mxu0 0.0
      %11466 = vmatpush1.msra.mxu0 0.0
      %11467 = vmatprep.subr.mxu0 0.0
      %11468 = vmatpush1.msra.mxu0 0.0
      %11469 = vmatprep.subr.mxu0 0.0
      %11470 = vmatpush1.msra.mxu0 0.0
      %11471 = vmatprep.subr.mxu0 0.0
      %11472 = vmatpush1.msra.mxu0 0.0
      %11473 = vmatprep.subr.mxu0 0.0
      %11474 = vmatpush1.msra.mxu0 0.0
      %11475 = vmatprep.subr.mxu0 0.0
      %11476 = vmatpush1.msra.mxu0 0.0
      %11477 = vmatprep.subr.mxu0 0.0
      %11478 = vmatpush1.msra.mxu0 0.0
      %11479 = vmatprep.mubr.f32.mxu0 0.0
      %11480 = vmatmul.mubr.f32.gmra.mrb[0].mxu0 %v11413
      %v11481 = vpop.f32.mrb[0].mxu0
      %v11482 = vadd.f32 0.0, %v11481
      %v11483 = vpop.f32.mrb[0].mxu0
      %11484 = vdwg.mxu0
      %v11486 = vsel %vm7250, %v7244, 0
      %11488 = vmatprep.subr.mxu0 0.0
      %11489 = vmatpush1.msra.mxu0 %v385
      %11490 = vmatprep.subr.mxu0 0.0
      %11491 = vmatpush1.msra.mxu0 %v386
      %11492 = vmatprep.subr.mxu0 0.0
      %11493 = vmatpush1.msra.mxu0 0.0
      %11494 = vmatprep.subr.mxu0 0.0
      %11495 = vmatpush1.msra.mxu0 0.0
      %11496 = vmatprep.subr.mxu0 0.0
      %11497 = vmatpush1.msra.mxu0 0.0
      %11498 = vmatprep.subr.mxu0 0.0
      %11499 = vmatpush1.msra.mxu0 0.0
      %11500 = vmatprep.subr.mxu0 0.0
      %11501 = vmatpush1.msra.mxu0 0.0
      %11502 = vmatprep.subr.mxu0 0.0
      %11503 = vmatpush1.msra.mxu0 0.0
      %11504 = vmatprep.subr.mxu0 0.0
      %11505 = vmatpush1.msra.mxu0 0.0
      %11506 = vmatprep.subr.mxu0 0.0
      %11507 = vmatpush1.msra.mxu0 0.0
      %11508 = vmatprep.subr.mxu0 0.0
      %11509 = vmatpush1.msra.mxu0 0.0
      %11510 = vmatprep.subr.mxu0 0.0
      %11511 = vmatpush1.msra.mxu0 0.0
      %11512 = vmatprep.subr.mxu0 0.0
      %11513 = vmatpush1.msra.mxu0 0.0
      %11514 = vmatprep.subr.mxu0 0.0
      %11515 = vmatpush1.msra.mxu0 0.0
      %11516 = vmatprep.subr.mxu0 0.0
      %11517 = vmatpush1.msra.mxu0 0.0
      %11518 = vmatprep.subr.mxu0 0.0
      %11519 = vmatpush1.msra.mxu0 0.0
      %11520 = vmatprep.subr.mxu0 0.0
      %11521 = vmatpush1.msra.mxu0 0.0
      %11522 = vmatprep.subr.mxu0 0.0
      %11523 = vmatpush1.msra.mxu0 0.0
      %11524 = vmatprep.subr.mxu0 0.0
      %11525 = vmatpush1.msra.mxu0 0.0
      %11526 = vmatprep.subr.mxu0 0.0
      %11527 = vmatpush1.msra.mxu0 0.0
      %11528 = vmatprep.subr.mxu0 0.0
      %11529 = vmatpush1.msra.mxu0 0.0
      %11530 = vmatprep.subr.mxu0 0.0
      %11531 = vmatpush1.msra.mxu0 0.0
      %11532 = vmatprep.subr.mxu0 0.0
      %11533 = vmatpush1.msra.mxu0 0.0
      %11534 = vmatprep.subr.mxu0 0.0
      %11535 = vmatpush1.msra.mxu0 0.0
      %11536 = vmatprep.subr.mxu0 0.0
      %11537 = vmatpush1.msra.mxu0 0.0
      %11538 = vmatprep.subr.mxu0 0.0
      %11539 = vmatpush1.msra.mxu0 0.0
      %11540 = vmatprep.subr.mxu0 0.0
      %11541 = vmatpush1.msra.mxu0 0.0
      %11542 = vmatprep.subr.mxu0 0.0
      %11543 = vmatpush1.msra.mxu0 0.0
      %11544 = vmatprep.subr.mxu0 0.0
      %11545 = vmatpush1.msra.mxu0 0.0
      %11546 = vmatprep.subr.mxu0 0.0
      %11547 = vmatpush1.msra.mxu0 0.0
      %11548 = vmatprep.subr.mxu0 0.0
      %11549 = vmatpush1.msra.mxu0 0.0
      %11550 = vmatprep.subr.mxu0 0.0
      %11551 = vmatpush1.msra.mxu0 0.0
      %11552 = vmatprep.mubr.f32.mxu0 0.0
      %11553 = vmatmul.mubr.f32.gmra.mrb[0].mxu0 %v11486
      %v11554 = vpop.f32.mrb[0].mxu0
      %v11555 = vadd.f32 0.0, %v11554
      %v11556 = vpop.f32.mrb[0].mxu0
      %11557 = vdwg.mxu0
      %v11559 = vsel %vm7250, %v7245, 0
      %11561 = vmatprep.subr.mxu0 0.0
      %11562 = vmatpush1.msra.mxu0 %v387
      %11563 = vmatprep.subr.mxu0 0.0
      %11564 = vmatpush1.msra.mxu0 %v388
      %11565 = vmatprep.subr.mxu0 0.0
      %11566 = vmatpush1.msra.mxu0 0.0
      %11567 = vmatprep.subr.mxu0 0.0
      %11568 = vmatpush1.msra.mxu0 0.0
      %11569 = vmatprep.subr.mxu0 0.0
      %11570 = vmatpush1.msra.mxu0 0.0
      %11571 = vmatprep.subr.mxu0 0.0
      %11572 = vmatpush1.msra.mxu0 0.0
      %11573 = vmatprep.subr.mxu0 0.0
      %11574 = vmatpush1.msra.mxu0 0.0
      %11575 = vmatprep.subr.mxu0 0.0
      %11576 = vmatpush1.msra.mxu0 0.0
      %11577 = vmatprep.subr.mxu0 0.0
      %11578 = vmatpush1.msra.mxu0 0.0
      %11579 = vmatprep.subr.mxu0 0.0
      %11580 = vmatpush1.msra.mxu0 0.0
      %11581 = vmatprep.subr.mxu0 0.0
      %11582 = vmatpush1.msra.mxu0 0.0
      %11583 = vmatprep.subr.mxu0 0.0
      %11584 = vmatpush1.msra.mxu0 0.0
      %11585 = vmatprep.subr.mxu0 0.0
      %11586 = vmatpush1.msra.mxu0 0.0
      %11587 = vmatprep.subr.mxu0 0.0
      %11588 = vmatpush1.msra.mxu0 0.0
      %11589 = vmatprep.subr.mxu0 0.0
      %11590 = vmatpush1.msra.mxu0 0.0
      %11591 = vmatprep.subr.mxu0 0.0
      %11592 = vmatpush1.msra.mxu0 0.0
      %11593 = vmatprep.subr.mxu0 0.0
      %11594 = vmatpush1.msra.mxu0 0.0
      %11595 = vmatprep.subr.mxu0 0.0
      %11596 = vmatpush1.msra.mxu0 0.0
      %11597 = vmatprep.subr.mxu0 0.0
      %11598 = vmatpush1.msra.mxu0 0.0
      %11599 = vmatprep.subr.mxu0 0.0
      %11600 = vmatpush1.msra.mxu0 0.0
      %11601 = vmatprep.subr.mxu0 0.0
      %11602 = vmatpush1.msra.mxu0 0.0
      %11603 = vmatprep.subr.mxu0 0.0
      %11604 = vmatpush1.msra.mxu0 0.0
      %11605 = vmatprep.subr.mxu0 0.0
      %11606 = vmatpush1.msra.mxu0 0.0
      %11607 = vmatprep.subr.mxu0 0.0
      %11608 = vmatpush1.msra.mxu0 0.0
      %11609 = vmatprep.subr.mxu0 0.0
      %11610 = vmatpush1.msra.mxu0 0.0
      %11611 = vmatprep.subr.mxu0 0.0
      %11612 = vmatpush1.msra.mxu0 0.0
      %11613 = vmatprep.subr.mxu0 0.0
      %11614 = vmatpush1.msra.mxu0 0.0
      %11615 = vmatprep.subr.mxu0 0.0
      %11616 = vmatpush1.msra.mxu0 0.0
      %11617 = vmatprep.subr.mxu0 0.0
      %11618 = vmatpush1.msra.mxu0 0.0
      %11619 = vmatprep.subr.mxu0 0.0
      %11620 = vmatpush1.msra.mxu0 0.0
      %11621 = vmatprep.subr.mxu0 0.0
      %11622 = vmatpush1.msra.mxu0 0.0
      %11623 = vmatprep.subr.mxu0 0.0
      %11624 = vmatpush1.msra.mxu0 0.0
      %11625 = vmatprep.mubr.f32.mxu0 0.0
      %11626 = vmatmul.mubr.f32.gmra.mrb[0].mxu0 %v11559
      %v11627 = vpop.f32.mrb[0].mxu0
      %v11628 = vadd.f32 0.0, %v11627
      %v11629 = vpop.f32.mrb[0].mxu0
      %11630 = vdwg.mxu0
      %v11632 = vsel %vm7250, %v7246, 0
      %11634 = vmatprep.subr.mxu0 0.0
      %11635 = vmatpush1.msra.mxu0 %v389
      %11636 = vmatprep.subr.mxu0 0.0
      %11637 = vmatpush1.msra.mxu0 %v390
      %11638 = vmatprep.subr.mxu0 0.0
      %11639 = vmatpush1.msra.mxu0 0.0
      %11640 = vmatprep.subr.mxu0 0.0
      %11641 = vmatpush1.msra.mxu0 0.0
      %11642 = vmatprep.subr.mxu0 0.0
      %11643 = vmatpush1.msra.mxu0 0.0
      %11644 = vmatprep.subr.mxu0 0.0
      %11645 = vmatpush1.msra.mxu0 0.0
      %11646 = vmatprep.subr.mxu0 0.0
      %11647 = vmatpush1.msra.mxu0 0.0
      %11648 = vmatprep.subr.mxu0 0.0
      %11649 = vmatpush1.msra.mxu0 0.0
      %11650 = vmatprep.subr.mxu0 0.0
      %11651 = vmatpush1.msra.mxu0 0.0
      %11652 = vmatprep.subr.mxu0 0.0
      %11653 = vmatpush1.msra.mxu0 0.0
      %11654 = vmatprep.subr.mxu0 0.0
      %11655 = vmatpush1.msra.mxu0 0.0
      %11656 = vmatprep.subr.mxu0 0.0
      %11657 = vmatpush1.msra.mxu0 0.0
      %11658 = vmatprep.subr.mxu0 0.0
      %11659 = vmatpush1.msra.mxu0 0.0
      %11660 = vmatprep.subr.mxu0 0.0
      %11661 = vmatpush1.msra.mxu0 0.0
      %11662 = vmatprep.subr.mxu0 0.0
      %11663 = vmatpush1.msra.mxu0 0.0
      %11664 = vmatprep.subr.mxu0 0.0
      %11665 = vmatpush1.msra.mxu0 0.0
      %11666 = vmatprep.subr.mxu0 0.0
      %11667 = vmatpush1.msra.mxu0 0.0
      %11668 = vmatprep.subr.mxu0 0.0
      %11669 = vmatpush1.msra.mxu0 0.0
      %11670 = vmatprep.subr.mxu0 0.0
      %11671 = vmatpush1.msra.mxu0 0.0
      %11672 = vmatprep.subr.mxu0 0.0
      %11673 = vmatpush1.msra.mxu0 0.0
      %11674 = vmatprep.subr.mxu0 0.0
      %11675 = vmatpush1.msra.mxu0 0.0
      %11676 = vmatprep.subr.mxu0 0.0
      %11677 = vmatpush1.msra.mxu0 0.0
      %11678 = vmatprep.subr.mxu0 0.0
      %11679 = vmatpush1.msra.mxu0 0.0
      %11680 = vmatprep.subr.mxu0 0.0
      %11681 = vmatpush1.msra.mxu0 0.0
      %11682 = vmatprep.subr.mxu0 0.0
      %11683 = vmatpush1.msra.mxu0 0.0
      %11684 = vmatprep.subr.mxu0 0.0
      %11685 = vmatpush1.msra.mxu0 0.0
      %11686 = vmatprep.subr.mxu0 0.0
      %11687 = vmatpush1.msra.mxu0 0.0
      %11688 = vmatprep.subr.mxu0 0.0
      %11689 = vmatpush1.msra.mxu0 0.0
      %11690 = vmatprep.subr.mxu0 0.0
      %11691 = vmatpush1.msra.mxu0 0.0
      %11692 = vmatprep.subr.mxu0 0.0
      %11693 = vmatpush1.msra.mxu0 0.0
      %11694 = vmatprep.subr.mxu0 0.0
      %11695 = vmatpush1.msra.mxu0 0.0
      %11696 = vmatprep.subr.mxu0 0.0
      %11697 = vmatpush1.msra.mxu0 0.0
      %11698 = vmatprep.mubr.f32.mxu0 0.0
      %11699 = vmatmul.mubr.f32.gmra.mrb[0].mxu0 %v11632
      %v11700 = vpop.f32.mrb[0].mxu0
      %v11701 = vadd.f32 0.0, %v11700
      %v11702 = vpop.f32.mrb[0].mxu0
      %11703 = vdwg.mxu0
      %v11705 = vsel %vm7250, %v7247, 0
      %11707 = vmatprep.subr.mxu0 0.0
      %11708 = vmatpush1.msra.mxu0 %v391
      %11709 = vmatprep.subr.mxu0 0.0
      %11710 = vmatpush1.msra.mxu0 %v392
      %11711 = vmatprep.subr.mxu0 0.0
      %11712 = vmatpush1.msra.mxu0 0.0
      %11713 = vmatprep.subr.mxu0 0.0
      %11714 = vmatpush1.msra.mxu0 0.0
      %11715 = vmatprep.subr.mxu0 0.0
      %11716 = vmatpush1.msra.mxu0 0.0
      %11717 = vmatprep.subr.mxu0 0.0
      %11718 = vmatpush1.msra.mxu0 0.0
      %11719 = vmatprep.subr.mxu0 0.0
      %11720 = vmatpush1.msra.mxu0 0.0
      %11721 = vmatprep.subr.mxu0 0.0
      %11722 = vmatpush1.msra.mxu0 0.0
      %11723 = vmatprep.subr.mxu0 0.0
      %11724 = vmatpush1.msra.mxu0 0.0
      %11725 = vmatprep.subr.mxu0 0.0
      %11726 = vmatpush1.msra.mxu0 0.0
      %11727 = vmatprep.subr.mxu0 0.0
      %11728 = vmatpush1.msra.mxu0 0.0
      %11729 = vmatprep.subr.mxu0 0.0
      %11730 = vmatpush1.msra.mxu0 0.0
      %11731 = vmatprep.subr.mxu0 0.0
      %11732 = vmatpush1.msra.mxu0 0.0
      %11733 = vmatprep.subr.mxu0 0.0
      %11734 = vmatpush1.msra.mxu0 0.0
      %11735 = vmatprep.subr.mxu0 0.0
      %11736 = vmatpush1.msra.mxu0 0.0
      %11737 = vmatprep.subr.mxu0 0.0
      %11738 = vmatpush1.msra.mxu0 0.0
      %11739 = vmatprep.subr.mxu0 0.0
      %11740 = vmatpush1.msra.mxu0 0.0
      %11741 = vmatprep.subr.mxu0 0.0
      %11742 = vmatpush1.msra.mxu0 0.0
      %11743 = vmatprep.subr.mxu0 0.0
      %11744 = vmatpush1.msra.mxu0 0.0
      %11745 = vmatprep.subr.mxu0 0.0
      %11746 = vmatpush1.msra.mxu0 0.0
      %11747 = vmatprep.subr.mxu0 0.0
      %11748 = vmatpush1.msra.mxu0 0.0
      %11749 = vmatprep.subr.mxu0 0.0
      %11750 = vmatpush1.msra.mxu0 0.0
      %11751 = vmatprep.subr.mxu0 0.0
      %11752 = vmatpush1.msra.mxu0 0.0
      %11753 = vmatprep.subr.mxu0 0.0
      %11754 = vmatpush1.msra.mxu0 0.0
      %11755 = vmatprep.subr.mxu0 0.0
      %11756 = vmatpush1.msra.mxu0 0.0
      %11757 = vmatprep.subr.mxu0 0.0
      %11758 = vmatpush1.msra.mxu0 0.0
      %11759 = vmatprep.subr.mxu0 0.0
      %11760 = vmatpush1.msra.mxu0 0.0
      %11761 = vmatprep.subr.mxu0 0.0
      %11762 = vmatpush1.msra.mxu0 0.0
      %11763 = vmatprep.subr.mxu0 0.0
      %11764 = vmatpush1.msra.mxu0 0.0
      %11765 = vmatprep.subr.mxu0 0.0
      %11766 = vmatpush1.msra.mxu0 0.0
      %11767 = vmatprep.subr.mxu0 0.0
      %11768 = vmatpush1.msra.mxu0 0.0
      %11769 = vmatprep.subr.mxu0 0.0
      %11770 = vmatpush1.msra.mxu0 0.0
      %11771 = vmatprep.mubr.f32.mxu0 0.0
      %11772 = vmatmul.mubr.f32.gmra.mrb[0].mxu0 %v11705
      %v11773 = vpop.f32.mrb[0].mxu0
      %v11774 = vadd.f32 0.0, %v11773
      %v11775 = vpop.f32.mrb[0].mxu0
      %11776 = vdwg.mxu0
      %v11778 = vsel %vm7250, %v7248, 0
      %11780 = vmatprep.subr.mxu0 0.0
      %11781 = vmatpush1.msra.mxu0 %v393
      %11782 = vmatprep.subr.mxu0 0.0
      %11783 = vmatpush1.msra.mxu0 %v394
      %11784 = vmatprep.subr.mxu0 0.0
      %11785 = vmatpush1.msra.mxu0 0.0
      %11786 = vmatprep.subr.mxu0 0.0
      %11787 = vmatpush1.msra.mxu0 0.0
      %11788 = vmatprep.subr.mxu0 0.0
      %11789 = vmatpush1.msra.mxu0 0.0
      %11790 = vmatprep.subr.mxu0 0.0
      %11791 = vmatpush1.msra.mxu0 0.0
      %11792 = vmatprep.subr.mxu0 0.0
      %11793 = vmatpush1.msra.mxu0 0.0
      %11794 = vmatprep.subr.mxu0 0.0
      %11795 = vmatpush1.msra.mxu0 0.0
      %11796 = vmatprep.subr.mxu0 0.0
      %11797 = vmatpush1.msra.mxu0 0.0
      %11798 = vmatprep.subr.mxu0 0.0
      %11799 = vmatpush1.msra.mxu0 0.0
      %11800 = vmatprep.subr.mxu0 0.0
      %11801 = vmatpush1.msra.mxu0 0.0
      %11802 = vmatprep.subr.mxu0 0.0
      %11803 = vmatpush1.msra.mxu0 0.0
      %11804 = vmatprep.subr.mxu0 0.0
      %11805 = vmatpush1.msra.mxu0 0.0
      %11806 = vmatprep.subr.mxu0 0.0
      %11807 = vmatpush1.msra.mxu0 0.0
      %11808 = vmatprep.subr.mxu0 0.0
      %11809 = vmatpush1.msra.mxu0 0.0
      %11810 = vmatprep.subr.mxu0 0.0
      %11811 = vmatpush1.msra.mxu0 0.0
      %11812 = vmatprep.subr.mxu0 0.0
      %11813 = vmatpush1.msra.mxu0 0.0
      %11814 = vmatprep.subr.mxu0 0.0
      %11815 = vmatpush1.msra.mxu0 0.0
      %11816 = vmatprep.subr.mxu0 0.0
      %11817 = vmatpush1.msra.mxu0 0.0
      %11818 = vmatprep.subr.mxu0 0.0
      %11819 = vmatpush1.msra.mxu0 0.0
      %11820 = vmatprep.subr.mxu0 0.0
      %11821 = vmatpush1.msra.mxu0 0.0
      %11822 = vmatprep.subr.mxu0 0.0
      %11823 = vmatpush1.msra.mxu0 0.0
      %11824 = vmatprep.subr.mxu0 0.0
      %11825 = vmatpush1.msra.mxu0 0.0
      %11826 = vmatprep.subr.mxu0 0.0
      %11827 = vmatpush1.msra.mxu0 0.0
      %11828 = vmatprep.subr.mxu0 0.0
      %11829 = vmatpush1.msra.mxu0 0.0
      %11830 = vmatprep.subr.mxu0 0.0
      %11831 = vmatpush1.msra.mxu0 0.0
      %11832 = vmatprep.subr.mxu0 0.0
      %11833 = vmatpush1.msra.mxu0 0.0
      %11834 = vmatprep.subr.mxu0 0.0
      %11835 = vmatpush1.msra.mxu0 0.0
      %11836 = vmatprep.subr.mxu0 0.0
      %11837 = vmatpush1.msra.mxu0 0.0
      %11838 = vmatprep.subr.mxu0 0.0
      %11839 = vmatpush1.msra.mxu0 0.0
      %11840 = vmatprep.subr.mxu0 0.0
      %11841 = vmatpush1.msra.mxu0 0.0
      %11842 = vmatprep.subr.mxu0 0.0
      %11843 = vmatpush1.msra.mxu0 0.0
      %11844 = vmatprep.mubr.f32.mxu0 0.0
      %11845 = vmatmul.mubr.f32.gmra.mrb[0].mxu0 %v11778
      %v11846 = vpop.f32.mrb[0].mxu0
      %v11847 = vadd.f32 0.0, %v11846
      %v11848 = vpop.f32.mrb[0].mxu0
      %11849 = vdwg.mxu0
      %v11851 = vsel %vm7250, %v7249, 0
      %11853 = vmatprep.subr.mxu0 0.0
      %11854 = vmatpush1.msra.mxu0 %v395
      %11855 = vmatprep.subr.mxu0 0.0
      %11856 = vmatpush1.msra.mxu0 %v396
      %11857 = vmatprep.subr.mxu0 0.0
      %11858 = vmatpush1.msra.mxu0 0.0
      %11859 = vmatprep.subr.mxu0 0.0
      %11860 = vmatpush1.msra.mxu0 0.0
      %11861 = vmatprep.subr.mxu0 0.0
      %11862 = vmatpush1.msra.mxu0 0.0
      %11863 = vmatprep.subr.mxu0 0.0
      %11864 = vmatpush1.msra.mxu0 0.0
      %11865 = vmatprep.subr.mxu0 0.0
      %11866 = vmatpush1.msra.mxu0 0.0
      %11867 = vmatprep.subr.mxu0 0.0
      %11868 = vmatpush1.msra.mxu0 0.0
      %11869 = vmatprep.subr.mxu0 0.0
      %11870 = vmatpush1.msra.mxu0 0.0
      %11871 = vmatprep.subr.mxu0 0.0
      %11872 = vmatpush1.msra.mxu0 0.0
      %11873 = vmatprep.subr.mxu0 0.0
      %11874 = vmatpush1.msra.mxu0 0.0
      %11875 = vmatprep.subr.mxu0 0.0
      %11876 = vmatpush1.msra.mxu0 0.0
      %11877 = vmatprep.subr.mxu0 0.0
      %11878 = vmatpush1.msra.mxu0 0.0
      %11879 = vmatprep.subr.mxu0 0.0
      %11880 = vmatpush1.msra.mxu0 0.0
      %11881 = vmatprep.subr.mxu0 0.0
      %11882 = vmatpush1.msra.mxu0 0.0
      %11883 = vmatprep.subr.mxu0 0.0
      %11884 = vmatpush1.msra.mxu0 0.0
      %11885 = vmatprep.subr.mxu0 0.0
      %11886 = vmatpush1.msra.mxu0 0.0
      %11887 = vmatprep.subr.mxu0 0.0
      %11888 = vmatpush1.msra.mxu0 0.0
      %11889 = vmatprep.subr.mxu0 0.0
      %11890 = vmatpush1.msra.mxu0 0.0
      %11891 = vmatprep.subr.mxu0 0.0
      %11892 = vmatpush1.msra.mxu0 0.0
      %11893 = vmatprep.subr.mxu0 0.0
      %11894 = vmatpush1.msra.mxu0 0.0
      %11895 = vmatprep.subr.mxu0 0.0
      %11896 = vmatpush1.msra.mxu0 0.0
      %11897 = vmatprep.subr.mxu0 0.0
      %11898 = vmatpush1.msra.mxu0 0.0
      %11899 = vmatprep.subr.mxu0 0.0
      %11900 = vmatpush1.msra.mxu0 0.0
      %11901 = vmatprep.subr.mxu0 0.0
      %11902 = vmatpush1.msra.mxu0 0.0
      %11903 = vmatprep.subr.mxu0 0.0
      %11904 = vmatpush1.msra.mxu0 0.0
      %11905 = vmatprep.subr.mxu0 0.0
      %11906 = vmatpush1.msra.mxu0 0.0
      %11907 = vmatprep.subr.mxu0 0.0
      %11908 = vmatpush1.msra.mxu0 0.0
      %11909 = vmatprep.subr.mxu0 0.0
      %11910 = vmatpush1.msra.mxu0 0.0
      %11911 = vmatprep.subr.mxu0 0.0
      %11912 = vmatpush1.msra.mxu0 0.0
      %11913 = vmatprep.subr.mxu0 0.0
      %11914 = vmatpush1.msra.mxu0 0.0
      %11915 = vmatprep.subr.mxu0 0.0
      %11916 = vmatpush1.msra.mxu0 0.0
      %11917 = vmatprep.mubr.f32.mxu0 0.0
      %11918 = vmatmul.mubr.f32.gmra.mrb[0].mxu0 %v11851
      %v11919 = vpop.f32.mrb[0].mxu0
      %v11920 = vadd.f32 0.0, %v11919
      %v11921 = vpop.f32.mrb[0].mxu0
      %11922 = vdwg.mxu0
      %v11923 = vld [vmem:[%s261] sm:$0x1]
      %v11924 = vld [vmem:[%s261 + $0x1] sm:$0x1]
      %v11925 = vld [vmem:[%s261 + $0x2] sm:$0x1]
      %v11926 = vld [vmem:[%s261 + $0x3] sm:$0x1]
      %v11927 = vld [vmem:[%s261 + $0x4] sm:$0x1]
      %v11928 = vld [vmem:[%s261 + $0x5] sm:$0x1]
      %v11929 = vld [vmem:[%s261 + $0x6] sm:$0x1]
      %v11930 = vld [vmem:[%s261 + $0x7] sm:$0x1]
      %v11931 = vld [vmem:[%s261 + $0x8] sm:$0x1]
      %v11932 = vld [vmem:[%s261 + $0x9] sm:$0x1]
      %v11933 = vld [vmem:[%s261 + $0xa] sm:$0x1]
      %v11934 = vld [vmem:[%s261 + $0xb] sm:$0x1]
      %v11935 = vld [vmem:[%s261 + $0xc] sm:$0x1]
      %v11936 = vld [vmem:[%s261 + $0xd] sm:$0x1]
      %v11937 = vld [vmem:[%s261 + $0xe] sm:$0x1]
      %v11938 = vld [vmem:[%s261 + $0xf] sm:$0x1]
      %v11939 = vld [vmem:[%s261 + $0x10] sm:$0x1]
      %v11940 = vld [vmem:[%s261 + $0x11] sm:$0x1]
      %v11941 = vld [vmem:[%s261 + $0x12] sm:$0x1]
      %v11942 = vld [vmem:[%s261 + $0x13] sm:$0x1]
      %v11943 = vld [vmem:[%s261 + $0x14] sm:$0x1]
      %v11944 = vld [vmem:[%s261 + $0x15] sm:$0x1]
      %v11945 = vld [vmem:[%s261 + $0x16] sm:$0x1]
      %v11946 = vld [vmem:[%s261 + $0x17] sm:$0x1]
      %v11947 = vld [vmem:[%s261 + $0x18] sm:$0x1]
      %v11948 = vld [vmem:[%s261 + $0x19] sm:$0x1]
      %v11949 = vld [vmem:[%s261 + $0x1a] sm:$0x1]
      %v11950 = vld [vmem:[%s261 + $0x1b] sm:$0x1]
      %v11951 = vld [vmem:[%s261 + $0x1c] sm:$0x1]
      %v11952 = vld [vmem:[%s261 + $0x1d] sm:$0x1]
      %v11953 = vld [vmem:[%s261 + $0x1e] sm:$0x1]
      %v11954 = vld [vmem:[%s261 + $0x1f] sm:$0x1]
      %v11955 = vld [vmem:[%s261 + $0x20] sm:$0x1]
      %v11956 = vld [vmem:[%s261 + $0x21] sm:$0x1]
      %v11957 = vld [vmem:[%s261 + $0x22] sm:$0x1]
      %v11958 = vld [vmem:[%s261 + $0x23] sm:$0x1]
      %v11959 = vld [vmem:[%s261 + $0x24] sm:$0x1]
      %v11960 = vld [vmem:[%s261 + $0x25] sm:$0x1]
      %v11961 = vld [vmem:[%s261 + $0x26] sm:$0x1]
      %v11962 = vld [vmem:[%s261 + $0x27] sm:$0x1]
      %v11963 = vld [vmem:[%s261 + $0x28] sm:$0x1]
      %v11964 = vld [vmem:[%s261 + $0x29] sm:$0x1]
      %v11965 = vld [vmem:[%s261 + $0x2a] sm:$0x1]
      %v11966 = vld [vmem:[%s261 + $0x2b] sm:$0x1]
      %v11967 = vld [vmem:[%s261 + $0x2c] sm:$0x1]
      %v11968 = vld [vmem:[%s261 + $0x2d] sm:$0x1]
      %v11969 = vld [vmem:[%s261 + $0x2e] sm:$0x1]
      %v11970 = vld [vmem:[%s261 + $0x2f] sm:$0x1]
      %v11971 = vld [vmem:[%s261 + $0x30] sm:$0x1]
      %v11972 = vld [vmem:[%s261 + $0x31] sm:$0x1]
      %v11973 = vld [vmem:[%s261 + $0x32] sm:$0x1]
      %v11974 = vld [vmem:[%s261 + $0x33] sm:$0x1]
      %v11975 = vld [vmem:[%s261 + $0x34] sm:$0x1]
      %v11976 = vld [vmem:[%s261 + $0x35] sm:$0x1]
      %v11977 = vld [vmem:[%s261 + $0x36] sm:$0x1]
      %v11978 = vld [vmem:[%s261 + $0x37] sm:$0x1]
      %v11979 = vld [vmem:[%s261 + $0x38] sm:$0x1]
      %v11980 = vld [vmem:[%s261 + $0x39] sm:$0x1]
      %v11981 = vld [vmem:[%s261 + $0x3a] sm:$0x1]
      %v11982 = vld [vmem:[%s261 + $0x3b] sm:$0x1]
      %v11983 = vld [vmem:[%s261 + $0x3c] sm:$0x1]
      %v11984 = vld [vmem:[%s261 + $0x3d] sm:$0x1]
      %v11985 = vld [vmem:[%s261 + $0x3e] sm:$0x1]
      %v11986 = vld [vmem:[%s261 + $0x3f] sm:$0x1]
      %v11987 = vld [vmem:[%s4] sm:$0xff]
      %v11988 = vld [vmem:[%s4 + $0x8] sm:$0xff]
      %v11989 = vld [vmem:[%s4 + $0x10] sm:$0xff]
      %v11990 = vld [vmem:[%s4 + $0x18] sm:$0xff]
      %v11991 = vld [vmem:[%s3] sm:$0xff]
      %v11992 = vld [vmem:[%s3 + $0x8] sm:$0xff]
      %v11993 = vld [vmem:[%s3 + $0x10] sm:$0xff]
      %v11994 = vld [vmem:[%s3 + $0x18] sm:$0xff]
      %v12059 = vrot.slane %v7394, 7
      %vm12060 = vcmask 1041409
      %v12061 = vsel %vm12060, %v12059, %v7321
      %v12062 = vrot.slane %v7467, 6
      %vm12063 = vcmask 1042434
      %v12064 = vsel %vm12063, %v12062, %v12061
      %v12065 = vrot.slane %v7540, 5
      %vm12066 = vcmask 1043459
      %v12067 = vsel %vm12066, %v12065, %v12064
      %v12068 = vrot.slane %v7613, 4
      %vm12069 = vcmask 1044484
      %v12070 = vsel %vm12069, %v12068, %v12067
      %v12071 = vrot.slane %v7686, 3
      %vm12072 = vcmask 1045509
      %v12073 = vsel %vm12072, %v12071, %v12070
      %v12074 = vrot.slane %v7759, 2
      %vm12075 = vcmask 1046534
      %v12076 = vsel %vm12075, %v12074, %v12073
      %v12077 = vrot.slane %v7832, 1
      %vm12078 = vcmask 1047559
      %v12079 = vsel %vm12078, %v12077, %v12076
      %v12080 = vrot.slane %v7978, 7
      %v12081 = vsel %vm12060, %v12080, %v7905
      %v12082 = vrot.slane %v8051, 6
      %v12083 = vsel %vm12063, %v12082, %v12081
      %v12084 = vrot.slane %v8124, 5
      %v12085 = vsel %vm12066, %v12084, %v12083
      %v12086 = vrot.slane %v8197, 4
      %v12087 = vsel %vm12069, %v12086, %v12085
      %v12088 = vrot.slane %v8270, 3
      %v12089 = vsel %vm12072, %v12088, %v12087
      %v12090 = vrot.slane %v8343, 2
      %v12091 = vsel %vm12075, %v12090, %v12089
      %v12092 = vrot.slane %v8416, 1
      %v12093 = vsel %vm12078, %v12092, %v12091
      %v12094 = vrot.slane %v8562, 7
      %v12095 = vsel %vm12060, %v12094, %v8489
      %v12096 = vrot.slane %v8635, 6
      %v12097 = vsel %vm12063, %v12096, %v12095
      %v12098 = vrot.slane %v8708, 5
      %v12099 = vsel %vm12066, %v12098, %v12097
      %v12100 = vrot.slane %v8781, 4
      %v12101 = vsel %vm12069, %v12100, %v12099
      %v12102 = vrot.slane %v8854, 3
      %v12103 = vsel %vm12072, %v12102, %v12101
      %v12104 = vrot.slane %v8927, 2
      %v12105 = vsel %vm12075, %v12104, %v12103
      %v12106 = vrot.slane %v9000, 1
      %v12107 = vsel %vm12078, %v12106, %v12105
      %v12108 = vrot.slane %v9146, 7
      %v12109 = vsel %vm12060, %v12108, %v9073
      %v12110 = vrot.slane %v9219, 6
      %v12111 = vsel %vm12063, %v12110, %v12109
      %v12112 = vrot.slane %v9292, 5
      %v12113 = vsel %vm12066, %v12112, %v12111
      %v12114 = vrot.slane %v9365, 4
      %v12115 = vsel %vm12069, %v12114, %v12113
      %v12116 = vrot.slane %v9438, 3
      %v12117 = vsel %vm12072, %v12116, %v12115
      %v12118 = vrot.slane %v9511, 2
      %v12119 = vsel %vm12075, %v12118, %v12117
      %v12120 = vrot.slane %v9584, 1
      %v12121 = vsel %vm12078, %v12120, %v12119
      %v12122 = vrot.slane %v9730, 7
      %v12123 = vsel %vm12060, %v12122, %v9657
      %v12124 = vrot.slane %v9803, 6
      %v12125 = vsel %vm12063, %v12124, %v12123
      %v12126 = vrot.slane %v9876, 5
      %v12127 = vsel %vm12066, %v12126, %v12125
      %v12128 = vrot.slane %v9949, 4
      %v12129 = vsel %vm12069, %v12128, %v12127
      %v12130 = vrot.slane %v10022, 3
      %v12131 = vsel %vm12072, %v12130, %v12129
      %v12132 = vrot.slane %v10095, 2
      %v12133 = vsel %vm12075, %v12132, %v12131
      %v12134 = vrot.slane %v10168, 1
      %v12135 = vsel %vm12078, %v12134, %v12133
      %v12136 = vrot.slane %v10314, 7
      %v12137 = vsel %vm12060, %v12136, %v10241
      %v12138 = vrot.slane %v10387, 6
      %v12139 = vsel %vm12063, %v12138, %v12137
      %v12140 = vrot.slane %v10460, 5
      %v12141 = vsel %vm12066, %v12140, %v12139
      %v12142 = vrot.slane %v10533, 4
      %v12143 = vsel %vm12069, %v12142, %v12141
      %v12144 = vrot.slane %v10606, 3
      %v12145 = vsel %vm12072, %v12144, %v12143
      %v12146 = vrot.slane %v10679, 2
      %v12147 = vsel %vm12075, %v12146, %v12145
      %v12148 = vrot.slane %v10752, 1
      %v12149 = vsel %vm12078, %v12148, %v12147
      %v12150 = vrot.slane %v10898, 7
      %v12151 = vsel %vm12060, %v12150, %v10825
      %v12152 = vrot.slane %v10971, 6
      %v12153 = vsel %vm12063, %v12152, %v12151
      %v12154 = vrot.slane %v11044, 5
      %v12155 = vsel %vm12066, %v12154, %v12153
      %v12156 = vrot.slane %v11117, 4
      %v12157 = vsel %vm12069, %v12156, %v12155
      %v12158 = vrot.slane %v11190, 3
      %v12159 = vsel %vm12072, %v12158, %v12157
      %v12160 = vrot.slane %v11263, 2
      %v12161 = vsel %vm12075, %v12160, %v12159
      %v12162 = vrot.slane %v11336, 1
      %v12163 = vsel %vm12078, %v12162, %v12161
      %v12164 = vrot.slane %v11482, 7
      %v12165 = vsel %vm12060, %v12164, %v11409
      %v12166 = vrot.slane %v11555, 6
      %v12167 = vsel %vm12063, %v12166, %v12165
      %v12168 = vrot.slane %v11628, 5
      %v12169 = vsel %vm12066, %v12168, %v12167
      %v12170 = vrot.slane %v11701, 4
      %v12171 = vsel %vm12069, %v12170, %v12169
      %v12172 = vrot.slane %v11774, 3
      %v12173 = vsel %vm12072, %v12172, %v12171
      %v12174 = vrot.slane %v11847, 2
      %v12175 = vsel %vm12075, %v12174, %v12173
      %v12176 = vrot.slane %v11920, 1
      %v12177 = vsel %vm12078, %v12176, %v12175
      %v12178 = vsel %vm461, %v12079, 0
      %v12180 = vsel %vm461, %v12093, 0
      %v12182 = vsel %vm461, %v12107, 0
      %v12184 = vsel %vm461, %v12121, 0
      %v12186 = vsel %vm461, %v12135, 0
      %v12188 = vsel %vm461, %v12149, 0
      %v12190 = vsel %vm461, %v12163, 0
      %v12192 = vsel %vm461, %v12177, 0
      %12194 = vmatprep.subr.mxu0 0.0
      %12195 = vmatpush1.msra.mxu0 %v11987
      %12196 = vmatprep.subr.mxu0 0.0
      %12197 = vmatpush1.msra.mxu0 %v11988
      %12198 = vmatprep.subr.mxu0 0.0
      %12199 = vmatpush1.msra.mxu0 %v11989
      %12200 = vmatprep.subr.mxu0 0.0
      %12201 = vmatpush1.msra.mxu0 %v11990
      %12202 = vmatprep.subr.mxu0 0.0
      %12203 = vmatpush1.msra.mxu0 0.0
      %12204 = vmatprep.subr.mxu0 0.0
      %12205 = vmatpush1.msra.mxu0 0.0
      %12206 = vmatprep.subr.mxu0 0.0
      %12207 = vmatpush1.msra.mxu0 0.0
      %12208 = vmatprep.subr.mxu0 0.0
      %12209 = vmatpush1.msra.mxu0 0.0
      %12210 = vmatprep.subr.mxu0 0.0
      %12211 = vmatpush1.msra.mxu0 0.0
      %12212 = vmatprep.subr.mxu0 0.0
      %12213 = vmatpush1.msra.mxu0 0.0
      %12214 = vmatprep.subr.mxu0 0.0
      %12215 = vmatpush1.msra.mxu0 0.0
      %12216 = vmatprep.subr.mxu0 0.0
      %12217 = vmatpush1.msra.mxu0 0.0
      %12218 = vmatprep.subr.mxu0 0.0
      %12219 = vmatpush1.msra.mxu0 0.0
      %12220 = vmatprep.subr.mxu0 0.0
      %12221 = vmatpush1.msra.mxu0 0.0
      %12222 = vmatprep.subr.mxu0 0.0
      %12223 = vmatpush1.msra.mxu0 0.0
      %12224 = vmatprep.subr.mxu0 0.0
      %12225 = vmatpush1.msra.mxu0 0.0
      %12226 = vmatprep.subr.mxu0 0.0
      %12227 = vmatpush1.msra.mxu0 0.0
      %12228 = vmatprep.subr.mxu0 0.0
      %12229 = vmatpush1.msra.mxu0 0.0
      %12230 = vmatprep.subr.mxu0 0.0
      %12231 = vmatpush1.msra.mxu0 0.0
      %12232 = vmatprep.subr.mxu0 0.0
      %12233 = vmatpush1.msra.mxu0 0.0
      %12234 = vmatprep.subr.mxu0 0.0
      %12235 = vmatpush1.msra.mxu0 0.0
      %12236 = vmatprep.subr.mxu0 0.0
      %12237 = vmatpush1.msra.mxu0 0.0
      %12238 = vmatprep.subr.mxu0 0.0
      %12239 = vmatpush1.msra.mxu0 0.0
      %12240 = vmatprep.subr.mxu0 0.0
      %12241 = vmatpush1.msra.mxu0 0.0
      %12242 = vmatprep.subr.mxu0 0.0
      %12243 = vmatpush1.msra.mxu0 0.0
      %12244 = vmatprep.subr.mxu0 0.0
      %12245 = vmatpush1.msra.mxu0 0.0
      %12246 = vmatprep.subr.mxu0 0.0
      %12247 = vmatpush1.msra.mxu0 0.0
      %12248 = vmatprep.subr.mxu0 0.0
      %12249 = vmatpush1.msra.mxu0 0.0
      %12250 = vmatprep.subr.mxu0 0.0
      %12251 = vmatpush1.msra.mxu0 0.0
      %12252 = vmatprep.subr.mxu0 0.0
      %12253 = vmatpush1.msra.mxu0 0.0
      %12254 = vmatprep.subr.mxu0 0.0
      %12255 = vmatpush1.msra.mxu0 0.0
      %12256 = vmatprep.subr.mxu0 0.0
      %12257 = vmatpush1.msra.mxu0 0.0
      %12258 = vmatprep.mubr.f32.mxu0 0.0
      %12259 = vmatmul.mubr.f32.gmra.mrb[0].mxu0 %v12178
      %v12260 = vpop.f32.mrb[0].mxu0
      %v12261 = vadd.f32 0.0, %v12260
      %v12262 = vpop.f32.mrb[0].mxu0
      %12263 = vmatprep.mubr.f32.mxu0 0.0
      %12264 = vmatmul.mubr.f32.gmra.mrb[0].mxu0 %v12180
      %v12265 = vpop.f32.mrb[0].mxu0
      %v12266 = vadd.f32 0.0, %v12265
      %v12267 = vpop.f32.mrb[0].mxu0
      %12268 = vmatprep.mubr.f32.mxu0 0.0
      %12269 = vmatmul.mubr.f32.gmra.mrb[0].mxu0 %v12182
      %v12270 = vpop.f32.mrb[0].mxu0
      %v12271 = vadd.f32 0.0, %v12270
      %v12272 = vpop.f32.mrb[0].mxu0
      %12273 = vmatprep.mubr.f32.mxu0 0.0
      %12274 = vmatmul.mubr.f32.gmra.mrb[0].mxu0 %v12184
      %v12275 = vpop.f32.mrb[0].mxu0
      %v12276 = vadd.f32 0.0, %v12275
      %v12277 = vpop.f32.mrb[0].mxu0
      %12278 = vmatprep.mubr.f32.mxu0 0.0
      %12279 = vmatmul.mubr.f32.gmra.mrb[0].mxu0 %v12186
      %v12280 = vpop.f32.mrb[0].mxu0
      %v12281 = vadd.f32 0.0, %v12280
      %v12282 = vpop.f32.mrb[0].mxu0
      %12283 = vmatprep.mubr.f32.mxu0 0.0
      %12284 = vmatmul.mubr.f32.gmra.mrb[0].mxu0 %v12188
      %v12285 = vpop.f32.mrb[0].mxu0
      %v12286 = vadd.f32 0.0, %v12285
      %v12287 = vpop.f32.mrb[0].mxu0
      %12288 = vmatprep.mubr.f32.mxu0 0.0
      %12289 = vmatmul.mubr.f32.gmra.mrb[0].mxu0 %v12190
      %v12290 = vpop.f32.mrb[0].mxu0
      %v12291 = vadd.f32 0.0, %v12290
      %v12292 = vpop.f32.mrb[0].mxu0
      %12293 = vmatprep.mubr.f32.mxu0 0.0
      %12294 = vmatmul.mubr.f32.gmra.mrb[0].mxu0 %v12192
      %v12295 = vpop.f32.mrb[0].mxu0
      %v12296 = vadd.f32 0.0, %v12295
      %v12297 = vpop.f32.mrb[0].mxu0
      %12298 = vdwg.mxu0
      %v12363 = vcombine.low %v11923, %v11924
      %v12364 = vcombine.low %v11925, %v11926
      %v12365 = vcombine.low %v11927, %v11928
      %v12366 = vcombine.low %v11929, %v11930
      %v12368 = vunpack.c.l.s4 1966171168
      %v12369 = vunpack.c.0.s8 %v12368
      %v12370 = vlaneseq
      %v12371 = vshrl.u32 %v12370, 7
      %v12372 = vsub.s32 %v12369, %v12371
      %v12373 = vrot.slane %v12363, %v12372
      %v12375 = vunpack.c.l.s4 1966171168
      %v12376 = vunpack.c.0.s8 %v12375
      %v12377 = vlaneseq
      %v12378 = vshrl.u32 %v12377, 7
      %v12379 = vsub.s32 %v12376, %v12378
      %v12380 = vrot.slane %v12364, %v12379
      %v12382 = vunpack.c.l.s4 1966171168
      %v12383 = vunpack.c.0.s8 %v12382
      %v12384 = vlaneseq
      %v12385 = vshrl.u32 %v12384, 7
      %v12386 = vsub.s32 %v12383, %v12385
      %v12387 = vrot.slane %v12365, %v12386
      %v12389 = vunpack.c.l.s4 1966171168
      %v12390 = vunpack.c.0.s8 %v12389
      %v12391 = vlaneseq
      %v12392 = vshrl.u32 %v12391, 7
      %v12393 = vsub.s32 %v12390, %v12392
      %v12394 = vrot.slane %v12366, %v12393
      %v12395 = vcombine.low %v12373, %v12380
      %v12396 = vcombine.low %v12387, %v12394
      %v12398 = vunpack.c.l.s4 1966171168
      %v12399 = vunpack.c.0.s8 %v12398
      %v12400 = vlaneseq
      %v12401 = vshrl.u32 %v12400, 7
      %v12402 = vsub.s32 %v12399, %v12401
      %v12403 = vrot.slane %v12395, %v12402
      %v12405 = vunpack.c.l.s4 1966171168
      %v12406 = vunpack.c.0.s8 %v12405
      %v12407 = vlaneseq
      %v12408 = vshrl.u32 %v12407, 7
      %v12409 = vsub.s32 %v12406, %v12408
      %v12410 = vrot.slane %v12396, %v12409
      %v12411 = vcombine.low %v12403, %v12410
      %v12412 = vcombine.low %v11931, %v11932
      %v12413 = vcombine.low %v11933, %v11934
      %v12414 = vcombine.low %v11935, %v11936
      %v12415 = vcombine.low %v11937, %v11938
      %v12417 = vunpack.c.l.s4 1966171168
      %v12418 = vunpack.c.0.s8 %v12417
      %v12419 = vlaneseq
      %v12420 = vshrl.u32 %v12419, 7
      %v12421 = vsub.s32 %v12418, %v12420
      %v12422 = vrot.slane %v12412, %v12421
      %v12424 = vunpack.c.l.s4 1966171168
      %v12425 = vunpack.c.0.s8 %v12424
      %v12426 = vlaneseq
      %v12427 = vshrl.u32 %v12426, 7
      %v12428 = vsub.s32 %v12425, %v12427
      %v12429 = vrot.slane %v12413, %v12428
      %v12431 = vunpack.c.l.s4 1966171168
      %v12432 = vunpack.c.0.s8 %v12431
      %v12433 = vlaneseq
      %v12434 = vshrl.u32 %v12433, 7
      %v12435 = vsub.s32 %v12432, %v12434
      %v12436 = vrot.slane %v12414, %v12435
      %v12438 = vunpack.c.l.s4 1966171168
      %v12439 = vunpack.c.0.s8 %v12438
      %v12440 = vlaneseq
      %v12441 = vshrl.u32 %v12440, 7
      %v12442 = vsub.s32 %v12439, %v12441
      %v12443 = vrot.slane %v12415, %v12442
      %v12444 = vcombine.low %v12422, %v12429
      %v12445 = vcombine.low %v12436, %v12443
      %v12447 = vunpack.c.l.s4 1966171168
      %v12448 = vunpack.c.0.s8 %v12447
      %v12449 = vlaneseq
      %v12450 = vshrl.u32 %v12449, 7
      %v12451 = vsub.s32 %v12448, %v12450
      %v12452 = vrot.slane %v12444, %v12451
      %v12454 = vunpack.c.l.s4 1966171168
      %v12455 = vunpack.c.0.s8 %v12454
      %v12456 = vlaneseq
      %v12457 = vshrl.u32 %v12456, 7
      %v12458 = vsub.s32 %v12455, %v12457
      %v12459 = vrot.slane %v12445, %v12458
      %v12460 = vcombine.low %v12452, %v12459
      %v12461 = vcombine.low %v11939, %v11940
      %v12462 = vcombine.low %v11941, %v11942
      %v12463 = vcombine.low %v11943, %v11944
      %v12464 = vcombine.low %v11945, %v11946
      %v12466 = vunpack.c.l.s4 1966171168
      %v12467 = vunpack.c.0.s8 %v12466
      %v12468 = vlaneseq
      %v12469 = vshrl.u32 %v12468, 7
      %v12470 = vsub.s32 %v12467, %v12469
      %v12471 = vrot.slane %v12461, %v12470
      %v12473 = vunpack.c.l.s4 1966171168
      %v12474 = vunpack.c.0.s8 %v12473
      %v12475 = vlaneseq
      %v12476 = vshrl.u32 %v12475, 7
      %v12477 = vsub.s32 %v12474, %v12476
      %v12478 = vrot.slane %v12462, %v12477
      %v12480 = vunpack.c.l.s4 1966171168
      %v12481 = vunpack.c.0.s8 %v12480
      %v12482 = vlaneseq
      %v12483 = vshrl.u32 %v12482, 7
      %v12484 = vsub.s32 %v12481, %v12483
      %v12485 = vrot.slane %v12463, %v12484
      %v12487 = vunpack.c.l.s4 1966171168
      %v12488 = vunpack.c.0.s8 %v12487
      %v12489 = vlaneseq
      %v12490 = vshrl.u32 %v12489, 7
      %v12491 = vsub.s32 %v12488, %v12490
      %v12492 = vrot.slane %v12464, %v12491
      %v12493 = vcombine.low %v12471, %v12478
      %v12494 = vcombine.low %v12485, %v12492
      %v12496 = vunpack.c.l.s4 1966171168
      %v12497 = vunpack.c.0.s8 %v12496
      %v12498 = vlaneseq
      %v12499 = vshrl.u32 %v12498, 7
      %v12500 = vsub.s32 %v12497, %v12499
      %v12501 = vrot.slane %v12493, %v12500
      %v12503 = vunpack.c.l.s4 1966171168
      %v12504 = vunpack.c.0.s8 %v12503
      %v12505 = vlaneseq
      %v12506 = vshrl.u32 %v12505, 7
      %v12507 = vsub.s32 %v12504, %v12506
      %v12508 = vrot.slane %v12494, %v12507
      %v12509 = vcombine.low %v12501, %v12508
      %v12510 = vcombine.low %v11947, %v11948
      %v12511 = vcombine.low %v11949, %v11950
      %v12512 = vcombine.low %v11951, %v11952
      %v12513 = vcombine.low %v11953, %v11954
      %v12515 = vunpack.c.l.s4 1966171168
      %v12516 = vunpack.c.0.s8 %v12515
      %v12517 = vlaneseq
      %v12518 = vshrl.u32 %v12517, 7
      %v12519 = vsub.s32 %v12516, %v12518
      %v12520 = vrot.slane %v12510, %v12519
      %v12522 = vunpack.c.l.s4 1966171168
      %v12523 = vunpack.c.0.s8 %v12522
      %v12524 = vlaneseq
      %v12525 = vshrl.u32 %v12524, 7
      %v12526 = vsub.s32 %v12523, %v12525
      %v12527 = vrot.slane %v12511, %v12526
      %v12529 = vunpack.c.l.s4 1966171168
      %v12530 = vunpack.c.0.s8 %v12529
      %v12531 = vlaneseq
      %v12532 = vshrl.u32 %v12531, 7
      %v12533 = vsub.s32 %v12530, %v12532
      %v12534 = vrot.slane %v12512, %v12533
      %v12536 = vunpack.c.l.s4 1966171168
      %v12537 = vunpack.c.0.s8 %v12536
      %v12538 = vlaneseq
      %v12539 = vshrl.u32 %v12538, 7
      %v12540 = vsub.s32 %v12537, %v12539
      %v12541 = vrot.slane %v12513, %v12540
      %v12542 = vcombine.low %v12520, %v12527
      %v12543 = vcombine.low %v12534, %v12541
      %v12545 = vunpack.c.l.s4 1966171168
      %v12546 = vunpack.c.0.s8 %v12545
      %v12547 = vlaneseq
      %v12548 = vshrl.u32 %v12547, 7
      %v12549 = vsub.s32 %v12546, %v12548
      %v12550 = vrot.slane %v12542, %v12549
      %v12552 = vunpack.c.l.s4 1966171168
      %v12553 = vunpack.c.0.s8 %v12552
      %v12554 = vlaneseq
      %v12555 = vshrl.u32 %v12554, 7
      %v12556 = vsub.s32 %v12553, %v12555
      %v12557 = vrot.slane %v12543, %v12556
      %v12558 = vcombine.low %v12550, %v12557
      %v12559 = vcombine.low %v11955, %v11956
      %v12560 = vcombine.low %v11957, %v11958
      %v12561 = vcombine.low %v11959, %v11960
      %v12562 = vcombine.low %v11961, %v11962
      %v12564 = vunpack.c.l.s4 1966171168
      %v12565 = vunpack.c.0.s8 %v12564
      %v12566 = vlaneseq
      %v12567 = vshrl.u32 %v12566, 7
      %v12568 = vsub.s32 %v12565, %v12567
      %v12569 = vrot.slane %v12559, %v12568
      %v12571 = vunpack.c.l.s4 1966171168
      %v12572 = vunpack.c.0.s8 %v12571
      %v12573 = vlaneseq
      %v12574 = vshrl.u32 %v12573, 7
      %v12575 = vsub.s32 %v12572, %v12574
      %v12576 = vrot.slane %v12560, %v12575
      %v12578 = vunpack.c.l.s4 1966171168
      %v12579 = vunpack.c.0.s8 %v12578
      %v12580 = vlaneseq
      %v12581 = vshrl.u32 %v12580, 7
      %v12582 = vsub.s32 %v12579, %v12581
      %v12583 = vrot.slane %v12561, %v12582
      %v12585 = vunpack.c.l.s4 1966171168
      %v12586 = vunpack.c.0.s8 %v12585
      %v12587 = vlaneseq
      %v12588 = vshrl.u32 %v12587, 7
      %v12589 = vsub.s32 %v12586, %v12588
      %v12590 = vrot.slane %v12562, %v12589
      %v12591 = vcombine.low %v12569, %v12576
      %v12592 = vcombine.low %v12583, %v12590
      %v12594 = vunpack.c.l.s4 1966171168
      %v12595 = vunpack.c.0.s8 %v12594
      %v12596 = vlaneseq
      %v12597 = vshrl.u32 %v12596, 7
      %v12598 = vsub.s32 %v12595, %v12597
      %v12599 = vrot.slane %v12591, %v12598
      %v12601 = vunpack.c.l.s4 1966171168
      %v12602 = vunpack.c.0.s8 %v12601
      %v12603 = vlaneseq
      %v12604 = vshrl.u32 %v12603, 7
      %v12605 = vsub.s32 %v12602, %v12604
      %v12606 = vrot.slane %v12592, %v12605
      %v12607 = vcombine.low %v12599, %v12606
      %v12608 = vcombine.low %v11963, %v11964
      %v12609 = vcombine.low %v11965, %v11966
      %v12610 = vcombine.low %v11967, %v11968
      %v12611 = vcombine.low %v11969, %v11970
      %v12613 = vunpack.c.l.s4 1966171168
      %v12614 = vunpack.c.0.s8 %v12613
      %v12615 = vlaneseq
      %v12616 = vshrl.u32 %v12615, 7
      %v12617 = vsub.s32 %v12614, %v12616
      %v12618 = vrot.slane %v12608, %v12617
      %v12620 = vunpack.c.l.s4 1966171168
      %v12621 = vunpack.c.0.s8 %v12620
      %v12622 = vlaneseq
      %v12623 = vshrl.u32 %v12622, 7
      %v12624 = vsub.s32 %v12621, %v12623
      %v12625 = vrot.slane %v12609, %v12624
      %v12627 = vunpack.c.l.s4 1966171168
      %v12628 = vunpack.c.0.s8 %v12627
      %v12629 = vlaneseq
      %v12630 = vshrl.u32 %v12629, 7
      %v12631 = vsub.s32 %v12628, %v12630
      %v12632 = vrot.slane %v12610, %v12631
      %v12634 = vunpack.c.l.s4 1966171168
      %v12635 = vunpack.c.0.s8 %v12634
      %v12636 = vlaneseq
      %v12637 = vshrl.u32 %v12636, 7
      %v12638 = vsub.s32 %v12635, %v12637
      %v12639 = vrot.slane %v12611, %v12638
      %v12640 = vcombine.low %v12618, %v12625
      %v12641 = vcombine.low %v12632, %v12639
      %v12643 = vunpack.c.l.s4 1966171168
      %v12644 = vunpack.c.0.s8 %v12643
      %v12645 = vlaneseq
      %v12646 = vshrl.u32 %v12645, 7
      %v12647 = vsub.s32 %v12644, %v12646
      %v12648 = vrot.slane %v12640, %v12647
      %v12650 = vunpack.c.l.s4 1966171168
      %v12651 = vunpack.c.0.s8 %v12650
      %v12652 = vlaneseq
      %v12653 = vshrl.u32 %v12652, 7
      %v12654 = vsub.s32 %v12651, %v12653
      %v12655 = vrot.slane %v12641, %v12654
      %v12656 = vcombine.low %v12648, %v12655
      %v12657 = vcombine.low %v11971, %v11972
      %v12658 = vcombine.low %v11973, %v11974
      %v12659 = vcombine.low %v11975, %v11976
      %v12660 = vcombine.low %v11977, %v11978
      %v12662 = vunpack.c.l.s4 1966171168
      %v12663 = vunpack.c.0.s8 %v12662
      %v12664 = vlaneseq
      %v12665 = vshrl.u32 %v12664, 7
      %v12666 = vsub.s32 %v12663, %v12665
      %v12667 = vrot.slane %v12657, %v12666
      %v12669 = vunpack.c.l.s4 1966171168
      %v12670 = vunpack.c.0.s8 %v12669
      %v12671 = vlaneseq
      %v12672 = vshrl.u32 %v12671, 7
      %v12673 = vsub.s32 %v12670, %v12672
      %v12674 = vrot.slane %v12658, %v12673
      %v12676 = vunpack.c.l.s4 1966171168
      %v12677 = vunpack.c.0.s8 %v12676
      %v12678 = vlaneseq
      %v12679 = vshrl.u32 %v12678, 7
      %v12680 = vsub.s32 %v12677, %v12679
      %v12681 = vrot.slane %v12659, %v12680
      %v12683 = vunpack.c.l.s4 1966171168
      %v12684 = vunpack.c.0.s8 %v12683
      %v12685 = vlaneseq
      %v12686 = vshrl.u32 %v12685, 7
      %v12687 = vsub.s32 %v12684, %v12686
      %v12688 = vrot.slane %v12660, %v12687
      %v12689 = vcombine.low %v12667, %v12674
      %v12690 = vcombine.low %v12681, %v12688
      %v12692 = vunpack.c.l.s4 1966171168
      %v12693 = vunpack.c.0.s8 %v12692
      %v12694 = vlaneseq
      %v12695 = vshrl.u32 %v12694, 7
      %v12696 = vsub.s32 %v12693, %v12695
      %v12697 = vrot.slane %v12689, %v12696
      %v12699 = vunpack.c.l.s4 1966171168
      %v12700 = vunpack.c.0.s8 %v12699
      %v12701 = vlaneseq
      %v12702 = vshrl.u32 %v12701, 7
      %v12703 = vsub.s32 %v12700, %v12702
      %v12704 = vrot.slane %v12690, %v12703
      %v12705 = vcombine.low %v12697, %v12704
      %v12706 = vcombine.low %v11979, %v11980
      %v12707 = vcombine.low %v11981, %v11982
      %v12708 = vcombine.low %v11983, %v11984
      %v12709 = vcombine.low %v11985, %v11986
      %v12711 = vunpack.c.l.s4 1966171168
      %v12712 = vunpack.c.0.s8 %v12711
      %v12713 = vlaneseq
      %v12714 = vshrl.u32 %v12713, 7
      %v12715 = vsub.s32 %v12712, %v12714
      %v12716 = vrot.slane %v12706, %v12715
      %v12718 = vunpack.c.l.s4 1966171168
      %v12719 = vunpack.c.0.s8 %v12718
      %v12720 = vlaneseq
      %v12721 = vshrl.u32 %v12720, 7
      %v12722 = vsub.s32 %v12719, %v12721
      %v12723 = vrot.slane %v12707, %v12722
      %v12725 = vunpack.c.l.s4 1966171168
      %v12726 = vunpack.c.0.s8 %v12725
      %v12727 = vlaneseq
      %v12728 = vshrl.u32 %v12727, 7
      %v12729 = vsub.s32 %v12726, %v12728
      %v12730 = vrot.slane %v12708, %v12729
      %v12732 = vunpack.c.l.s4 1966171168
      %v12733 = vunpack.c.0.s8 %v12732
      %v12734 = vlaneseq
      %v12735 = vshrl.u32 %v12734, 7
      %v12736 = vsub.s32 %v12733, %v12735
      %v12737 = vrot.slane %v12709, %v12736
      %v12738 = vcombine.low %v12716, %v12723
      %v12739 = vcombine.low %v12730, %v12737
      %v12741 = vunpack.c.l.s4 1966171168
      %v12742 = vunpack.c.0.s8 %v12741
      %v12743 = vlaneseq
      %v12744 = vshrl.u32 %v12743, 7
      %v12745 = vsub.s32 %v12742, %v12744
      %v12746 = vrot.slane %v12738, %v12745
      %v12748 = vunpack.c.l.s4 1966171168
      %v12749 = vunpack.c.0.s8 %v12748
      %v12750 = vlaneseq
      %v12751 = vshrl.u32 %v12750, 7
      %v12752 = vsub.s32 %v12749, %v12751
      %v12753 = vrot.slane %v12739, %v12752
      %v12754 = vcombine.low %v12746, %v12753
      %v12755 = vsel %vm461, %v12411, 0
      %v12757 = vsel %vm461, %v12460, 0
      %v12759 = vsel %vm461, %v12509, 0
      %v12761 = vsel %vm461, %v12558, 0
      %v12763 = vsel %vm461, %v12607, 0
      %v12765 = vsel %vm461, %v12656, 0
      %v12767 = vsel %vm461, %v12705, 0
      %v12769 = vsel %vm461, %v12754, 0
      %12771 = vmatprep.subr.mxu0 0.0
      %12772 = vmatpush1.msra.mxu0 %v11991
      %12773 = vmatprep.subr.mxu0 0.0
      %12774 = vmatpush1.msra.mxu0 %v11992
      %12775 = vmatprep.subr.mxu0 0.0
      %12776 = vmatpush1.msra.mxu0 %v11993
      %12777 = vmatprep.subr.mxu0 0.0
      %12778 = vmatpush1.msra.mxu0 %v11994
      %12779 = vmatprep.subr.mxu0 0.0
      %12780 = vmatpush1.msra.mxu0 0.0
      %12781 = vmatprep.subr.mxu0 0.0
      %12782 = vmatpush1.msra.mxu0 0.0
      %12783 = vmatprep.subr.mxu0 0.0
      %12784 = vmatpush1.msra.mxu0 0.0
      %12785 = vmatprep.subr.mxu0 0.0
      %12786 = vmatpush1.msra.mxu0 0.0
      %12787 = vmatprep.subr.mxu0 0.0
      %12788 = vmatpush1.msra.mxu0 0.0
      %12789 = vmatprep.subr.mxu0 0.0
      %12790 = vmatpush1.msra.mxu0 0.0
      %12791 = vmatprep.subr.mxu0 0.0
      %12792 = vmatpush1.msra.mxu0 0.0
      %12793 = vmatprep.subr.mxu0 0.0
      %12794 = vmatpush1.msra.mxu0 0.0
      %12795 = vmatprep.subr.mxu0 0.0
      %12796 = vmatpush1.msra.mxu0 0.0
      %12797 = vmatprep.subr.mxu0 0.0
      %12798 = vmatpush1.msra.mxu0 0.0
      %12799 = vmatprep.subr.mxu0 0.0
      %12800 = vmatpush1.msra.mxu0 0.0
      %12801 = vmatprep.subr.mxu0 0.0
      %12802 = vmatpush1.msra.mxu0 0.0
      %12803 = vmatprep.subr.mxu0 0.0
      %12804 = vmatpush1.msra.mxu0 0.0
      %12805 = vmatprep.subr.mxu0 0.0
      %12806 = vmatpush1.msra.mxu0 0.0
      %12807 = vmatprep.subr.mxu0 0.0
      %12808 = vmatpush1.msra.mxu0 0.0
      %12809 = vmatprep.subr.mxu0 0.0
      %12810 = vmatpush1.msra.mxu0 0.0
      %12811 = vmatprep.subr.mxu0 0.0
      %12812 = vmatpush1.msra.mxu0 0.0
      %12813 = vmatprep.subr.mxu0 0.0
      %12814 = vmatpush1.msra.mxu0 0.0
      %12815 = vmatprep.subr.mxu0 0.0
      %12816 = vmatpush1.msra.mxu0 0.0
      %12817 = vmatprep.subr.mxu0 0.0
      %12818 = vmatpush1.msra.mxu0 0.0
      %12819 = vmatprep.subr.mxu0 0.0
      %12820 = vmatpush1.msra.mxu0 0.0
      %12821 = vmatprep.subr.mxu0 0.0
      %12822 = vmatpush1.msra.mxu0 0.0
      %12823 = vmatprep.subr.mxu0 0.0
      %12824 = vmatpush1.msra.mxu0 0.0
      %12825 = vmatprep.subr.mxu0 0.0
      %12826 = vmatpush1.msra.mxu0 0.0
      %12827 = vmatprep.subr.mxu0 0.0
      %12828 = vmatpush1.msra.mxu0 0.0
      %12829 = vmatprep.subr.mxu0 0.0
      %12830 = vmatpush1.msra.mxu0 0.0
      %12831 = vmatprep.subr.mxu0 0.0
      %12832 = vmatpush1.msra.mxu0 0.0
      %12833 = vmatprep.subr.mxu0 0.0
      %12834 = vmatpush1.msra.mxu0 0.0
      %12835 = vmatprep.mubr.f32.mxu0 0.0
      %12836 = vmatmul.mubr.f32.gmra.mrb[0].mxu0 %v12755
      %v12837 = vpop.f32.mrb[0].mxu0
      %v12838 = vadd.f32 %v12261, %v12837
      %v12839 = vpop.f32.mrb[0].mxu0
      %12840 = vmatprep.mubr.f32.mxu0 0.0
      %12841 = vmatmul.mubr.f32.gmra.mrb[0].mxu0 %v12757
      %v12842 = vpop.f32.mrb[0].mxu0
      %v12843 = vadd.f32 %v12266, %v12842
      %v12844 = vpop.f32.mrb[0].mxu0
      %12845 = vmatprep.mubr.f32.mxu0 0.0
      %12846 = vmatmul.mubr.f32.gmra.mrb[0].mxu0 %v12759
      %v12847 = vpop.f32.mrb[0].mxu0
      %v12848 = vadd.f32 %v12271, %v12847
      %v12849 = vpop.f32.mrb[0].mxu0
      %12850 = vmatprep.mubr.f32.mxu0 0.0
      %12851 = vmatmul.mubr.f32.gmra.mrb[0].mxu0 %v12761
      %v12852 = vpop.f32.mrb[0].mxu0
      %v12853 = vadd.f32 %v12276, %v12852
      %v12854 = vpop.f32.mrb[0].mxu0
      %12855 = vmatprep.mubr.f32.mxu0 0.0
      %12856 = vmatmul.mubr.f32.gmra.mrb[0].mxu0 %v12763
      %v12857 = vpop.f32.mrb[0].mxu0
      %v12858 = vadd.f32 %v12281, %v12857
      %v12859 = vpop.f32.mrb[0].mxu0
      %12860 = vmatprep.mubr.f32.mxu0 0.0
      %12861 = vmatmul.mubr.f32.gmra.mrb[0].mxu0 %v12765
      %v12862 = vpop.f32.mrb[0].mxu0
      %v12863 = vadd.f32 %v12286, %v12862
      %v12864 = vpop.f32.mrb[0].mxu0
      %12865 = vmatprep.mubr.f32.mxu0 0.0
      %12866 = vmatmul.mubr.f32.gmra.mrb[0].mxu0 %v12767
      %v12867 = vpop.f32.mrb[0].mxu0
      %v12868 = vadd.f32 %v12291, %v12867
      %v12869 = vpop.f32.mrb[0].mxu0
      %12870 = vmatprep.mubr.f32.mxu0 0.0
      %12871 = vmatmul.mubr.f32.gmra.mrb[0].mxu0 %v12769
      %v12872 = vpop.f32.mrb[0].mxu0
      %v12873 = vadd.f32 %v12296, %v12872
      %v12874 = vpop.f32.mrb[0].mxu0
      %12875 = vdwg.mxu0
      %v12876 = vtanh.pop %v12838
      %v12877 = vtanh.pop %v12843
      %v12878 = vtanh.pop %v12848
      %v12879 = vtanh.pop %v12853
      %v12880 = vtanh.pop %v12858
      %v12881 = vtanh.pop %v12863
      %v12882 = vtanh.pop %v12868
      %v12883 = vtanh.pop %v12873
      %vm12884 = vcmask 523264
      %12885 = vst.msk [vmem:[%s267] sm:$0xff] %vm12884, %v12876
      %12886 = vst.msk [vmem:[%s267 + $0x8] sm:$0xff] %vm12884, %v12877
      %12887 = vst.msk [vmem:[%s267 + $0x10] sm:$0xff] %vm12884, %v12878
      %12888 = vst.msk [vmem:[%s267 + $0x18] sm:$0xff] %vm12884, %v12879
      %12889 = vst.msk [vmem:[%s267 + $0x20] sm:$0xff] %vm12884, %v12880
      %12890 = vst.msk [vmem:[%s267 + $0x28] sm:$0xff] %vm12884, %v12881
      %12891 = vst.msk [vmem:[%s267 + $0x30] sm:$0xff] %vm12884, %v12882
      %12892 = vst.msk [vmem:[%s267 + $0x38] sm:$0xff] %vm12884, %v12883
      %s12893 = smul.u32 8, %s16
      %p12894 = scmp.lt.s32.totalorder %s12893, 15
      %s12895 = scalar_select %p12894, %s12893, 15
      %s12896 = smul.addr %s12895, 8
      %s12897 = scalar_lea.vmem %s5, %s12896
      // Predicated region
      $region41: #{tpu_custom_call.1} parent=39 // pred_check
        %p12898 = pneg %p154
      $region42: #{tpu_custom_call.1} parent=39 // pred_check_branch
        %12900 = sbr.rel (%p12898) target = $region44
      $region43: #{tpu_custom_call.1} parent=39 // pred_region
        %s12901 = smul.u32 8, %s16
      $region44: #{tpu_custom_call.1} parent=39 // pred_fallthru
        _
    $region40: #{tpu_custom_call.1} parent=5 // pred_fallthru
      _
    %p12902 = scmp.le.s32.totalorder 2, %s11
    // Predicated region
    $region45: #{tpu_custom_call.1} parent=5 // pred_check
      %p12903 = pneg %p12902
    $region46: #{tpu_custom_call.1} parent=5 // pred_check_branch
      %12905 = sbr.rel (%p12903) target = $region48
    $region47: #{tpu_custom_call.1} parent=5 // pred_region
      %s12906 = ssub.s32 %s11, 2
      // Predicated region
      $region49: #{tpu_custom_call.1} parent=47 // pred_check
        %p12907 = pneg %p160
      $region50: #{tpu_custom_call.1} parent=47 // pred_check_branch
        %12909 = sbr.rel (%p12907) target = $region52
      $region51: #{tpu_custom_call.1} parent=47 // pred_region
        %s12910 = smul.u32 8, %s17
        %p12911 = scmp.lt.s32.totalorder %s12910, 15
        %s12912 = scalar_select %p12911, %s12910, 15
        %s12913 = smul.addr %s12912, 8
        %s12914 = scalar_lea.vmem %s5, %s12913
      $region52: #{tpu_custom_call.1} parent=47 // pred_fallthru
        _
    $region48: #{tpu_custom_call.1} parent=5 // pred_fallthru
      _
  $region6: #{tpu_custom_call.1} parent=0 // loop_footer
    %s15 = sadd.s32 1, %s11
  $region7: #{tpu_custom_call.1} parent=0 // loop_footer_branch
    %10 = sbr.rel target = $region3
  $region8: #{tpu_custom_call.1} parent=0 // loop_exit
    _

</llo_original>
